<compile_context>
chip_gen: v5e
topology: v5e:2x2
jax: 0.10.0
libtpu: 0.0.40
codegen_flags: <defaults>
</compile_context>

<pallas_src>
import functools

import jax
import jax.numpy as jnp
from jax.experimental import pallas as pl
from jax.experimental.pallas import tpu as pltpu


# ----------------------------- Pallas kernel ------------------------------- #
def _phase_matmul_shift_relu_kernel(p_ref, w_ref, shift_ref, o_ref):
    """Fused per-phase matmul (bf16 in, f32 acc) + BN shift + ReLU.

    Grid = (phase, M_tiles); both axes are independent ("parallel").  The BN
    scale is pre-folded into the weight columns, only the additive shift is
    applied here.
    """
    y = jnp.dot(p_ref[...], w_ref[...], preferred_element_type=jnp.float32)
    y = y + shift_ref[...]
    o_ref[...] = jnp.maximum(y, 0.0).astype(o_ref.dtype)


def fused_phase_matmul_bn_relu(patches, w_all, shift, *, out_dtype, tm):
    """patches: (4, M, K) bf16, w_all: (4, K, N) bf16, shift: (1, N) f32."""
    P, M, K = patches.shape
    P2, K2, N = w_all.shape
    assert P == 4 and P2 == 4 and K == K2
    assert M % tm == 0, (M, tm)

    return pl.pallas_call(
        _phase_matmul_shift_relu_kernel,
        out_shape=jax.ShapeDtypeStruct((P, M, N), out_dtype),
        grid_spec=pltpu.PrefetchScalarGridSpec(
            num_scalar_prefetch=0,
            grid=(P, M // tm),
            in_specs=[
                # Per-phase patch tile; streams over M.
                pl.BlockSpec((None, tm, K), lambda p, i: (p, i, 0)),
                # Per-phase weight; constant across M tiles -> VMEM resident.
                pl.BlockSpec((None, K, N), lambda p, i: (p, 0, 0)),
                # BN shift (per output channel), shared by all grid points.
                pl.BlockSpec((1, N), lambda p, i: (0, 0)),
            ],
            out_specs=pl.BlockSpec((None, tm, N), lambda p, i: (p, i, 0)),
        ),
        compiler_params=pltpu.CompilerParams(
            dimension_semantics=("parallel", "parallel"),
        ),
    )(patches, w_all, shift)


# --------------------------- glue (plain JAX) ------------------------------ #
@functools.lru_cache(maxsize=1)
def _tile_m_cap():
    """256 matches the 256x256 MXU on v6e/v7x; keep 128 on v5-class parts."""
    try:
        kind = jax.devices()[0].device_kind.lower()
    except Exception:
        kind = ""
    return 128 if "v5" in kind else 256


def _round_up(x, m):
    return ((x + m - 1) // m) * m


def _choose_tm(m_padded, cap):
    for tm in (256, 128, 64, 32, 16):
        if tm <= cap and m_padded % tm == 0:
            return tm
    return 16


def _build_phase_patches(x_nhwc):
    """Sub-pixel im2col: (B,H,W,Cin) -> (4, B*H*W, 4*Cin) in bf16.

    Phase p = 2*ry + rx, K ordering (dy, dx, ci):
      patches[p][b*H*W + qy*W + qx, (2*dy+dx)*Cin + ci]
        = xpad[b, qy+ry+dy, qx+rx+dx, ci]
    where xpad is x zero-padded by 1 in H and W.
    """
    B, H, W, Cin = x_nhwc.shape
    xp = jnp.pad(x_nhwc.astype(jnp.bfloat16), ((0, 0), (1, 1), (1, 1), (0, 0)))
    phases = []
    for ry in range(2):
        for rx in range(2):
            taps = []
            for dy in range(2):
                for dx in range(2):
                    taps.append(xp[:, ry + dy:ry + dy + H, rx + dx:rx + dx + W, :])
            ph = jnp.stack(taps, axis=3)                      # (B, H, W, 4, Cin)
            phases.append(ph.reshape(B * H * W, 4 * Cin))
    return jnp.stack(phases, axis=0)                          # (4, M, 4*Cin)


def conv_transpose_bn_relu(x_nhwc, w_all, shift, *, out_dtype):
    """One ConvTranspose2d(4x4, s2, p1, bias=False) + BN + ReLU.

    x_nhwc : (B, H, W, Cin)
    w_all  : (4, 4*Cin, Cout) bf16 sub-pixel weights (BN scale folded in)
    shift  : (1, Cout) f32
    returns: (B, 2H, 2W, Cout) in out_dtype
    """
    B, H, W, _ = x_nhwc.shape
    Cout = w_all.shape[-1]
    M = B * H * W

    patches = _build_phase_patches(x_nhwc)
    Mp = _round_up(M, 16)
    if Mp != M:
        patches = jnp.pad(patches, ((0, 0), (0, Mp - M), (0, 0)))
    tm = _choose_tm(Mp, _tile_m_cap())

    out = fused_phase_matmul_bn_relu(
        patches, w_all, shift, out_dtype=out_dtype, tm=tm)    # (4, Mp, Cout)
    out = out[:, :M, :]
    # Interleave phases: (ry, rx, b, qy, qx, c) -> (b, 2*qy+ry, 2*qx+rx, c).
    out = out.reshape(2, 2, B, H, W, Cout)
    out = jnp.transpose(out, (2, 3, 0, 4, 1, 5)).reshape(B, 2 * H, 2 * W, Cout)
    return out


# ------------------------------ parameters --------------------------------- #
def make_params(key, output_features=512, feature_size=256):
    """Deterministic raw parameters matching KM3DCore.__init__ (eval-mode BN)."""
    eps = 1e-5
    params = []
    in_c = output_features
    for k in jax.random.split(key, 3):
        # nn.init.normal_(m.weight, std=0.001); ConvTranspose2d weight (Cin,Cout,4,4)
        w = 0.001 * jax.random.normal(k, (in_c, feature_size, 4, 4), jnp.float32)
        gamma = jnp.ones((feature_size,), jnp.float32)
        beta = jnp.zeros((feature_size,), jnp.float32)
        mean = jnp.zeros((feature_size,), jnp.float32)
        var = jnp.ones((feature_size,), jnp.float32)
        scale = gamma / jnp.sqrt(var + eps)
        shift = beta - mean * scale
        params.append((w, scale, shift))
        in_c = feature_size
    return params


def fold_params(raw_params):
    """Precompute sub-pixel weight matrices (BN scale folded, bf16) + shifts."""
    folded = []
    for (w, scale, shift) in raw_params:
        cin, cout = w.shape[0], w.shape[1]
        wmats = []
        for ry in range(2):
            for rx in range(2):
                taps = []
                for dy in range(2):
                    for dx in range(2):
                        # kernel tap used by output phase (ry,rx), offset (dy,dx)
                        taps.append(w[:, :, 3 - ry - 2 * dy, 3 - rx - 2 * dx])
                wm = jnp.stack(taps, axis=0).reshape(4 * cin, cout)  # (dy,dx,ci) rows
                wmats.append(wm * scale[None, :])                    # fold BN scale
        w_all = jnp.stack(wmats, axis=0).astype(jnp.bfloat16)        # (4, 4*Cin, Cout)
        folded.append((w_all, shift.reshape(1, cout).astype(jnp.float32)))
    return folded


# -------------------------------- forward ---------------------------------- #
@jax.jit
def km3d_core_head(backbone_feat_nchw, folded_params):
    """KM3DCore.deconv_layers forward.  In/out are NCHW like PyTorch."""
    x = jnp.transpose(backbone_feat_nchw, (0, 2, 3, 1))        # NCHW -> NHWC
    n = len(folded_params)
    for li, (w_all, shift) in enumerate(folded_params):
        out_dtype = jnp.float32 if li == n - 1 else jnp.bfloat16
        x = conv_transpose_bn_relu(x, w_all, shift, out_dtype=out_dtype)
    return jnp.transpose(x, (0, 3, 1, 2))                       # NHWC -> NCHW


def _ref_forward(feat_nchw, raw_params):
    """Pure-XLA f32 reference of the deconv head (numerical cross-check)."""
    x = feat_nchw
    for (w, scale, shift) in raw_params:
        wt = jnp.transpose(w[:, :, ::-1, ::-1], (1, 0, 2, 3))   # (Cout, Cin, 4, 4)
        x = jax.lax.conv_general_dilated(
            x, wt, window_strides=(1, 1), padding=((2, 2), (2, 2)),
            lhs_dilation=(2, 2), rhs_dilation=(1, 1),
            dimension_numbers=("NCHW", "OIHW", "NCHW"))
        x = x * scale[None, :, None, None] + shift[None, :, None, None]
        x = jnp.maximum(x, 0.0)
    return x


# --------------------------------- main ------------------------------------ #
if __name__ == "__main__":
    key = jax.random.PRNGKey(0)
    k_feat, k_params = jax.random.split(key)

    # Backbone output feature map (depth<=34 => 512 channels), small spatial.
    B, C, H, W = 2, 512, 4, 4
    feat = jax.random.normal(k_feat, (B, C, H, W), jnp.float32)

    raw_params = make_params(k_params, output_features=C, feature_size=256)
    params = fold_params(raw_params)

    out = km3d_core_head(feat, params)
    out = jax.block_until_ready(out)

    assert out.shape == (B, 256, 8 * H, 8 * W), out.shape
    assert out.dtype == jnp.float32
    assert bool(jnp.all(out >= 0.0))          # ReLU output

    # Numerical cross-check vs. pure-XLA f32 reference (bf16 matmul tolerance).
    ref = jax.block_until_ready(_ref_forward(feat, raw_params))
    rel = float(jnp.linalg.norm(out - ref) / (jnp.linalg.norm(ref) + 1e-12))
    assert rel < 1e-1, rel

    print("KERNEL_OK")
</pallas_src>

<mosaic_0001>
module attributes {stable_mosaic.version = 11 : i64} {
  func.func @_phase_matmul_shift_relu_kernel(%arg0: i32, %arg1: i32, %arg2: memref<1x32x2048xbf16, #tpu.memory_space<vmem>>, %arg3: memref<1x2048x256xbf16, #tpu.memory_space<vmem>>, %arg4: memref<1x256xf32, #tpu.memory_space<vmem>>, %arg5: memref<1x32x256xbf16, #tpu.memory_space<vmem>>) attributes {dimension_semantics = [#tpu.dimension_semantics<parallel>, #tpu.dimension_semantics<parallel>], iteration_bounds = array<i64: 4, 1>, scalar_prefetch = 0 : i64, scratch_operands = 0 : i64, tpu.core_type = #tpu.core_type<tc>, window_params = [{transform_indices = @transform_0, window_bounds = array<i64: 1, 32, 2048>}, {transform_indices = @transform_1, window_bounds = array<i64: 1, 2048, 256>}, {pipeline_mode = #tpu.pipeline_mode<synchronous>, transform_indices = @transform_2, window_bounds = array<i64: 1, 256>}, {transform_indices = @transform_3, window_bounds = array<i64: 1, 32, 256>}]} {
    %c0 = arith.constant 0 : index
    %c0_0 = arith.constant 0 : index
    %c0_1 = arith.constant 0 : index
    %0 = vector.load %arg2[%c0, %c0_0, %c0_1] : memref<1x32x2048xbf16, #tpu.memory_space<vmem>>, vector<1x32x2048xbf16>
    %1 = vector.shape_cast %0 : vector<1x32x2048xbf16> to vector<32x2048xbf16>
    %c0_2 = arith.constant 0 : index
    %c0_3 = arith.constant 0 : index
    %c0_4 = arith.constant 0 : index
    %2 = vector.load %arg3[%c0_2, %c0_3, %c0_4] : memref<1x2048x256xbf16, #tpu.memory_space<vmem>>, vector<1x2048x256xbf16>
    %3 = vector.shape_cast %2 : vector<1x2048x256xbf16> to vector<2048x256xbf16>
    %cst = arith.constant dense<0.000000e+00> : vector<32x256xf32>
    %4 = tpu.matmul %1, %3, %cst {dimension_numbers = #tpu.dot_dimension_numbers<[1], [0], [0], [1], [0, 0, 1, 1], [], []>} : vector<32x2048xbf16>, vector<2048x256xbf16>, vector<32x256xf32> -> vector<32x256xf32>
    %c0_5 = arith.constant 0 : index
    %c0_6 = arith.constant 0 : index
    %5 = vector.load %arg4[%c0_5, %c0_6] : memref<1x256xf32, #tpu.memory_space<vmem>>, vector<1x256xf32>
    %6 = vector.broadcast %5 : vector<1x256xf32> to vector<32x256xf32>
    %7 = arith.addf %4, %6 : vector<32x256xf32>
    %cst_7 = arith.constant 0.000000e+00 : f32
    %8 = vector.broadcast %cst_7 : f32 to vector<32x256xf32>
    %9 = arith.maximumf %7, %8 : vector<32x256xf32>
    %10 = arith.truncf %9 : vector<32x256xf32> to vector<32x256xbf16>
    %c0_8 = arith.constant 0 : index
    %c0_9 = arith.constant 0 : index
    %c0_10 = arith.constant 0 : index
    %11 = vector.load %arg5[%c0_8, %c0_9, %c0_10] : memref<1x32x256xbf16, #tpu.memory_space<vmem>>, vector<1x32x256xbf16>
    %12 = vector.shape_cast %11 : vector<1x32x256xbf16> to vector<32x256xbf16>
    %13 = vector.shape_cast %10 : vector<32x256xbf16> to vector<1x32x256xbf16>
    tpu.vector_store %arg5[%c0_8, %c0_9, %c0_10], %13 {strides = array<i32>} : memref<1x32x256xbf16, #tpu.memory_space<vmem>>, vector<1x32x256xbf16>,
    return
  }
  func.func @transform_0(%arg0: i32, %arg1: i32) -> (i32, i32, i32) {
    %c0_i32 = arith.constant 0 : i32
    %c0_i32_0 = arith.constant 0 : i32
    return %arg0, %arg1, %c0_i32 : i32, i32, i32
  }
  func.func @transform_1(%arg0: i32, %arg1: i32) -> (i32, i32, i32) {
    %c0_i32 = arith.constant 0 : i32
    %c0_i32_0 = arith.constant 0 : i32
    %c0_i32_1 = arith.constant 0 : i32
    return %arg0, %c0_i32, %c0_i32_0 : i32, i32, i32
  }
  func.func @transform_2(%arg0: i32, %arg1: i32) -> (i32, i32) {
    %c0_i32 = arith.constant 0 : i32
    %c0_i32_0 = arith.constant 0 : i32
    %c0_i32_1 = arith.constant 0 : i32
    return %c0_i32, %c0_i32_0 : i32, i32
  }
  func.func @transform_3(%arg0: i32, %arg1: i32) -> (i32, i32, i32) {
    %c0_i32 = arith.constant 0 : i32
    %c0_i32_0 = arith.constant 0 : i32
    return %arg0, %arg1, %c0_i32 : i32, i32, i32
  }
}

module attributes {stable_mosaic.version = 11 : i64} {
  func.func @_phase_matmul_shift_relu_kernel(%arg0: i32, %arg1: i32, %arg2: memref<1x128x1024xbf16, #tpu.memory_space<vmem>>, %arg3: memref<1x1024x256xbf16, #tpu.memory_space<vmem>>, %arg4: memref<1x256xf32, #tpu.memory_space<vmem>>, %arg5: memref<1x128x256xbf16, #tpu.memory_space<vmem>>) attributes {dimension_semantics = [#tpu.dimension_semantics<parallel>, #tpu.dimension_semantics<parallel>], iteration_bounds = array<i64: 4, 1>, scalar_prefetch = 0 : i64, scratch_operands = 0 : i64, tpu.core_type = #tpu.core_type<tc>, window_params = [{transform_indices = @transform_0, window_bounds = array<i64: 1, 128, 1024>}, {transform_indices = @transform_1, window_bounds = array<i64: 1, 1024, 256>}, {pipeline_mode = #tpu.pipeline_mode<synchronous>, transform_indices = @transform_2, window_bounds = array<i64: 1, 256>}, {transform_indices = @transform_3, window_bounds = array<i64: 1, 128, 256>}]} {
    %c0 = arith.constant 0 : index
    %c0_0 = arith.constant 0 : index
    %c0_1 = arith.constant 0 : index
    %0 = vector.load %arg2[%c0, %c0_0, %c0_1] : memref<1x128x1024xbf16, #tpu.memory_space<vmem>>, vector<1x128x1024xbf16>
    %1 = vector.shape_cast %0 : vector<1x128x1024xbf16> to vector<128x1024xbf16>
    %c0_2 = arith.constant 0 : index
    %c0_3 = arith.constant 0 : index
    %c0_4 = arith.constant 0 : index
    %2 = vector.load %arg3[%c0_2, %c0_3, %c0_4] : memref<1x1024x256xbf16, #tpu.memory_space<vmem>>, vector<1x1024x256xbf16>
    %3 = vector.shape_cast %2 : vector<1x1024x256xbf16> to vector<1024x256xbf16>
    %cst = arith.constant dense<0.000000e+00> : vector<128x256xf32>
    %4 = tpu.matmul %1, %3, %cst {dimension_numbers = #tpu.dot_dimension_numbers<[1], [0], [0], [1], [0, 0, 1, 1], [], []>} : vector<128x1024xbf16>, vector<1024x256xbf16>, vector<128x256xf32> -> vector<128x256xf32>
    %c0_5 = arith.constant 0 : index
    %c0_6 = arith.constant 0 : index
    %5 = vector.load %arg4[%c0_5, %c0_6] : memref<1x256xf32, #tpu.memory_space<vmem>>, vector<1x256xf32>
    %6 = vector.broadcast %5 : vector<1x256xf32> to vector<128x256xf32>
    %7 = arith.addf %4, %6 : vector<128x256xf32>
    %cst_7 = arith.constant 0.000000e+00 : f32
    %8 = vector.broadcast %cst_7 : f32 to vector<128x256xf32>
    %9 = arith.maximumf %7, %8 : vector<128x256xf32>
    %10 = arith.truncf %9 : vector<128x256xf32> to vector<128x256xbf16>
    %c0_8 = arith.constant 0 : index
    %c0_9 = arith.constant 0 : index
    %c0_10 = arith.constant 0 : index
    %11 = vector.load %arg5[%c0_8, %c0_9, %c0_10] : memref<1x128x256xbf16, #tpu.memory_space<vmem>>, vector<1x128x256xbf16>
    %12 = vector.shape_cast %11 : vector<1x128x256xbf16> to vector<128x256xbf16>
    %13 = vector.shape_cast %10 : vector<128x256xbf16> to vector<1x128x256xbf16>
    tpu.vector_store %arg5[%c0_8, %c0_9, %c0_10], %13 {strides = array<i32>} : memref<1x128x256xbf16, #tpu.memory_space<vmem>>, vector<1x128x256xbf16>,
    return
  }
  func.func @transform_0(%arg0: i32, %arg1: i32) -> (i32, i32, i32) {
    %c0_i32 = arith.constant 0 : i32
    %c0_i32_0 = arith.constant 0 : i32
    return %arg0, %arg1, %c0_i32 : i32, i32, i32
  }
  func.func @transform_1(%arg0: i32, %arg1: i32) -> (i32, i32, i32) {
    %c0_i32 = arith.constant 0 : i32
    %c0_i32_0 = arith.constant 0 : i32
    %c0_i32_1 = arith.constant 0 : i32
    return %arg0, %c0_i32, %c0_i32_0 : i32, i32, i32
  }
  func.func @transform_2(%arg0: i32, %arg1: i32) -> (i32, i32) {
    %c0_i32 = arith.constant 0 : i32
    %c0_i32_0 = arith.constant 0 : i32
    %c0_i32_1 = arith.constant 0 : i32
    return %c0_i32, %c0_i32_0 : i32, i32
  }
  func.func @transform_3(%arg0: i32, %arg1: i32) -> (i32, i32, i32) {
    %c0_i32 = arith.constant 0 : i32
    %c0_i32_0 = arith.constant 0 : i32
    return %arg0, %arg1, %c0_i32 : i32, i32, i32
  }
}

module attributes {stable_mosaic.version = 11 : i64} {
  func.func @_phase_matmul_shift_relu_kernel(%arg0: i32, %arg1: i32, %arg2: memref<1x256x1024xbf16, #tpu.memory_space<vmem>>, %arg3: memref<1x1024x256xbf16, #tpu.memory_space<vmem>>, %arg4: memref<1x256xf32, #tpu.memory_space<vmem>>, %arg5: memref<1x256x256xf32, #tpu.memory_space<vmem>>) attributes {dimension_semantics = [#tpu.dimension_semantics<parallel>, #tpu.dimension_semantics<parallel>], iteration_bounds = array<i64: 4, 2>, scalar_prefetch = 0 : i64, scratch_operands = 0 : i64, tpu.core_type = #tpu.core_type<tc>, window_params = [{transform_indices = @transform_0, window_bounds = array<i64: 1, 256, 1024>}, {transform_indices = @transform_1, window_bounds = array<i64: 1, 1024, 256>}, {pipeline_mode = #tpu.pipeline_mode<synchronous>, transform_indices = @transform_2, window_bounds = array<i64: 1, 256>}, {transform_indices = @transform_3, window_bounds = array<i64: 1, 256, 256>}]} {
    %c0 = arith.constant 0 : index
    %c0_0 = arith.constant 0 : index
    %c0_1 = arith.constant 0 : index
    %0 = vector.load %arg2[%c0, %c0_0, %c0_1] : memref<1x256x1024xbf16, #tpu.memory_space<vmem>>, vector<1x256x1024xbf16>
    %1 = vector.shape_cast %0 : vector<1x256x1024xbf16> to vector<256x1024xbf16>
    %c0_2 = arith.constant 0 : index
    %c0_3 = arith.constant 0 : index
    %c0_4 = arith.constant 0 : index
    %2 = vector.load %arg3[%c0_2, %c0_3, %c0_4] : memref<1x1024x256xbf16, #tpu.memory_space<vmem>>, vector<1x1024x256xbf16>
    %3 = vector.shape_cast %2 : vector<1x1024x256xbf16> to vector<1024x256xbf16>
    %cst = arith.constant dense<0.000000e+00> : vector<256x256xf32>
    %4 = tpu.matmul %1, %3, %cst {dimension_numbers = #tpu.dot_dimension_numbers<[1], [0], [0], [1], [0, 0, 1, 1], [], []>} : vector<256x1024xbf16>, vector<1024x256xbf16>, vector<256x256xf32> -> vector<256x256xf32>
    %c0_5 = arith.constant 0 : index
    %c0_6 = arith.constant 0 : index
    %5 = vector.load %arg4[%c0_5, %c0_6] : memref<1x256xf32, #tpu.memory_space<vmem>>, vector<1x256xf32>
    %6 = vector.broadcast %5 : vector<1x256xf32> to vector<256x256xf32>
    %7 = arith.addf %4, %6 : vector<256x256xf32>
    %cst_7 = arith.constant 0.000000e+00 : f32
    %8 = vector.broadcast %cst_7 : f32 to vector<256x256xf32>
    %9 = arith.maximumf %7, %8 : vector<256x256xf32>
    %c0_8 = arith.constant 0 : index
    %c0_9 = arith.constant 0 : index
    %c0_10 = arith.constant 0 : index
    %10 = vector.load %arg5[%c0_8, %c0_9, %c0_10] : memref<1x256x256xf32, #tpu.memory_space<vmem>>, vector<1x256x256xf32>
    %11 = vector.shape_cast %10 : vector<1x256x256xf32> to vector<256x256xf32>
    %12 = vector.shape_cast %9 : vector<256x256xf32> to vector<1x256x256xf32>
    tpu.vector_store %arg5[%c0_8, %c0_9, %c0_10], %12 {strides = array<i32>} : memref<1x256x256xf32, #tpu.memory_space<vmem>>, vector<1x256x256xf32>,
    return
  }
  func.func @transform_0(%arg0: i32, %arg1: i32) -> (i32, i32, i32) {
    %c0_i32 = arith.constant 0 : i32
    %c0_i32_0 = arith.constant 0 : i32
    return %arg0, %arg1, %c0_i32 : i32, i32, i32
  }
  func.func @transform_1(%arg0: i32, %arg1: i32) -> (i32, i32, i32) {
    %c0_i32 = arith.constant 0 : i32
    %c0_i32_0 = arith.constant 0 : i32
    %c0_i32_1 = arith.constant 0 : i32
    return %arg0, %c0_i32, %c0_i32_0 : i32, i32, i32
  }
  func.func @transform_2(%arg0: i32, %arg1: i32) -> (i32, i32) {
    %c0_i32 = arith.constant 0 : i32
    %c0_i32_0 = arith.constant 0 : i32
    %c0_i32_1 = arith.constant 0 : i32
    return %c0_i32, %c0_i32_0 : i32, i32
  }
  func.func @transform_3(%arg0: i32, %arg1: i32) -> (i32, i32, i32) {
    %c0_i32 = arith.constant 0 : i32
    %c0_i32_0 = arith.constant 0 : i32
    return %arg0, %arg1, %c0_i32 : i32, i32, i32
  }
}

</mosaic_0001>

<llo_original>
// kernel: km3d_core_head.3
$region0: #{km3d_core_head.3}
  #allocation0 [shape = 'u32[]', space=smem, size = 0x4, offset = 0x4, fixed_abs, tag = 'smem constant byte address 0x4 - core index']
  #allocation1 [shape = 'u32[72,128]{1,0:T(1,128)}', space=vmem, size = 0x9000, scoped, tag = 'internal scratch']
  %s0 = inlined_call_operand.vmem [shape: bf16[4,32,2048], index: 0, kind: input, shape index: {}]
  %s1 = inlined_call_operand.vmem [shape: bf16[4,2048,256], index: 1, kind: input, shape index: {}]
  %s2 = inlined_call_operand.vmem [shape: f32[1,256], index: 2, kind: input, shape index: {}]
  %s3 = inlined_call_operand.vmem [shape: bf16[4,32,256], index: 3, kind: output, shape index: {}]
  %s4 = sld [smem:[#allocation0]]
  $region45: #{km3d_core_head.3} parent=0
    _
  %s6 = ssub.s32 1, %s4
  %s7 = scalar_select 0, %s6, %s4
  loop: start=0, step=1, limit=6
  $region2: #{km3d_core_head.3} parent=0 // loop_pre_header
    _
  $region3: #{km3d_core_head.3} parent=0 // loop_header
    %s9 = sphi 0, %s13
    %p10 = scmp.ge.s32.totalorder %s9, 6
    %s16 = sphi 0, %s28
    %s17 = sphi 0, %s24
    %s18 = sphi 0, %s16
    %s19 = sphi 0, %s17
    %s20 = sphi 0, %s18
    %s21 = sphi 0, %s19
    %s33 = sphi 0, %s35
    %s36 = sphi 0, %s33
    %s37 = sphi 0, %s36
    %s53 = sphi 0, %s37
    %s59 = sphi 0, %s61
    %s62 = sphi 0, %s59
    %s63 = sphi 0, %s62
    %s79 = sphi 0, %s63
    %s83 = sphi 0, %s83
    %s85 = sphi 0, %s83
    %s86 = sphi 0, %s85
    %s100 = sphi 0, %s86
    %s108 = sphi 0, %s110
    %s111 = sphi 0, %s108
    %s112 = sphi 0, %s111
    %s128 = sphi 0, %s112
  $region4: #{km3d_core_head.3} parent=0 // loop_header_branch
    %12 = sbr.rel (%p10) target = $region8
  $region5: #{km3d_core_head.3} parent=0 // loop_body
    %s14 = ssub.s32 %s9, 1
    %s15 = ssub.s32 %s9, 2
    %s22 = sadd.s32 1, %s17
    %p23 = scmp.ge.s32.totalorder %s22, 1
    %s24 = scalar_select %p23, 0, %s22
    %s25 = sadd.s32 1, %s16
    %s26 = scalar_select %p23, %s25, %s16
    %p27 = scmp.ge.s32.totalorder %s26, 4
    %s28 = scalar_select %p27, 0, %s26
    %s29 = ssub.s32 %s16, %s28
    %s30 = ssub.s32 %s17, %s24
    %s31 = sor.u32 %s29, %s30
    %p32 = scmp.eq.s32.totalorder %s31, 0
    %s34 = sadd.s32 %s33, 1
    %s35 = scalar_select %p32, %s33, %s34
    %p38 = pneg %p32
    %p39 = scmp.eq.s32.totalorder %s9, 3
    %p40 = por %p38, %p39
    %p41 = scmp.ne.s32.totalorder %s33, %s36
    %p42 = scmp.eq.s32.totalorder %s9, 0
    %p43 = por %p41, %p42
    %p44 = scmp.ne.s32.totalorder %s33, %s36
    %p45 = scmp.eq.s32.totalorder %s14, 3
    %p46 = por %p44, %p45
    %p47 = scmp.ne.s32.totalorder %s36, %s37
    %p48 = scmp.eq.s32.totalorder %s14, 0
    %p49 = por %p47, %p48
    %p50 = scmp.ne.s32.totalorder %s36, %s37
    %p51 = scmp.eq.s32.totalorder %s15, 3
    %p52 = por %p50, %p51
    %p54 = scmp.ne.s32.totalorder %s37, %s53
    %p55 = scmp.eq.s32.totalorder %s15, 0
    %p56 = por %p54, %p55
    %s57 = ssub.s32 %s16, %s28
    %p58 = scmp.eq.s32.totalorder %s57, 0
    %s60 = sadd.s32 %s59, 1
    %s61 = scalar_select %p58, %s59, %s60
    %p64 = pneg %p58
    %p65 = scmp.eq.s32.totalorder %s9, 3
    %p66 = por %p64, %p65
    %p67 = scmp.ne.s32.totalorder %s59, %s62
    %p68 = scmp.eq.s32.totalorder %s9, 0
    %p69 = por %p67, %p68
    %p70 = scmp.ne.s32.totalorder %s59, %s62
    %p71 = scmp.eq.s32.totalorder %s14, 3
    %p72 = por %p70, %p71
    %p73 = scmp.ne.s32.totalorder %s62, %s63
    %p74 = scmp.eq.s32.totalorder %s14, 0
    %p75 = por %p73, %p74
    %p76 = scmp.ne.s32.totalorder %s62, %s63
    %p77 = scmp.eq.s32.totalorder %s15, 3
    %p78 = por %p76, %p77
    %p80 = scmp.ne.s32.totalorder %s63, %s79
    %p81 = scmp.eq.s32.totalorder %s15, 0
    %p82 = por %p80, %p81
    %s84 = sadd.s32 %s83, 1
    %p87 = scmp.eq.s32.totalorder %s9, 3
    %p88 = scmp.ne.s32.totalorder %s83, %s85
    %p89 = scmp.eq.s32.totalorder %s9, 0
    %p90 = por %p88, %p89
    %p91 = scmp.ne.s32.totalorder %s83, %s85
    %p92 = scmp.eq.s32.totalorder %s14, 3
    %p93 = por %p91, %p92
    %p94 = scmp.ne.s32.totalorder %s85, %s86
    %p95 = scmp.eq.s32.totalorder %s14, 0
    %p96 = por %p94, %p95
    %p97 = scmp.ne.s32.totalorder %s85, %s86
    %p98 = scmp.eq.s32.totalorder %s15, 3
    %p99 = por %p97, %p98
    %p101 = scmp.ne.s32.totalorder %s86, %s100
    %p102 = scmp.eq.s32.totalorder %s15, 0
    %p103 = por %p101, %p102
    %s104 = ssub.s32 %s16, %s28
    %s105 = ssub.s32 %s17, %s24
    %s106 = sor.u32 %s104, %s105
    %p107 = scmp.eq.s32.totalorder %s106, 0
    %s109 = sadd.s32 %s108, 1
    %s110 = scalar_select %p107, %s108, %s109
    %p113 = pneg %p107
    %p114 = scmp.eq.s32.totalorder %s9, 3
    %p115 = por %p113, %p114
    %p116 = scmp.ne.s32.totalorder %s108, %s111
    %p117 = scmp.eq.s32.totalorder %s9, 0
    %p118 = por %p116, %p117
    %p119 = scmp.ne.s32.totalorder %s108, %s111
    %p120 = scmp.eq.s32.totalorder %s14, 3
    %p121 = por %p119, %p120
    %p122 = scmp.ne.s32.totalorder %s111, %s112
    %p123 = scmp.eq.s32.totalorder %s14, 0
    %p124 = por %p122, %p123
    %p125 = scmp.ne.s32.totalorder %s111, %s112
    %p126 = scmp.eq.s32.totalorder %s15, 3
    %p127 = por %p125, %p126
    %p129 = scmp.ne.s32.totalorder %s112, %s128
    %p130 = scmp.eq.s32.totalorder %s15, 0
    %p131 = por %p129, %p130
    %p132 = scmp.le.s32.totalorder 1, %s9
    %p133 = scmp.lt.s32.totalorder %s9, 5
    %p134 = pnand %p132, %p133
    %p135 = pneg %p134
    // Predicated region
    $region9: #{km3d_core_head.3} parent=5 // pred_check
      _
    $region10: #{km3d_core_head.3} parent=5 // pred_check_branch
      %137 = sbr.rel (%p134) target = $region12
    $region11: #{km3d_core_head.3} parent=5 // pred_region
      %s138 = ssub.s32 %s9, 1
      // Predicated region
      $region13: #{km3d_core_head.3} parent=11 // pred_check
        %p139 = pneg %p96
      $region14: #{km3d_core_head.3} parent=11 // pred_check_branch
        %141 = sbr.rel (%p139) target = $region16
      $region15: #{km3d_core_head.3} parent=11 // pred_region
        _
      $region16: #{km3d_core_head.3} parent=11 // pred_fallthru
        _
    $region12: #{km3d_core_head.3} parent=5 // pred_fallthru
      _
    %p142 = scmp.lt.s32.totalorder %s9, 4
    // Predicated region
    $region17: #{km3d_core_head.3} parent=5 // pred_check
      %p143 = pneg %p142
    $region18: #{km3d_core_head.3} parent=5 // pred_check_branch
      %145 = sbr.rel (%p143) target = $region20
    $region19: #{km3d_core_head.3} parent=5 // pred_region
      // Predicated region
      $region21: #{km3d_core_head.3} parent=19 // pred_check
        %p146 = pneg %p43
      $region22: #{km3d_core_head.3} parent=19 // pred_check_branch
        %148 = sbr.rel (%p146) target = $region24
      $region23: #{km3d_core_head.3} parent=19 // pred_region
        %s149 = smul.u32 4, %s17
        %p150 = scmp.lt.s32.totalorder %s16, 3
        %s151 = scalar_select %p150, %s16, 3
        %p152 = scmp.lt.s32.totalorder %s149, 3
        %s153 = scalar_select %p152, %s149, 3
        %s154 = smul.addr %s153, 16
        %s155 = smul.addr %s151, 64
        %s156 = sadd.s32 %s154, %s155
        %s157 = smul.addr %s156, 4
        %s158 = scalar_lea.vmem %s0, %s157
        %s159 = smul.u32 4, %s17
      $region24: #{km3d_core_head.3} parent=19 // pred_fallthru
        _
      // Predicated region
      $region25: #{km3d_core_head.3} parent=19 // pred_check
        %p160 = pneg %p69
      $region26: #{km3d_core_head.3} parent=19 // pred_check_branch
        %162 = sbr.rel (%p160) target = $region28
      $region27: #{km3d_core_head.3} parent=19 // pred_region
        %p163 = scmp.lt.s32.totalorder %s16, 3
        %s164 = scalar_select %p163, %s16, 3
        %s165 = smul.addr %s164, 512
        %s166 = smul.addr %s165, 4
        %s167 = scalar_lea.vmem %s1, %s166
      $region28: #{km3d_core_head.3} parent=19 // pred_fallthru
        _
    $region20: #{km3d_core_head.3} parent=5 // pred_fallthru
      _
    %p168 = scmp.le.s32.totalorder 1, %s9
    %p169 = scmp.lt.s32.totalorder %s9, 5
    %p170 = pnand %p168, %p169
    %p171 = pneg %p170
    // Predicated region
    $region29: #{km3d_core_head.3} parent=5 // pred_check
      _
    $region30: #{km3d_core_head.3} parent=5 // pred_check_branch
      %173 = sbr.rel (%p170) target = $region32
    $region31: #{km3d_core_head.3} parent=5 // pred_region
      %s174 = ssub.s32 %s9, 1
      %s175 = smul.u32 4, %s19
      %p176 = scmp.lt.s32.totalorder %s18, 3
      %s177 = scalar_select %p176, %s18, 3
      %p178 = scmp.lt.s32.totalorder %s175, 3
      %s179 = scalar_select %p178, %s175, 3
      %s180 = smul.addr %s179, 16
      %s181 = smul.addr %s177, 64
      %s182 = sadd.s32 %s180, %s181
      %s183 = smul.addr %s182, 4
      %s184 = scalar_lea.vmem %s0, %s183
      %p185 = pneg %p49
      %p186 = pneg %p46
      %p187 = scmp.lt.s32.totalorder %s18, 3
      %s188 = scalar_select %p187, %s18, 3
      %s189 = smul.addr %s188, 512
      %s190 = smul.addr %s189, 4
      %s191 = scalar_lea.vmem %s1, %s190
      %p192 = pneg %p75
      %p193 = pneg %p72
      %p194 = pneg %p96
      %p195 = pneg %p93
      %p196 = pneg %p124
      %p197 = pneg %p121
      %s198 = smul.u32 4, %s19
      %p199 = scmp.lt.s32.totalorder %s18, 3
      %s200 = scalar_select %p199, %s18, 3
      %p201 = scmp.lt.s32.totalorder %s198, 3
      %s202 = scalar_select %p201, %s198, 3
      %s203 = smul.addr %s202, 2
      %s204 = smul.addr %s200, 8
      %s205 = sadd.s32 %s203, %s204
      %s206 = smul.addr %s205, 4
      %s207 = scalar_lea.vmem %s3, %s206
      %s208 = smul.u32 4, %s19
      %p209 = scmp.lt.s32.totalorder %s18, 3
      %s210 = scalar_select %p209, %s18, 3
      %p211 = scmp.lt.s32.totalorder %s208, 3
      %s212 = scalar_select %p211, %s208, 3
      %s213 = smul.addr %s212, 16
      %s214 = smul.addr %s210, 64
      %s215 = sadd.s32 %s213, %s214
      %s216 = smul.addr %s215, 4
      %s217 = scalar_lea.vmem %s0, %s216
      %s218 = smul.u32 4, %s19
      %p219 = scmp.lt.s32.totalorder %s18, 3
      %s220 = scalar_select %p219, %s18, 3
      %s221 = smul.addr %s220, 512
      %s222 = smul.addr %s221, 4
      %s223 = scalar_lea.vmem %s1, %s222
      %s224 = smul.u32 4, %s19
      %p225 = scmp.lt.s32.totalorder %s18, 3
      %s226 = scalar_select %p225, %s18, 3
      %p227 = scmp.lt.s32.totalorder %s224, 3
      %s228 = scalar_select %p227, %s224, 3
      %s229 = smul.addr %s228, 2
      %s230 = smul.addr %s226, 8
      %s231 = sadd.s32 %s229, %s230
      %s232 = smul.addr %s231, 4
      %s233 = scalar_lea.vmem %s3, %s232
      %s234 = smul.u32 4, %s19
      %v235 = vld [vmem:[%s217] sm:$0xff]
      %v236 = vld [vmem:[%s217 + $0x8] sm:$0xff]
      %v237 = vld [vmem:[%s217 + $0x10] sm:$0xff]
      %v238 = vld [vmem:[%s217 + $0x18] sm:$0xff]
      %v239 = vld [vmem:[%s217 + $0x20] sm:$0xff]
      %v240 = vld [vmem:[%s217 + $0x28] sm:$0xff]
      %v241 = vld [vmem:[%s217 + $0x30] sm:$0xff]
      %v242 = vld [vmem:[%s217 + $0x38] sm:$0xff]
      %v243 = vld [vmem:[%s217 + $0x40] sm:$0xff]
      %v244 = vld [vmem:[%s217 + $0x48] sm:$0xff]
      %v245 = vld [vmem:[%s217 + $0x50] sm:$0xff]
      %v246 = vld [vmem:[%s217 + $0x58] sm:$0xff]
      %v247 = vld [vmem:[%s217 + $0x60] sm:$0xff]
      %v248 = vld [vmem:[%s217 + $0x68] sm:$0xff]
      %v249 = vld [vmem:[%s217 + $0x70] sm:$0xff]
      %v250 = vld [vmem:[%s217 + $0x78] sm:$0xff]
      %v251 = vld [vmem:[%s217 + $0x80] sm:$0xff]
      %v252 = vld [vmem:[%s217 + $0x88] sm:$0xff]
      %v253 = vld [vmem:[%s217 + $0x90] sm:$0xff]
      %v254 = vld [vmem:[%s217 + $0x98] sm:$0xff]
      %v255 = vld [vmem:[%s217 + $0xa0] sm:$0xff]
      %v256 = vld [vmem:[%s217 + $0xa8] sm:$0xff]
      %v257 = vld [vmem:[%s217 + $0xb0] sm:$0xff]
      %v258 = vld [vmem:[%s217 + $0xb8] sm:$0xff]
      %v259 = vld [vmem:[%s217 + $0xc0] sm:$0xff]
      %v260 = vld [vmem:[%s217 + $0xc8] sm:$0xff]
      %v261 = vld [vmem:[%s217 + $0xd0] sm:$0xff]
      %v262 = vld [vmem:[%s217 + $0xd8] sm:$0xff]
      %v263 = vld [vmem:[%s217 + $0xe0] sm:$0xff]
      %v264 = vld [vmem:[%s217 + $0xe8] sm:$0xff]
      %v265 = vld [vmem:[%s217 + $0xf0] sm:$0xff]
      %v266 = vld [vmem:[%s217 + $0xf8] sm:$0xff]
      %v267 = vld [vmem:[%s223] sm:$0xff]
      %v268 = vld [vmem:[%s223 + $0x8] sm:$0xff]
      %v269 = vld [vmem:[%s223 + $0x10] sm:$0xff]
      %v270 = vld [vmem:[%s223 + $0x18] sm:$0xff]
      %v271 = vld [vmem:[%s223 + $0x20] sm:$0xff]
      %v272 = vld [vmem:[%s223 + $0x28] sm:$0xff]
      %v273 = vld [vmem:[%s223 + $0x30] sm:$0xff]
      %v274 = vld [vmem:[%s223 + $0x38] sm:$0xff]
      %v275 = vld [vmem:[%s223 + $0x40] sm:$0xff]
      %v276 = vld [vmem:[%s223 + $0x48] sm:$0xff]
      %v277 = vld [vmem:[%s223 + $0x50] sm:$0xff]
      %v278 = vld [vmem:[%s223 + $0x58] sm:$0xff]
      %v279 = vld [vmem:[%s223 + $0x60] sm:$0xff]
      %v280 = vld [vmem:[%s223 + $0x68] sm:$0xff]
      %v281 = vld [vmem:[%s223 + $0x70] sm:$0xff]
      %v282 = vld [vmem:[%s223 + $0x78] sm:$0xff]
      %v283 = vld [vmem:[%s223 + $0x80] sm:$0xff]
      %v284 = vld [vmem:[%s223 + $0x88] sm:$0xff]
      %v285 = vld [vmem:[%s223 + $0x90] sm:$0xff]
      %v286 = vld [vmem:[%s223 + $0x98] sm:$0xff]
      %v287 = vld [vmem:[%s223 + $0xa0] sm:$0xff]
      %v288 = vld [vmem:[%s223 + $0xa8] sm:$0xff]
      %v289 = vld [vmem:[%s223 + $0xb0] sm:$0xff]
      %v290 = vld [vmem:[%s223 + $0xb8] sm:$0xff]
      %v291 = vld [vmem:[%s223 + $0xc0] sm:$0xff]
      %v292 = vld [vmem:[%s223 + $0xc8] sm:$0xff]
      %v293 = vld [vmem:[%s223 + $0xd0] sm:$0xff]
      %v294 = vld [vmem:[%s223 + $0xd8] sm:$0xff]
      %v295 = vld [vmem:[%s223 + $0xe0] sm:$0xff]
      %v296 = vld [vmem:[%s223 + $0xe8] sm:$0xff]
      %v297 = vld [vmem:[%s223 + $0xf0] sm:$0xff]
      %v298 = vld [vmem:[%s223 + $0xf8] sm:$0xff]
      %v299 = vld [vmem:[%s223 + $0x100] sm:$0xff]
      %v300 = vld [vmem:[%s223 + $0x108] sm:$0xff]
      %v301 = vld [vmem:[%s223 + $0x110] sm:$0xff]
      %v302 = vld [vmem:[%s223 + $0x118] sm:$0xff]
      %v303 = vld [vmem:[%s223 + $0x120] sm:$0xff]
      %v304 = vld [vmem:[%s223 + $0x128] sm:$0xff]
      %v305 = vld [vmem:[%s223 + $0x130] sm:$0xff]
      %v306 = vld [vmem:[%s223 + $0x138] sm:$0xff]
      %v307 = vld [vmem:[%s223 + $0x140] sm:$0xff]
      %v308 = vld [vmem:[%s223 + $0x148] sm:$0xff]
      %v309 = vld [vmem:[%s223 + $0x150] sm:$0xff]
      %v310 = vld [vmem:[%s223 + $0x158] sm:$0xff]
      %v311 = vld [vmem:[%s223 + $0x160] sm:$0xff]
      %v312 = vld [vmem:[%s223 + $0x168] sm:$0xff]
      %v313 = vld [vmem:[%s223 + $0x170] sm:$0xff]
      %v314 = vld [vmem:[%s223 + $0x178] sm:$0xff]
      %v315 = vld [vmem:[%s223 + $0x180] sm:$0xff]
      %v316 = vld [vmem:[%s223 + $0x188] sm:$0xff]
      %v317 = vld [vmem:[%s223 + $0x190] sm:$0xff]
      %v318 = vld [vmem:[%s223 + $0x198] sm:$0xff]
      %v319 = vld [vmem:[%s223 + $0x1a0] sm:$0xff]
      %v320 = vld [vmem:[%s223 + $0x1a8] sm:$0xff]
      %v321 = vld [vmem:[%s223 + $0x1b0] sm:$0xff]
      %v322 = vld [vmem:[%s223 + $0x1b8] sm:$0xff]
      %v323 = vld [vmem:[%s223 + $0x1c0] sm:$0xff]
      %v324 = vld [vmem:[%s223 + $0x1c8] sm:$0xff]
      %v325 = vld [vmem:[%s223 + $0x1d0] sm:$0xff]
      %v326 = vld [vmem:[%s223 + $0x1d8] sm:$0xff]
      %v327 = vld [vmem:[%s223 + $0x1e0] sm:$0xff]
      %v328 = vld [vmem:[%s223 + $0x1e8] sm:$0xff]
      %v329 = vld [vmem:[%s223 + $0x1f0] sm:$0xff]
      %v330 = vld [vmem:[%s223 + $0x1f8] sm:$0xff]
      %v331 = vld [vmem:[%s223 + $0x200] sm:$0xff]
      %v332 = vld [vmem:[%s223 + $0x208] sm:$0xff]
      %v333 = vld [vmem:[%s223 + $0x210] sm:$0xff]
      %v334 = vld [vmem:[%s223 + $0x218] sm:$0xff]
      %v335 = vld [vmem:[%s223 + $0x220] sm:$0xff]
      %v336 = vld [vmem:[%s223 + $0x228] sm:$0xff]
      %v337 = vld [vmem:[%s223 + $0x230] sm:$0xff]
      %v338 = vld [vmem:[%s223 + $0x238] sm:$0xff]
      %v339 = vld [vmem:[%s223 + $0x240] sm:$0xff]
      %v340 = vld [vmem:[%s223 + $0x248] sm:$0xff]
      %v341 = vld [vmem:[%s223 + $0x250] sm:$0xff]
      %v342 = vld [vmem:[%s223 + $0x258] sm:$0xff]
      %v343 = vld [vmem:[%s223 + $0x260] sm:$0xff]
      %v344 = vld [vmem:[%s223 + $0x268] sm:$0xff]
      %v345 = vld [vmem:[%s223 + $0x270] sm:$0xff]
      %v346 = vld [vmem:[%s223 + $0x278] sm:$0xff]
      %v347 = vld [vmem:[%s223 + $0x280] sm:$0xff]
      %v348 = vld [vmem:[%s223 + $0x288] sm:$0xff]
      %v349 = vld [vmem:[%s223 + $0x290] sm:$0xff]
      %v350 = vld [vmem:[%s223 + $0x298] sm:$0xff]
      %v351 = vld [vmem:[%s223 + $0x2a0] sm:$0xff]
      %v352 = vld [vmem:[%s223 + $0x2a8] sm:$0xff]
      %v353 = vld [vmem:[%s223 + $0x2b0] sm:$0xff]
      %v354 = vld [vmem:[%s223 + $0x2b8] sm:$0xff]
      %v355 = vld [vmem:[%s223 + $0x2c0] sm:$0xff]
      %v356 = vld [vmem:[%s223 + $0x2c8] sm:$0xff]
      %v357 = vld [vmem:[%s223 + $0x2d0] sm:$0xff]
      %v358 = vld [vmem:[%s223 + $0x2d8] sm:$0xff]
      %v359 = vld [vmem:[%s223 + $0x2e0] sm:$0xff]
      %v360 = vld [vmem:[%s223 + $0x2e8] sm:$0xff]
      %v361 = vld [vmem:[%s223 + $0x2f0] sm:$0xff]
      %v362 = vld [vmem:[%s223 + $0x2f8] sm:$0xff]
      %v363 = vld [vmem:[%s223 + $0x300] sm:$0xff]
      %v364 = vld [vmem:[%s223 + $0x308] sm:$0xff]
      %v365 = vld [vmem:[%s223 + $0x310] sm:$0xff]
      %v366 = vld [vmem:[%s223 + $0x318] sm:$0xff]
      %v367 = vld [vmem:[%s223 + $0x320] sm:$0xff]
      %v368 = vld [vmem:[%s223 + $0x328] sm:$0xff]
      %v369 = vld [vmem:[%s223 + $0x330] sm:$0xff]
      %v370 = vld [vmem:[%s223 + $0x338] sm:$0xff]
      %v371 = vld [vmem:[%s223 + $0x340] sm:$0xff]
      %v372 = vld [vmem:[%s223 + $0x348] sm:$0xff]
      %v373 = vld [vmem:[%s223 + $0x350] sm:$0xff]
      %v374 = vld [vmem:[%s223 + $0x358] sm:$0xff]
      %v375 = vld [vmem:[%s223 + $0x360] sm:$0xff]
      %v376 = vld [vmem:[%s223 + $0x368] sm:$0xff]
      %v377 = vld [vmem:[%s223 + $0x370] sm:$0xff]
      %v378 = vld [vmem:[%s223 + $0x378] sm:$0xff]
      %v379 = vld [vmem:[%s223 + $0x380] sm:$0xff]
      %v380 = vld [vmem:[%s223 + $0x388] sm:$0xff]
      %v381 = vld [vmem:[%s223 + $0x390] sm:$0xff]
      %v382 = vld [vmem:[%s223 + $0x398] sm:$0xff]
      %v383 = vld [vmem:[%s223 + $0x3a0] sm:$0xff]
      %v384 = vld [vmem:[%s223 + $0x3a8] sm:$0xff]
      %v385 = vld [vmem:[%s223 + $0x3b0] sm:$0xff]
      %v386 = vld [vmem:[%s223 + $0x3b8] sm:$0xff]
      %v387 = vld [vmem:[%s223 + $0x3c0] sm:$0xff]
      %v388 = vld [vmem:[%s223 + $0x3c8] sm:$0xff]
      %v389 = vld [vmem:[%s223 + $0x3d0] sm:$0xff]
      %v390 = vld [vmem:[%s223 + $0x3d8] sm:$0xff]
      %v391 = vld [vmem:[%s223 + $0x3e0] sm:$0xff]
      %v392 = vld [vmem:[%s223 + $0x3e8] sm:$0xff]
      %v393 = vld [vmem:[%s223 + $0x3f0] sm:$0xff]
      %v394 = vld [vmem:[%s223 + $0x3f8] sm:$0xff]
      %v395 = vld [vmem:[%s223 + $0x400] sm:$0xff]
      %v396 = vld [vmem:[%s223 + $0x408] sm:$0xff]
      %v397 = vld [vmem:[%s223 + $0x410] sm:$0xff]
      %v398 = vld [vmem:[%s223 + $0x418] sm:$0xff]
      %v399 = vld [vmem:[%s223 + $0x420] sm:$0xff]
      %v400 = vld [vmem:[%s223 + $0x428] sm:$0xff]
      %v401 = vld [vmem:[%s223 + $0x430] sm:$0xff]
      %v402 = vld [vmem:[%s223 + $0x438] sm:$0xff]
      %v403 = vld [vmem:[%s223 + $0x440] sm:$0xff]
      %v404 = vld [vmem:[%s223 + $0x448] sm:$0xff]
      %v405 = vld [vmem:[%s223 + $0x450] sm:$0xff]
      %v406 = vld [vmem:[%s223 + $0x458] sm:$0xff]
      %v407 = vld [vmem:[%s223 + $0x460] sm:$0xff]
      %v408 = vld [vmem:[%s223 + $0x468] sm:$0xff]
      %v409 = vld [vmem:[%s223 + $0x470] sm:$0xff]
      %v410 = vld [vmem:[%s223 + $0x478] sm:$0xff]
      %v411 = vld [vmem:[%s223 + $0x480] sm:$0xff]
      %v412 = vld [vmem:[%s223 + $0x488] sm:$0xff]
      %v413 = vld [vmem:[%s223 + $0x490] sm:$0xff]
      %v414 = vld [vmem:[%s223 + $0x498] sm:$0xff]
      %v415 = vld [vmem:[%s223 + $0x4a0] sm:$0xff]
      %v416 = vld [vmem:[%s223 + $0x4a8] sm:$0xff]
      %v417 = vld [vmem:[%s223 + $0x4b0] sm:$0xff]
      %v418 = vld [vmem:[%s223 + $0x4b8] sm:$0xff]
      %v419 = vld [vmem:[%s223 + $0x4c0] sm:$0xff]
      %v420 = vld [vmem:[%s223 + $0x4c8] sm:$0xff]
      %v421 = vld [vmem:[%s223 + $0x4d0] sm:$0xff]
      %v422 = vld [vmem:[%s223 + $0x4d8] sm:$0xff]
      %v423 = vld [vmem:[%s223 + $0x4e0] sm:$0xff]
      %v424 = vld [vmem:[%s223 + $0x4e8] sm:$0xff]
      %v425 = vld [vmem:[%s223 + $0x4f0] sm:$0xff]
      %v426 = vld [vmem:[%s223 + $0x4f8] sm:$0xff]
      %v427 = vld [vmem:[%s223 + $0x500] sm:$0xff]
      %v428 = vld [vmem:[%s223 + $0x508] sm:$0xff]
      %v429 = vld [vmem:[%s223 + $0x510] sm:$0xff]
      %v430 = vld [vmem:[%s223 + $0x518] sm:$0xff]
      %v431 = vld [vmem:[%s223 + $0x520] sm:$0xff]
      %v432 = vld [vmem:[%s223 + $0x528] sm:$0xff]
      %v433 = vld [vmem:[%s223 + $0x530] sm:$0xff]
      %v434 = vld [vmem:[%s223 + $0x538] sm:$0xff]
      %v435 = vld [vmem:[%s223 + $0x540] sm:$0xff]
      %v436 = vld [vmem:[%s223 + $0x548] sm:$0xff]
      %v437 = vld [vmem:[%s223 + $0x550] sm:$0xff]
      %v438 = vld [vmem:[%s223 + $0x558] sm:$0xff]
      %v439 = vld [vmem:[%s223 + $0x560] sm:$0xff]
      %v440 = vld [vmem:[%s223 + $0x568] sm:$0xff]
      %v441 = vld [vmem:[%s223 + $0x570] sm:$0xff]
      %v442 = vld [vmem:[%s223 + $0x578] sm:$0xff]
      %v443 = vld [vmem:[%s223 + $0x580] sm:$0xff]
      %v444 = vld [vmem:[%s223 + $0x588] sm:$0xff]
      %v445 = vld [vmem:[%s223 + $0x590] sm:$0xff]
      %v446 = vld [vmem:[%s223 + $0x598] sm:$0xff]
      %v447 = vld [vmem:[%s223 + $0x5a0] sm:$0xff]
      %v448 = vld [vmem:[%s223 + $0x5a8] sm:$0xff]
      %v449 = vld [vmem:[%s223 + $0x5b0] sm:$0xff]
      %v450 = vld [vmem:[%s223 + $0x5b8] sm:$0xff]
      %v451 = vld [vmem:[%s223 + $0x5c0] sm:$0xff]
      %v452 = vld [vmem:[%s223 + $0x5c8] sm:$0xff]
      %v453 = vld [vmem:[%s223 + $0x5d0] sm:$0xff]
      %v454 = vld [vmem:[%s223 + $0x5d8] sm:$0xff]
      %v455 = vld [vmem:[%s223 + $0x5e0] sm:$0xff]
      %v456 = vld [vmem:[%s223 + $0x5e8] sm:$0xff]
      %v457 = vld [vmem:[%s223 + $0x5f0] sm:$0xff]
      %v458 = vld [vmem:[%s223 + $0x5f8] sm:$0xff]
      %v459 = vld [vmem:[%s223 + $0x600] sm:$0xff]
      %v460 = vld [vmem:[%s223 + $0x608] sm:$0xff]
      %v461 = vld [vmem:[%s223 + $0x610] sm:$0xff]
      %v462 = vld [vmem:[%s223 + $0x618] sm:$0xff]
      %v463 = vld [vmem:[%s223 + $0x620] sm:$0xff]
      %v464 = vld [vmem:[%s223 + $0x628] sm:$0xff]
      %v465 = vld [vmem:[%s223 + $0x630] sm:$0xff]
      %v466 = vld [vmem:[%s223 + $0x638] sm:$0xff]
      %v467 = vld [vmem:[%s223 + $0x640] sm:$0xff]
      %v468 = vld [vmem:[%s223 + $0x648] sm:$0xff]
      %v469 = vld [vmem:[%s223 + $0x650] sm:$0xff]
      %v470 = vld [vmem:[%s223 + $0x658] sm:$0xff]
      %v471 = vld [vmem:[%s223 + $0x660] sm:$0xff]
      %v472 = vld [vmem:[%s223 + $0x668] sm:$0xff]
      %v473 = vld [vmem:[%s223 + $0x670] sm:$0xff]
      %v474 = vld [vmem:[%s223 + $0x678] sm:$0xff]
      %v475 = vld [vmem:[%s223 + $0x680] sm:$0xff]
      %v476 = vld [vmem:[%s223 + $0x688] sm:$0xff]
      %v477 = vld [vmem:[%s223 + $0x690] sm:$0xff]
      %v478 = vld [vmem:[%s223 + $0x698] sm:$0xff]
      %v479 = vld [vmem:[%s223 + $0x6a0] sm:$0xff]
      %v480 = vld [vmem:[%s223 + $0x6a8] sm:$0xff]
      %v481 = vld [vmem:[%s223 + $0x6b0] sm:$0xff]
      %v482 = vld [vmem:[%s223 + $0x6b8] sm:$0xff]
      %v483 = vld [vmem:[%s223 + $0x6c0] sm:$0xff]
      %v484 = vld [vmem:[%s223 + $0x6c8] sm:$0xff]
      %v485 = vld [vmem:[%s223 + $0x6d0] sm:$0xff]
      %v486 = vld [vmem:[%s223 + $0x6d8] sm:$0xff]
      %v487 = vld [vmem:[%s223 + $0x6e0] sm:$0xff]
      %v488 = vld [vmem:[%s223 + $0x6e8] sm:$0xff]
      %v489 = vld [vmem:[%s223 + $0x6f0] sm:$0xff]
      %v490 = vld [vmem:[%s223 + $0x6f8] sm:$0xff]
      %v491 = vld [vmem:[%s223 + $0x700] sm:$0xff]
      %v492 = vld [vmem:[%s223 + $0x708] sm:$0xff]
      %v493 = vld [vmem:[%s223 + $0x710] sm:$0xff]
      %v494 = vld [vmem:[%s223 + $0x718] sm:$0xff]
      %v495 = vld [vmem:[%s223 + $0x720] sm:$0xff]
      %v496 = vld [vmem:[%s223 + $0x728] sm:$0xff]
      %v497 = vld [vmem:[%s223 + $0x730] sm:$0xff]
      %v498 = vld [vmem:[%s223 + $0x738] sm:$0xff]
      %v499 = vld [vmem:[%s223 + $0x740] sm:$0xff]
      %v500 = vld [vmem:[%s223 + $0x748] sm:$0xff]
      %v501 = vld [vmem:[%s223 + $0x750] sm:$0xff]
      %v502 = vld [vmem:[%s223 + $0x758] sm:$0xff]
      %v503 = vld [vmem:[%s223 + $0x760] sm:$0xff]
      %v504 = vld [vmem:[%s223 + $0x768] sm:$0xff]
      %v505 = vld [vmem:[%s223 + $0x770] sm:$0xff]
      %v506 = vld [vmem:[%s223 + $0x778] sm:$0xff]
      %v507 = vld [vmem:[%s223 + $0x780] sm:$0xff]
      %v508 = vld [vmem:[%s223 + $0x788] sm:$0xff]
      %v509 = vld [vmem:[%s223 + $0x790] sm:$0xff]
      %v510 = vld [vmem:[%s223 + $0x798] sm:$0xff]
      %v511 = vld [vmem:[%s223 + $0x7a0] sm:$0xff]
      %v512 = vld [vmem:[%s223 + $0x7a8] sm:$0xff]
      %v513 = vld [vmem:[%s223 + $0x7b0] sm:$0xff]
      %v514 = vld [vmem:[%s223 + $0x7b8] sm:$0xff]
      %v515 = vld [vmem:[%s223 + $0x7c0] sm:$0xff]
      %v516 = vld [vmem:[%s223 + $0x7c8] sm:$0xff]
      %v517 = vld [vmem:[%s223 + $0x7d0] sm:$0xff]
      %v518 = vld [vmem:[%s223 + $0x7d8] sm:$0xff]
      %v519 = vld [vmem:[%s223 + $0x7e0] sm:$0xff]
      %v520 = vld [vmem:[%s223 + $0x7e8] sm:$0xff]
      %v521 = vld [vmem:[%s223 + $0x7f0] sm:$0xff]
      %v522 = vld [vmem:[%s223 + $0x7f8] sm:$0xff]
      %v523 = vld [vmem:[%s2] sm:$0x3]
      %v525 = vperm.slane %v523, 0
      %v526 = vperm.slane %v523, 1
      %v561 = vunpack.c.l.b16 %v235
      %v562 = vunpack.c.h.b16 %v235
      %v563 = vunpack.c.l.b16 %v236
      %v564 = vunpack.c.h.b16 %v236
      %v565 = vunpack.c.l.b16 %v237
      %v566 = vunpack.c.h.b16 %v237
      %v567 = vunpack.c.l.b16 %v238
      %v568 = vunpack.c.h.b16 %v238
      %v569 = vunpack.c.l.b16 %v239
      %v570 = vunpack.c.h.b16 %v239
      %v571 = vunpack.c.l.b16 %v240
      %v572 = vunpack.c.h.b16 %v240
      %v573 = vunpack.c.l.b16 %v241
      %v574 = vunpack.c.h.b16 %v241
      %v575 = vunpack.c.l.b16 %v242
      %v576 = vunpack.c.h.b16 %v242
      %v577 = vunpack.c.l.b16 %v243
      %v578 = vunpack.c.h.b16 %v243
      %v579 = vunpack.c.l.b16 %v244
      %v580 = vunpack.c.h.b16 %v244
      %v581 = vunpack.c.l.b16 %v245
      %v582 = vunpack.c.h.b16 %v245
      %v583 = vunpack.c.l.b16 %v246
      %v584 = vunpack.c.h.b16 %v246
      %v585 = vunpack.c.l.b16 %v247
      %v586 = vunpack.c.h.b16 %v247
      %v587 = vunpack.c.l.b16 %v248
      %v588 = vunpack.c.h.b16 %v248
      %v589 = vunpack.c.l.b16 %v249
      %v590 = vunpack.c.h.b16 %v249
      %v591 = vunpack.c.l.b16 %v250
      %v592 = vunpack.c.h.b16 %v250
      %v593 = vunpack.c.l.b16 %v251
      %v594 = vunpack.c.h.b16 %v251
      %v595 = vunpack.c.l.b16 %v252
      %v596 = vunpack.c.h.b16 %v252
      %v597 = vunpack.c.l.b16 %v253
      %v598 = vunpack.c.h.b16 %v253
      %v599 = vunpack.c.l.b16 %v254
      %v600 = vunpack.c.h.b16 %v254
      %v601 = vunpack.c.l.b16 %v255
      %v602 = vunpack.c.h.b16 %v255
      %v603 = vunpack.c.l.b16 %v256
      %v604 = vunpack.c.h.b16 %v256
      %v605 = vunpack.c.l.b16 %v257
      %v606 = vunpack.c.h.b16 %v257
      %v607 = vunpack.c.l.b16 %v258
      %v608 = vunpack.c.h.b16 %v258
      %v609 = vunpack.c.l.b16 %v259
      %v610 = vunpack.c.h.b16 %v259
      %v611 = vunpack.c.l.b16 %v260
      %v612 = vunpack.c.h.b16 %v260
      %v613 = vunpack.c.l.b16 %v261
      %v614 = vunpack.c.h.b16 %v261
      %v615 = vunpack.c.l.b16 %v262
      %v616 = vunpack.c.h.b16 %v262
      %v617 = vunpack.c.l.b16 %v263
      %v618 = vunpack.c.h.b16 %v263
      %v619 = vunpack.c.l.b16 %v264
      %v620 = vunpack.c.h.b16 %v264
      %v621 = vunpack.c.l.b16 %v265
      %v622 = vunpack.c.h.b16 %v265
      %v623 = vunpack.c.l.b16 %v266
      %v624 = vunpack.c.h.b16 %v266
      %v625 = vpack.c.b16 %v577, %v561
      %v626 = vpack.c.b16 %v578, %v562
      %v627 = vpack.c.b16 %v579, %v563
      %v628 = vpack.c.b16 %v580, %v564
      %v629 = vpack.c.b16 %v581, %v565
      %v630 = vpack.c.b16 %v582, %v566
      %v631 = vpack.c.b16 %v583, %v567
      %v632 = vpack.c.b16 %v584, %v568
      %v633 = vpack.c.b16 %v585, %v569
      %v634 = vpack.c.b16 %v586, %v570
      %v635 = vpack.c.b16 %v587, %v571
      %v636 = vpack.c.b16 %v588, %v572
      %v637 = vpack.c.b16 %v589, %v573
      %v638 = vpack.c.b16 %v590, %v574
      %v639 = vpack.c.b16 %v591, %v575
      %v640 = vpack.c.b16 %v592, %v576
      %v641 = vpack.c.b16 %v609, %v593
      %v642 = vpack.c.b16 %v610, %v594
      %v643 = vpack.c.b16 %v611, %v595
      %v644 = vpack.c.b16 %v612, %v596
      %v645 = vpack.c.b16 %v613, %v597
      %v646 = vpack.c.b16 %v614, %v598
      %v647 = vpack.c.b16 %v615, %v599
      %v648 = vpack.c.b16 %v616, %v600
      %v649 = vpack.c.b16 %v617, %v601
      %v650 = vpack.c.b16 %v618, %v602
      %v651 = vpack.c.b16 %v619, %v603
      %v652 = vpack.c.b16 %v620, %v604
      %v653 = vpack.c.b16 %v621, %v605
      %v654 = vpack.c.b16 %v622, %v606
      %v655 = vpack.c.b16 %v623, %v607
      %v656 = vpack.c.b16 %v624, %v608
      %v945 = vunpack.c.l.b16 %v267
      %v946 = vunpack.c.h.b16 %v267
      %v947 = vunpack.c.l.b16 %v268
      %v948 = vunpack.c.h.b16 %v268
      %v949 = vunpack.c.l.b16 %v269
      %v950 = vunpack.c.h.b16 %v269
      %v951 = vunpack.c.l.b16 %v270
      %v952 = vunpack.c.h.b16 %v270
      %v953 = vunpack.c.l.b16 %v271
      %v954 = vunpack.c.h.b16 %v271
      %v955 = vunpack.c.l.b16 %v272
      %v956 = vunpack.c.h.b16 %v272
      %v957 = vunpack.c.l.b16 %v273
      %v958 = vunpack.c.h.b16 %v273
      %v959 = vunpack.c.l.b16 %v274
      %v960 = vunpack.c.h.b16 %v274
      %v961 = vunpack.c.l.b16 %v275
      %v962 = vunpack.c.h.b16 %v275
      %v963 = vunpack.c.l.b16 %v276
      %v964 = vunpack.c.h.b16 %v276
      %v965 = vunpack.c.l.b16 %v277
      %v966 = vunpack.c.h.b16 %v277
      %v967 = vunpack.c.l.b16 %v278
      %v968 = vunpack.c.h.b16 %v278
      %v969 = vunpack.c.l.b16 %v279
      %v970 = vunpack.c.h.b16 %v279
      %v971 = vunpack.c.l.b16 %v280
      %v972 = vunpack.c.h.b16 %v280
      %v973 = vunpack.c.l.b16 %v281
      %v974 = vunpack.c.h.b16 %v281
      %v975 = vunpack.c.l.b16 %v282
      %v976 = vunpack.c.h.b16 %v282
      %v977 = vunpack.c.l.b16 %v283
      %v978 = vunpack.c.h.b16 %v283
      %v979 = vunpack.c.l.b16 %v284
      %v980 = vunpack.c.h.b16 %v284
      %v981 = vunpack.c.l.b16 %v285
      %v982 = vunpack.c.h.b16 %v285
      %v983 = vunpack.c.l.b16 %v286
      %v984 = vunpack.c.h.b16 %v286
      %v985 = vunpack.c.l.b16 %v287
      %v986 = vunpack.c.h.b16 %v287
      %v987 = vunpack.c.l.b16 %v288
      %v988 = vunpack.c.h.b16 %v288
      %v989 = vunpack.c.l.b16 %v289
      %v990 = vunpack.c.h.b16 %v289
      %v991 = vunpack.c.l.b16 %v290
      %v992 = vunpack.c.h.b16 %v290
      %v993 = vunpack.c.l.b16 %v291
      %v994 = vunpack.c.h.b16 %v291
      %v995 = vunpack.c.l.b16 %v292
      %v996 = vunpack.c.h.b16 %v292
      %v997 = vunpack.c.l.b16 %v293
      %v998 = vunpack.c.h.b16 %v293
      %v999 = vunpack.c.l.b16 %v294
      %v1000 = vunpack.c.h.b16 %v294
      %v1001 = vunpack.c.l.b16 %v295
      %v1002 = vunpack.c.h.b16 %v295
      %v1003 = vunpack.c.l.b16 %v296
      %v1004 = vunpack.c.h.b16 %v296
      %v1005 = vunpack.c.l.b16 %v297
      %v1006 = vunpack.c.h.b16 %v297
      %v1007 = vunpack.c.l.b16 %v298
      %v1008 = vunpack.c.h.b16 %v298
      %v1009 = vunpack.c.l.b16 %v299
      %v1010 = vunpack.c.h.b16 %v299
      %v1011 = vunpack.c.l.b16 %v300
      %v1012 = vunpack.c.h.b16 %v300
      %v1013 = vunpack.c.l.b16 %v301
      %v1014 = vunpack.c.h.b16 %v301
      %v1015 = vunpack.c.l.b16 %v302
      %v1016 = vunpack.c.h.b16 %v302
      %v1017 = vunpack.c.l.b16 %v303
      %v1018 = vunpack.c.h.b16 %v303
      %v1019 = vunpack.c.l.b16 %v304
      %v1020 = vunpack.c.h.b16 %v304
      %v1021 = vunpack.c.l.b16 %v305
      %v1022 = vunpack.c.h.b16 %v305
      %v1023 = vunpack.c.l.b16 %v306
      %v1024 = vunpack.c.h.b16 %v306
      %v1025 = vunpack.c.l.b16 %v307
      %v1026 = vunpack.c.h.b16 %v307
      %v1027 = vunpack.c.l.b16 %v308
      %v1028 = vunpack.c.h.b16 %v308
      %v1029 = vunpack.c.l.b16 %v309
      %v1030 = vunpack.c.h.b16 %v309
      %v1031 = vunpack.c.l.b16 %v310
      %v1032 = vunpack.c.h.b16 %v310
      %v1033 = vunpack.c.l.b16 %v311
      %v1034 = vunpack.c.h.b16 %v311
      %v1035 = vunpack.c.l.b16 %v312
      %v1036 = vunpack.c.h.b16 %v312
      %v1037 = vunpack.c.l.b16 %v313
      %v1038 = vunpack.c.h.b16 %v313
      %v1039 = vunpack.c.l.b16 %v314
      %v1040 = vunpack.c.h.b16 %v314
      %v1041 = vunpack.c.l.b16 %v315
      %v1042 = vunpack.c.h.b16 %v315
      %v1043 = vunpack.c.l.b16 %v316
      %v1044 = vunpack.c.h.b16 %v316
      %v1045 = vunpack.c.l.b16 %v317
      %v1046 = vunpack.c.h.b16 %v317
      %v1047 = vunpack.c.l.b16 %v318
      %v1048 = vunpack.c.h.b16 %v318
      %v1049 = vunpack.c.l.b16 %v319
      %v1050 = vunpack.c.h.b16 %v319
      %v1051 = vunpack.c.l.b16 %v320
      %v1052 = vunpack.c.h.b16 %v320
      %v1053 = vunpack.c.l.b16 %v321
      %v1054 = vunpack.c.h.b16 %v321
      %v1055 = vunpack.c.l.b16 %v322
      %v1056 = vunpack.c.h.b16 %v322
      %v1057 = vunpack.c.l.b16 %v323
      %v1058 = vunpack.c.h.b16 %v323
      %v1059 = vunpack.c.l.b16 %v324
      %v1060 = vunpack.c.h.b16 %v324
      %v1061 = vunpack.c.l.b16 %v325
      %v1062 = vunpack.c.h.b16 %v325
      %v1063 = vunpack.c.l.b16 %v326
      %v1064 = vunpack.c.h.b16 %v326
      %v1065 = vunpack.c.l.b16 %v327
      %v1066 = vunpack.c.h.b16 %v327
      %v1067 = vunpack.c.l.b16 %v328
      %v1068 = vunpack.c.h.b16 %v328
      %v1069 = vunpack.c.l.b16 %v329
      %v1070 = vunpack.c.h.b16 %v329
      %v1071 = vunpack.c.l.b16 %v330
      %v1072 = vunpack.c.h.b16 %v330
      %v1073 = vunpack.c.l.b16 %v331
      %v1074 = vunpack.c.h.b16 %v331
      %v1075 = vunpack.c.l.b16 %v332
      %v1076 = vunpack.c.h.b16 %v332
      %v1077 = vunpack.c.l.b16 %v333
      %v1078 = vunpack.c.h.b16 %v333
      %v1079 = vunpack.c.l.b16 %v334
      %v1080 = vunpack.c.h.b16 %v334
      %v1081 = vunpack.c.l.b16 %v335
      %v1082 = vunpack.c.h.b16 %v335
      %v1083 = vunpack.c.l.b16 %v336
      %v1084 = vunpack.c.h.b16 %v336
      %v1085 = vunpack.c.l.b16 %v337
      %v1086 = vunpack.c.h.b16 %v337
      %v1087 = vunpack.c.l.b16 %v338
      %v1088 = vunpack.c.h.b16 %v338
      %v1089 = vunpack.c.l.b16 %v339
      %v1090 = vunpack.c.h.b16 %v339
      %v1091 = vunpack.c.l.b16 %v340
      %v1092 = vunpack.c.h.b16 %v340
      %v1093 = vunpack.c.l.b16 %v341
      %v1094 = vunpack.c.h.b16 %v341
      %v1095 = vunpack.c.l.b16 %v342
      %v1096 = vunpack.c.h.b16 %v342
      %v1097 = vunpack.c.l.b16 %v343
      %v1098 = vunpack.c.h.b16 %v343
      %v1099 = vunpack.c.l.b16 %v344
      %v1100 = vunpack.c.h.b16 %v344
      %v1101 = vunpack.c.l.b16 %v345
      %v1102 = vunpack.c.h.b16 %v345
      %v1103 = vunpack.c.l.b16 %v346
      %v1104 = vunpack.c.h.b16 %v346
      %v1105 = vunpack.c.l.b16 %v347
      %v1106 = vunpack.c.h.b16 %v347
      %v1107 = vunpack.c.l.b16 %v348
      %v1108 = vunpack.c.h.b16 %v348
      %v1109 = vunpack.c.l.b16 %v349
      %v1110 = vunpack.c.h.b16 %v349
      %v1111 = vunpack.c.l.b16 %v350
      %v1112 = vunpack.c.h.b16 %v350
      %v1113 = vunpack.c.l.b16 %v351
      %v1114 = vunpack.c.h.b16 %v351
      %v1115 = vunpack.c.l.b16 %v352
      %v1116 = vunpack.c.h.b16 %v352
      %v1117 = vunpack.c.l.b16 %v353
      %v1118 = vunpack.c.h.b16 %v353
      %v1119 = vunpack.c.l.b16 %v354
      %v1120 = vunpack.c.h.b16 %v354
      %v1121 = vunpack.c.l.b16 %v355
      %v1122 = vunpack.c.h.b16 %v355
      %v1123 = vunpack.c.l.b16 %v356
      %v1124 = vunpack.c.h.b16 %v356
      %v1125 = vunpack.c.l.b16 %v357
      %v1126 = vunpack.c.h.b16 %v357
      %v1127 = vunpack.c.l.b16 %v358
      %v1128 = vunpack.c.h.b16 %v358
      %v1129 = vunpack.c.l.b16 %v359
      %v1130 = vunpack.c.h.b16 %v359
      %v1131 = vunpack.c.l.b16 %v360
      %v1132 = vunpack.c.h.b16 %v360
      %v1133 = vunpack.c.l.b16 %v361
      %v1134 = vunpack.c.h.b16 %v361
      %v1135 = vunpack.c.l.b16 %v362
      %v1136 = vunpack.c.h.b16 %v362
      %v1137 = vunpack.c.l.b16 %v363
      %v1138 = vunpack.c.h.b16 %v363
      %v1139 = vunpack.c.l.b16 %v364
      %v1140 = vunpack.c.h.b16 %v364
      %v1141 = vunpack.c.l.b16 %v365
      %v1142 = vunpack.c.h.b16 %v365
      %v1143 = vunpack.c.l.b16 %v366
      %v1144 = vunpack.c.h.b16 %v366
      %v1145 = vunpack.c.l.b16 %v367
      %v1146 = vunpack.c.h.b16 %v367
      %v1147 = vunpack.c.l.b16 %v368
      %v1148 = vunpack.c.h.b16 %v368
      %v1149 = vunpack.c.l.b16 %v369
      %v1150 = vunpack.c.h.b16 %v369
      %v1151 = vunpack.c.l.b16 %v370
      %v1152 = vunpack.c.h.b16 %v370
      %v1153 = vunpack.c.l.b16 %v371
      %v1154 = vunpack.c.h.b16 %v371
      %v1155 = vunpack.c.l.b16 %v372
      %v1156 = vunpack.c.h.b16 %v372
      %v1157 = vunpack.c.l.b16 %v373
      %v1158 = vunpack.c.h.b16 %v373
      %v1159 = vunpack.c.l.b16 %v374
      %v1160 = vunpack.c.h.b16 %v374
      %v1161 = vunpack.c.l.b16 %v375
      %v1162 = vunpack.c.h.b16 %v375
      %v1163 = vunpack.c.l.b16 %v376
      %v1164 = vunpack.c.h.b16 %v376
      %v1165 = vunpack.c.l.b16 %v377
      %v1166 = vunpack.c.h.b16 %v377
      %v1167 = vunpack.c.l.b16 %v378
      %v1168 = vunpack.c.h.b16 %v378
      %v1169 = vunpack.c.l.b16 %v379
      %v1170 = vunpack.c.h.b16 %v379
      %v1171 = vunpack.c.l.b16 %v380
      %v1172 = vunpack.c.h.b16 %v380
      %v1173 = vunpack.c.l.b16 %v381
      %v1174 = vunpack.c.h.b16 %v381
      %v1175 = vunpack.c.l.b16 %v382
      %v1176 = vunpack.c.h.b16 %v382
      %v1177 = vunpack.c.l.b16 %v383
      %v1178 = vunpack.c.h.b16 %v383
      %v1179 = vunpack.c.l.b16 %v384
      %v1180 = vunpack.c.h.b16 %v384
      %v1181 = vunpack.c.l.b16 %v385
      %v1182 = vunpack.c.h.b16 %v385
      %v1183 = vunpack.c.l.b16 %v386
      %v1184 = vunpack.c.h.b16 %v386
      %v1185 = vunpack.c.l.b16 %v387
      %v1186 = vunpack.c.h.b16 %v387
      %v1187 = vunpack.c.l.b16 %v388
      %v1188 = vunpack.c.h.b16 %v388
      %v1189 = vunpack.c.l.b16 %v389
      %v1190 = vunpack.c.h.b16 %v389
      %v1191 = vunpack.c.l.b16 %v390
      %v1192 = vunpack.c.h.b16 %v390
      %v1193 = vunpack.c.l.b16 %v391
      %v1194 = vunpack.c.h.b16 %v391
      %v1195 = vunpack.c.l.b16 %v392
      %v1196 = vunpack.c.h.b16 %v392
      %v1197 = vunpack.c.l.b16 %v393
      %v1198 = vunpack.c.h.b16 %v393
      %v1199 = vunpack.c.l.b16 %v394
      %v1200 = vunpack.c.h.b16 %v394
      %v1201 = vunpack.c.l.b16 %v395
      %v1202 = vunpack.c.h.b16 %v395
      %v1203 = vunpack.c.l.b16 %v396
      %v1204 = vunpack.c.h.b16 %v396
      %v1205 = vunpack.c.l.b16 %v397
      %v1206 = vunpack.c.h.b16 %v397
      %v1207 = vunpack.c.l.b16 %v398
      %v1208 = vunpack.c.h.b16 %v398
      %v1209 = vunpack.c.l.b16 %v399
      %v1210 = vunpack.c.h.b16 %v399
      %v1211 = vunpack.c.l.b16 %v400
      %v1212 = vunpack.c.h.b16 %v400
      %v1213 = vunpack.c.l.b16 %v401
      %v1214 = vunpack.c.h.b16 %v401
      %v1215 = vunpack.c.l.b16 %v402
      %v1216 = vunpack.c.h.b16 %v402
      %v1217 = vunpack.c.l.b16 %v403
      %v1218 = vunpack.c.h.b16 %v403
      %v1219 = vunpack.c.l.b16 %v404
      %v1220 = vunpack.c.h.b16 %v404
      %v1221 = vunpack.c.l.b16 %v405
      %v1222 = vunpack.c.h.b16 %v405
      %v1223 = vunpack.c.l.b16 %v406
      %v1224 = vunpack.c.h.b16 %v406
      %v1225 = vunpack.c.l.b16 %v407
      %v1226 = vunpack.c.h.b16 %v407
      %v1227 = vunpack.c.l.b16 %v408
      %v1228 = vunpack.c.h.b16 %v408
      %v1229 = vunpack.c.l.b16 %v409
      %v1230 = vunpack.c.h.b16 %v409
      %v1231 = vunpack.c.l.b16 %v410
      %v1232 = vunpack.c.h.b16 %v410
      %v1233 = vunpack.c.l.b16 %v411
      %v1234 = vunpack.c.h.b16 %v411
      %v1235 = vunpack.c.l.b16 %v412
      %v1236 = vunpack.c.h.b16 %v412
      %v1237 = vunpack.c.l.b16 %v413
      %v1238 = vunpack.c.h.b16 %v413
      %v1239 = vunpack.c.l.b16 %v414
      %v1240 = vunpack.c.h.b16 %v414
      %v1241 = vunpack.c.l.b16 %v415
      %v1242 = vunpack.c.h.b16 %v415
      %v1243 = vunpack.c.l.b16 %v416
      %v1244 = vunpack.c.h.b16 %v416
      %v1245 = vunpack.c.l.b16 %v417
      %v1246 = vunpack.c.h.b16 %v417
      %v1247 = vunpack.c.l.b16 %v418
      %v1248 = vunpack.c.h.b16 %v418
      %v1249 = vunpack.c.l.b16 %v419
      %v1250 = vunpack.c.h.b16 %v419
      %v1251 = vunpack.c.l.b16 %v420
      %v1252 = vunpack.c.h.b16 %v420
      %v1253 = vunpack.c.l.b16 %v421
      %v1254 = vunpack.c.h.b16 %v421
      %v1255 = vunpack.c.l.b16 %v422
      %v1256 = vunpack.c.h.b16 %v422
      %v1257 = vunpack.c.l.b16 %v423
      %v1258 = vunpack.c.h.b16 %v423
      %v1259 = vunpack.c.l.b16 %v424
      %v1260 = vunpack.c.h.b16 %v424
      %v1261 = vunpack.c.l.b16 %v425
      %v1262 = vunpack.c.h.b16 %v425
      %v1263 = vunpack.c.l.b16 %v426
      %v1264 = vunpack.c.h.b16 %v426
      %v1265 = vunpack.c.l.b16 %v427
      %v1266 = vunpack.c.h.b16 %v427
      %v1267 = vunpack.c.l.b16 %v428
      %v1268 = vunpack.c.h.b16 %v428
      %v1269 = vunpack.c.l.b16 %v429
      %v1270 = vunpack.c.h.b16 %v429
      %v1271 = vunpack.c.l.b16 %v430
      %v1272 = vunpack.c.h.b16 %v430
      %v1273 = vunpack.c.l.b16 %v431
      %v1274 = vunpack.c.h.b16 %v431
      %v1275 = vunpack.c.l.b16 %v432
      %v1276 = vunpack.c.h.b16 %v432
      %v1277 = vunpack.c.l.b16 %v433
      %v1278 = vunpack.c.h.b16 %v433
      %v1279 = vunpack.c.l.b16 %v434
      %v1280 = vunpack.c.h.b16 %v434
      %v1281 = vunpack.c.l.b16 %v435
      %v1282 = vunpack.c.h.b16 %v435
      %v1283 = vunpack.c.l.b16 %v436
      %v1284 = vunpack.c.h.b16 %v436
      %v1285 = vunpack.c.l.b16 %v437
      %v1286 = vunpack.c.h.b16 %v437
      %v1287 = vunpack.c.l.b16 %v438
      %v1288 = vunpack.c.h.b16 %v438
      %v1289 = vunpack.c.l.b16 %v439
      %v1290 = vunpack.c.h.b16 %v439
      %v1291 = vunpack.c.l.b16 %v440
      %v1292 = vunpack.c.h.b16 %v440
      %v1293 = vunpack.c.l.b16 %v441
      %v1294 = vunpack.c.h.b16 %v441
      %v1295 = vunpack.c.l.b16 %v442
      %v1296 = vunpack.c.h.b16 %v442
      %v1297 = vunpack.c.l.b16 %v443
      %v1298 = vunpack.c.h.b16 %v443
      %v1299 = vunpack.c.l.b16 %v444
      %v1300 = vunpack.c.h.b16 %v444
      %v1301 = vunpack.c.l.b16 %v445
      %v1302 = vunpack.c.h.b16 %v445
      %v1303 = vunpack.c.l.b16 %v446
      %v1304 = vunpack.c.h.b16 %v446
      %v1305 = vunpack.c.l.b16 %v447
      %v1306 = vunpack.c.h.b16 %v447
      %v1307 = vunpack.c.l.b16 %v448
      %v1308 = vunpack.c.h.b16 %v448
      %v1309 = vunpack.c.l.b16 %v449
      %v1310 = vunpack.c.h.b16 %v449
      %v1311 = vunpack.c.l.b16 %v450
      %v1312 = vunpack.c.h.b16 %v450
      %v1313 = vunpack.c.l.b16 %v451
      %v1314 = vunpack.c.h.b16 %v451
      %v1315 = vunpack.c.l.b16 %v452
      %v1316 = vunpack.c.h.b16 %v452
      %v1317 = vunpack.c.l.b16 %v453
      %v1318 = vunpack.c.h.b16 %v453
      %v1319 = vunpack.c.l.b16 %v454
      %v1320 = vunpack.c.h.b16 %v454
      %v1321 = vunpack.c.l.b16 %v455
      %v1322 = vunpack.c.h.b16 %v455
      %v1323 = vunpack.c.l.b16 %v456
      %v1324 = vunpack.c.h.b16 %v456
      %v1325 = vunpack.c.l.b16 %v457
      %v1326 = vunpack.c.h.b16 %v457
      %v1327 = vunpack.c.l.b16 %v458
      %v1328 = vunpack.c.h.b16 %v458
      %v1329 = vunpack.c.l.b16 %v459
      %v1330 = vunpack.c.h.b16 %v459
      %v1331 = vunpack.c.l.b16 %v460
      %v1332 = vunpack.c.h.b16 %v460
      %v1333 = vunpack.c.l.b16 %v461
      %v1334 = vunpack.c.h.b16 %v461
      %v1335 = vunpack.c.l.b16 %v462
      %v1336 = vunpack.c.h.b16 %v462
      %v1337 = vunpack.c.l.b16 %v463
      %v1338 = vunpack.c.h.b16 %v463
      %v1339 = vunpack.c.l.b16 %v464
      %v1340 = vunpack.c.h.b16 %v464
      %v1341 = vunpack.c.l.b16 %v465
      %v1342 = vunpack.c.h.b16 %v465
      %v1343 = vunpack.c.l.b16 %v466
      %v1344 = vunpack.c.h.b16 %v466
      %v1345 = vunpack.c.l.b16 %v467
      %v1346 = vunpack.c.h.b16 %v467
      %v1347 = vunpack.c.l.b16 %v468
      %v1348 = vunpack.c.h.b16 %v468
      %v1349 = vunpack.c.l.b16 %v469
      %v1350 = vunpack.c.h.b16 %v469
      %v1351 = vunpack.c.l.b16 %v470
      %v1352 = vunpack.c.h.b16 %v470
      %v1353 = vunpack.c.l.b16 %v471
      %v1354 = vunpack.c.h.b16 %v471
      %v1355 = vunpack.c.l.b16 %v472
      %v1356 = vunpack.c.h.b16 %v472
      %v1357 = vunpack.c.l.b16 %v473
      %v1358 = vunpack.c.h.b16 %v473
      %v1359 = vunpack.c.l.b16 %v474
      %v1360 = vunpack.c.h.b16 %v474
      %v1361 = vunpack.c.l.b16 %v475
      %v1362 = vunpack.c.h.b16 %v475
      %v1363 = vunpack.c.l.b16 %v476
      %v1364 = vunpack.c.h.b16 %v476
      %v1365 = vunpack.c.l.b16 %v477
      %v1366 = vunpack.c.h.b16 %v477
      %v1367 = vunpack.c.l.b16 %v478
      %v1368 = vunpack.c.h.b16 %v478
      %v1369 = vunpack.c.l.b16 %v479
      %v1370 = vunpack.c.h.b16 %v479
      %v1371 = vunpack.c.l.b16 %v480
      %v1372 = vunpack.c.h.b16 %v480
      %v1373 = vunpack.c.l.b16 %v481
      %v1374 = vunpack.c.h.b16 %v481
      %v1375 = vunpack.c.l.b16 %v482
      %v1376 = vunpack.c.h.b16 %v482
      %v1377 = vunpack.c.l.b16 %v483
      %v1378 = vunpack.c.h.b16 %v483
      %v1379 = vunpack.c.l.b16 %v484
      %v1380 = vunpack.c.h.b16 %v484
      %v1381 = vunpack.c.l.b16 %v485
      %v1382 = vunpack.c.h.b16 %v485
      %v1383 = vunpack.c.l.b16 %v486
      %v1384 = vunpack.c.h.b16 %v486
      %v1385 = vunpack.c.l.b16 %v487
      %v1386 = vunpack.c.h.b16 %v487
      %v1387 = vunpack.c.l.b16 %v488
      %v1388 = vunpack.c.h.b16 %v488
      %v1389 = vunpack.c.l.b16 %v489
      %v1390 = vunpack.c.h.b16 %v489
      %v1391 = vunpack.c.l.b16 %v490
      %v1392 = vunpack.c.h.b16 %v490
      %v1393 = vunpack.c.l.b16 %v491
      %v1394 = vunpack.c.h.b16 %v491
      %v1395 = vunpack.c.l.b16 %v492
      %v1396 = vunpack.c.h.b16 %v492
      %v1397 = vunpack.c.l.b16 %v493
      %v1398 = vunpack.c.h.b16 %v493
      %v1399 = vunpack.c.l.b16 %v494
      %v1400 = vunpack.c.h.b16 %v494
      %v1401 = vunpack.c.l.b16 %v495
      %v1402 = vunpack.c.h.b16 %v495
      %v1403 = vunpack.c.l.b16 %v496
      %v1404 = vunpack.c.h.b16 %v496
      %v1405 = vunpack.c.l.b16 %v497
      %v1406 = vunpack.c.h.b16 %v497
      %v1407 = vunpack.c.l.b16 %v498
      %v1408 = vunpack.c.h.b16 %v498
      %v1409 = vunpack.c.l.b16 %v499
      %v1410 = vunpack.c.h.b16 %v499
      %v1411 = vunpack.c.l.b16 %v500
      %v1412 = vunpack.c.h.b16 %v500
      %v1413 = vunpack.c.l.b16 %v501
      %v1414 = vunpack.c.h.b16 %v501
      %v1415 = vunpack.c.l.b16 %v502
      %v1416 = vunpack.c.h.b16 %v502
      %v1417 = vunpack.c.l.b16 %v503
      %v1418 = vunpack.c.h.b16 %v503
      %v1419 = vunpack.c.l.b16 %v504
      %v1420 = vunpack.c.h.b16 %v504
      %v1421 = vunpack.c.l.b16 %v505
      %v1422 = vunpack.c.h.b16 %v505
      %v1423 = vunpack.c.l.b16 %v506
      %v1424 = vunpack.c.h.b16 %v506
      %v1425 = vunpack.c.l.b16 %v507
      %v1426 = vunpack.c.h.b16 %v507
      %v1427 = vunpack.c.l.b16 %v508
      %v1428 = vunpack.c.h.b16 %v508
      %v1429 = vunpack.c.l.b16 %v509
      %v1430 = vunpack.c.h.b16 %v509
      %v1431 = vunpack.c.l.b16 %v510
      %v1432 = vunpack.c.h.b16 %v510
      %v1433 = vunpack.c.l.b16 %v511
      %v1434 = vunpack.c.h.b16 %v511
      %v1435 = vunpack.c.l.b16 %v512
      %v1436 = vunpack.c.h.b16 %v512
      %v1437 = vunpack.c.l.b16 %v513
      %v1438 = vunpack.c.h.b16 %v513
      %v1439 = vunpack.c.l.b16 %v514
      %v1440 = vunpack.c.h.b16 %v514
      %v1441 = vunpack.c.l.b16 %v515
      %v1442 = vunpack.c.h.b16 %v515
      %v1443 = vunpack.c.l.b16 %v516
      %v1444 = vunpack.c.h.b16 %v516
      %v1445 = vunpack.c.l.b16 %v517
      %v1446 = vunpack.c.h.b16 %v517
      %v1447 = vunpack.c.l.b16 %v518
      %v1448 = vunpack.c.h.b16 %v518
      %v1449 = vunpack.c.l.b16 %v519
      %v1450 = vunpack.c.h.b16 %v519
      %v1451 = vunpack.c.l.b16 %v520
      %v1452 = vunpack.c.h.b16 %v520
      %v1453 = vunpack.c.l.b16 %v521
      %v1454 = vunpack.c.h.b16 %v521
      %v1455 = vunpack.c.l.b16 %v522
      %v1456 = vunpack.c.h.b16 %v522
      %v1457 = vpack.c.b16 %v947, %v945
      %v1458 = vpack.c.b16 %v948, %v946
      %v1459 = vpack.c.b16 %v951, %v949
      %v1460 = vpack.c.b16 %v952, %v950
      %v1461 = vpack.c.b16 %v955, %v953
      %v1462 = vpack.c.b16 %v956, %v954
      %v1463 = vpack.c.b16 %v959, %v957
      %v1464 = vpack.c.b16 %v960, %v958
      %v1465 = vpack.c.b16 %v963, %v961
      %v1466 = vpack.c.b16 %v964, %v962
      %v1467 = vpack.c.b16 %v967, %v965
      %v1468 = vpack.c.b16 %v968, %v966
      %v1469 = vpack.c.b16 %v971, %v969
      %v1470 = vpack.c.b16 %v972, %v970
      %v1471 = vpack.c.b16 %v975, %v973
      %v1472 = vpack.c.b16 %v976, %v974
      %v1473 = vpack.c.b16 %v979, %v977
      %v1474 = vpack.c.b16 %v980, %v978
      %v1475 = vpack.c.b16 %v983, %v981
      %v1476 = vpack.c.b16 %v984, %v982
      %v1477 = vpack.c.b16 %v987, %v985
      %v1478 = vpack.c.b16 %v988, %v986
      %v1479 = vpack.c.b16 %v991, %v989
      %v1480 = vpack.c.b16 %v992, %v990
      %v1481 = vpack.c.b16 %v995, %v993
      %v1482 = vpack.c.b16 %v996, %v994
      %v1483 = vpack.c.b16 %v999, %v997
      %v1484 = vpack.c.b16 %v1000, %v998
      %v1485 = vpack.c.b16 %v1003, %v1001
      %v1486 = vpack.c.b16 %v1004, %v1002
      %v1487 = vpack.c.b16 %v1007, %v1005
      %v1488 = vpack.c.b16 %v1008, %v1006
      %v1489 = vpack.c.b16 %v1011, %v1009
      %v1490 = vpack.c.b16 %v1012, %v1010
      %v1491 = vpack.c.b16 %v1015, %v1013
      %v1492 = vpack.c.b16 %v1016, %v1014
      %v1493 = vpack.c.b16 %v1019, %v1017
      %v1494 = vpack.c.b16 %v1020, %v1018
      %v1495 = vpack.c.b16 %v1023, %v1021
      %v1496 = vpack.c.b16 %v1024, %v1022
      %v1497 = vpack.c.b16 %v1027, %v1025
      %v1498 = vpack.c.b16 %v1028, %v1026
      %v1499 = vpack.c.b16 %v1031, %v1029
      %v1500 = vpack.c.b16 %v1032, %v1030
      %v1501 = vpack.c.b16 %v1035, %v1033
      %v1502 = vpack.c.b16 %v1036, %v1034
      %v1503 = vpack.c.b16 %v1039, %v1037
      %v1504 = vpack.c.b16 %v1040, %v1038
      %v1505 = vpack.c.b16 %v1043, %v1041
      %v1506 = vpack.c.b16 %v1044, %v1042
      %v1507 = vpack.c.b16 %v1047, %v1045
      %v1508 = vpack.c.b16 %v1048, %v1046
      %v1509 = vpack.c.b16 %v1051, %v1049
      %v1510 = vpack.c.b16 %v1052, %v1050
      %v1511 = vpack.c.b16 %v1055, %v1053
      %v1512 = vpack.c.b16 %v1056, %v1054
      %v1513 = vpack.c.b16 %v1059, %v1057
      %v1514 = vpack.c.b16 %v1060, %v1058
      %v1515 = vpack.c.b16 %v1063, %v1061
      %v1516 = vpack.c.b16 %v1064, %v1062
      %v1517 = vpack.c.b16 %v1067, %v1065
      %v1518 = vpack.c.b16 %v1068, %v1066
      %v1519 = vpack.c.b16 %v1071, %v1069
      %v1520 = vpack.c.b16 %v1072, %v1070
      %v1521 = vpack.c.b16 %v1075, %v1073
      %v1522 = vpack.c.b16 %v1076, %v1074
      %v1523 = vpack.c.b16 %v1079, %v1077
      %v1524 = vpack.c.b16 %v1080, %v1078
      %v1525 = vpack.c.b16 %v1083, %v1081
      %v1526 = vpack.c.b16 %v1084, %v1082
      %v1527 = vpack.c.b16 %v1087, %v1085
      %v1528 = vpack.c.b16 %v1088, %v1086
      %v1529 = vpack.c.b16 %v1091, %v1089
      %v1530 = vpack.c.b16 %v1092, %v1090
      %v1531 = vpack.c.b16 %v1095, %v1093
      %v1532 = vpack.c.b16 %v1096, %v1094
      %v1533 = vpack.c.b16 %v1099, %v1097
      %v1534 = vpack.c.b16 %v1100, %v1098
      %v1535 = vpack.c.b16 %v1103, %v1101
      %v1536 = vpack.c.b16 %v1104, %v1102
      %v1537 = vpack.c.b16 %v1107, %v1105
      %v1538 = vpack.c.b16 %v1108, %v1106
      %v1539 = vpack.c.b16 %v1111, %v1109
      %v1540 = vpack.c.b16 %v1112, %v1110
      %v1541 = vpack.c.b16 %v1115, %v1113
      %v1542 = vpack.c.b16 %v1116, %v1114
      %v1543 = vpack.c.b16 %v1119, %v1117
      %v1544 = vpack.c.b16 %v1120, %v1118
      %v1545 = vpack.c.b16 %v1123, %v1121
      %v1546 = vpack.c.b16 %v1124, %v1122
      %v1547 = vpack.c.b16 %v1127, %v1125
      %v1548 = vpack.c.b16 %v1128, %v1126
      %v1549 = vpack.c.b16 %v1131, %v1129
      %v1550 = vpack.c.b16 %v1132, %v1130
      %v1551 = vpack.c.b16 %v1135, %v1133
      %v1552 = vpack.c.b16 %v1136, %v1134
      %v1553 = vpack.c.b16 %v1139, %v1137
      %v1554 = vpack.c.b16 %v1140, %v1138
      %v1555 = vpack.c.b16 %v1143, %v1141
      %v1556 = vpack.c.b16 %v1144, %v1142
      %v1557 = vpack.c.b16 %v1147, %v1145
      %v1558 = vpack.c.b16 %v1148, %v1146
      %v1559 = vpack.c.b16 %v1151, %v1149
      %v1560 = vpack.c.b16 %v1152, %v1150
      %v1561 = vpack.c.b16 %v1155, %v1153
      %v1562 = vpack.c.b16 %v1156, %v1154
      %v1563 = vpack.c.b16 %v1159, %v1157
      %v1564 = vpack.c.b16 %v1160, %v1158
      %v1565 = vpack.c.b16 %v1163, %v1161
      %v1566 = vpack.c.b16 %v1164, %v1162
      %v1567 = vpack.c.b16 %v1167, %v1165
      %v1568 = vpack.c.b16 %v1168, %v1166
      %v1569 = vpack.c.b16 %v1171, %v1169
      %v1570 = vpack.c.b16 %v1172, %v1170
      %v1571 = vpack.c.b16 %v1175, %v1173
      %v1572 = vpack.c.b16 %v1176, %v1174
      %v1573 = vpack.c.b16 %v1179, %v1177
      %v1574 = vpack.c.b16 %v1180, %v1178
      %v1575 = vpack.c.b16 %v1183, %v1181
      %v1576 = vpack.c.b16 %v1184, %v1182
      %v1577 = vpack.c.b16 %v1187, %v1185
      %v1578 = vpack.c.b16 %v1188, %v1186
      %v1579 = vpack.c.b16 %v1191, %v1189
      %v1580 = vpack.c.b16 %v1192, %v1190
      %v1581 = vpack.c.b16 %v1195, %v1193
      %v1582 = vpack.c.b16 %v1196, %v1194
      %v1583 = vpack.c.b16 %v1199, %v1197
      %v1584 = vpack.c.b16 %v1200, %v1198
      %v1585 = vpack.c.b16 %v1203, %v1201
      %v1586 = vpack.c.b16 %v1204, %v1202
      %v1587 = vpack.c.b16 %v1207, %v1205
      %v1588 = vpack.c.b16 %v1208, %v1206
      %v1589 = vpack.c.b16 %v1211, %v1209
      %v1590 = vpack.c.b16 %v1212, %v1210
      %v1591 = vpack.c.b16 %v1215, %v1213
      %v1592 = vpack.c.b16 %v1216, %v1214
      %v1593 = vpack.c.b16 %v1219, %v1217
      %v1594 = vpack.c.b16 %v1220, %v1218
      %v1595 = vpack.c.b16 %v1223, %v1221
      %v1596 = vpack.c.b16 %v1224, %v1222
      %v1597 = vpack.c.b16 %v1227, %v1225
      %v1598 = vpack.c.b16 %v1228, %v1226
      %v1599 = vpack.c.b16 %v1231, %v1229
      %v1600 = vpack.c.b16 %v1232, %v1230
      %v1601 = vpack.c.b16 %v1235, %v1233
      %v1602 = vpack.c.b16 %v1236, %v1234
      %v1603 = vpack.c.b16 %v1239, %v1237
      %v1604 = vpack.c.b16 %v1240, %v1238
      %v1605 = vpack.c.b16 %v1243, %v1241
      %v1606 = vpack.c.b16 %v1244, %v1242
      %v1607 = vpack.c.b16 %v1247, %v1245
      %v1608 = vpack.c.b16 %v1248, %v1246
      %v1609 = vpack.c.b16 %v1251, %v1249
      %v1610 = vpack.c.b16 %v1252, %v1250
      %v1611 = vpack.c.b16 %v1255, %v1253
      %v1612 = vpack.c.b16 %v1256, %v1254
      %v1613 = vpack.c.b16 %v1259, %v1257
      %v1614 = vpack.c.b16 %v1260, %v1258
      %v1615 = vpack.c.b16 %v1263, %v1261
      %v1616 = vpack.c.b16 %v1264, %v1262
      %v1617 = vpack.c.b16 %v1267, %v1265
      %v1618 = vpack.c.b16 %v1268, %v1266
      %v1619 = vpack.c.b16 %v1271, %v1269
      %v1620 = vpack.c.b16 %v1272, %v1270
      %v1621 = vpack.c.b16 %v1275, %v1273
      %v1622 = vpack.c.b16 %v1276, %v1274
      %v1623 = vpack.c.b16 %v1279, %v1277
      %v1624 = vpack.c.b16 %v1280, %v1278
      %v1625 = vpack.c.b16 %v1283, %v1281
      %v1626 = vpack.c.b16 %v1284, %v1282
      %v1627 = vpack.c.b16 %v1287, %v1285
      %v1628 = vpack.c.b16 %v1288, %v1286
      %v1629 = vpack.c.b16 %v1291, %v1289
      %v1630 = vpack.c.b16 %v1292, %v1290
      %v1631 = vpack.c.b16 %v1295, %v1293
      %v1632 = vpack.c.b16 %v1296, %v1294
      %v1633 = vpack.c.b16 %v1299, %v1297
      %v1634 = vpack.c.b16 %v1300, %v1298
      %v1635 = vpack.c.b16 %v1303, %v1301
      %v1636 = vpack.c.b16 %v1304, %v1302
      %v1637 = vpack.c.b16 %v1307, %v1305
      %v1638 = vpack.c.b16 %v1308, %v1306
      %v1639 = vpack.c.b16 %v1311, %v1309
      %v1640 = vpack.c.b16 %v1312, %v1310
      %v1641 = vpack.c.b16 %v1315, %v1313
      %v1642 = vpack.c.b16 %v1316, %v1314
      %v1643 = vpack.c.b16 %v1319, %v1317
      %v1644 = vpack.c.b16 %v1320, %v1318
      %v1645 = vpack.c.b16 %v1323, %v1321
      %v1646 = vpack.c.b16 %v1324, %v1322
      %v1647 = vpack.c.b16 %v1327, %v1325
      %v1648 = vpack.c.b16 %v1328, %v1326
      %v1649 = vpack.c.b16 %v1331, %v1329
      %v1650 = vpack.c.b16 %v1332, %v1330
      %v1651 = vpack.c.b16 %v1335, %v1333
      %v1652 = vpack.c.b16 %v1336, %v1334
      %v1653 = vpack.c.b16 %v1339, %v1337
      %v1654 = vpack.c.b16 %v1340, %v1338
      %v1655 = vpack.c.b16 %v1343, %v1341
      %v1656 = vpack.c.b16 %v1344, %v1342
      %v1657 = vpack.c.b16 %v1347, %v1345
      %v1658 = vpack.c.b16 %v1348, %v1346
      %v1659 = vpack.c.b16 %v1351, %v1349
      %v1660 = vpack.c.b16 %v1352, %v1350
      %v1661 = vpack.c.b16 %v1355, %v1353
      %v1662 = vpack.c.b16 %v1356, %v1354
      %v1663 = vpack.c.b16 %v1359, %v1357
      %v1664 = vpack.c.b16 %v1360, %v1358
      %v1665 = vpack.c.b16 %v1363, %v1361
      %v1666 = vpack.c.b16 %v1364, %v1362
      %v1667 = vpack.c.b16 %v1367, %v1365
      %v1668 = vpack.c.b16 %v1368, %v1366
      %v1669 = vpack.c.b16 %v1371, %v1369
      %v1670 = vpack.c.b16 %v1372, %v1370
      %v1671 = vpack.c.b16 %v1375, %v1373
      %v1672 = vpack.c.b16 %v1376, %v1374
      %v1673 = vpack.c.b16 %v1379, %v1377
      %v1674 = vpack.c.b16 %v1380, %v1378
      %v1675 = vpack.c.b16 %v1383, %v1381
      %v1676 = vpack.c.b16 %v1384, %v1382
      %v1677 = vpack.c.b16 %v1387, %v1385
      %v1678 = vpack.c.b16 %v1388, %v1386
      %v1679 = vpack.c.b16 %v1391, %v1389
      %v1680 = vpack.c.b16 %v1392, %v1390
      %v1681 = vpack.c.b16 %v1395, %v1393
      %v1682 = vpack.c.b16 %v1396, %v1394
      %v1683 = vpack.c.b16 %v1399, %v1397
      %v1684 = vpack.c.b16 %v1400, %v1398
      %v1685 = vpack.c.b16 %v1403, %v1401
      %v1686 = vpack.c.b16 %v1404, %v1402
      %v1687 = vpack.c.b16 %v1407, %v1405
      %v1688 = vpack.c.b16 %v1408, %v1406
      %v1689 = vpack.c.b16 %v1411, %v1409
      %v1690 = vpack.c.b16 %v1412, %v1410
      %v1691 = vpack.c.b16 %v1415, %v1413
      %v1692 = vpack.c.b16 %v1416, %v1414
      %v1693 = vpack.c.b16 %v1419, %v1417
      %v1694 = vpack.c.b16 %v1420, %v1418
      %v1695 = vpack.c.b16 %v1423, %v1421
      %v1696 = vpack.c.b16 %v1424, %v1422
      %v1697 = vpack.c.b16 %v1427, %v1425
      %v1698 = vpack.c.b16 %v1428, %v1426
      %v1699 = vpack.c.b16 %v1431, %v1429
      %v1700 = vpack.c.b16 %v1432, %v1430
      %v1701 = vpack.c.b16 %v1435, %v1433
      %v1702 = vpack.c.b16 %v1436, %v1434
      %v1703 = vpack.c.b16 %v1439, %v1437
      %v1704 = vpack.c.b16 %v1440, %v1438
      %v1705 = vpack.c.b16 %v1443, %v1441
      %v1706 = vpack.c.b16 %v1444, %v1442
      %v1707 = vpack.c.b16 %v1447, %v1445
      %v1708 = vpack.c.b16 %v1448, %v1446
      %v1709 = vpack.c.b16 %v1451, %v1449
      %v1710 = vpack.c.b16 %v1452, %v1450
      %v1711 = vpack.c.b16 %v1455, %v1453
      %v1712 = vpack.c.b16 %v1456, %v1454
      %1969 = vmatpush.bf16.msra.mxu0 %v1471
      %1970 = vmatpush.bf16.msra.mxu0 %v1469
      %1971 = vmatpush.bf16.msra.mxu0 %v1467
      %1972 = vmatpush.bf16.msra.mxu0 %v1465
      %1973 = vmatpush.bf16.msra.mxu0 %v1463
      %1974 = vmatpush.bf16.msra.mxu0 %v1461
      %1975 = vmatpush.bf16.msra.mxu0 %v1459
      %1976 = vmatpush.bf16.msra.mxu0 %v1457
      %1977 = vmatmul.bf16.gmra.mxu0 %v625
      %v1978 = vpop.f32.mrf.mxu0
      %v1979 = vadd.f32 %v525, %v1978
      %v1980 = vpop.f32.mrf.mxu0
      %v1981 = vadd.f32 %v525, %v1980
      %1982 = vmatmul.bf16.gmra.mxu0 %v641
      %v1983 = vpop.f32.mrf.mxu0
      %v1984 = vadd.f32 %v525, %v1983
      %v1985 = vpop.f32.mrf.mxu0
      %v1986 = vadd.f32 %v525, %v1985
      %1987 = vdwg.mxu0
      %1988 = vmatpush.bf16.msra.mxu0 %v1487
      %1989 = vmatpush.bf16.msra.mxu0 %v1485
      %1990 = vmatpush.bf16.msra.mxu0 %v1483
      %1991 = vmatpush.bf16.msra.mxu0 %v1481
      %1992 = vmatpush.bf16.msra.mxu0 %v1479
      %1993 = vmatpush.bf16.msra.mxu0 %v1477
      %1994 = vmatpush.bf16.msra.mxu0 %v1475
      %1995 = vmatpush.bf16.msra.mxu0 %v1473
      %1996 = vmatmul.bf16.gmra.mxu0 %v626
      %v1997 = vpop.f32.mrf.mxu0
      %v1998 = vadd.f32 %v1979, %v1997
      %v1999 = vpop.f32.mrf.mxu0
      %v2000 = vadd.f32 %v1981, %v1999
      %2001 = vmatmul.bf16.gmra.mxu0 %v642
      %v2002 = vpop.f32.mrf.mxu0
      %v2003 = vadd.f32 %v1984, %v2002
      %v2004 = vpop.f32.mrf.mxu0
      %v2005 = vadd.f32 %v1986, %v2004
      %2006 = vdwg.mxu0
      %2007 = vmatpush.bf16.msra.mxu0 %v1503
      %2008 = vmatpush.bf16.msra.mxu0 %v1501
      %2009 = vmatpush.bf16.msra.mxu0 %v1499
      %2010 = vmatpush.bf16.msra.mxu0 %v1497
      %2011 = vmatpush.bf16.msra.mxu0 %v1495
      %2012 = vmatpush.bf16.msra.mxu0 %v1493
      %2013 = vmatpush.bf16.msra.mxu0 %v1491
      %2014 = vmatpush.bf16.msra.mxu0 %v1489
      %2015 = vmatmul.bf16.gmra.mxu0 %v627
      %v2016 = vpop.f32.mrf.mxu0
      %v2017 = vadd.f32 %v1998, %v2016
      %v2018 = vpop.f32.mrf.mxu0
      %v2019 = vadd.f32 %v2000, %v2018
      %2020 = vmatmul.bf16.gmra.mxu0 %v643
      %v2021 = vpop.f32.mrf.mxu0
      %v2022 = vadd.f32 %v2003, %v2021
      %v2023 = vpop.f32.mrf.mxu0
      %v2024 = vadd.f32 %v2005, %v2023
      %2025 = vdwg.mxu0
      %2026 = vmatpush.bf16.msra.mxu0 %v1519
      %2027 = vmatpush.bf16.msra.mxu0 %v1517
      %2028 = vmatpush.bf16.msra.mxu0 %v1515
      %2029 = vmatpush.bf16.msra.mxu0 %v1513
      %2030 = vmatpush.bf16.msra.mxu0 %v1511
      %2031 = vmatpush.bf16.msra.mxu0 %v1509
      %2032 = vmatpush.bf16.msra.mxu0 %v1507
      %2033 = vmatpush.bf16.msra.mxu0 %v1505
      %2034 = vmatmul.bf16.gmra.mxu0 %v628
      %v2035 = vpop.f32.mrf.mxu0
      %v2036 = vadd.f32 %v2017, %v2035
      %v2037 = vpop.f32.mrf.mxu0
      %v2038 = vadd.f32 %v2019, %v2037
      %2039 = vmatmul.bf16.gmra.mxu0 %v644
      %v2040 = vpop.f32.mrf.mxu0
      %v2041 = vadd.f32 %v2022, %v2040
      %v2042 = vpop.f32.mrf.mxu0
      %v2043 = vadd.f32 %v2024, %v2042
      %2044 = vdwg.mxu0
      %2045 = vmatpush.bf16.msra.mxu0 %v1535
      %2046 = vmatpush.bf16.msra.mxu0 %v1533
      %2047 = vmatpush.bf16.msra.mxu0 %v1531
      %2048 = vmatpush.bf16.msra.mxu0 %v1529
      %2049 = vmatpush.bf16.msra.mxu0 %v1527
      %2050 = vmatpush.bf16.msra.mxu0 %v1525
      %2051 = vmatpush.bf16.msra.mxu0 %v1523
      %2052 = vmatpush.bf16.msra.mxu0 %v1521
      %2053 = vmatmul.bf16.gmra.mxu0 %v629
      %v2054 = vpop.f32.mrf.mxu0
      %v2055 = vadd.f32 %v2036, %v2054
      %v2056 = vpop.f32.mrf.mxu0
      %v2057 = vadd.f32 %v2038, %v2056
      %2058 = vmatmul.bf16.gmra.mxu0 %v645
      %v2059 = vpop.f32.mrf.mxu0
      %v2060 = vadd.f32 %v2041, %v2059
      %v2061 = vpop.f32.mrf.mxu0
      %v2062 = vadd.f32 %v2043, %v2061
      %2063 = vdwg.mxu0
      %2064 = vmatpush.bf16.msra.mxu0 %v1551
      %2065 = vmatpush.bf16.msra.mxu0 %v1549
      %2066 = vmatpush.bf16.msra.mxu0 %v1547
      %2067 = vmatpush.bf16.msra.mxu0 %v1545
      %2068 = vmatpush.bf16.msra.mxu0 %v1543
      %2069 = vmatpush.bf16.msra.mxu0 %v1541
      %2070 = vmatpush.bf16.msra.mxu0 %v1539
      %2071 = vmatpush.bf16.msra.mxu0 %v1537
      %2072 = vmatmul.bf16.gmra.mxu0 %v630
      %v2073 = vpop.f32.mrf.mxu0
      %v2074 = vadd.f32 %v2055, %v2073
      %v2075 = vpop.f32.mrf.mxu0
      %v2076 = vadd.f32 %v2057, %v2075
      %2077 = vmatmul.bf16.gmra.mxu0 %v646
      %v2078 = vpop.f32.mrf.mxu0
      %v2079 = vadd.f32 %v2060, %v2078
      %v2080 = vpop.f32.mrf.mxu0
      %v2081 = vadd.f32 %v2062, %v2080
      %2082 = vdwg.mxu0
      %2083 = vmatpush.bf16.msra.mxu0 %v1567
      %2084 = vmatpush.bf16.msra.mxu0 %v1565
      %2085 = vmatpush.bf16.msra.mxu0 %v1563
      %2086 = vmatpush.bf16.msra.mxu0 %v1561
      %2087 = vmatpush.bf16.msra.mxu0 %v1559
      %2088 = vmatpush.bf16.msra.mxu0 %v1557
      %2089 = vmatpush.bf16.msra.mxu0 %v1555
      %2090 = vmatpush.bf16.msra.mxu0 %v1553
      %2091 = vmatmul.bf16.gmra.mxu0 %v631
      %v2092 = vpop.f32.mrf.mxu0
      %v2093 = vadd.f32 %v2074, %v2092
      %v2094 = vpop.f32.mrf.mxu0
      %v2095 = vadd.f32 %v2076, %v2094
      %2096 = vmatmul.bf16.gmra.mxu0 %v647
      %v2097 = vpop.f32.mrf.mxu0
      %v2098 = vadd.f32 %v2079, %v2097
      %v2099 = vpop.f32.mrf.mxu0
      %v2100 = vadd.f32 %v2081, %v2099
      %2101 = vdwg.mxu0
      %2102 = vmatpush.bf16.msra.mxu0 %v1583
      %2103 = vmatpush.bf16.msra.mxu0 %v1581
      %2104 = vmatpush.bf16.msra.mxu0 %v1579
      %2105 = vmatpush.bf16.msra.mxu0 %v1577
      %2106 = vmatpush.bf16.msra.mxu0 %v1575
      %2107 = vmatpush.bf16.msra.mxu0 %v1573
      %2108 = vmatpush.bf16.msra.mxu0 %v1571
      %2109 = vmatpush.bf16.msra.mxu0 %v1569
      %2110 = vmatmul.bf16.gmra.mxu0 %v632
      %v2111 = vpop.f32.mrf.mxu0
      %v2112 = vadd.f32 %v2093, %v2111
      %v2113 = vpop.f32.mrf.mxu0
      %v2114 = vadd.f32 %v2095, %v2113
      %2115 = vmatmul.bf16.gmra.mxu0 %v648
      %v2116 = vpop.f32.mrf.mxu0
      %v2117 = vadd.f32 %v2098, %v2116
      %v2118 = vpop.f32.mrf.mxu0
      %v2119 = vadd.f32 %v2100, %v2118
      %2120 = vdwg.mxu0
      %2121 = vmatpush.bf16.msra.mxu0 %v1599
      %2122 = vmatpush.bf16.msra.mxu0 %v1597
      %2123 = vmatpush.bf16.msra.mxu0 %v1595
      %2124 = vmatpush.bf16.msra.mxu0 %v1593
      %2125 = vmatpush.bf16.msra.mxu0 %v1591
      %2126 = vmatpush.bf16.msra.mxu0 %v1589
      %2127 = vmatpush.bf16.msra.mxu0 %v1587
      %2128 = vmatpush.bf16.msra.mxu0 %v1585
      %2129 = vmatmul.bf16.gmra.mxu0 %v633
      %v2130 = vpop.f32.mrf.mxu0
      %v2131 = vadd.f32 %v2112, %v2130
      %v2132 = vpop.f32.mrf.mxu0
      %v2133 = vadd.f32 %v2114, %v2132
      %2134 = vmatmul.bf16.gmra.mxu0 %v649
      %v2135 = vpop.f32.mrf.mxu0
      %v2136 = vadd.f32 %v2117, %v2135
      %v2137 = vpop.f32.mrf.mxu0
      %v2138 = vadd.f32 %v2119, %v2137
      %2139 = vdwg.mxu0
      %2140 = vmatpush.bf16.msra.mxu0 %v1615
      %2141 = vmatpush.bf16.msra.mxu0 %v1613
      %2142 = vmatpush.bf16.msra.mxu0 %v1611
      %2143 = vmatpush.bf16.msra.mxu0 %v1609
      %2144 = vmatpush.bf16.msra.mxu0 %v1607
      %2145 = vmatpush.bf16.msra.mxu0 %v1605
      %2146 = vmatpush.bf16.msra.mxu0 %v1603
      %2147 = vmatpush.bf16.msra.mxu0 %v1601
      %2148 = vmatmul.bf16.gmra.mxu0 %v634
      %v2149 = vpop.f32.mrf.mxu0
      %v2150 = vadd.f32 %v2131, %v2149
      %v2151 = vpop.f32.mrf.mxu0
      %v2152 = vadd.f32 %v2133, %v2151
      %2153 = vmatmul.bf16.gmra.mxu0 %v650
      %v2154 = vpop.f32.mrf.mxu0
      %v2155 = vadd.f32 %v2136, %v2154
      %v2156 = vpop.f32.mrf.mxu0
      %v2157 = vadd.f32 %v2138, %v2156
      %2158 = vdwg.mxu0
      %2159 = vmatpush.bf16.msra.mxu0 %v1631
      %2160 = vmatpush.bf16.msra.mxu0 %v1629
      %2161 = vmatpush.bf16.msra.mxu0 %v1627
      %2162 = vmatpush.bf16.msra.mxu0 %v1625
      %2163 = vmatpush.bf16.msra.mxu0 %v1623
      %2164 = vmatpush.bf16.msra.mxu0 %v1621
      %2165 = vmatpush.bf16.msra.mxu0 %v1619
      %2166 = vmatpush.bf16.msra.mxu0 %v1617
      %2167 = vmatmul.bf16.gmra.mxu0 %v635
      %v2168 = vpop.f32.mrf.mxu0
      %v2169 = vadd.f32 %v2150, %v2168
      %v2170 = vpop.f32.mrf.mxu0
      %v2171 = vadd.f32 %v2152, %v2170
      %2172 = vmatmul.bf16.gmra.mxu0 %v651
      %v2173 = vpop.f32.mrf.mxu0
      %v2174 = vadd.f32 %v2155, %v2173
      %v2175 = vpop.f32.mrf.mxu0
      %v2176 = vadd.f32 %v2157, %v2175
      %2177 = vdwg.mxu0
      %2178 = vmatpush.bf16.msra.mxu0 %v1647
      %2179 = vmatpush.bf16.msra.mxu0 %v1645
      %2180 = vmatpush.bf16.msra.mxu0 %v1643
      %2181 = vmatpush.bf16.msra.mxu0 %v1641
      %2182 = vmatpush.bf16.msra.mxu0 %v1639
      %2183 = vmatpush.bf16.msra.mxu0 %v1637
      %2184 = vmatpush.bf16.msra.mxu0 %v1635
      %2185 = vmatpush.bf16.msra.mxu0 %v1633
      %2186 = vmatmul.bf16.gmra.mxu0 %v636
      %v2187 = vpop.f32.mrf.mxu0
      %v2188 = vadd.f32 %v2169, %v2187
      %v2189 = vpop.f32.mrf.mxu0
      %v2190 = vadd.f32 %v2171, %v2189
      %2191 = vmatmul.bf16.gmra.mxu0 %v652
      %v2192 = vpop.f32.mrf.mxu0
      %v2193 = vadd.f32 %v2174, %v2192
      %v2194 = vpop.f32.mrf.mxu0
      %v2195 = vadd.f32 %v2176, %v2194
      %2196 = vdwg.mxu0
      %2197 = vmatpush.bf16.msra.mxu0 %v1663
      %2198 = vmatpush.bf16.msra.mxu0 %v1661
      %2199 = vmatpush.bf16.msra.mxu0 %v1659
      %2200 = vmatpush.bf16.msra.mxu0 %v1657
      %2201 = vmatpush.bf16.msra.mxu0 %v1655
      %2202 = vmatpush.bf16.msra.mxu0 %v1653
      %2203 = vmatpush.bf16.msra.mxu0 %v1651
      %2204 = vmatpush.bf16.msra.mxu0 %v1649
      %2205 = vmatmul.bf16.gmra.mxu0 %v637
      %v2206 = vpop.f32.mrf.mxu0
      %v2207 = vadd.f32 %v2188, %v2206
      %v2208 = vpop.f32.mrf.mxu0
      %v2209 = vadd.f32 %v2190, %v2208
      %2210 = vmatmul.bf16.gmra.mxu0 %v653
      %v2211 = vpop.f32.mrf.mxu0
      %v2212 = vadd.f32 %v2193, %v2211
      %v2213 = vpop.f32.mrf.mxu0
      %v2214 = vadd.f32 %v2195, %v2213
      %2215 = vdwg.mxu0
      %2216 = vmatpush.bf16.msra.mxu0 %v1679
      %2217 = vmatpush.bf16.msra.mxu0 %v1677
      %2218 = vmatpush.bf16.msra.mxu0 %v1675
      %2219 = vmatpush.bf16.msra.mxu0 %v1673
      %2220 = vmatpush.bf16.msra.mxu0 %v1671
      %2221 = vmatpush.bf16.msra.mxu0 %v1669
      %2222 = vmatpush.bf16.msra.mxu0 %v1667
      %2223 = vmatpush.bf16.msra.mxu0 %v1665
      %2224 = vmatmul.bf16.gmra.mxu0 %v638
      %v2225 = vpop.f32.mrf.mxu0
      %v2226 = vadd.f32 %v2207, %v2225
      %v2227 = vpop.f32.mrf.mxu0
      %v2228 = vadd.f32 %v2209, %v2227
      %2229 = vmatmul.bf16.gmra.mxu0 %v654
      %v2230 = vpop.f32.mrf.mxu0
      %v2231 = vadd.f32 %v2212, %v2230
      %v2232 = vpop.f32.mrf.mxu0
      %v2233 = vadd.f32 %v2214, %v2232
      %2234 = vdwg.mxu0
      %2235 = vmatpush.bf16.msra.mxu0 %v1695
      %2236 = vmatpush.bf16.msra.mxu0 %v1693
      %2237 = vmatpush.bf16.msra.mxu0 %v1691
      %2238 = vmatpush.bf16.msra.mxu0 %v1689
      %2239 = vmatpush.bf16.msra.mxu0 %v1687
      %2240 = vmatpush.bf16.msra.mxu0 %v1685
      %2241 = vmatpush.bf16.msra.mxu0 %v1683
      %2242 = vmatpush.bf16.msra.mxu0 %v1681
      %2243 = vmatmul.bf16.gmra.mxu0 %v639
      %v2244 = vpop.f32.mrf.mxu0
      %v2245 = vadd.f32 %v2226, %v2244
      %v2246 = vpop.f32.mrf.mxu0
      %v2247 = vadd.f32 %v2228, %v2246
      %2248 = vmatmul.bf16.gmra.mxu0 %v655
      %v2249 = vpop.f32.mrf.mxu0
      %v2250 = vadd.f32 %v2231, %v2249
      %v2251 = vpop.f32.mrf.mxu0
      %v2252 = vadd.f32 %v2233, %v2251
      %2253 = vdwg.mxu0
      %2254 = vmatpush.bf16.msra.mxu0 %v1711
      %2255 = vmatpush.bf16.msra.mxu0 %v1709
      %2256 = vmatpush.bf16.msra.mxu0 %v1707
      %2257 = vmatpush.bf16.msra.mxu0 %v1705
      %2258 = vmatpush.bf16.msra.mxu0 %v1703
      %2259 = vmatpush.bf16.msra.mxu0 %v1701
      %2260 = vmatpush.bf16.msra.mxu0 %v1699
      %2261 = vmatpush.bf16.msra.mxu0 %v1697
      %2262 = vmatmul.bf16.gmra.mxu0 %v640
      %v2263 = vpop.f32.mrf.mxu0
      %v2264 = vadd.f32 %v2245, %v2263
      %v2265 = vpop.f32.mrf.mxu0
      %v2266 = vadd.f32 %v2247, %v2265
      %2267 = vmatmul.bf16.gmra.mxu0 %v656
      %v2268 = vpop.f32.mrf.mxu0
      %v2269 = vadd.f32 %v2250, %v2268
      %v2270 = vpop.f32.mrf.mxu0
      %v2271 = vadd.f32 %v2252, %v2270
      %2272 = vdwg.mxu0
      %2273 = vmatpush.bf16.msra.mxu0 %v1472
      %2274 = vmatpush.bf16.msra.mxu0 %v1470
      %2275 = vmatpush.bf16.msra.mxu0 %v1468
      %2276 = vmatpush.bf16.msra.mxu0 %v1466
      %2277 = vmatpush.bf16.msra.mxu0 %v1464
      %2278 = vmatpush.bf16.msra.mxu0 %v1462
      %2279 = vmatpush.bf16.msra.mxu0 %v1460
      %2280 = vmatpush.bf16.msra.mxu0 %v1458
      %2281 = vmatmul.bf16.gmra.mxu0 %v625
      %v2282 = vpop.f32.mrf.mxu0
      %v2283 = vadd.f32 %v526, %v2282
      %v2284 = vpop.f32.mrf.mxu0
      %v2285 = vadd.f32 %v526, %v2284
      %2286 = vmatmul.bf16.gmra.mxu0 %v641
      %v2287 = vpop.f32.mrf.mxu0
      %v2288 = vadd.f32 %v526, %v2287
      %v2289 = vpop.f32.mrf.mxu0
      %v2290 = vadd.f32 %v526, %v2289
      %2291 = vdwg.mxu0
      %2292 = vmatpush.bf16.msra.mxu0 %v1488
      %2293 = vmatpush.bf16.msra.mxu0 %v1486
      %2294 = vmatpush.bf16.msra.mxu0 %v1484
      %2295 = vmatpush.bf16.msra.mxu0 %v1482
      %2296 = vmatpush.bf16.msra.mxu0 %v1480
      %2297 = vmatpush.bf16.msra.mxu0 %v1478
      %2298 = vmatpush.bf16.msra.mxu0 %v1476
      %2299 = vmatpush.bf16.msra.mxu0 %v1474
      %2300 = vmatmul.bf16.gmra.mxu0 %v626
      %v2301 = vpop.f32.mrf.mxu0
      %v2302 = vadd.f32 %v2283, %v2301
      %v2303 = vpop.f32.mrf.mxu0
      %v2304 = vadd.f32 %v2285, %v2303
      %2305 = vmatmul.bf16.gmra.mxu0 %v642
      %v2306 = vpop.f32.mrf.mxu0
      %v2307 = vadd.f32 %v2288, %v2306
      %v2308 = vpop.f32.mrf.mxu0
      %v2309 = vadd.f32 %v2290, %v2308
      %2310 = vdwg.mxu0
      %2311 = vmatpush.bf16.msra.mxu0 %v1504
      %2312 = vmatpush.bf16.msra.mxu0 %v1502
      %2313 = vmatpush.bf16.msra.mxu0 %v1500
      %2314 = vmatpush.bf16.msra.mxu0 %v1498
      %2315 = vmatpush.bf16.msra.mxu0 %v1496
      %2316 = vmatpush.bf16.msra.mxu0 %v1494
      %2317 = vmatpush.bf16.msra.mxu0 %v1492
      %2318 = vmatpush.bf16.msra.mxu0 %v1490
      %2319 = vmatmul.bf16.gmra.mxu0 %v627
      %v2320 = vpop.f32.mrf.mxu0
      %v2321 = vadd.f32 %v2302, %v2320
      %v2322 = vpop.f32.mrf.mxu0
      %v2323 = vadd.f32 %v2304, %v2322
      %2324 = vmatmul.bf16.gmra.mxu0 %v643
      %v2325 = vpop.f32.mrf.mxu0
      %v2326 = vadd.f32 %v2307, %v2325
      %v2327 = vpop.f32.mrf.mxu0
      %v2328 = vadd.f32 %v2309, %v2327
      %2329 = vdwg.mxu0
      %2330 = vmatpush.bf16.msra.mxu0 %v1520
      %2331 = vmatpush.bf16.msra.mxu0 %v1518
      %2332 = vmatpush.bf16.msra.mxu0 %v1516
      %2333 = vmatpush.bf16.msra.mxu0 %v1514
      %2334 = vmatpush.bf16.msra.mxu0 %v1512
      %2335 = vmatpush.bf16.msra.mxu0 %v1510
      %2336 = vmatpush.bf16.msra.mxu0 %v1508
      %2337 = vmatpush.bf16.msra.mxu0 %v1506
      %2338 = vmatmul.bf16.gmra.mxu0 %v628
      %v2339 = vpop.f32.mrf.mxu0
      %v2340 = vadd.f32 %v2321, %v2339
      %v2341 = vpop.f32.mrf.mxu0
      %v2342 = vadd.f32 %v2323, %v2341
      %2343 = vmatmul.bf16.gmra.mxu0 %v644
      %v2344 = vpop.f32.mrf.mxu0
      %v2345 = vadd.f32 %v2326, %v2344
      %v2346 = vpop.f32.mrf.mxu0
      %v2347 = vadd.f32 %v2328, %v2346
      %2348 = vdwg.mxu0
      %2349 = vmatpush.bf16.msra.mxu0 %v1536
      %2350 = vmatpush.bf16.msra.mxu0 %v1534
      %2351 = vmatpush.bf16.msra.mxu0 %v1532
      %2352 = vmatpush.bf16.msra.mxu0 %v1530
      %2353 = vmatpush.bf16.msra.mxu0 %v1528
      %2354 = vmatpush.bf16.msra.mxu0 %v1526
      %2355 = vmatpush.bf16.msra.mxu0 %v1524
      %2356 = vmatpush.bf16.msra.mxu0 %v1522
      %2357 = vmatmul.bf16.gmra.mxu0 %v629
      %v2358 = vpop.f32.mrf.mxu0
      %v2359 = vadd.f32 %v2340, %v2358
      %v2360 = vpop.f32.mrf.mxu0
      %v2361 = vadd.f32 %v2342, %v2360
      %2362 = vmatmul.bf16.gmra.mxu0 %v645
      %v2363 = vpop.f32.mrf.mxu0
      %v2364 = vadd.f32 %v2345, %v2363
      %v2365 = vpop.f32.mrf.mxu0
      %v2366 = vadd.f32 %v2347, %v2365
      %2367 = vdwg.mxu0
      %2368 = vmatpush.bf16.msra.mxu0 %v1552
      %2369 = vmatpush.bf16.msra.mxu0 %v1550
      %2370 = vmatpush.bf16.msra.mxu0 %v1548
      %2371 = vmatpush.bf16.msra.mxu0 %v1546
      %2372 = vmatpush.bf16.msra.mxu0 %v1544
      %2373 = vmatpush.bf16.msra.mxu0 %v1542
      %2374 = vmatpush.bf16.msra.mxu0 %v1540
      %2375 = vmatpush.bf16.msra.mxu0 %v1538
      %2376 = vmatmul.bf16.gmra.mxu0 %v630
      %v2377 = vpop.f32.mrf.mxu0
      %v2378 = vadd.f32 %v2359, %v2377
      %v2379 = vpop.f32.mrf.mxu0
      %v2380 = vadd.f32 %v2361, %v2379
      %2381 = vmatmul.bf16.gmra.mxu0 %v646
      %v2382 = vpop.f32.mrf.mxu0
      %v2383 = vadd.f32 %v2364, %v2382
      %v2384 = vpop.f32.mrf.mxu0
      %v2385 = vadd.f32 %v2366, %v2384
      %2386 = vdwg.mxu0
      %2387 = vmatpush.bf16.msra.mxu0 %v1568
      %2388 = vmatpush.bf16.msra.mxu0 %v1566
      %2389 = vmatpush.bf16.msra.mxu0 %v1564
      %2390 = vmatpush.bf16.msra.mxu0 %v1562
      %2391 = vmatpush.bf16.msra.mxu0 %v1560
      %2392 = vmatpush.bf16.msra.mxu0 %v1558
      %2393 = vmatpush.bf16.msra.mxu0 %v1556
      %2394 = vmatpush.bf16.msra.mxu0 %v1554
      %2395 = vmatmul.bf16.gmra.mxu0 %v631
      %v2396 = vpop.f32.mrf.mxu0
      %v2397 = vadd.f32 %v2378, %v2396
      %v2398 = vpop.f32.mrf.mxu0
      %v2399 = vadd.f32 %v2380, %v2398
      %2400 = vmatmul.bf16.gmra.mxu0 %v647
      %v2401 = vpop.f32.mrf.mxu0
      %v2402 = vadd.f32 %v2383, %v2401
      %v2403 = vpop.f32.mrf.mxu0
      %v2404 = vadd.f32 %v2385, %v2403
      %2405 = vdwg.mxu0
      %2406 = vmatpush.bf16.msra.mxu0 %v1584
      %2407 = vmatpush.bf16.msra.mxu0 %v1582
      %2408 = vmatpush.bf16.msra.mxu0 %v1580
      %2409 = vmatpush.bf16.msra.mxu0 %v1578
      %2410 = vmatpush.bf16.msra.mxu0 %v1576
      %2411 = vmatpush.bf16.msra.mxu0 %v1574
      %2412 = vmatpush.bf16.msra.mxu0 %v1572
      %2413 = vmatpush.bf16.msra.mxu0 %v1570
      %2414 = vmatmul.bf16.gmra.mxu0 %v632
      %v2415 = vpop.f32.mrf.mxu0
      %v2416 = vadd.f32 %v2397, %v2415
      %v2417 = vpop.f32.mrf.mxu0
      %v2418 = vadd.f32 %v2399, %v2417
      %2419 = vmatmul.bf16.gmra.mxu0 %v648
      %v2420 = vpop.f32.mrf.mxu0
      %v2421 = vadd.f32 %v2402, %v2420
      %v2422 = vpop.f32.mrf.mxu0
      %v2423 = vadd.f32 %v2404, %v2422
      %2424 = vdwg.mxu0
      %2425 = vmatpush.bf16.msra.mxu0 %v1600
      %2426 = vmatpush.bf16.msra.mxu0 %v1598
      %2427 = vmatpush.bf16.msra.mxu0 %v1596
      %2428 = vmatpush.bf16.msra.mxu0 %v1594
      %2429 = vmatpush.bf16.msra.mxu0 %v1592
      %2430 = vmatpush.bf16.msra.mxu0 %v1590
      %2431 = vmatpush.bf16.msra.mxu0 %v1588
      %2432 = vmatpush.bf16.msra.mxu0 %v1586
      %2433 = vmatmul.bf16.gmra.mxu0 %v633
      %v2434 = vpop.f32.mrf.mxu0
      %v2435 = vadd.f32 %v2416, %v2434
      %v2436 = vpop.f32.mrf.mxu0
      %v2437 = vadd.f32 %v2418, %v2436
      %2438 = vmatmul.bf16.gmra.mxu0 %v649
      %v2439 = vpop.f32.mrf.mxu0
      %v2440 = vadd.f32 %v2421, %v2439
      %v2441 = vpop.f32.mrf.mxu0
      %v2442 = vadd.f32 %v2423, %v2441
      %2443 = vdwg.mxu0
      %2444 = vmatpush.bf16.msra.mxu0 %v1616
      %2445 = vmatpush.bf16.msra.mxu0 %v1614
      %2446 = vmatpush.bf16.msra.mxu0 %v1612
      %2447 = vmatpush.bf16.msra.mxu0 %v1610
      %2448 = vmatpush.bf16.msra.mxu0 %v1608
      %2449 = vmatpush.bf16.msra.mxu0 %v1606
      %2450 = vmatpush.bf16.msra.mxu0 %v1604
      %2451 = vmatpush.bf16.msra.mxu0 %v1602
      %2452 = vmatmul.bf16.gmra.mxu0 %v634
      %v2453 = vpop.f32.mrf.mxu0
      %v2454 = vadd.f32 %v2435, %v2453
      %v2455 = vpop.f32.mrf.mxu0
      %v2456 = vadd.f32 %v2437, %v2455
      %2457 = vmatmul.bf16.gmra.mxu0 %v650
      %v2458 = vpop.f32.mrf.mxu0
      %v2459 = vadd.f32 %v2440, %v2458
      %v2460 = vpop.f32.mrf.mxu0
      %v2461 = vadd.f32 %v2442, %v2460
      %2462 = vdwg.mxu0
      %2463 = vmatpush.bf16.msra.mxu0 %v1632
      %2464 = vmatpush.bf16.msra.mxu0 %v1630
      %2465 = vmatpush.bf16.msra.mxu0 %v1628
      %2466 = vmatpush.bf16.msra.mxu0 %v1626
      %2467 = vmatpush.bf16.msra.mxu0 %v1624
      %2468 = vmatpush.bf16.msra.mxu0 %v1622
      %2469 = vmatpush.bf16.msra.mxu0 %v1620
      %2470 = vmatpush.bf16.msra.mxu0 %v1618
      %2471 = vmatmul.bf16.gmra.mxu0 %v635
      %v2472 = vpop.f32.mrf.mxu0
      %v2473 = vadd.f32 %v2454, %v2472
      %v2474 = vpop.f32.mrf.mxu0
      %v2475 = vadd.f32 %v2456, %v2474
      %2476 = vmatmul.bf16.gmra.mxu0 %v651
      %v2477 = vpop.f32.mrf.mxu0
      %v2478 = vadd.f32 %v2459, %v2477
      %v2479 = vpop.f32.mrf.mxu0
      %v2480 = vadd.f32 %v2461, %v2479
      %2481 = vdwg.mxu0
      %2482 = vmatpush.bf16.msra.mxu0 %v1648
      %2483 = vmatpush.bf16.msra.mxu0 %v1646
      %2484 = vmatpush.bf16.msra.mxu0 %v1644
      %2485 = vmatpush.bf16.msra.mxu0 %v1642
      %2486 = vmatpush.bf16.msra.mxu0 %v1640
      %2487 = vmatpush.bf16.msra.mxu0 %v1638
      %2488 = vmatpush.bf16.msra.mxu0 %v1636
      %2489 = vmatpush.bf16.msra.mxu0 %v1634
      %2490 = vmatmul.bf16.gmra.mxu0 %v636
      %v2491 = vpop.f32.mrf.mxu0
      %v2492 = vadd.f32 %v2473, %v2491
      %v2493 = vpop.f32.mrf.mxu0
      %v2494 = vadd.f32 %v2475, %v2493
      %2495 = vmatmul.bf16.gmra.mxu0 %v652
      %v2496 = vpop.f32.mrf.mxu0
      %v2497 = vadd.f32 %v2478, %v2496
      %v2498 = vpop.f32.mrf.mxu0
      %v2499 = vadd.f32 %v2480, %v2498
      %2500 = vdwg.mxu0
      %2501 = vmatpush.bf16.msra.mxu0 %v1664
      %2502 = vmatpush.bf16.msra.mxu0 %v1662
      %2503 = vmatpush.bf16.msra.mxu0 %v1660
      %2504 = vmatpush.bf16.msra.mxu0 %v1658
      %2505 = vmatpush.bf16.msra.mxu0 %v1656
      %2506 = vmatpush.bf16.msra.mxu0 %v1654
      %2507 = vmatpush.bf16.msra.mxu0 %v1652
      %2508 = vmatpush.bf16.msra.mxu0 %v1650
      %2509 = vmatmul.bf16.gmra.mxu0 %v637
      %v2510 = vpop.f32.mrf.mxu0
      %v2511 = vadd.f32 %v2492, %v2510
      %v2512 = vpop.f32.mrf.mxu0
      %v2513 = vadd.f32 %v2494, %v2512
      %2514 = vmatmul.bf16.gmra.mxu0 %v653
      %v2515 = vpop.f32.mrf.mxu0
      %v2516 = vadd.f32 %v2497, %v2515
      %v2517 = vpop.f32.mrf.mxu0
      %v2518 = vadd.f32 %v2499, %v2517
      %2519 = vdwg.mxu0
      %2520 = vmatpush.bf16.msra.mxu0 %v1680
      %2521 = vmatpush.bf16.msra.mxu0 %v1678
      %2522 = vmatpush.bf16.msra.mxu0 %v1676
      %2523 = vmatpush.bf16.msra.mxu0 %v1674
      %2524 = vmatpush.bf16.msra.mxu0 %v1672
      %2525 = vmatpush.bf16.msra.mxu0 %v1670
      %2526 = vmatpush.bf16.msra.mxu0 %v1668
      %2527 = vmatpush.bf16.msra.mxu0 %v1666
      %2528 = vmatmul.bf16.gmra.mxu0 %v638
      %v2529 = vpop.f32.mrf.mxu0
      %v2530 = vadd.f32 %v2511, %v2529
      %v2531 = vpop.f32.mrf.mxu0
      %v2532 = vadd.f32 %v2513, %v2531
      %2533 = vmatmul.bf16.gmra.mxu0 %v654
      %v2534 = vpop.f32.mrf.mxu0
      %v2535 = vadd.f32 %v2516, %v2534
      %v2536 = vpop.f32.mrf.mxu0
      %v2537 = vadd.f32 %v2518, %v2536
      %2538 = vdwg.mxu0
      %2539 = vmatpush.bf16.msra.mxu0 %v1696
      %2540 = vmatpush.bf16.msra.mxu0 %v1694
      %2541 = vmatpush.bf16.msra.mxu0 %v1692
      %2542 = vmatpush.bf16.msra.mxu0 %v1690
      %2543 = vmatpush.bf16.msra.mxu0 %v1688
      %2544 = vmatpush.bf16.msra.mxu0 %v1686
      %2545 = vmatpush.bf16.msra.mxu0 %v1684
      %2546 = vmatpush.bf16.msra.mxu0 %v1682
      %2547 = vmatmul.bf16.gmra.mxu0 %v639
      %v2548 = vpop.f32.mrf.mxu0
      %v2549 = vadd.f32 %v2530, %v2548
      %v2550 = vpop.f32.mrf.mxu0
      %v2551 = vadd.f32 %v2532, %v2550
      %2552 = vmatmul.bf16.gmra.mxu0 %v655
      %v2553 = vpop.f32.mrf.mxu0
      %v2554 = vadd.f32 %v2535, %v2553
      %v2555 = vpop.f32.mrf.mxu0
      %v2556 = vadd.f32 %v2537, %v2555
      %2557 = vdwg.mxu0
      %2558 = vmatpush.bf16.msra.mxu0 %v1712
      %2559 = vmatpush.bf16.msra.mxu0 %v1710
      %2560 = vmatpush.bf16.msra.mxu0 %v1708
      %2561 = vmatpush.bf16.msra.mxu0 %v1706
      %2562 = vmatpush.bf16.msra.mxu0 %v1704
      %2563 = vmatpush.bf16.msra.mxu0 %v1702
      %2564 = vmatpush.bf16.msra.mxu0 %v1700
      %2565 = vmatpush.bf16.msra.mxu0 %v1698
      %2566 = vmatmul.bf16.gmra.mxu0 %v640
      %v2567 = vpop.f32.mrf.mxu0
      %v2568 = vadd.f32 %v2549, %v2567
      %v2569 = vpop.f32.mrf.mxu0
      %v2570 = vadd.f32 %v2551, %v2569
      %2571 = vmatmul.bf16.gmra.mxu0 %v656
      %v2572 = vpop.f32.mrf.mxu0
      %v2573 = vadd.f32 %v2554, %v2572
      %v2574 = vpop.f32.mrf.mxu0
      %v2575 = vadd.f32 %v2556, %v2574
      %2576 = vdwg.mxu0
      %v2577 = vmax.f32 %v2264, 0.0
      %v2578 = vmax.f32 %v2568, 0.0
      %v2579 = vmax.f32 %v2266, 0.0
      %v2580 = vmax.f32 %v2570, 0.0
      %v2581 = vmax.f32 %v2269, 0.0
      %v2582 = vmax.f32 %v2573, 0.0
      %v2583 = vmax.f32 %v2271, 0.0
      %v2584 = vmax.f32 %v2575, 0.0
      %v2585 = vpack.c.bf16 %v2578, %v2577
      %v2586 = vpack.c.bf16 %v2580, %v2579
      %v2587 = vpack.c.bf16 %v2582, %v2581
      %v2588 = vpack.c.bf16 %v2584, %v2583
      %2589 = vst [vmem:[%s233] sm:$0xff] %v2585
      %2590 = vst [vmem:[%s233 + $0x8] sm:$0xff] %v2586
      %2591 = vst [vmem:[%s233 + $0x10] sm:$0xff] %v2587
      %2592 = vst [vmem:[%s233 + $0x18] sm:$0xff] %v2588
      %s2593 = smul.u32 4, %s19
      %p2594 = scmp.lt.s32.totalorder %s18, 3
      %s2595 = scalar_select %p2594, %s18, 3
      %p2596 = scmp.lt.s32.totalorder %s2593, 3
      %s2597 = scalar_select %p2596, %s2593, 3
      %s2598 = smul.addr %s2597, 2
      %s2599 = smul.addr %s2595, 8
      %s2600 = sadd.s32 %s2598, %s2599
      %s2601 = smul.addr %s2600, 4
      %s2602 = scalar_lea.vmem %s3, %s2601
      // Predicated region
      $region33: #{km3d_core_head.3} parent=31 // pred_check
        %p2603 = pneg %p121
      $region34: #{km3d_core_head.3} parent=31 // pred_check_branch
        %2605 = sbr.rel (%p2603) target = $region36
      $region35: #{km3d_core_head.3} parent=31 // pred_region
        %s2606 = smul.u32 4, %s19
      $region36: #{km3d_core_head.3} parent=31 // pred_fallthru
        _
    $region32: #{km3d_core_head.3} parent=5 // pred_fallthru
      _
    %p2607 = scmp.le.s32.totalorder 2, %s9
    // Predicated region
    $region37: #{km3d_core_head.3} parent=5 // pred_check
      %p2608 = pneg %p2607
    $region38: #{km3d_core_head.3} parent=5 // pred_check_branch
      %2610 = sbr.rel (%p2608) target = $region40
    $region39: #{km3d_core_head.3} parent=5 // pred_region
      %s2611 = ssub.s32 %s9, 2
      // Predicated region
      $region41: #{km3d_core_head.3} parent=39 // pred_check
        %p2612 = pneg %p127
      $region42: #{km3d_core_head.3} parent=39 // pred_check_branch
        %2614 = sbr.rel (%p2612) target = $region44
      $region43: #{km3d_core_head.3} parent=39 // pred_region
        %s2615 = smul.u32 4, %s21
        %p2616 = scmp.lt.s32.totalorder %s20, 3
        %s2617 = scalar_select %p2616, %s20, 3
        %p2618 = scmp.lt.s32.totalorder %s2615, 3
        %s2619 = scalar_select %p2618, %s2615, 3
        %s2620 = smul.addr %s2619, 2
        %s2621 = smul.addr %s2617, 8
        %s2622 = sadd.s32 %s2620, %s2621
        %s2623 = smul.addr %s2622, 4
        %s2624 = scalar_lea.vmem %s3, %s2623
      $region44: #{km3d_core_head.3} parent=39 // pred_fallthru
        _
    $region40: #{km3d_core_head.3} parent=5 // pred_fallthru
      _
  $region6: #{km3d_core_head.3} parent=0 // loop_footer
    %s13 = sadd.s32 1, %s9
  $region7: #{km3d_core_head.3} parent=0 // loop_footer_branch
    %8 = sbr.rel target = $region3
  $region8: #{km3d_core_head.3} parent=0 // loop_exit
    _

// kernel: km3d_core_head.4
$region0: #{km3d_core_head.4}
  #allocation0 [shape = 'u32[]', space=smem, size = 0x4, offset = 0x4, fixed_abs, tag = 'smem constant byte address 0x4 - core index']
  #allocation1 [shape = 'u32[72,128]{1,0:T(1,128)}', space=vmem, size = 0x9000, scoped, tag = 'internal scratch']
  %s0 = inlined_call_operand.vmem [shape: bf16[4,128,1024], index: 0, kind: input, shape index: {}]
  %s1 = inlined_call_operand.vmem [shape: bf16[4,1024,256], index: 1, kind: input, shape index: {}]
  %s2 = inlined_call_operand.vmem [shape: f32[1,256], index: 2, kind: input, shape index: {}]
  %s3 = inlined_call_operand.vmem [shape: bf16[4,128,256], index: 3, kind: output, shape index: {}]
  %s4 = sld [smem:[#allocation0]]
  $region45: #{km3d_core_head.4} parent=0
    _
  %s6 = ssub.s32 1, %s4
  %s7 = scalar_select 0, %s6, %s4
  loop: start=0, step=1, limit=6
  $region2: #{km3d_core_head.4} parent=0 // loop_pre_header
    _
  $region3: #{km3d_core_head.4} parent=0 // loop_header
    %s9 = sphi 0, %s13
    %p10 = scmp.ge.s32.totalorder %s9, 6
    %s16 = sphi 0, %s28
    %s17 = sphi 0, %s24
    %s18 = sphi 0, %s16
    %s19 = sphi 0, %s17
    %s20 = sphi 0, %s18
    %s21 = sphi 0, %s19
    %s33 = sphi 0, %s35
    %s36 = sphi 0, %s33
    %s37 = sphi 0, %s36
    %s53 = sphi 0, %s37
    %s59 = sphi 0, %s61
    %s62 = sphi 0, %s59
    %s63 = sphi 0, %s62
    %s79 = sphi 0, %s63
    %s83 = sphi 0, %s83
    %s85 = sphi 0, %s83
    %s86 = sphi 0, %s85
    %s100 = sphi 0, %s86
    %s108 = sphi 0, %s110
    %s111 = sphi 0, %s108
    %s112 = sphi 0, %s111
    %s128 = sphi 0, %s112
  $region4: #{km3d_core_head.4} parent=0 // loop_header_branch
    %12 = sbr.rel (%p10) target = $region8
  $region5: #{km3d_core_head.4} parent=0 // loop_body
    %s14 = ssub.s32 %s9, 1
    %s15 = ssub.s32 %s9, 2
    %s22 = sadd.s32 1, %s17
    %p23 = scmp.ge.s32.totalorder %s22, 1
    %s24 = scalar_select %p23, 0, %s22
    %s25 = sadd.s32 1, %s16
    %s26 = scalar_select %p23, %s25, %s16
    %p27 = scmp.ge.s32.totalorder %s26, 4
    %s28 = scalar_select %p27, 0, %s26
    %s29 = ssub.s32 %s16, %s28
    %s30 = ssub.s32 %s17, %s24
    %s31 = sor.u32 %s29, %s30
    %p32 = scmp.eq.s32.totalorder %s31, 0
    %s34 = sadd.s32 %s33, 1
    %s35 = scalar_select %p32, %s33, %s34
    %p38 = pneg %p32
    %p39 = scmp.eq.s32.totalorder %s9, 3
    %p40 = por %p38, %p39
    %p41 = scmp.ne.s32.totalorder %s33, %s36
    %p42 = scmp.eq.s32.totalorder %s9, 0
    %p43 = por %p41, %p42
    %p44 = scmp.ne.s32.totalorder %s33, %s36
    %p45 = scmp.eq.s32.totalorder %s14, 3
    %p46 = por %p44, %p45
    %p47 = scmp.ne.s32.totalorder %s36, %s37
    %p48 = scmp.eq.s32.totalorder %s14, 0
    %p49 = por %p47, %p48
    %p50 = scmp.ne.s32.totalorder %s36, %s37
    %p51 = scmp.eq.s32.totalorder %s15, 3
    %p52 = por %p50, %p51
    %p54 = scmp.ne.s32.totalorder %s37, %s53
    %p55 = scmp.eq.s32.totalorder %s15, 0
    %p56 = por %p54, %p55
    %s57 = ssub.s32 %s16, %s28
    %p58 = scmp.eq.s32.totalorder %s57, 0
    %s60 = sadd.s32 %s59, 1
    %s61 = scalar_select %p58, %s59, %s60
    %p64 = pneg %p58
    %p65 = scmp.eq.s32.totalorder %s9, 3
    %p66 = por %p64, %p65
    %p67 = scmp.ne.s32.totalorder %s59, %s62
    %p68 = scmp.eq.s32.totalorder %s9, 0
    %p69 = por %p67, %p68
    %p70 = scmp.ne.s32.totalorder %s59, %s62
    %p71 = scmp.eq.s32.totalorder %s14, 3
    %p72 = por %p70, %p71
    %p73 = scmp.ne.s32.totalorder %s62, %s63
    %p74 = scmp.eq.s32.totalorder %s14, 0
    %p75 = por %p73, %p74
    %p76 = scmp.ne.s32.totalorder %s62, %s63
    %p77 = scmp.eq.s32.totalorder %s15, 3
    %p78 = por %p76, %p77
    %p80 = scmp.ne.s32.totalorder %s63, %s79
    %p81 = scmp.eq.s32.totalorder %s15, 0
    %p82 = por %p80, %p81
    %s84 = sadd.s32 %s83, 1
    %p87 = scmp.eq.s32.totalorder %s9, 3
    %p88 = scmp.ne.s32.totalorder %s83, %s85
    %p89 = scmp.eq.s32.totalorder %s9, 0
    %p90 = por %p88, %p89
    %p91 = scmp.ne.s32.totalorder %s83, %s85
    %p92 = scmp.eq.s32.totalorder %s14, 3
    %p93 = por %p91, %p92
    %p94 = scmp.ne.s32.totalorder %s85, %s86
    %p95 = scmp.eq.s32.totalorder %s14, 0
    %p96 = por %p94, %p95
    %p97 = scmp.ne.s32.totalorder %s85, %s86
    %p98 = scmp.eq.s32.totalorder %s15, 3
    %p99 = por %p97, %p98
    %p101 = scmp.ne.s32.totalorder %s86, %s100
    %p102 = scmp.eq.s32.totalorder %s15, 0
    %p103 = por %p101, %p102
    %s104 = ssub.s32 %s16, %s28
    %s105 = ssub.s32 %s17, %s24
    %s106 = sor.u32 %s104, %s105
    %p107 = scmp.eq.s32.totalorder %s106, 0
    %s109 = sadd.s32 %s108, 1
    %s110 = scalar_select %p107, %s108, %s109
    %p113 = pneg %p107
    %p114 = scmp.eq.s32.totalorder %s9, 3
    %p115 = por %p113, %p114
    %p116 = scmp.ne.s32.totalorder %s108, %s111
    %p117 = scmp.eq.s32.totalorder %s9, 0
    %p118 = por %p116, %p117
    %p119 = scmp.ne.s32.totalorder %s108, %s111
    %p120 = scmp.eq.s32.totalorder %s14, 3
    %p121 = por %p119, %p120
    %p122 = scmp.ne.s32.totalorder %s111, %s112
    %p123 = scmp.eq.s32.totalorder %s14, 0
    %p124 = por %p122, %p123
    %p125 = scmp.ne.s32.totalorder %s111, %s112
    %p126 = scmp.eq.s32.totalorder %s15, 3
    %p127 = por %p125, %p126
    %p129 = scmp.ne.s32.totalorder %s112, %s128
    %p130 = scmp.eq.s32.totalorder %s15, 0
    %p131 = por %p129, %p130
    %p132 = scmp.le.s32.totalorder 1, %s9
    %p133 = scmp.lt.s32.totalorder %s9, 5
    %p134 = pnand %p132, %p133
    %p135 = pneg %p134
    // Predicated region
    $region9: #{km3d_core_head.4} parent=5 // pred_check
      _
    $region10: #{km3d_core_head.4} parent=5 // pred_check_branch
      %137 = sbr.rel (%p134) target = $region12
    $region11: #{km3d_core_head.4} parent=5 // pred_region
      %s138 = ssub.s32 %s9, 1
      // Predicated region
      $region13: #{km3d_core_head.4} parent=11 // pred_check
        %p139 = pneg %p96
      $region14: #{km3d_core_head.4} parent=11 // pred_check_branch
        %141 = sbr.rel (%p139) target = $region16
      $region15: #{km3d_core_head.4} parent=11 // pred_region
        _
      $region16: #{km3d_core_head.4} parent=11 // pred_fallthru
        _
    $region12: #{km3d_core_head.4} parent=5 // pred_fallthru
      _
    %p142 = scmp.lt.s32.totalorder %s9, 4
    // Predicated region
    $region17: #{km3d_core_head.4} parent=5 // pred_check
      %p143 = pneg %p142
    $region18: #{km3d_core_head.4} parent=5 // pred_check_branch
      %145 = sbr.rel (%p143) target = $region20
    $region19: #{km3d_core_head.4} parent=5 // pred_region
      // Predicated region
      $region21: #{km3d_core_head.4} parent=19 // pred_check
        %p146 = pneg %p43
      $region22: #{km3d_core_head.4} parent=19 // pred_check_branch
        %148 = sbr.rel (%p146) target = $region24
      $region23: #{km3d_core_head.4} parent=19 // pred_region
        %s149 = smul.u32 16, %s17
        %p150 = scmp.lt.s32.totalorder %s16, 3
        %s151 = scalar_select %p150, %s16, 3
        %p152 = scmp.lt.s32.totalorder %s149, 15
        %s153 = scalar_select %p152, %s149, 15
        %s154 = smul.addr %s153, 8
        %s155 = smul.addr %s151, 128
        %s156 = sadd.s32 %s154, %s155
        %s157 = smul.addr %s156, 4
        %s158 = scalar_lea.vmem %s0, %s157
        %s159 = smul.u32 16, %s17
      $region24: #{km3d_core_head.4} parent=19 // pred_fallthru
        _
      // Predicated region
      $region25: #{km3d_core_head.4} parent=19 // pred_check
        %p160 = pneg %p69
      $region26: #{km3d_core_head.4} parent=19 // pred_check_branch
        %162 = sbr.rel (%p160) target = $region28
      $region27: #{km3d_core_head.4} parent=19 // pred_region
        %p163 = scmp.lt.s32.totalorder %s16, 3
        %s164 = scalar_select %p163, %s16, 3
        %s165 = smul.addr %s164, 256
        %s166 = smul.addr %s165, 4
        %s167 = scalar_lea.vmem %s1, %s166
      $region28: #{km3d_core_head.4} parent=19 // pred_fallthru
        _
    $region20: #{km3d_core_head.4} parent=5 // pred_fallthru
      _
    %p168 = scmp.le.s32.totalorder 1, %s9
    %p169 = scmp.lt.s32.totalorder %s9, 5
    %p170 = pnand %p168, %p169
    %p171 = pneg %p170
    // Predicated region
    $region29: #{km3d_core_head.4} parent=5 // pred_check
      _
    $region30: #{km3d_core_head.4} parent=5 // pred_check_branch
      %173 = sbr.rel (%p170) target = $region32
    $region31: #{km3d_core_head.4} parent=5 // pred_region
      %s174 = ssub.s32 %s9, 1
      %s175 = smul.u32 16, %s19
      %p176 = scmp.lt.s32.totalorder %s18, 3
      %s177 = scalar_select %p176, %s18, 3
      %p178 = scmp.lt.s32.totalorder %s175, 15
      %s179 = scalar_select %p178, %s175, 15
      %s180 = smul.addr %s179, 8
      %s181 = smul.addr %s177, 128
      %s182 = sadd.s32 %s180, %s181
      %s183 = smul.addr %s182, 4
      %s184 = scalar_lea.vmem %s0, %s183
      %p185 = pneg %p49
      %p186 = pneg %p46
      %p187 = scmp.lt.s32.totalorder %s18, 3
      %s188 = scalar_select %p187, %s18, 3
      %s189 = smul.addr %s188, 256
      %s190 = smul.addr %s189, 4
      %s191 = scalar_lea.vmem %s1, %s190
      %p192 = pneg %p75
      %p193 = pneg %p72
      %p194 = pneg %p96
      %p195 = pneg %p93
      %p196 = pneg %p124
      %p197 = pneg %p121
      %s198 = smul.u32 16, %s19
      %p199 = scmp.lt.s32.totalorder %s18, 3
      %s200 = scalar_select %p199, %s18, 3
      %p201 = scmp.lt.s32.totalorder %s198, 15
      %s202 = scalar_select %p201, %s198, 15
      %s203 = smul.addr %s202, 2
      %s204 = smul.addr %s200, 32
      %s205 = sadd.s32 %s203, %s204
      %s206 = smul.addr %s205, 4
      %s207 = scalar_lea.vmem %s3, %s206
      %s208 = smul.u32 16, %s19
      %p209 = scmp.lt.s32.totalorder %s18, 3
      %s210 = scalar_select %p209, %s18, 3
      %p211 = scmp.lt.s32.totalorder %s208, 15
      %s212 = scalar_select %p211, %s208, 15
      %s213 = smul.addr %s212, 8
      %s214 = smul.addr %s210, 128
      %s215 = sadd.s32 %s213, %s214
      %s216 = smul.addr %s215, 4
      %s217 = scalar_lea.vmem %s0, %s216
      %s218 = smul.u32 16, %s19
      %p219 = scmp.lt.s32.totalorder %s18, 3
      %s220 = scalar_select %p219, %s18, 3
      %s221 = smul.addr %s220, 256
      %s222 = smul.addr %s221, 4
      %s223 = scalar_lea.vmem %s1, %s222
      %s224 = smul.u32 16, %s19
      %p225 = scmp.lt.s32.totalorder %s18, 3
      %s226 = scalar_select %p225, %s18, 3
      %p227 = scmp.lt.s32.totalorder %s224, 15
      %s228 = scalar_select %p227, %s224, 15
      %s229 = smul.addr %s228, 2
      %s230 = smul.addr %s226, 32
      %s231 = sadd.s32 %s229, %s230
      %s232 = smul.addr %s231, 4
      %s233 = scalar_lea.vmem %s3, %s232
      %s234 = smul.u32 16, %s19
      %v235 = vld [vmem:[%s217] sm:$0xff]
      %v236 = vld [vmem:[%s217 + $0x8] sm:$0xff]
      %v237 = vld [vmem:[%s217 + $0x10] sm:$0xff]
      %v238 = vld [vmem:[%s217 + $0x18] sm:$0xff]
      %v239 = vld [vmem:[%s217 + $0x20] sm:$0xff]
      %v240 = vld [vmem:[%s217 + $0x28] sm:$0xff]
      %v241 = vld [vmem:[%s217 + $0x30] sm:$0xff]
      %v242 = vld [vmem:[%s217 + $0x38] sm:$0xff]
      %v243 = vld [vmem:[%s217 + $0x40] sm:$0xff]
      %v244 = vld [vmem:[%s217 + $0x48] sm:$0xff]
      %v245 = vld [vmem:[%s217 + $0x50] sm:$0xff]
      %v246 = vld [vmem:[%s217 + $0x58] sm:$0xff]
      %v247 = vld [vmem:[%s217 + $0x60] sm:$0xff]
      %v248 = vld [vmem:[%s217 + $0x68] sm:$0xff]
      %v249 = vld [vmem:[%s217 + $0x70] sm:$0xff]
      %v250 = vld [vmem:[%s217 + $0x78] sm:$0xff]
      %v251 = vld [vmem:[%s217 + $0x80] sm:$0xff]
      %v252 = vld [vmem:[%s217 + $0x88] sm:$0xff]
      %v253 = vld [vmem:[%s217 + $0x90] sm:$0xff]
      %v254 = vld [vmem:[%s217 + $0x98] sm:$0xff]
      %v255 = vld [vmem:[%s217 + $0xa0] sm:$0xff]
      %v256 = vld [vmem:[%s217 + $0xa8] sm:$0xff]
      %v257 = vld [vmem:[%s217 + $0xb0] sm:$0xff]
      %v258 = vld [vmem:[%s217 + $0xb8] sm:$0xff]
      %v259 = vld [vmem:[%s217 + $0xc0] sm:$0xff]
      %v260 = vld [vmem:[%s217 + $0xc8] sm:$0xff]
      %v261 = vld [vmem:[%s217 + $0xd0] sm:$0xff]
      %v262 = vld [vmem:[%s217 + $0xd8] sm:$0xff]
      %v263 = vld [vmem:[%s217 + $0xe0] sm:$0xff]
      %v264 = vld [vmem:[%s217 + $0xe8] sm:$0xff]
      %v265 = vld [vmem:[%s217 + $0xf0] sm:$0xff]
      %v266 = vld [vmem:[%s217 + $0xf8] sm:$0xff]
      %v267 = vld [vmem:[%s217 + $0x100] sm:$0xff]
      %v268 = vld [vmem:[%s217 + $0x108] sm:$0xff]
      %v269 = vld [vmem:[%s217 + $0x110] sm:$0xff]
      %v270 = vld [vmem:[%s217 + $0x118] sm:$0xff]
      %v271 = vld [vmem:[%s217 + $0x120] sm:$0xff]
      %v272 = vld [vmem:[%s217 + $0x128] sm:$0xff]
      %v273 = vld [vmem:[%s217 + $0x130] sm:$0xff]
      %v274 = vld [vmem:[%s217 + $0x138] sm:$0xff]
      %v275 = vld [vmem:[%s217 + $0x140] sm:$0xff]
      %v276 = vld [vmem:[%s217 + $0x148] sm:$0xff]
      %v277 = vld [vmem:[%s217 + $0x150] sm:$0xff]
      %v278 = vld [vmem:[%s217 + $0x158] sm:$0xff]
      %v279 = vld [vmem:[%s217 + $0x160] sm:$0xff]
      %v280 = vld [vmem:[%s217 + $0x168] sm:$0xff]
      %v281 = vld [vmem:[%s217 + $0x170] sm:$0xff]
      %v282 = vld [vmem:[%s217 + $0x178] sm:$0xff]
      %v283 = vld [vmem:[%s217 + $0x180] sm:$0xff]
      %v284 = vld [vmem:[%s217 + $0x188] sm:$0xff]
      %v285 = vld [vmem:[%s217 + $0x190] sm:$0xff]
      %v286 = vld [vmem:[%s217 + $0x198] sm:$0xff]
      %v287 = vld [vmem:[%s217 + $0x1a0] sm:$0xff]
      %v288 = vld [vmem:[%s217 + $0x1a8] sm:$0xff]
      %v289 = vld [vmem:[%s217 + $0x1b0] sm:$0xff]
      %v290 = vld [vmem:[%s217 + $0x1b8] sm:$0xff]
      %v291 = vld [vmem:[%s217 + $0x1c0] sm:$0xff]
      %v292 = vld [vmem:[%s217 + $0x1c8] sm:$0xff]
      %v293 = vld [vmem:[%s217 + $0x1d0] sm:$0xff]
      %v294 = vld [vmem:[%s217 + $0x1d8] sm:$0xff]
      %v295 = vld [vmem:[%s217 + $0x1e0] sm:$0xff]
      %v296 = vld [vmem:[%s217 + $0x1e8] sm:$0xff]
      %v297 = vld [vmem:[%s217 + $0x1f0] sm:$0xff]
      %v298 = vld [vmem:[%s217 + $0x1f8] sm:$0xff]
      %v299 = vld [vmem:[%s223] sm:$0xff]
      %v300 = vld [vmem:[%s223 + $0x8] sm:$0xff]
      %v301 = vld [vmem:[%s223 + $0x10] sm:$0xff]
      %v302 = vld [vmem:[%s223 + $0x18] sm:$0xff]
      %v303 = vld [vmem:[%s223 + $0x20] sm:$0xff]
      %v304 = vld [vmem:[%s223 + $0x28] sm:$0xff]
      %v305 = vld [vmem:[%s223 + $0x30] sm:$0xff]
      %v306 = vld [vmem:[%s223 + $0x38] sm:$0xff]
      %v307 = vld [vmem:[%s223 + $0x40] sm:$0xff]
      %v308 = vld [vmem:[%s223 + $0x48] sm:$0xff]
      %v309 = vld [vmem:[%s223 + $0x50] sm:$0xff]
      %v310 = vld [vmem:[%s223 + $0x58] sm:$0xff]
      %v311 = vld [vmem:[%s223 + $0x60] sm:$0xff]
      %v312 = vld [vmem:[%s223 + $0x68] sm:$0xff]
      %v313 = vld [vmem:[%s223 + $0x70] sm:$0xff]
      %v314 = vld [vmem:[%s223 + $0x78] sm:$0xff]
      %v315 = vld [vmem:[%s223 + $0x80] sm:$0xff]
      %v316 = vld [vmem:[%s223 + $0x88] sm:$0xff]
      %v317 = vld [vmem:[%s223 + $0x90] sm:$0xff]
      %v318 = vld [vmem:[%s223 + $0x98] sm:$0xff]
      %v319 = vld [vmem:[%s223 + $0xa0] sm:$0xff]
      %v320 = vld [vmem:[%s223 + $0xa8] sm:$0xff]
      %v321 = vld [vmem:[%s223 + $0xb0] sm:$0xff]
      %v322 = vld [vmem:[%s223 + $0xb8] sm:$0xff]
      %v323 = vld [vmem:[%s223 + $0xc0] sm:$0xff]
      %v324 = vld [vmem:[%s223 + $0xc8] sm:$0xff]
      %v325 = vld [vmem:[%s223 + $0xd0] sm:$0xff]
      %v326 = vld [vmem:[%s223 + $0xd8] sm:$0xff]
      %v327 = vld [vmem:[%s223 + $0xe0] sm:$0xff]
      %v328 = vld [vmem:[%s223 + $0xe8] sm:$0xff]
      %v329 = vld [vmem:[%s223 + $0xf0] sm:$0xff]
      %v330 = vld [vmem:[%s223 + $0xf8] sm:$0xff]
      %v331 = vld [vmem:[%s223 + $0x100] sm:$0xff]
      %v332 = vld [vmem:[%s223 + $0x108] sm:$0xff]
      %v333 = vld [vmem:[%s223 + $0x110] sm:$0xff]
      %v334 = vld [vmem:[%s223 + $0x118] sm:$0xff]
      %v335 = vld [vmem:[%s223 + $0x120] sm:$0xff]
      %v336 = vld [vmem:[%s223 + $0x128] sm:$0xff]
      %v337 = vld [vmem:[%s223 + $0x130] sm:$0xff]
      %v338 = vld [vmem:[%s223 + $0x138] sm:$0xff]
      %v339 = vld [vmem:[%s223 + $0x140] sm:$0xff]
      %v340 = vld [vmem:[%s223 + $0x148] sm:$0xff]
      %v341 = vld [vmem:[%s223 + $0x150] sm:$0xff]
      %v342 = vld [vmem:[%s223 + $0x158] sm:$0xff]
      %v343 = vld [vmem:[%s223 + $0x160] sm:$0xff]
      %v344 = vld [vmem:[%s223 + $0x168] sm:$0xff]
      %v345 = vld [vmem:[%s223 + $0x170] sm:$0xff]
      %v346 = vld [vmem:[%s223 + $0x178] sm:$0xff]
      %v347 = vld [vmem:[%s223 + $0x180] sm:$0xff]
      %v348 = vld [vmem:[%s223 + $0x188] sm:$0xff]
      %v349 = vld [vmem:[%s223 + $0x190] sm:$0xff]
      %v350 = vld [vmem:[%s223 + $0x198] sm:$0xff]
      %v351 = vld [vmem:[%s223 + $0x1a0] sm:$0xff]
      %v352 = vld [vmem:[%s223 + $0x1a8] sm:$0xff]
      %v353 = vld [vmem:[%s223 + $0x1b0] sm:$0xff]
      %v354 = vld [vmem:[%s223 + $0x1b8] sm:$0xff]
      %v355 = vld [vmem:[%s223 + $0x1c0] sm:$0xff]
      %v356 = vld [vmem:[%s223 + $0x1c8] sm:$0xff]
      %v357 = vld [vmem:[%s223 + $0x1d0] sm:$0xff]
      %v358 = vld [vmem:[%s223 + $0x1d8] sm:$0xff]
      %v359 = vld [vmem:[%s223 + $0x1e0] sm:$0xff]
      %v360 = vld [vmem:[%s223 + $0x1e8] sm:$0xff]
      %v361 = vld [vmem:[%s223 + $0x1f0] sm:$0xff]
      %v362 = vld [vmem:[%s223 + $0x1f8] sm:$0xff]
      %v363 = vld [vmem:[%s223 + $0x200] sm:$0xff]
      %v364 = vld [vmem:[%s223 + $0x208] sm:$0xff]
      %v365 = vld [vmem:[%s223 + $0x210] sm:$0xff]
      %v366 = vld [vmem:[%s223 + $0x218] sm:$0xff]
      %v367 = vld [vmem:[%s223 + $0x220] sm:$0xff]
      %v368 = vld [vmem:[%s223 + $0x228] sm:$0xff]
      %v369 = vld [vmem:[%s223 + $0x230] sm:$0xff]
      %v370 = vld [vmem:[%s223 + $0x238] sm:$0xff]
      %v371 = vld [vmem:[%s223 + $0x240] sm:$0xff]
      %v372 = vld [vmem:[%s223 + $0x248] sm:$0xff]
      %v373 = vld [vmem:[%s223 + $0x250] sm:$0xff]
      %v374 = vld [vmem:[%s223 + $0x258] sm:$0xff]
      %v375 = vld [vmem:[%s223 + $0x260] sm:$0xff]
      %v376 = vld [vmem:[%s223 + $0x268] sm:$0xff]
      %v377 = vld [vmem:[%s223 + $0x270] sm:$0xff]
      %v378 = vld [vmem:[%s223 + $0x278] sm:$0xff]
      %v379 = vld [vmem:[%s223 + $0x280] sm:$0xff]
      %v380 = vld [vmem:[%s223 + $0x288] sm:$0xff]
      %v381 = vld [vmem:[%s223 + $0x290] sm:$0xff]
      %v382 = vld [vmem:[%s223 + $0x298] sm:$0xff]
      %v383 = vld [vmem:[%s223 + $0x2a0] sm:$0xff]
      %v384 = vld [vmem:[%s223 + $0x2a8] sm:$0xff]
      %v385 = vld [vmem:[%s223 + $0x2b0] sm:$0xff]
      %v386 = vld [vmem:[%s223 + $0x2b8] sm:$0xff]
      %v387 = vld [vmem:[%s223 + $0x2c0] sm:$0xff]
      %v388 = vld [vmem:[%s223 + $0x2c8] sm:$0xff]
      %v389 = vld [vmem:[%s223 + $0x2d0] sm:$0xff]
      %v390 = vld [vmem:[%s223 + $0x2d8] sm:$0xff]
      %v391 = vld [vmem:[%s223 + $0x2e0] sm:$0xff]
      %v392 = vld [vmem:[%s223 + $0x2e8] sm:$0xff]
      %v393 = vld [vmem:[%s223 + $0x2f0] sm:$0xff]
      %v394 = vld [vmem:[%s223 + $0x2f8] sm:$0xff]
      %v395 = vld [vmem:[%s223 + $0x300] sm:$0xff]
      %v396 = vld [vmem:[%s223 + $0x308] sm:$0xff]
      %v397 = vld [vmem:[%s223 + $0x310] sm:$0xff]
      %v398 = vld [vmem:[%s223 + $0x318] sm:$0xff]
      %v399 = vld [vmem:[%s223 + $0x320] sm:$0xff]
      %v400 = vld [vmem:[%s223 + $0x328] sm:$0xff]
      %v401 = vld [vmem:[%s223 + $0x330] sm:$0xff]
      %v402 = vld [vmem:[%s223 + $0x338] sm:$0xff]
      %v403 = vld [vmem:[%s223 + $0x340] sm:$0xff]
      %v404 = vld [vmem:[%s223 + $0x348] sm:$0xff]
      %v405 = vld [vmem:[%s223 + $0x350] sm:$0xff]
      %v406 = vld [vmem:[%s223 + $0x358] sm:$0xff]
      %v407 = vld [vmem:[%s223 + $0x360] sm:$0xff]
      %v408 = vld [vmem:[%s223 + $0x368] sm:$0xff]
      %v409 = vld [vmem:[%s223 + $0x370] sm:$0xff]
      %v410 = vld [vmem:[%s223 + $0x378] sm:$0xff]
      %v411 = vld [vmem:[%s223 + $0x380] sm:$0xff]
      %v412 = vld [vmem:[%s223 + $0x388] sm:$0xff]
      %v413 = vld [vmem:[%s223 + $0x390] sm:$0xff]
      %v414 = vld [vmem:[%s223 + $0x398] sm:$0xff]
      %v415 = vld [vmem:[%s223 + $0x3a0] sm:$0xff]
      %v416 = vld [vmem:[%s223 + $0x3a8] sm:$0xff]
      %v417 = vld [vmem:[%s223 + $0x3b0] sm:$0xff]
      %v418 = vld [vmem:[%s223 + $0x3b8] sm:$0xff]
      %v419 = vld [vmem:[%s223 + $0x3c0] sm:$0xff]
      %v420 = vld [vmem:[%s223 + $0x3c8] sm:$0xff]
      %v421 = vld [vmem:[%s223 + $0x3d0] sm:$0xff]
      %v422 = vld [vmem:[%s223 + $0x3d8] sm:$0xff]
      %v423 = vld [vmem:[%s223 + $0x3e0] sm:$0xff]
      %v424 = vld [vmem:[%s223 + $0x3e8] sm:$0xff]
      %v425 = vld [vmem:[%s223 + $0x3f0] sm:$0xff]
      %v426 = vld [vmem:[%s223 + $0x3f8] sm:$0xff]
      %v427 = vld [vmem:[%s2] sm:$0x3]
      %v429 = vperm.slane %v427, 0
      %v430 = vperm.slane %v427, 1
      %v497 = vunpack.c.l.b16 %v235
      %v498 = vunpack.c.h.b16 %v235
      %v499 = vunpack.c.l.b16 %v236
      %v500 = vunpack.c.h.b16 %v236
      %v501 = vunpack.c.l.b16 %v237
      %v502 = vunpack.c.h.b16 %v237
      %v503 = vunpack.c.l.b16 %v238
      %v504 = vunpack.c.h.b16 %v238
      %v505 = vunpack.c.l.b16 %v239
      %v506 = vunpack.c.h.b16 %v239
      %v507 = vunpack.c.l.b16 %v240
      %v508 = vunpack.c.h.b16 %v240
      %v509 = vunpack.c.l.b16 %v241
      %v510 = vunpack.c.h.b16 %v241
      %v511 = vunpack.c.l.b16 %v242
      %v512 = vunpack.c.h.b16 %v242
      %v513 = vunpack.c.l.b16 %v243
      %v514 = vunpack.c.h.b16 %v243
      %v515 = vunpack.c.l.b16 %v244
      %v516 = vunpack.c.h.b16 %v244
      %v517 = vunpack.c.l.b16 %v245
      %v518 = vunpack.c.h.b16 %v245
      %v519 = vunpack.c.l.b16 %v246
      %v520 = vunpack.c.h.b16 %v246
      %v521 = vunpack.c.l.b16 %v247
      %v522 = vunpack.c.h.b16 %v247
      %v523 = vunpack.c.l.b16 %v248
      %v524 = vunpack.c.h.b16 %v248
      %v525 = vunpack.c.l.b16 %v249
      %v526 = vunpack.c.h.b16 %v249
      %v527 = vunpack.c.l.b16 %v250
      %v528 = vunpack.c.h.b16 %v250
      %v529 = vunpack.c.l.b16 %v251
      %v530 = vunpack.c.h.b16 %v251
      %v531 = vunpack.c.l.b16 %v252
      %v532 = vunpack.c.h.b16 %v252
      %v533 = vunpack.c.l.b16 %v253
      %v534 = vunpack.c.h.b16 %v253
      %v535 = vunpack.c.l.b16 %v254
      %v536 = vunpack.c.h.b16 %v254
      %v537 = vunpack.c.l.b16 %v255
      %v538 = vunpack.c.h.b16 %v255
      %v539 = vunpack.c.l.b16 %v256
      %v540 = vunpack.c.h.b16 %v256
      %v541 = vunpack.c.l.b16 %v257
      %v542 = vunpack.c.h.b16 %v257
      %v543 = vunpack.c.l.b16 %v258
      %v544 = vunpack.c.h.b16 %v258
      %v545 = vunpack.c.l.b16 %v259
      %v546 = vunpack.c.h.b16 %v259
      %v547 = vunpack.c.l.b16 %v260
      %v548 = vunpack.c.h.b16 %v260
      %v549 = vunpack.c.l.b16 %v261
      %v550 = vunpack.c.h.b16 %v261
      %v551 = vunpack.c.l.b16 %v262
      %v552 = vunpack.c.h.b16 %v262
      %v553 = vunpack.c.l.b16 %v263
      %v554 = vunpack.c.h.b16 %v263
      %v555 = vunpack.c.l.b16 %v264
      %v556 = vunpack.c.h.b16 %v264
      %v557 = vunpack.c.l.b16 %v265
      %v558 = vunpack.c.h.b16 %v265
      %v559 = vunpack.c.l.b16 %v266
      %v560 = vunpack.c.h.b16 %v266
      %v561 = vunpack.c.l.b16 %v267
      %v562 = vunpack.c.h.b16 %v267
      %v563 = vunpack.c.l.b16 %v268
      %v564 = vunpack.c.h.b16 %v268
      %v565 = vunpack.c.l.b16 %v269
      %v566 = vunpack.c.h.b16 %v269
      %v567 = vunpack.c.l.b16 %v270
      %v568 = vunpack.c.h.b16 %v270
      %v569 = vunpack.c.l.b16 %v271
      %v570 = vunpack.c.h.b16 %v271
      %v571 = vunpack.c.l.b16 %v272
      %v572 = vunpack.c.h.b16 %v272
      %v573 = vunpack.c.l.b16 %v273
      %v574 = vunpack.c.h.b16 %v273
      %v575 = vunpack.c.l.b16 %v274
      %v576 = vunpack.c.h.b16 %v274
      %v577 = vunpack.c.l.b16 %v275
      %v578 = vunpack.c.h.b16 %v275
      %v579 = vunpack.c.l.b16 %v276
      %v580 = vunpack.c.h.b16 %v276
      %v581 = vunpack.c.l.b16 %v277
      %v582 = vunpack.c.h.b16 %v277
      %v583 = vunpack.c.l.b16 %v278
      %v584 = vunpack.c.h.b16 %v278
      %v585 = vunpack.c.l.b16 %v279
      %v586 = vunpack.c.h.b16 %v279
      %v587 = vunpack.c.l.b16 %v280
      %v588 = vunpack.c.h.b16 %v280
      %v589 = vunpack.c.l.b16 %v281
      %v590 = vunpack.c.h.b16 %v281
      %v591 = vunpack.c.l.b16 %v282
      %v592 = vunpack.c.h.b16 %v282
      %v593 = vunpack.c.l.b16 %v283
      %v594 = vunpack.c.h.b16 %v283
      %v595 = vunpack.c.l.b16 %v284
      %v596 = vunpack.c.h.b16 %v284
      %v597 = vunpack.c.l.b16 %v285
      %v598 = vunpack.c.h.b16 %v285
      %v599 = vunpack.c.l.b16 %v286
      %v600 = vunpack.c.h.b16 %v286
      %v601 = vunpack.c.l.b16 %v287
      %v602 = vunpack.c.h.b16 %v287
      %v603 = vunpack.c.l.b16 %v288
      %v604 = vunpack.c.h.b16 %v288
      %v605 = vunpack.c.l.b16 %v289
      %v606 = vunpack.c.h.b16 %v289
      %v607 = vunpack.c.l.b16 %v290
      %v608 = vunpack.c.h.b16 %v290
      %v609 = vunpack.c.l.b16 %v291
      %v610 = vunpack.c.h.b16 %v291
      %v611 = vunpack.c.l.b16 %v292
      %v612 = vunpack.c.h.b16 %v292
      %v613 = vunpack.c.l.b16 %v293
      %v614 = vunpack.c.h.b16 %v293
      %v615 = vunpack.c.l.b16 %v294
      %v616 = vunpack.c.h.b16 %v294
      %v617 = vunpack.c.l.b16 %v295
      %v618 = vunpack.c.h.b16 %v295
      %v619 = vunpack.c.l.b16 %v296
      %v620 = vunpack.c.h.b16 %v296
      %v621 = vunpack.c.l.b16 %v297
      %v622 = vunpack.c.h.b16 %v297
      %v623 = vunpack.c.l.b16 %v298
      %v624 = vunpack.c.h.b16 %v298
      %v625 = vpack.c.b16 %v505, %v497
      %v626 = vpack.c.b16 %v506, %v498
      %v627 = vpack.c.b16 %v507, %v499
      %v628 = vpack.c.b16 %v508, %v500
      %v629 = vpack.c.b16 %v509, %v501
      %v630 = vpack.c.b16 %v510, %v502
      %v631 = vpack.c.b16 %v511, %v503
      %v632 = vpack.c.b16 %v512, %v504
      %v633 = vpack.c.b16 %v521, %v513
      %v634 = vpack.c.b16 %v522, %v514
      %v635 = vpack.c.b16 %v523, %v515
      %v636 = vpack.c.b16 %v524, %v516
      %v637 = vpack.c.b16 %v525, %v517
      %v638 = vpack.c.b16 %v526, %v518
      %v639 = vpack.c.b16 %v527, %v519
      %v640 = vpack.c.b16 %v528, %v520
      %v641 = vpack.c.b16 %v537, %v529
      %v642 = vpack.c.b16 %v538, %v530
      %v643 = vpack.c.b16 %v539, %v531
      %v644 = vpack.c.b16 %v540, %v532
      %v645 = vpack.c.b16 %v541, %v533
      %v646 = vpack.c.b16 %v542, %v534
      %v647 = vpack.c.b16 %v543, %v535
      %v648 = vpack.c.b16 %v544, %v536
      %v649 = vpack.c.b16 %v553, %v545
      %v650 = vpack.c.b16 %v554, %v546
      %v651 = vpack.c.b16 %v555, %v547
      %v652 = vpack.c.b16 %v556, %v548
      %v653 = vpack.c.b16 %v557, %v549
      %v654 = vpack.c.b16 %v558, %v550
      %v655 = vpack.c.b16 %v559, %v551
      %v656 = vpack.c.b16 %v560, %v552
      %v657 = vpack.c.b16 %v569, %v561
      %v658 = vpack.c.b16 %v570, %v562
      %v659 = vpack.c.b16 %v571, %v563
      %v660 = vpack.c.b16 %v572, %v564
      %v661 = vpack.c.b16 %v573, %v565
      %v662 = vpack.c.b16 %v574, %v566
      %v663 = vpack.c.b16 %v575, %v567
      %v664 = vpack.c.b16 %v576, %v568
      %v665 = vpack.c.b16 %v585, %v577
      %v666 = vpack.c.b16 %v586, %v578
      %v667 = vpack.c.b16 %v587, %v579
      %v668 = vpack.c.b16 %v588, %v580
      %v669 = vpack.c.b16 %v589, %v581
      %v670 = vpack.c.b16 %v590, %v582
      %v671 = vpack.c.b16 %v591, %v583
      %v672 = vpack.c.b16 %v592, %v584
      %v673 = vpack.c.b16 %v601, %v593
      %v674 = vpack.c.b16 %v602, %v594
      %v675 = vpack.c.b16 %v603, %v595
      %v676 = vpack.c.b16 %v604, %v596
      %v677 = vpack.c.b16 %v605, %v597
      %v678 = vpack.c.b16 %v606, %v598
      %v679 = vpack.c.b16 %v607, %v599
      %v680 = vpack.c.b16 %v608, %v600
      %v681 = vpack.c.b16 %v617, %v609
      %v682 = vpack.c.b16 %v618, %v610
      %v683 = vpack.c.b16 %v619, %v611
      %v684 = vpack.c.b16 %v620, %v612
      %v685 = vpack.c.b16 %v621, %v613
      %v686 = vpack.c.b16 %v622, %v614
      %v687 = vpack.c.b16 %v623, %v615
      %v688 = vpack.c.b16 %v624, %v616
      %v881 = vunpack.c.l.b16 %v299
      %v882 = vunpack.c.h.b16 %v299
      %v883 = vunpack.c.l.b16 %v300
      %v884 = vunpack.c.h.b16 %v300
      %v885 = vunpack.c.l.b16 %v301
      %v886 = vunpack.c.h.b16 %v301
      %v887 = vunpack.c.l.b16 %v302
      %v888 = vunpack.c.h.b16 %v302
      %v889 = vunpack.c.l.b16 %v303
      %v890 = vunpack.c.h.b16 %v303
      %v891 = vunpack.c.l.b16 %v304
      %v892 = vunpack.c.h.b16 %v304
      %v893 = vunpack.c.l.b16 %v305
      %v894 = vunpack.c.h.b16 %v305
      %v895 = vunpack.c.l.b16 %v306
      %v896 = vunpack.c.h.b16 %v306
      %v897 = vunpack.c.l.b16 %v307
      %v898 = vunpack.c.h.b16 %v307
      %v899 = vunpack.c.l.b16 %v308
      %v900 = vunpack.c.h.b16 %v308
      %v901 = vunpack.c.l.b16 %v309
      %v902 = vunpack.c.h.b16 %v309
      %v903 = vunpack.c.l.b16 %v310
      %v904 = vunpack.c.h.b16 %v310
      %v905 = vunpack.c.l.b16 %v311
      %v906 = vunpack.c.h.b16 %v311
      %v907 = vunpack.c.l.b16 %v312
      %v908 = vunpack.c.h.b16 %v312
      %v909 = vunpack.c.l.b16 %v313
      %v910 = vunpack.c.h.b16 %v313
      %v911 = vunpack.c.l.b16 %v314
      %v912 = vunpack.c.h.b16 %v314
      %v913 = vunpack.c.l.b16 %v315
      %v914 = vunpack.c.h.b16 %v315
      %v915 = vunpack.c.l.b16 %v316
      %v916 = vunpack.c.h.b16 %v316
      %v917 = vunpack.c.l.b16 %v317
      %v918 = vunpack.c.h.b16 %v317
      %v919 = vunpack.c.l.b16 %v318
      %v920 = vunpack.c.h.b16 %v318
      %v921 = vunpack.c.l.b16 %v319
      %v922 = vunpack.c.h.b16 %v319
      %v923 = vunpack.c.l.b16 %v320
      %v924 = vunpack.c.h.b16 %v320
      %v925 = vunpack.c.l.b16 %v321
      %v926 = vunpack.c.h.b16 %v321
      %v927 = vunpack.c.l.b16 %v322
      %v928 = vunpack.c.h.b16 %v322
      %v929 = vunpack.c.l.b16 %v323
      %v930 = vunpack.c.h.b16 %v323
      %v931 = vunpack.c.l.b16 %v324
      %v932 = vunpack.c.h.b16 %v324
      %v933 = vunpack.c.l.b16 %v325
      %v934 = vunpack.c.h.b16 %v325
      %v935 = vunpack.c.l.b16 %v326
      %v936 = vunpack.c.h.b16 %v326
      %v937 = vunpack.c.l.b16 %v327
      %v938 = vunpack.c.h.b16 %v327
      %v939 = vunpack.c.l.b16 %v328
      %v940 = vunpack.c.h.b16 %v328
      %v941 = vunpack.c.l.b16 %v329
      %v942 = vunpack.c.h.b16 %v329
      %v943 = vunpack.c.l.b16 %v330
      %v944 = vunpack.c.h.b16 %v330
      %v945 = vunpack.c.l.b16 %v331
      %v946 = vunpack.c.h.b16 %v331
      %v947 = vunpack.c.l.b16 %v332
      %v948 = vunpack.c.h.b16 %v332
      %v949 = vunpack.c.l.b16 %v333
      %v950 = vunpack.c.h.b16 %v333
      %v951 = vunpack.c.l.b16 %v334
      %v952 = vunpack.c.h.b16 %v334
      %v953 = vunpack.c.l.b16 %v335
      %v954 = vunpack.c.h.b16 %v335
      %v955 = vunpack.c.l.b16 %v336
      %v956 = vunpack.c.h.b16 %v336
      %v957 = vunpack.c.l.b16 %v337
      %v958 = vunpack.c.h.b16 %v337
      %v959 = vunpack.c.l.b16 %v338
      %v960 = vunpack.c.h.b16 %v338
      %v961 = vunpack.c.l.b16 %v339
      %v962 = vunpack.c.h.b16 %v339
      %v963 = vunpack.c.l.b16 %v340
      %v964 = vunpack.c.h.b16 %v340
      %v965 = vunpack.c.l.b16 %v341
      %v966 = vunpack.c.h.b16 %v341
      %v967 = vunpack.c.l.b16 %v342
      %v968 = vunpack.c.h.b16 %v342
      %v969 = vunpack.c.l.b16 %v343
      %v970 = vunpack.c.h.b16 %v343
      %v971 = vunpack.c.l.b16 %v344
      %v972 = vunpack.c.h.b16 %v344
      %v973 = vunpack.c.l.b16 %v345
      %v974 = vunpack.c.h.b16 %v345
      %v975 = vunpack.c.l.b16 %v346
      %v976 = vunpack.c.h.b16 %v346
      %v977 = vunpack.c.l.b16 %v347
      %v978 = vunpack.c.h.b16 %v347
      %v979 = vunpack.c.l.b16 %v348
      %v980 = vunpack.c.h.b16 %v348
      %v981 = vunpack.c.l.b16 %v349
      %v982 = vunpack.c.h.b16 %v349
      %v983 = vunpack.c.l.b16 %v350
      %v984 = vunpack.c.h.b16 %v350
      %v985 = vunpack.c.l.b16 %v351
      %v986 = vunpack.c.h.b16 %v351
      %v987 = vunpack.c.l.b16 %v352
      %v988 = vunpack.c.h.b16 %v352
      %v989 = vunpack.c.l.b16 %v353
      %v990 = vunpack.c.h.b16 %v353
      %v991 = vunpack.c.l.b16 %v354
      %v992 = vunpack.c.h.b16 %v354
      %v993 = vunpack.c.l.b16 %v355
      %v994 = vunpack.c.h.b16 %v355
      %v995 = vunpack.c.l.b16 %v356
      %v996 = vunpack.c.h.b16 %v356
      %v997 = vunpack.c.l.b16 %v357
      %v998 = vunpack.c.h.b16 %v357
      %v999 = vunpack.c.l.b16 %v358
      %v1000 = vunpack.c.h.b16 %v358
      %v1001 = vunpack.c.l.b16 %v359
      %v1002 = vunpack.c.h.b16 %v359
      %v1003 = vunpack.c.l.b16 %v360
      %v1004 = vunpack.c.h.b16 %v360
      %v1005 = vunpack.c.l.b16 %v361
      %v1006 = vunpack.c.h.b16 %v361
      %v1007 = vunpack.c.l.b16 %v362
      %v1008 = vunpack.c.h.b16 %v362
      %v1009 = vunpack.c.l.b16 %v363
      %v1010 = vunpack.c.h.b16 %v363
      %v1011 = vunpack.c.l.b16 %v364
      %v1012 = vunpack.c.h.b16 %v364
      %v1013 = vunpack.c.l.b16 %v365
      %v1014 = vunpack.c.h.b16 %v365
      %v1015 = vunpack.c.l.b16 %v366
      %v1016 = vunpack.c.h.b16 %v366
      %v1017 = vunpack.c.l.b16 %v367
      %v1018 = vunpack.c.h.b16 %v367
      %v1019 = vunpack.c.l.b16 %v368
      %v1020 = vunpack.c.h.b16 %v368
      %v1021 = vunpack.c.l.b16 %v369
      %v1022 = vunpack.c.h.b16 %v369
      %v1023 = vunpack.c.l.b16 %v370
      %v1024 = vunpack.c.h.b16 %v370
      %v1025 = vunpack.c.l.b16 %v371
      %v1026 = vunpack.c.h.b16 %v371
      %v1027 = vunpack.c.l.b16 %v372
      %v1028 = vunpack.c.h.b16 %v372
      %v1029 = vunpack.c.l.b16 %v373
      %v1030 = vunpack.c.h.b16 %v373
      %v1031 = vunpack.c.l.b16 %v374
      %v1032 = vunpack.c.h.b16 %v374
      %v1033 = vunpack.c.l.b16 %v375
      %v1034 = vunpack.c.h.b16 %v375
      %v1035 = vunpack.c.l.b16 %v376
      %v1036 = vunpack.c.h.b16 %v376
      %v1037 = vunpack.c.l.b16 %v377
      %v1038 = vunpack.c.h.b16 %v377
      %v1039 = vunpack.c.l.b16 %v378
      %v1040 = vunpack.c.h.b16 %v378
      %v1041 = vunpack.c.l.b16 %v379
      %v1042 = vunpack.c.h.b16 %v379
      %v1043 = vunpack.c.l.b16 %v380
      %v1044 = vunpack.c.h.b16 %v380
      %v1045 = vunpack.c.l.b16 %v381
      %v1046 = vunpack.c.h.b16 %v381
      %v1047 = vunpack.c.l.b16 %v382
      %v1048 = vunpack.c.h.b16 %v382
      %v1049 = vunpack.c.l.b16 %v383
      %v1050 = vunpack.c.h.b16 %v383
      %v1051 = vunpack.c.l.b16 %v384
      %v1052 = vunpack.c.h.b16 %v384
      %v1053 = vunpack.c.l.b16 %v385
      %v1054 = vunpack.c.h.b16 %v385
      %v1055 = vunpack.c.l.b16 %v386
      %v1056 = vunpack.c.h.b16 %v386
      %v1057 = vunpack.c.l.b16 %v387
      %v1058 = vunpack.c.h.b16 %v387
      %v1059 = vunpack.c.l.b16 %v388
      %v1060 = vunpack.c.h.b16 %v388
      %v1061 = vunpack.c.l.b16 %v389
      %v1062 = vunpack.c.h.b16 %v389
      %v1063 = vunpack.c.l.b16 %v390
      %v1064 = vunpack.c.h.b16 %v390
      %v1065 = vunpack.c.l.b16 %v391
      %v1066 = vunpack.c.h.b16 %v391
      %v1067 = vunpack.c.l.b16 %v392
      %v1068 = vunpack.c.h.b16 %v392
      %v1069 = vunpack.c.l.b16 %v393
      %v1070 = vunpack.c.h.b16 %v393
      %v1071 = vunpack.c.l.b16 %v394
      %v1072 = vunpack.c.h.b16 %v394
      %v1073 = vunpack.c.l.b16 %v395
      %v1074 = vunpack.c.h.b16 %v395
      %v1075 = vunpack.c.l.b16 %v396
      %v1076 = vunpack.c.h.b16 %v396
      %v1077 = vunpack.c.l.b16 %v397
      %v1078 = vunpack.c.h.b16 %v397
      %v1079 = vunpack.c.l.b16 %v398
      %v1080 = vunpack.c.h.b16 %v398
      %v1081 = vunpack.c.l.b16 %v399
      %v1082 = vunpack.c.h.b16 %v399
      %v1083 = vunpack.c.l.b16 %v400
      %v1084 = vunpack.c.h.b16 %v400
      %v1085 = vunpack.c.l.b16 %v401
      %v1086 = vunpack.c.h.b16 %v401
      %v1087 = vunpack.c.l.b16 %v402
      %v1088 = vunpack.c.h.b16 %v402
      %v1089 = vunpack.c.l.b16 %v403
      %v1090 = vunpack.c.h.b16 %v403
      %v1091 = vunpack.c.l.b16 %v404
      %v1092 = vunpack.c.h.b16 %v404
      %v1093 = vunpack.c.l.b16 %v405
      %v1094 = vunpack.c.h.b16 %v405
      %v1095 = vunpack.c.l.b16 %v406
      %v1096 = vunpack.c.h.b16 %v406
      %v1097 = vunpack.c.l.b16 %v407
      %v1098 = vunpack.c.h.b16 %v407
      %v1099 = vunpack.c.l.b16 %v408
      %v1100 = vunpack.c.h.b16 %v408
      %v1101 = vunpack.c.l.b16 %v409
      %v1102 = vunpack.c.h.b16 %v409
      %v1103 = vunpack.c.l.b16 %v410
      %v1104 = vunpack.c.h.b16 %v410
      %v1105 = vunpack.c.l.b16 %v411
      %v1106 = vunpack.c.h.b16 %v411
      %v1107 = vunpack.c.l.b16 %v412
      %v1108 = vunpack.c.h.b16 %v412
      %v1109 = vunpack.c.l.b16 %v413
      %v1110 = vunpack.c.h.b16 %v413
      %v1111 = vunpack.c.l.b16 %v414
      %v1112 = vunpack.c.h.b16 %v414
      %v1113 = vunpack.c.l.b16 %v415
      %v1114 = vunpack.c.h.b16 %v415
      %v1115 = vunpack.c.l.b16 %v416
      %v1116 = vunpack.c.h.b16 %v416
      %v1117 = vunpack.c.l.b16 %v417
      %v1118 = vunpack.c.h.b16 %v417
      %v1119 = vunpack.c.l.b16 %v418
      %v1120 = vunpack.c.h.b16 %v418
      %v1121 = vunpack.c.l.b16 %v419
      %v1122 = vunpack.c.h.b16 %v419
      %v1123 = vunpack.c.l.b16 %v420
      %v1124 = vunpack.c.h.b16 %v420
      %v1125 = vunpack.c.l.b16 %v421
      %v1126 = vunpack.c.h.b16 %v421
      %v1127 = vunpack.c.l.b16 %v422
      %v1128 = vunpack.c.h.b16 %v422
      %v1129 = vunpack.c.l.b16 %v423
      %v1130 = vunpack.c.h.b16 %v423
      %v1131 = vunpack.c.l.b16 %v424
      %v1132 = vunpack.c.h.b16 %v424
      %v1133 = vunpack.c.l.b16 %v425
      %v1134 = vunpack.c.h.b16 %v425
      %v1135 = vunpack.c.l.b16 %v426
      %v1136 = vunpack.c.h.b16 %v426
      %v1137 = vpack.c.b16 %v883, %v881
      %v1138 = vpack.c.b16 %v884, %v882
      %v1139 = vpack.c.b16 %v887, %v885
      %v1140 = vpack.c.b16 %v888, %v886
      %v1141 = vpack.c.b16 %v891, %v889
      %v1142 = vpack.c.b16 %v892, %v890
      %v1143 = vpack.c.b16 %v895, %v893
      %v1144 = vpack.c.b16 %v896, %v894
      %v1145 = vpack.c.b16 %v899, %v897
      %v1146 = vpack.c.b16 %v900, %v898
      %v1147 = vpack.c.b16 %v903, %v901
      %v1148 = vpack.c.b16 %v904, %v902
      %v1149 = vpack.c.b16 %v907, %v905
      %v1150 = vpack.c.b16 %v908, %v906
      %v1151 = vpack.c.b16 %v911, %v909
      %v1152 = vpack.c.b16 %v912, %v910
      %v1153 = vpack.c.b16 %v915, %v913
      %v1154 = vpack.c.b16 %v916, %v914
      %v1155 = vpack.c.b16 %v919, %v917
      %v1156 = vpack.c.b16 %v920, %v918
      %v1157 = vpack.c.b16 %v923, %v921
      %v1158 = vpack.c.b16 %v924, %v922
      %v1159 = vpack.c.b16 %v927, %v925
      %v1160 = vpack.c.b16 %v928, %v926
      %v1161 = vpack.c.b16 %v931, %v929
      %v1162 = vpack.c.b16 %v932, %v930
      %v1163 = vpack.c.b16 %v935, %v933
      %v1164 = vpack.c.b16 %v936, %v934
      %v1165 = vpack.c.b16 %v939, %v937
      %v1166 = vpack.c.b16 %v940, %v938
      %v1167 = vpack.c.b16 %v943, %v941
      %v1168 = vpack.c.b16 %v944, %v942
      %v1169 = vpack.c.b16 %v947, %v945
      %v1170 = vpack.c.b16 %v948, %v946
      %v1171 = vpack.c.b16 %v951, %v949
      %v1172 = vpack.c.b16 %v952, %v950
      %v1173 = vpack.c.b16 %v955, %v953
      %v1174 = vpack.c.b16 %v956, %v954
      %v1175 = vpack.c.b16 %v959, %v957
      %v1176 = vpack.c.b16 %v960, %v958
      %v1177 = vpack.c.b16 %v963, %v961
      %v1178 = vpack.c.b16 %v964, %v962
      %v1179 = vpack.c.b16 %v967, %v965
      %v1180 = vpack.c.b16 %v968, %v966
      %v1181 = vpack.c.b16 %v971, %v969
      %v1182 = vpack.c.b16 %v972, %v970
      %v1183 = vpack.c.b16 %v975, %v973
      %v1184 = vpack.c.b16 %v976, %v974
      %v1185 = vpack.c.b16 %v979, %v977
      %v1186 = vpack.c.b16 %v980, %v978
      %v1187 = vpack.c.b16 %v983, %v981
      %v1188 = vpack.c.b16 %v984, %v982
      %v1189 = vpack.c.b16 %v987, %v985
      %v1190 = vpack.c.b16 %v988, %v986
      %v1191 = vpack.c.b16 %v991, %v989
      %v1192 = vpack.c.b16 %v992, %v990
      %v1193 = vpack.c.b16 %v995, %v993
      %v1194 = vpack.c.b16 %v996, %v994
      %v1195 = vpack.c.b16 %v999, %v997
      %v1196 = vpack.c.b16 %v1000, %v998
      %v1197 = vpack.c.b16 %v1003, %v1001
      %v1198 = vpack.c.b16 %v1004, %v1002
      %v1199 = vpack.c.b16 %v1007, %v1005
      %v1200 = vpack.c.b16 %v1008, %v1006
      %v1201 = vpack.c.b16 %v1011, %v1009
      %v1202 = vpack.c.b16 %v1012, %v1010
      %v1203 = vpack.c.b16 %v1015, %v1013
      %v1204 = vpack.c.b16 %v1016, %v1014
      %v1205 = vpack.c.b16 %v1019, %v1017
      %v1206 = vpack.c.b16 %v1020, %v1018
      %v1207 = vpack.c.b16 %v1023, %v1021
      %v1208 = vpack.c.b16 %v1024, %v1022
      %v1209 = vpack.c.b16 %v1027, %v1025
      %v1210 = vpack.c.b16 %v1028, %v1026
      %v1211 = vpack.c.b16 %v1031, %v1029
      %v1212 = vpack.c.b16 %v1032, %v1030
      %v1213 = vpack.c.b16 %v1035, %v1033
      %v1214 = vpack.c.b16 %v1036, %v1034
      %v1215 = vpack.c.b16 %v1039, %v1037
      %v1216 = vpack.c.b16 %v1040, %v1038
      %v1217 = vpack.c.b16 %v1043, %v1041
      %v1218 = vpack.c.b16 %v1044, %v1042
      %v1219 = vpack.c.b16 %v1047, %v1045
      %v1220 = vpack.c.b16 %v1048, %v1046
      %v1221 = vpack.c.b16 %v1051, %v1049
      %v1222 = vpack.c.b16 %v1052, %v1050
      %v1223 = vpack.c.b16 %v1055, %v1053
      %v1224 = vpack.c.b16 %v1056, %v1054
      %v1225 = vpack.c.b16 %v1059, %v1057
      %v1226 = vpack.c.b16 %v1060, %v1058
      %v1227 = vpack.c.b16 %v1063, %v1061
      %v1228 = vpack.c.b16 %v1064, %v1062
      %v1229 = vpack.c.b16 %v1067, %v1065
      %v1230 = vpack.c.b16 %v1068, %v1066
      %v1231 = vpack.c.b16 %v1071, %v1069
      %v1232 = vpack.c.b16 %v1072, %v1070
      %v1233 = vpack.c.b16 %v1075, %v1073
      %v1234 = vpack.c.b16 %v1076, %v1074
      %v1235 = vpack.c.b16 %v1079, %v1077
      %v1236 = vpack.c.b16 %v1080, %v1078
      %v1237 = vpack.c.b16 %v1083, %v1081
      %v1238 = vpack.c.b16 %v1084, %v1082
      %v1239 = vpack.c.b16 %v1087, %v1085
      %v1240 = vpack.c.b16 %v1088, %v1086
      %v1241 = vpack.c.b16 %v1091, %v1089
      %v1242 = vpack.c.b16 %v1092, %v1090
      %v1243 = vpack.c.b16 %v1095, %v1093
      %v1244 = vpack.c.b16 %v1096, %v1094
      %v1245 = vpack.c.b16 %v1099, %v1097
      %v1246 = vpack.c.b16 %v1100, %v1098
      %v1247 = vpack.c.b16 %v1103, %v1101
      %v1248 = vpack.c.b16 %v1104, %v1102
      %v1249 = vpack.c.b16 %v1107, %v1105
      %v1250 = vpack.c.b16 %v1108, %v1106
      %v1251 = vpack.c.b16 %v1111, %v1109
      %v1252 = vpack.c.b16 %v1112, %v1110
      %v1253 = vpack.c.b16 %v1115, %v1113
      %v1254 = vpack.c.b16 %v1116, %v1114
      %v1255 = vpack.c.b16 %v1119, %v1117
      %v1256 = vpack.c.b16 %v1120, %v1118
      %v1257 = vpack.c.b16 %v1123, %v1121
      %v1258 = vpack.c.b16 %v1124, %v1122
      %v1259 = vpack.c.b16 %v1127, %v1125
      %v1260 = vpack.c.b16 %v1128, %v1126
      %v1261 = vpack.c.b16 %v1131, %v1129
      %v1262 = vpack.c.b16 %v1132, %v1130
      %v1263 = vpack.c.b16 %v1135, %v1133
      %v1264 = vpack.c.b16 %v1136, %v1134
      %1393 = vmatpush.bf16.msra.mxu0 %v1151
      %1394 = vmatpush.bf16.msra.mxu0 %v1149
      %1395 = vmatpush.bf16.msra.mxu0 %v1147
      %1396 = vmatpush.bf16.msra.mxu0 %v1145
      %1397 = vmatpush.bf16.msra.mxu0 %v1143
      %1398 = vmatpush.bf16.msra.mxu0 %v1141
      %1399 = vmatpush.bf16.msra.mxu0 %v1139
      %1400 = vmatpush.bf16.msra.mxu0 %v1137
      %1401 = vmatmul.bf16.gmra.mxu0 %v625
      %v1402 = vpop.f32.mrf.mxu0
      %v1403 = vadd.f32 %v429, %v1402
      %v1404 = vpop.f32.mrf.mxu0
      %v1405 = vadd.f32 %v429, %v1404
      %1406 = vmatmul.bf16.gmra.mxu0 %v633
      %v1407 = vpop.f32.mrf.mxu0
      %v1408 = vadd.f32 %v429, %v1407
      %v1409 = vpop.f32.mrf.mxu0
      %v1410 = vadd.f32 %v429, %v1409
      %1411 = vmatmul.bf16.gmra.mxu0 %v641
      %v1412 = vpop.f32.mrf.mxu0
      %v1413 = vadd.f32 %v429, %v1412
      %v1414 = vpop.f32.mrf.mxu0
      %v1415 = vadd.f32 %v429, %v1414
      %1416 = vmatmul.bf16.gmra.mxu0 %v649
      %v1417 = vpop.f32.mrf.mxu0
      %v1418 = vadd.f32 %v429, %v1417
      %v1419 = vpop.f32.mrf.mxu0
      %v1420 = vadd.f32 %v429, %v1419
      %1421 = vmatmul.bf16.gmra.mxu0 %v657
      %v1422 = vpop.f32.mrf.mxu0
      %v1423 = vadd.f32 %v429, %v1422
      %v1424 = vpop.f32.mrf.mxu0
      %v1425 = vadd.f32 %v429, %v1424
      %1426 = vmatmul.bf16.gmra.mxu0 %v665
      %v1427 = vpop.f32.mrf.mxu0
      %v1428 = vadd.f32 %v429, %v1427
      %v1429 = vpop.f32.mrf.mxu0
      %v1430 = vadd.f32 %v429, %v1429
      %1431 = vmatmul.bf16.gmra.mxu0 %v673
      %v1432 = vpop.f32.mrf.mxu0
      %v1433 = vadd.f32 %v429, %v1432
      %v1434 = vpop.f32.mrf.mxu0
      %v1435 = vadd.f32 %v429, %v1434
      %1436 = vmatmul.bf16.gmra.mxu0 %v681
      %v1437 = vpop.f32.mrf.mxu0
      %v1438 = vadd.f32 %v429, %v1437
      %v1439 = vpop.f32.mrf.mxu0
      %v1440 = vadd.f32 %v429, %v1439
      %1441 = vdwg.mxu0
      %1442 = vmatpush.bf16.msra.mxu0 %v1167
      %1443 = vmatpush.bf16.msra.mxu0 %v1165
      %1444 = vmatpush.bf16.msra.mxu0 %v1163
      %1445 = vmatpush.bf16.msra.mxu0 %v1161
      %1446 = vmatpush.bf16.msra.mxu0 %v1159
      %1447 = vmatpush.bf16.msra.mxu0 %v1157
      %1448 = vmatpush.bf16.msra.mxu0 %v1155
      %1449 = vmatpush.bf16.msra.mxu0 %v1153
      %1450 = vmatmul.bf16.gmra.mxu0 %v626
      %v1451 = vpop.f32.mrf.mxu0
      %v1452 = vadd.f32 %v1403, %v1451
      %v1453 = vpop.f32.mrf.mxu0
      %v1454 = vadd.f32 %v1405, %v1453
      %1455 = vmatmul.bf16.gmra.mxu0 %v634
      %v1456 = vpop.f32.mrf.mxu0
      %v1457 = vadd.f32 %v1408, %v1456
      %v1458 = vpop.f32.mrf.mxu0
      %v1459 = vadd.f32 %v1410, %v1458
      %1460 = vmatmul.bf16.gmra.mxu0 %v642
      %v1461 = vpop.f32.mrf.mxu0
      %v1462 = vadd.f32 %v1413, %v1461
      %v1463 = vpop.f32.mrf.mxu0
      %v1464 = vadd.f32 %v1415, %v1463
      %1465 = vmatmul.bf16.gmra.mxu0 %v650
      %v1466 = vpop.f32.mrf.mxu0
      %v1467 = vadd.f32 %v1418, %v1466
      %v1468 = vpop.f32.mrf.mxu0
      %v1469 = vadd.f32 %v1420, %v1468
      %1470 = vmatmul.bf16.gmra.mxu0 %v658
      %v1471 = vpop.f32.mrf.mxu0
      %v1472 = vadd.f32 %v1423, %v1471
      %v1473 = vpop.f32.mrf.mxu0
      %v1474 = vadd.f32 %v1425, %v1473
      %1475 = vmatmul.bf16.gmra.mxu0 %v666
      %v1476 = vpop.f32.mrf.mxu0
      %v1477 = vadd.f32 %v1428, %v1476
      %v1478 = vpop.f32.mrf.mxu0
      %v1479 = vadd.f32 %v1430, %v1478
      %1480 = vmatmul.bf16.gmra.mxu0 %v674
      %v1481 = vpop.f32.mrf.mxu0
      %v1482 = vadd.f32 %v1433, %v1481
      %v1483 = vpop.f32.mrf.mxu0
      %v1484 = vadd.f32 %v1435, %v1483
      %1485 = vmatmul.bf16.gmra.mxu0 %v682
      %v1486 = vpop.f32.mrf.mxu0
      %v1487 = vadd.f32 %v1438, %v1486
      %v1488 = vpop.f32.mrf.mxu0
      %v1489 = vadd.f32 %v1440, %v1488
      %1490 = vdwg.mxu0
      %1491 = vmatpush.bf16.msra.mxu0 %v1183
      %1492 = vmatpush.bf16.msra.mxu0 %v1181
      %1493 = vmatpush.bf16.msra.mxu0 %v1179
      %1494 = vmatpush.bf16.msra.mxu0 %v1177
      %1495 = vmatpush.bf16.msra.mxu0 %v1175
      %1496 = vmatpush.bf16.msra.mxu0 %v1173
      %1497 = vmatpush.bf16.msra.mxu0 %v1171
      %1498 = vmatpush.bf16.msra.mxu0 %v1169
      %1499 = vmatmul.bf16.gmra.mxu0 %v627
      %v1500 = vpop.f32.mrf.mxu0
      %v1501 = vadd.f32 %v1452, %v1500
      %v1502 = vpop.f32.mrf.mxu0
      %v1503 = vadd.f32 %v1454, %v1502
      %1504 = vmatmul.bf16.gmra.mxu0 %v635
      %v1505 = vpop.f32.mrf.mxu0
      %v1506 = vadd.f32 %v1457, %v1505
      %v1507 = vpop.f32.mrf.mxu0
      %v1508 = vadd.f32 %v1459, %v1507
      %1509 = vmatmul.bf16.gmra.mxu0 %v643
      %v1510 = vpop.f32.mrf.mxu0
      %v1511 = vadd.f32 %v1462, %v1510
      %v1512 = vpop.f32.mrf.mxu0
      %v1513 = vadd.f32 %v1464, %v1512
      %1514 = vmatmul.bf16.gmra.mxu0 %v651
      %v1515 = vpop.f32.mrf.mxu0
      %v1516 = vadd.f32 %v1467, %v1515
      %v1517 = vpop.f32.mrf.mxu0
      %v1518 = vadd.f32 %v1469, %v1517
      %1519 = vmatmul.bf16.gmra.mxu0 %v659
      %v1520 = vpop.f32.mrf.mxu0
      %v1521 = vadd.f32 %v1472, %v1520
      %v1522 = vpop.f32.mrf.mxu0
      %v1523 = vadd.f32 %v1474, %v1522
      %1524 = vmatmul.bf16.gmra.mxu0 %v667
      %v1525 = vpop.f32.mrf.mxu0
      %v1526 = vadd.f32 %v1477, %v1525
      %v1527 = vpop.f32.mrf.mxu0
      %v1528 = vadd.f32 %v1479, %v1527
      %1529 = vmatmul.bf16.gmra.mxu0 %v675
      %v1530 = vpop.f32.mrf.mxu0
      %v1531 = vadd.f32 %v1482, %v1530
      %v1532 = vpop.f32.mrf.mxu0
      %v1533 = vadd.f32 %v1484, %v1532
      %1534 = vmatmul.bf16.gmra.mxu0 %v683
      %v1535 = vpop.f32.mrf.mxu0
      %v1536 = vadd.f32 %v1487, %v1535
      %v1537 = vpop.f32.mrf.mxu0
      %v1538 = vadd.f32 %v1489, %v1537
      %1539 = vdwg.mxu0
      %1540 = vmatpush.bf16.msra.mxu0 %v1199
      %1541 = vmatpush.bf16.msra.mxu0 %v1197
      %1542 = vmatpush.bf16.msra.mxu0 %v1195
      %1543 = vmatpush.bf16.msra.mxu0 %v1193
      %1544 = vmatpush.bf16.msra.mxu0 %v1191
      %1545 = vmatpush.bf16.msra.mxu0 %v1189
      %1546 = vmatpush.bf16.msra.mxu0 %v1187
      %1547 = vmatpush.bf16.msra.mxu0 %v1185
      %1548 = vmatmul.bf16.gmra.mxu0 %v628
      %v1549 = vpop.f32.mrf.mxu0
      %v1550 = vadd.f32 %v1501, %v1549
      %v1551 = vpop.f32.mrf.mxu0
      %v1552 = vadd.f32 %v1503, %v1551
      %1553 = vmatmul.bf16.gmra.mxu0 %v636
      %v1554 = vpop.f32.mrf.mxu0
      %v1555 = vadd.f32 %v1506, %v1554
      %v1556 = vpop.f32.mrf.mxu0
      %v1557 = vadd.f32 %v1508, %v1556
      %1558 = vmatmul.bf16.gmra.mxu0 %v644
      %v1559 = vpop.f32.mrf.mxu0
      %v1560 = vadd.f32 %v1511, %v1559
      %v1561 = vpop.f32.mrf.mxu0
      %v1562 = vadd.f32 %v1513, %v1561
      %1563 = vmatmul.bf16.gmra.mxu0 %v652
      %v1564 = vpop.f32.mrf.mxu0
      %v1565 = vadd.f32 %v1516, %v1564
      %v1566 = vpop.f32.mrf.mxu0
      %v1567 = vadd.f32 %v1518, %v1566
      %1568 = vmatmul.bf16.gmra.mxu0 %v660
      %v1569 = vpop.f32.mrf.mxu0
      %v1570 = vadd.f32 %v1521, %v1569
      %v1571 = vpop.f32.mrf.mxu0
      %v1572 = vadd.f32 %v1523, %v1571
      %1573 = vmatmul.bf16.gmra.mxu0 %v668
      %v1574 = vpop.f32.mrf.mxu0
      %v1575 = vadd.f32 %v1526, %v1574
      %v1576 = vpop.f32.mrf.mxu0
      %v1577 = vadd.f32 %v1528, %v1576
      %1578 = vmatmul.bf16.gmra.mxu0 %v676
      %v1579 = vpop.f32.mrf.mxu0
      %v1580 = vadd.f32 %v1531, %v1579
      %v1581 = vpop.f32.mrf.mxu0
      %v1582 = vadd.f32 %v1533, %v1581
      %1583 = vmatmul.bf16.gmra.mxu0 %v684
      %v1584 = vpop.f32.mrf.mxu0
      %v1585 = vadd.f32 %v1536, %v1584
      %v1586 = vpop.f32.mrf.mxu0
      %v1587 = vadd.f32 %v1538, %v1586
      %1588 = vdwg.mxu0
      %1589 = vmatpush.bf16.msra.mxu0 %v1215
      %1590 = vmatpush.bf16.msra.mxu0 %v1213
      %1591 = vmatpush.bf16.msra.mxu0 %v1211
      %1592 = vmatpush.bf16.msra.mxu0 %v1209
      %1593 = vmatpush.bf16.msra.mxu0 %v1207
      %1594 = vmatpush.bf16.msra.mxu0 %v1205
      %1595 = vmatpush.bf16.msra.mxu0 %v1203
      %1596 = vmatpush.bf16.msra.mxu0 %v1201
      %1597 = vmatmul.bf16.gmra.mxu0 %v629
      %v1598 = vpop.f32.mrf.mxu0
      %v1599 = vadd.f32 %v1550, %v1598
      %v1600 = vpop.f32.mrf.mxu0
      %v1601 = vadd.f32 %v1552, %v1600
      %1602 = vmatmul.bf16.gmra.mxu0 %v637
      %v1603 = vpop.f32.mrf.mxu0
      %v1604 = vadd.f32 %v1555, %v1603
      %v1605 = vpop.f32.mrf.mxu0
      %v1606 = vadd.f32 %v1557, %v1605
      %1607 = vmatmul.bf16.gmra.mxu0 %v645
      %v1608 = vpop.f32.mrf.mxu0
      %v1609 = vadd.f32 %v1560, %v1608
      %v1610 = vpop.f32.mrf.mxu0
      %v1611 = vadd.f32 %v1562, %v1610
      %1612 = vmatmul.bf16.gmra.mxu0 %v653
      %v1613 = vpop.f32.mrf.mxu0
      %v1614 = vadd.f32 %v1565, %v1613
      %v1615 = vpop.f32.mrf.mxu0
      %v1616 = vadd.f32 %v1567, %v1615
      %1617 = vmatmul.bf16.gmra.mxu0 %v661
      %v1618 = vpop.f32.mrf.mxu0
      %v1619 = vadd.f32 %v1570, %v1618
      %v1620 = vpop.f32.mrf.mxu0
      %v1621 = vadd.f32 %v1572, %v1620
      %1622 = vmatmul.bf16.gmra.mxu0 %v669
      %v1623 = vpop.f32.mrf.mxu0
      %v1624 = vadd.f32 %v1575, %v1623
      %v1625 = vpop.f32.mrf.mxu0
      %v1626 = vadd.f32 %v1577, %v1625
      %1627 = vmatmul.bf16.gmra.mxu0 %v677
      %v1628 = vpop.f32.mrf.mxu0
      %v1629 = vadd.f32 %v1580, %v1628
      %v1630 = vpop.f32.mrf.mxu0
      %v1631 = vadd.f32 %v1582, %v1630
      %1632 = vmatmul.bf16.gmra.mxu0 %v685
      %v1633 = vpop.f32.mrf.mxu0
      %v1634 = vadd.f32 %v1585, %v1633
      %v1635 = vpop.f32.mrf.mxu0
      %v1636 = vadd.f32 %v1587, %v1635
      %1637 = vdwg.mxu0
      %1638 = vmatpush.bf16.msra.mxu0 %v1231
      %1639 = vmatpush.bf16.msra.mxu0 %v1229
      %1640 = vmatpush.bf16.msra.mxu0 %v1227
      %1641 = vmatpush.bf16.msra.mxu0 %v1225
      %1642 = vmatpush.bf16.msra.mxu0 %v1223
      %1643 = vmatpush.bf16.msra.mxu0 %v1221
      %1644 = vmatpush.bf16.msra.mxu0 %v1219
      %1645 = vmatpush.bf16.msra.mxu0 %v1217
      %1646 = vmatmul.bf16.gmra.mxu0 %v630
      %v1647 = vpop.f32.mrf.mxu0
      %v1648 = vadd.f32 %v1599, %v1647
      %v1649 = vpop.f32.mrf.mxu0
      %v1650 = vadd.f32 %v1601, %v1649
      %1651 = vmatmul.bf16.gmra.mxu0 %v638
      %v1652 = vpop.f32.mrf.mxu0
      %v1653 = vadd.f32 %v1604, %v1652
      %v1654 = vpop.f32.mrf.mxu0
      %v1655 = vadd.f32 %v1606, %v1654
      %1656 = vmatmul.bf16.gmra.mxu0 %v646
      %v1657 = vpop.f32.mrf.mxu0
      %v1658 = vadd.f32 %v1609, %v1657
      %v1659 = vpop.f32.mrf.mxu0
      %v1660 = vadd.f32 %v1611, %v1659
      %1661 = vmatmul.bf16.gmra.mxu0 %v654
      %v1662 = vpop.f32.mrf.mxu0
      %v1663 = vadd.f32 %v1614, %v1662
      %v1664 = vpop.f32.mrf.mxu0
      %v1665 = vadd.f32 %v1616, %v1664
      %1666 = vmatmul.bf16.gmra.mxu0 %v662
      %v1667 = vpop.f32.mrf.mxu0
      %v1668 = vadd.f32 %v1619, %v1667
      %v1669 = vpop.f32.mrf.mxu0
      %v1670 = vadd.f32 %v1621, %v1669
      %1671 = vmatmul.bf16.gmra.mxu0 %v670
      %v1672 = vpop.f32.mrf.mxu0
      %v1673 = vadd.f32 %v1624, %v1672
      %v1674 = vpop.f32.mrf.mxu0
      %v1675 = vadd.f32 %v1626, %v1674
      %1676 = vmatmul.bf16.gmra.mxu0 %v678
      %v1677 = vpop.f32.mrf.mxu0
      %v1678 = vadd.f32 %v1629, %v1677
      %v1679 = vpop.f32.mrf.mxu0
      %v1680 = vadd.f32 %v1631, %v1679
      %1681 = vmatmul.bf16.gmra.mxu0 %v686
      %v1682 = vpop.f32.mrf.mxu0
      %v1683 = vadd.f32 %v1634, %v1682
      %v1684 = vpop.f32.mrf.mxu0
      %v1685 = vadd.f32 %v1636, %v1684
      %1686 = vdwg.mxu0
      %1687 = vmatpush.bf16.msra.mxu0 %v1247
      %1688 = vmatpush.bf16.msra.mxu0 %v1245
      %1689 = vmatpush.bf16.msra.mxu0 %v1243
      %1690 = vmatpush.bf16.msra.mxu0 %v1241
      %1691 = vmatpush.bf16.msra.mxu0 %v1239
      %1692 = vmatpush.bf16.msra.mxu0 %v1237
      %1693 = vmatpush.bf16.msra.mxu0 %v1235
      %1694 = vmatpush.bf16.msra.mxu0 %v1233
      %1695 = vmatmul.bf16.gmra.mxu0 %v631
      %v1696 = vpop.f32.mrf.mxu0
      %v1697 = vadd.f32 %v1648, %v1696
      %v1698 = vpop.f32.mrf.mxu0
      %v1699 = vadd.f32 %v1650, %v1698
      %1700 = vmatmul.bf16.gmra.mxu0 %v639
      %v1701 = vpop.f32.mrf.mxu0
      %v1702 = vadd.f32 %v1653, %v1701
      %v1703 = vpop.f32.mrf.mxu0
      %v1704 = vadd.f32 %v1655, %v1703
      %1705 = vmatmul.bf16.gmra.mxu0 %v647
      %v1706 = vpop.f32.mrf.mxu0
      %v1707 = vadd.f32 %v1658, %v1706
      %v1708 = vpop.f32.mrf.mxu0
      %v1709 = vadd.f32 %v1660, %v1708
      %1710 = vmatmul.bf16.gmra.mxu0 %v655
      %v1711 = vpop.f32.mrf.mxu0
      %v1712 = vadd.f32 %v1663, %v1711
      %v1713 = vpop.f32.mrf.mxu0
      %v1714 = vadd.f32 %v1665, %v1713
      %1715 = vmatmul.bf16.gmra.mxu0 %v663
      %v1716 = vpop.f32.mrf.mxu0
      %v1717 = vadd.f32 %v1668, %v1716
      %v1718 = vpop.f32.mrf.mxu0
      %v1719 = vadd.f32 %v1670, %v1718
      %1720 = vmatmul.bf16.gmra.mxu0 %v671
      %v1721 = vpop.f32.mrf.mxu0
      %v1722 = vadd.f32 %v1673, %v1721
      %v1723 = vpop.f32.mrf.mxu0
      %v1724 = vadd.f32 %v1675, %v1723
      %1725 = vmatmul.bf16.gmra.mxu0 %v679
      %v1726 = vpop.f32.mrf.mxu0
      %v1727 = vadd.f32 %v1678, %v1726
      %v1728 = vpop.f32.mrf.mxu0
      %v1729 = vadd.f32 %v1680, %v1728
      %1730 = vmatmul.bf16.gmra.mxu0 %v687
      %v1731 = vpop.f32.mrf.mxu0
      %v1732 = vadd.f32 %v1683, %v1731
      %v1733 = vpop.f32.mrf.mxu0
      %v1734 = vadd.f32 %v1685, %v1733
      %1735 = vdwg.mxu0
      %1736 = vmatpush.bf16.msra.mxu0 %v1263
      %1737 = vmatpush.bf16.msra.mxu0 %v1261
      %1738 = vmatpush.bf16.msra.mxu0 %v1259
      %1739 = vmatpush.bf16.msra.mxu0 %v1257
      %1740 = vmatpush.bf16.msra.mxu0 %v1255
      %1741 = vmatpush.bf16.msra.mxu0 %v1253
      %1742 = vmatpush.bf16.msra.mxu0 %v1251
      %1743 = vmatpush.bf16.msra.mxu0 %v1249
      %1744 = vmatmul.bf16.gmra.mxu0 %v632
      %v1745 = vpop.f32.mrf.mxu0
      %v1746 = vadd.f32 %v1697, %v1745
      %v1747 = vpop.f32.mrf.mxu0
      %v1748 = vadd.f32 %v1699, %v1747
      %1749 = vmatmul.bf16.gmra.mxu0 %v640
      %v1750 = vpop.f32.mrf.mxu0
      %v1751 = vadd.f32 %v1702, %v1750
      %v1752 = vpop.f32.mrf.mxu0
      %v1753 = vadd.f32 %v1704, %v1752
      %1754 = vmatmul.bf16.gmra.mxu0 %v648
      %v1755 = vpop.f32.mrf.mxu0
      %v1756 = vadd.f32 %v1707, %v1755
      %v1757 = vpop.f32.mrf.mxu0
      %v1758 = vadd.f32 %v1709, %v1757
      %1759 = vmatmul.bf16.gmra.mxu0 %v656
      %v1760 = vpop.f32.mrf.mxu0
      %v1761 = vadd.f32 %v1712, %v1760
      %v1762 = vpop.f32.mrf.mxu0
      %v1763 = vadd.f32 %v1714, %v1762
      %1764 = vmatmul.bf16.gmra.mxu0 %v664
      %v1765 = vpop.f32.mrf.mxu0
      %v1766 = vadd.f32 %v1717, %v1765
      %v1767 = vpop.f32.mrf.mxu0
      %v1768 = vadd.f32 %v1719, %v1767
      %1769 = vmatmul.bf16.gmra.mxu0 %v672
      %v1770 = vpop.f32.mrf.mxu0
      %v1771 = vadd.f32 %v1722, %v1770
      %v1772 = vpop.f32.mrf.mxu0
      %v1773 = vadd.f32 %v1724, %v1772
      %1774 = vmatmul.bf16.gmra.mxu0 %v680
      %v1775 = vpop.f32.mrf.mxu0
      %v1776 = vadd.f32 %v1727, %v1775
      %v1777 = vpop.f32.mrf.mxu0
      %v1778 = vadd.f32 %v1729, %v1777
      %1779 = vmatmul.bf16.gmra.mxu0 %v688
      %v1780 = vpop.f32.mrf.mxu0
      %v1781 = vadd.f32 %v1732, %v1780
      %v1782 = vpop.f32.mrf.mxu0
      %v1783 = vadd.f32 %v1734, %v1782
      %1784 = vdwg.mxu0
      %1785 = vmatpush.bf16.msra.mxu0 %v1152
      %1786 = vmatpush.bf16.msra.mxu0 %v1150
      %1787 = vmatpush.bf16.msra.mxu0 %v1148
      %1788 = vmatpush.bf16.msra.mxu0 %v1146
      %1789 = vmatpush.bf16.msra.mxu0 %v1144
      %1790 = vmatpush.bf16.msra.mxu0 %v1142
      %1791 = vmatpush.bf16.msra.mxu0 %v1140
      %1792 = vmatpush.bf16.msra.mxu0 %v1138
      %1793 = vmatmul.bf16.gmra.mxu0 %v625
      %v1794 = vpop.f32.mrf.mxu0
      %v1795 = vadd.f32 %v430, %v1794
      %v1796 = vpop.f32.mrf.mxu0
      %v1797 = vadd.f32 %v430, %v1796
      %1798 = vmatmul.bf16.gmra.mxu0 %v633
      %v1799 = vpop.f32.mrf.mxu0
      %v1800 = vadd.f32 %v430, %v1799
      %v1801 = vpop.f32.mrf.mxu0
      %v1802 = vadd.f32 %v430, %v1801
      %1803 = vmatmul.bf16.gmra.mxu0 %v641
      %v1804 = vpop.f32.mrf.mxu0
      %v1805 = vadd.f32 %v430, %v1804
      %v1806 = vpop.f32.mrf.mxu0
      %v1807 = vadd.f32 %v430, %v1806
      %1808 = vmatmul.bf16.gmra.mxu0 %v649
      %v1809 = vpop.f32.mrf.mxu0
      %v1810 = vadd.f32 %v430, %v1809
      %v1811 = vpop.f32.mrf.mxu0
      %v1812 = vadd.f32 %v430, %v1811
      %1813 = vmatmul.bf16.gmra.mxu0 %v657
      %v1814 = vpop.f32.mrf.mxu0
      %v1815 = vadd.f32 %v430, %v1814
      %v1816 = vpop.f32.mrf.mxu0
      %v1817 = vadd.f32 %v430, %v1816
      %1818 = vmatmul.bf16.gmra.mxu0 %v665
      %v1819 = vpop.f32.mrf.mxu0
      %v1820 = vadd.f32 %v430, %v1819
      %v1821 = vpop.f32.mrf.mxu0
      %v1822 = vadd.f32 %v430, %v1821
      %1823 = vmatmul.bf16.gmra.mxu0 %v673
      %v1824 = vpop.f32.mrf.mxu0
      %v1825 = vadd.f32 %v430, %v1824
      %v1826 = vpop.f32.mrf.mxu0
      %v1827 = vadd.f32 %v430, %v1826
      %1828 = vmatmul.bf16.gmra.mxu0 %v681
      %v1829 = vpop.f32.mrf.mxu0
      %v1830 = vadd.f32 %v430, %v1829
      %v1831 = vpop.f32.mrf.mxu0
      %v1832 = vadd.f32 %v430, %v1831
      %1833 = vdwg.mxu0
      %1834 = vmatpush.bf16.msra.mxu0 %v1168
      %1835 = vmatpush.bf16.msra.mxu0 %v1166
      %1836 = vmatpush.bf16.msra.mxu0 %v1164
      %1837 = vmatpush.bf16.msra.mxu0 %v1162
      %1838 = vmatpush.bf16.msra.mxu0 %v1160
      %1839 = vmatpush.bf16.msra.mxu0 %v1158
      %1840 = vmatpush.bf16.msra.mxu0 %v1156
      %1841 = vmatpush.bf16.msra.mxu0 %v1154
      %1842 = vmatmul.bf16.gmra.mxu0 %v626
      %v1843 = vpop.f32.mrf.mxu0
      %v1844 = vadd.f32 %v1795, %v1843
      %v1845 = vpop.f32.mrf.mxu0
      %v1846 = vadd.f32 %v1797, %v1845
      %1847 = vmatmul.bf16.gmra.mxu0 %v634
      %v1848 = vpop.f32.mrf.mxu0
      %v1849 = vadd.f32 %v1800, %v1848
      %v1850 = vpop.f32.mrf.mxu0
      %v1851 = vadd.f32 %v1802, %v1850
      %1852 = vmatmul.bf16.gmra.mxu0 %v642
      %v1853 = vpop.f32.mrf.mxu0
      %v1854 = vadd.f32 %v1805, %v1853
      %v1855 = vpop.f32.mrf.mxu0
      %v1856 = vadd.f32 %v1807, %v1855
      %1857 = vmatmul.bf16.gmra.mxu0 %v650
      %v1858 = vpop.f32.mrf.mxu0
      %v1859 = vadd.f32 %v1810, %v1858
      %v1860 = vpop.f32.mrf.mxu0
      %v1861 = vadd.f32 %v1812, %v1860
      %1862 = vmatmul.bf16.gmra.mxu0 %v658
      %v1863 = vpop.f32.mrf.mxu0
      %v1864 = vadd.f32 %v1815, %v1863
      %v1865 = vpop.f32.mrf.mxu0
      %v1866 = vadd.f32 %v1817, %v1865
      %1867 = vmatmul.bf16.gmra.mxu0 %v666
      %v1868 = vpop.f32.mrf.mxu0
      %v1869 = vadd.f32 %v1820, %v1868
      %v1870 = vpop.f32.mrf.mxu0
      %v1871 = vadd.f32 %v1822, %v1870
      %1872 = vmatmul.bf16.gmra.mxu0 %v674
      %v1873 = vpop.f32.mrf.mxu0
      %v1874 = vadd.f32 %v1825, %v1873
      %v1875 = vpop.f32.mrf.mxu0
      %v1876 = vadd.f32 %v1827, %v1875
      %1877 = vmatmul.bf16.gmra.mxu0 %v682
      %v1878 = vpop.f32.mrf.mxu0
      %v1879 = vadd.f32 %v1830, %v1878
      %v1880 = vpop.f32.mrf.mxu0
      %v1881 = vadd.f32 %v1832, %v1880
      %1882 = vdwg.mxu0
      %1883 = vmatpush.bf16.msra.mxu0 %v1184
      %1884 = vmatpush.bf16.msra.mxu0 %v1182
      %1885 = vmatpush.bf16.msra.mxu0 %v1180
      %1886 = vmatpush.bf16.msra.mxu0 %v1178
      %1887 = vmatpush.bf16.msra.mxu0 %v1176
      %1888 = vmatpush.bf16.msra.mxu0 %v1174
      %1889 = vmatpush.bf16.msra.mxu0 %v1172
      %1890 = vmatpush.bf16.msra.mxu0 %v1170
      %1891 = vmatmul.bf16.gmra.mxu0 %v627
      %v1892 = vpop.f32.mrf.mxu0
      %v1893 = vadd.f32 %v1844, %v1892
      %v1894 = vpop.f32.mrf.mxu0
      %v1895 = vadd.f32 %v1846, %v1894
      %1896 = vmatmul.bf16.gmra.mxu0 %v635
      %v1897 = vpop.f32.mrf.mxu0
      %v1898 = vadd.f32 %v1849, %v1897
      %v1899 = vpop.f32.mrf.mxu0
      %v1900 = vadd.f32 %v1851, %v1899
      %1901 = vmatmul.bf16.gmra.mxu0 %v643
      %v1902 = vpop.f32.mrf.mxu0
      %v1903 = vadd.f32 %v1854, %v1902
      %v1904 = vpop.f32.mrf.mxu0
      %v1905 = vadd.f32 %v1856, %v1904
      %1906 = vmatmul.bf16.gmra.mxu0 %v651
      %v1907 = vpop.f32.mrf.mxu0
      %v1908 = vadd.f32 %v1859, %v1907
      %v1909 = vpop.f32.mrf.mxu0
      %v1910 = vadd.f32 %v1861, %v1909
      %1911 = vmatmul.bf16.gmra.mxu0 %v659
      %v1912 = vpop.f32.mrf.mxu0
      %v1913 = vadd.f32 %v1864, %v1912
      %v1914 = vpop.f32.mrf.mxu0
      %v1915 = vadd.f32 %v1866, %v1914
      %1916 = vmatmul.bf16.gmra.mxu0 %v667
      %v1917 = vpop.f32.mrf.mxu0
      %v1918 = vadd.f32 %v1869, %v1917
      %v1919 = vpop.f32.mrf.mxu0
      %v1920 = vadd.f32 %v1871, %v1919
      %1921 = vmatmul.bf16.gmra.mxu0 %v675
      %v1922 = vpop.f32.mrf.mxu0
      %v1923 = vadd.f32 %v1874, %v1922
      %v1924 = vpop.f32.mrf.mxu0
      %v1925 = vadd.f32 %v1876, %v1924
      %1926 = vmatmul.bf16.gmra.mxu0 %v683
      %v1927 = vpop.f32.mrf.mxu0
      %v1928 = vadd.f32 %v1879, %v1927
      %v1929 = vpop.f32.mrf.mxu0
      %v1930 = vadd.f32 %v1881, %v1929
      %1931 = vdwg.mxu0
      %1932 = vmatpush.bf16.msra.mxu0 %v1200
      %1933 = vmatpush.bf16.msra.mxu0 %v1198
      %1934 = vmatpush.bf16.msra.mxu0 %v1196
      %1935 = vmatpush.bf16.msra.mxu0 %v1194
      %1936 = vmatpush.bf16.msra.mxu0 %v1192
      %1937 = vmatpush.bf16.msra.mxu0 %v1190
      %1938 = vmatpush.bf16.msra.mxu0 %v1188
      %1939 = vmatpush.bf16.msra.mxu0 %v1186
      %1940 = vmatmul.bf16.gmra.mxu0 %v628
      %v1941 = vpop.f32.mrf.mxu0
      %v1942 = vadd.f32 %v1893, %v1941
      %v1943 = vpop.f32.mrf.mxu0
      %v1944 = vadd.f32 %v1895, %v1943
      %1945 = vmatmul.bf16.gmra.mxu0 %v636
      %v1946 = vpop.f32.mrf.mxu0
      %v1947 = vadd.f32 %v1898, %v1946
      %v1948 = vpop.f32.mrf.mxu0
      %v1949 = vadd.f32 %v1900, %v1948
      %1950 = vmatmul.bf16.gmra.mxu0 %v644
      %v1951 = vpop.f32.mrf.mxu0
      %v1952 = vadd.f32 %v1903, %v1951
      %v1953 = vpop.f32.mrf.mxu0
      %v1954 = vadd.f32 %v1905, %v1953
      %1955 = vmatmul.bf16.gmra.mxu0 %v652
      %v1956 = vpop.f32.mrf.mxu0
      %v1957 = vadd.f32 %v1908, %v1956
      %v1958 = vpop.f32.mrf.mxu0
      %v1959 = vadd.f32 %v1910, %v1958
      %1960 = vmatmul.bf16.gmra.mxu0 %v660
      %v1961 = vpop.f32.mrf.mxu0
      %v1962 = vadd.f32 %v1913, %v1961
      %v1963 = vpop.f32.mrf.mxu0
      %v1964 = vadd.f32 %v1915, %v1963
      %1965 = vmatmul.bf16.gmra.mxu0 %v668
      %v1966 = vpop.f32.mrf.mxu0
      %v1967 = vadd.f32 %v1918, %v1966
      %v1968 = vpop.f32.mrf.mxu0
      %v1969 = vadd.f32 %v1920, %v1968
      %1970 = vmatmul.bf16.gmra.mxu0 %v676
      %v1971 = vpop.f32.mrf.mxu0
      %v1972 = vadd.f32 %v1923, %v1971
      %v1973 = vpop.f32.mrf.mxu0
      %v1974 = vadd.f32 %v1925, %v1973
      %1975 = vmatmul.bf16.gmra.mxu0 %v684
      %v1976 = vpop.f32.mrf.mxu0
      %v1977 = vadd.f32 %v1928, %v1976
      %v1978 = vpop.f32.mrf.mxu0
      %v1979 = vadd.f32 %v1930, %v1978
      %1980 = vdwg.mxu0
      %1981 = vmatpush.bf16.msra.mxu0 %v1216
      %1982 = vmatpush.bf16.msra.mxu0 %v1214
      %1983 = vmatpush.bf16.msra.mxu0 %v1212
      %1984 = vmatpush.bf16.msra.mxu0 %v1210
      %1985 = vmatpush.bf16.msra.mxu0 %v1208
      %1986 = vmatpush.bf16.msra.mxu0 %v1206
      %1987 = vmatpush.bf16.msra.mxu0 %v1204
      %1988 = vmatpush.bf16.msra.mxu0 %v1202
      %1989 = vmatmul.bf16.gmra.mxu0 %v629
      %v1990 = vpop.f32.mrf.mxu0
      %v1991 = vadd.f32 %v1942, %v1990
      %v1992 = vpop.f32.mrf.mxu0
      %v1993 = vadd.f32 %v1944, %v1992
      %1994 = vmatmul.bf16.gmra.mxu0 %v637
      %v1995 = vpop.f32.mrf.mxu0
      %v1996 = vadd.f32 %v1947, %v1995
      %v1997 = vpop.f32.mrf.mxu0
      %v1998 = vadd.f32 %v1949, %v1997
      %1999 = vmatmul.bf16.gmra.mxu0 %v645
      %v2000 = vpop.f32.mrf.mxu0
      %v2001 = vadd.f32 %v1952, %v2000
      %v2002 = vpop.f32.mrf.mxu0
      %v2003 = vadd.f32 %v1954, %v2002
      %2004 = vmatmul.bf16.gmra.mxu0 %v653
      %v2005 = vpop.f32.mrf.mxu0
      %v2006 = vadd.f32 %v1957, %v2005
      %v2007 = vpop.f32.mrf.mxu0
      %v2008 = vadd.f32 %v1959, %v2007
      %2009 = vmatmul.bf16.gmra.mxu0 %v661
      %v2010 = vpop.f32.mrf.mxu0
      %v2011 = vadd.f32 %v1962, %v2010
      %v2012 = vpop.f32.mrf.mxu0
      %v2013 = vadd.f32 %v1964, %v2012
      %2014 = vmatmul.bf16.gmra.mxu0 %v669
      %v2015 = vpop.f32.mrf.mxu0
      %v2016 = vadd.f32 %v1967, %v2015
      %v2017 = vpop.f32.mrf.mxu0
      %v2018 = vadd.f32 %v1969, %v2017
      %2019 = vmatmul.bf16.gmra.mxu0 %v677
      %v2020 = vpop.f32.mrf.mxu0
      %v2021 = vadd.f32 %v1972, %v2020
      %v2022 = vpop.f32.mrf.mxu0
      %v2023 = vadd.f32 %v1974, %v2022
      %2024 = vmatmul.bf16.gmra.mxu0 %v685
      %v2025 = vpop.f32.mrf.mxu0
      %v2026 = vadd.f32 %v1977, %v2025
      %v2027 = vpop.f32.mrf.mxu0
      %v2028 = vadd.f32 %v1979, %v2027
      %2029 = vdwg.mxu0
      %2030 = vmatpush.bf16.msra.mxu0 %v1232
      %2031 = vmatpush.bf16.msra.mxu0 %v1230
      %2032 = vmatpush.bf16.msra.mxu0 %v1228
      %2033 = vmatpush.bf16.msra.mxu0 %v1226
      %2034 = vmatpush.bf16.msra.mxu0 %v1224
      %2035 = vmatpush.bf16.msra.mxu0 %v1222
      %2036 = vmatpush.bf16.msra.mxu0 %v1220
      %2037 = vmatpush.bf16.msra.mxu0 %v1218
      %2038 = vmatmul.bf16.gmra.mxu0 %v630
      %v2039 = vpop.f32.mrf.mxu0
      %v2040 = vadd.f32 %v1991, %v2039
      %v2041 = vpop.f32.mrf.mxu0
      %v2042 = vadd.f32 %v1993, %v2041
      %2043 = vmatmul.bf16.gmra.mxu0 %v638
      %v2044 = vpop.f32.mrf.mxu0
      %v2045 = vadd.f32 %v1996, %v2044
      %v2046 = vpop.f32.mrf.mxu0
      %v2047 = vadd.f32 %v1998, %v2046
      %2048 = vmatmul.bf16.gmra.mxu0 %v646
      %v2049 = vpop.f32.mrf.mxu0
      %v2050 = vadd.f32 %v2001, %v2049
      %v2051 = vpop.f32.mrf.mxu0
      %v2052 = vadd.f32 %v2003, %v2051
      %2053 = vmatmul.bf16.gmra.mxu0 %v654
      %v2054 = vpop.f32.mrf.mxu0
      %v2055 = vadd.f32 %v2006, %v2054
      %v2056 = vpop.f32.mrf.mxu0
      %v2057 = vadd.f32 %v2008, %v2056
      %2058 = vmatmul.bf16.gmra.mxu0 %v662
      %v2059 = vpop.f32.mrf.mxu0
      %v2060 = vadd.f32 %v2011, %v2059
      %v2061 = vpop.f32.mrf.mxu0
      %v2062 = vadd.f32 %v2013, %v2061
      %2063 = vmatmul.bf16.gmra.mxu0 %v670
      %v2064 = vpop.f32.mrf.mxu0
      %v2065 = vadd.f32 %v2016, %v2064
      %v2066 = vpop.f32.mrf.mxu0
      %v2067 = vadd.f32 %v2018, %v2066
      %2068 = vmatmul.bf16.gmra.mxu0 %v678
      %v2069 = vpop.f32.mrf.mxu0
      %v2070 = vadd.f32 %v2021, %v2069
      %v2071 = vpop.f32.mrf.mxu0
      %v2072 = vadd.f32 %v2023, %v2071
      %2073 = vmatmul.bf16.gmra.mxu0 %v686
      %v2074 = vpop.f32.mrf.mxu0
      %v2075 = vadd.f32 %v2026, %v2074
      %v2076 = vpop.f32.mrf.mxu0
      %v2077 = vadd.f32 %v2028, %v2076
      %2078 = vdwg.mxu0
      %2079 = vmatpush.bf16.msra.mxu0 %v1248
      %2080 = vmatpush.bf16.msra.mxu0 %v1246
      %2081 = vmatpush.bf16.msra.mxu0 %v1244
      %2082 = vmatpush.bf16.msra.mxu0 %v1242
      %2083 = vmatpush.bf16.msra.mxu0 %v1240
      %2084 = vmatpush.bf16.msra.mxu0 %v1238
      %2085 = vmatpush.bf16.msra.mxu0 %v1236
      %2086 = vmatpush.bf16.msra.mxu0 %v1234
      %2087 = vmatmul.bf16.gmra.mxu0 %v631
      %v2088 = vpop.f32.mrf.mxu0
      %v2089 = vadd.f32 %v2040, %v2088
      %v2090 = vpop.f32.mrf.mxu0
      %v2091 = vadd.f32 %v2042, %v2090
      %2092 = vmatmul.bf16.gmra.mxu0 %v639
      %v2093 = vpop.f32.mrf.mxu0
      %v2094 = vadd.f32 %v2045, %v2093
      %v2095 = vpop.f32.mrf.mxu0
      %v2096 = vadd.f32 %v2047, %v2095
      %2097 = vmatmul.bf16.gmra.mxu0 %v647
      %v2098 = vpop.f32.mrf.mxu0
      %v2099 = vadd.f32 %v2050, %v2098
      %v2100 = vpop.f32.mrf.mxu0
      %v2101 = vadd.f32 %v2052, %v2100
      %2102 = vmatmul.bf16.gmra.mxu0 %v655
      %v2103 = vpop.f32.mrf.mxu0
      %v2104 = vadd.f32 %v2055, %v2103
      %v2105 = vpop.f32.mrf.mxu0
      %v2106 = vadd.f32 %v2057, %v2105
      %2107 = vmatmul.bf16.gmra.mxu0 %v663
      %v2108 = vpop.f32.mrf.mxu0
      %v2109 = vadd.f32 %v2060, %v2108
      %v2110 = vpop.f32.mrf.mxu0
      %v2111 = vadd.f32 %v2062, %v2110
      %2112 = vmatmul.bf16.gmra.mxu0 %v671
      %v2113 = vpop.f32.mrf.mxu0
      %v2114 = vadd.f32 %v2065, %v2113
      %v2115 = vpop.f32.mrf.mxu0
      %v2116 = vadd.f32 %v2067, %v2115
      %2117 = vmatmul.bf16.gmra.mxu0 %v679
      %v2118 = vpop.f32.mrf.mxu0
      %v2119 = vadd.f32 %v2070, %v2118
      %v2120 = vpop.f32.mrf.mxu0
      %v2121 = vadd.f32 %v2072, %v2120
      %2122 = vmatmul.bf16.gmra.mxu0 %v687
      %v2123 = vpop.f32.mrf.mxu0
      %v2124 = vadd.f32 %v2075, %v2123
      %v2125 = vpop.f32.mrf.mxu0
      %v2126 = vadd.f32 %v2077, %v2125
      %2127 = vdwg.mxu0
      %2128 = vmatpush.bf16.msra.mxu0 %v1264
      %2129 = vmatpush.bf16.msra.mxu0 %v1262
      %2130 = vmatpush.bf16.msra.mxu0 %v1260
      %2131 = vmatpush.bf16.msra.mxu0 %v1258
      %2132 = vmatpush.bf16.msra.mxu0 %v1256
      %2133 = vmatpush.bf16.msra.mxu0 %v1254
      %2134 = vmatpush.bf16.msra.mxu0 %v1252
      %2135 = vmatpush.bf16.msra.mxu0 %v1250
      %2136 = vmatmul.bf16.gmra.mxu0 %v632
      %v2137 = vpop.f32.mrf.mxu0
      %v2138 = vadd.f32 %v2089, %v2137
      %v2139 = vpop.f32.mrf.mxu0
      %v2140 = vadd.f32 %v2091, %v2139
      %2141 = vmatmul.bf16.gmra.mxu0 %v640
      %v2142 = vpop.f32.mrf.mxu0
      %v2143 = vadd.f32 %v2094, %v2142
      %v2144 = vpop.f32.mrf.mxu0
      %v2145 = vadd.f32 %v2096, %v2144
      %2146 = vmatmul.bf16.gmra.mxu0 %v648
      %v2147 = vpop.f32.mrf.mxu0
      %v2148 = vadd.f32 %v2099, %v2147
      %v2149 = vpop.f32.mrf.mxu0
      %v2150 = vadd.f32 %v2101, %v2149
      %2151 = vmatmul.bf16.gmra.mxu0 %v656
      %v2152 = vpop.f32.mrf.mxu0
      %v2153 = vadd.f32 %v2104, %v2152
      %v2154 = vpop.f32.mrf.mxu0
      %v2155 = vadd.f32 %v2106, %v2154
      %2156 = vmatmul.bf16.gmra.mxu0 %v664
      %v2157 = vpop.f32.mrf.mxu0
      %v2158 = vadd.f32 %v2109, %v2157
      %v2159 = vpop.f32.mrf.mxu0
      %v2160 = vadd.f32 %v2111, %v2159
      %2161 = vmatmul.bf16.gmra.mxu0 %v672
      %v2162 = vpop.f32.mrf.mxu0
      %v2163 = vadd.f32 %v2114, %v2162
      %v2164 = vpop.f32.mrf.mxu0
      %v2165 = vadd.f32 %v2116, %v2164
      %2166 = vmatmul.bf16.gmra.mxu0 %v680
      %v2167 = vpop.f32.mrf.mxu0
      %v2168 = vadd.f32 %v2119, %v2167
      %v2169 = vpop.f32.mrf.mxu0
      %v2170 = vadd.f32 %v2121, %v2169
      %2171 = vmatmul.bf16.gmra.mxu0 %v688
      %v2172 = vpop.f32.mrf.mxu0
      %v2173 = vadd.f32 %v2124, %v2172
      %v2174 = vpop.f32.mrf.mxu0
      %v2175 = vadd.f32 %v2126, %v2174
      %2176 = vdwg.mxu0
      %v2177 = vmax.f32 %v1746, 0.0
      %v2178 = vmax.f32 %v2138, 0.0
      %v2179 = vmax.f32 %v1748, 0.0
      %v2180 = vmax.f32 %v2140, 0.0
      %v2181 = vmax.f32 %v1751, 0.0
      %v2182 = vmax.f32 %v2143, 0.0
      %v2183 = vmax.f32 %v1753, 0.0
      %v2184 = vmax.f32 %v2145, 0.0
      %v2185 = vmax.f32 %v1756, 0.0
      %v2186 = vmax.f32 %v2148, 0.0
      %v2187 = vmax.f32 %v1758, 0.0
      %v2188 = vmax.f32 %v2150, 0.0
      %v2189 = vmax.f32 %v1761, 0.0
      %v2190 = vmax.f32 %v2153, 0.0
      %v2191 = vmax.f32 %v1763, 0.0
      %v2192 = vmax.f32 %v2155, 0.0
      %v2193 = vmax.f32 %v1766, 0.0
      %v2194 = vmax.f32 %v2158, 0.0
      %v2195 = vmax.f32 %v1768, 0.0
      %v2196 = vmax.f32 %v2160, 0.0
      %v2197 = vmax.f32 %v1771, 0.0
      %v2198 = vmax.f32 %v2163, 0.0
      %v2199 = vmax.f32 %v1773, 0.0
      %v2200 = vmax.f32 %v2165, 0.0
      %v2201 = vmax.f32 %v1776, 0.0
      %v2202 = vmax.f32 %v2168, 0.0
      %v2203 = vmax.f32 %v1778, 0.0
      %v2204 = vmax.f32 %v2170, 0.0
      %v2205 = vmax.f32 %v1781, 0.0
      %v2206 = vmax.f32 %v2173, 0.0
      %v2207 = vmax.f32 %v1783, 0.0
      %v2208 = vmax.f32 %v2175, 0.0
      %v2209 = vpack.c.bf16 %v2178, %v2177
      %v2210 = vpack.c.bf16 %v2180, %v2179
      %v2211 = vpack.c.bf16 %v2182, %v2181
      %v2212 = vpack.c.bf16 %v2184, %v2183
      %v2213 = vpack.c.bf16 %v2186, %v2185
      %v2214 = vpack.c.bf16 %v2188, %v2187
      %v2215 = vpack.c.bf16 %v2190, %v2189
      %v2216 = vpack.c.bf16 %v2192, %v2191
      %v2217 = vpack.c.bf16 %v2194, %v2193
      %v2218 = vpack.c.bf16 %v2196, %v2195
      %v2219 = vpack.c.bf16 %v2198, %v2197
      %v2220 = vpack.c.bf16 %v2200, %v2199
      %v2221 = vpack.c.bf16 %v2202, %v2201
      %v2222 = vpack.c.bf16 %v2204, %v2203
      %v2223 = vpack.c.bf16 %v2206, %v2205
      %v2224 = vpack.c.bf16 %v2208, %v2207
      %2225 = vst [vmem:[%s233] sm:$0xff] %v2209
      %2226 = vst [vmem:[%s233 + $0x8] sm:$0xff] %v2210
      %2227 = vst [vmem:[%s233 + $0x10] sm:$0xff] %v2211
      %2228 = vst [vmem:[%s233 + $0x18] sm:$0xff] %v2212
      %2229 = vst [vmem:[%s233 + $0x20] sm:$0xff] %v2213
      %2230 = vst [vmem:[%s233 + $0x28] sm:$0xff] %v2214
      %2231 = vst [vmem:[%s233 + $0x30] sm:$0xff] %v2215
      %2232 = vst [vmem:[%s233 + $0x38] sm:$0xff] %v2216
      %2233 = vst [vmem:[%s233 + $0x40] sm:$0xff] %v2217
      %2234 = vst [vmem:[%s233 + $0x48] sm:$0xff] %v2218
      %2235 = vst [vmem:[%s233 + $0x50] sm:$0xff] %v2219
      %2236 = vst [vmem:[%s233 + $0x58] sm:$0xff] %v2220
      %2237 = vst [vmem:[%s233 + $0x60] sm:$0xff] %v2221
      %2238 = vst [vmem:[%s233 + $0x68] sm:$0xff] %v2222
      %2239 = vst [vmem:[%s233 + $0x70] sm:$0xff] %v2223
      %2240 = vst [vmem:[%s233 + $0x78] sm:$0xff] %v2224
      %s2241 = smul.u32 16, %s19
      %p2242 = scmp.lt.s32.totalorder %s18, 3
      %s2243 = scalar_select %p2242, %s18, 3
      %p2244 = scmp.lt.s32.totalorder %s2241, 15
      %s2245 = scalar_select %p2244, %s2241, 15
      %s2246 = smul.addr %s2245, 2
      %s2247 = smul.addr %s2243, 32
      %s2248 = sadd.s32 %s2246, %s2247
      %s2249 = smul.addr %s2248, 4
      %s2250 = scalar_lea.vmem %s3, %s2249
      // Predicated region
      $region33: #{km3d_core_head.4} parent=31 // pred_check
        %p2251 = pneg %p121
      $region34: #{km3d_core_head.4} parent=31 // pred_check_branch
        %2253 = sbr.rel (%p2251) target = $region36
      $region35: #{km3d_core_head.4} parent=31 // pred_region
        %s2254 = smul.u32 16, %s19
      $region36: #{km3d_core_head.4} parent=31 // pred_fallthru
        _
    $region32: #{km3d_core_head.4} parent=5 // pred_fallthru
      _
    %p2255 = scmp.le.s32.totalorder 2, %s9
    // Predicated region
    $region37: #{km3d_core_head.4} parent=5 // pred_check
      %p2256 = pneg %p2255
    $region38: #{km3d_core_head.4} parent=5 // pred_check_branch
      %2258 = sbr.rel (%p2256) target = $region40
    $region39: #{km3d_core_head.4} parent=5 // pred_region
      %s2259 = ssub.s32 %s9, 2
      // Predicated region
      $region41: #{km3d_core_head.4} parent=39 // pred_check
        %p2260 = pneg %p127
      $region42: #{km3d_core_head.4} parent=39 // pred_check_branch
        %2262 = sbr.rel (%p2260) target = $region44
      $region43: #{km3d_core_head.4} parent=39 // pred_region
        %s2263 = smul.u32 16, %s21
        %p2264 = scmp.lt.s32.totalorder %s20, 3
        %s2265 = scalar_select %p2264, %s20, 3
        %p2266 = scmp.lt.s32.totalorder %s2263, 15
        %s2267 = scalar_select %p2266, %s2263, 15
        %s2268 = smul.addr %s2267, 2
        %s2269 = smul.addr %s2265, 32
        %s2270 = sadd.s32 %s2268, %s2269
        %s2271 = smul.addr %s2270, 4
        %s2272 = scalar_lea.vmem %s3, %s2271
      $region44: #{km3d_core_head.4} parent=39 // pred_fallthru
        _
    $region40: #{km3d_core_head.4} parent=5 // pred_fallthru
      _
  $region6: #{km3d_core_head.4} parent=0 // loop_footer
    %s13 = sadd.s32 1, %s9
  $region7: #{km3d_core_head.4} parent=0 // loop_footer_branch
    %8 = sbr.rel target = $region3
  $region8: #{km3d_core_head.4} parent=0 // loop_exit
    _

// kernel: km3d_core_head.5
$region0: #{km3d_core_head.5}
  #allocation0 [shape = 'u32[]', space=smem, size = 0x4, offset = 0x4, fixed_abs, tag = 'smem constant byte address 0x4 - core index']
  #allocation1 [shape = 'u32[72,128]{1,0:T(1,128)}', space=vmem, size = 0x9000, scoped, tag = 'internal scratch']
  %s0 = inlined_call_operand.vmem [shape: bf16[4,512,1024], index: 0, kind: input, shape index: {}]
  %s1 = inlined_call_operand.vmem [shape: bf16[4,1024,256], index: 1, kind: input, shape index: {}]
  %s2 = inlined_call_operand.vmem [shape: f32[1,256], index: 2, kind: input, shape index: {}]
  %s3 = inlined_call_operand.vmem [shape: f32[4,512,256], index: 3, kind: output, shape index: {}]
  %s4 = sld [smem:[#allocation0]]
  $region45: #{km3d_core_head.5} parent=0
    _
  %s6 = ssub.s32 1, %s4
  %s7 = scalar_select 0, %s6, %s4
  loop: start=0, step=1, limit=10
  $region2: #{km3d_core_head.5} parent=0 // loop_pre_header
    _
  $region3: #{km3d_core_head.5} parent=0 // loop_header
    %s9 = sphi 0, %s13
    %p10 = scmp.ge.s32.totalorder %s9, 10
    %s16 = sphi 0, %s28
    %s17 = sphi 0, %s24
    %s18 = sphi 0, %s16
    %s19 = sphi 0, %s17
    %s20 = sphi 0, %s18
    %s21 = sphi 0, %s19
    %s33 = sphi 0, %s35
    %s36 = sphi 0, %s33
    %s37 = sphi 0, %s36
    %s53 = sphi 0, %s37
    %s59 = sphi 0, %s61
    %s62 = sphi 0, %s59
    %s63 = sphi 0, %s62
    %s79 = sphi 0, %s63
    %s83 = sphi 0, %s83
    %s85 = sphi 0, %s83
    %s86 = sphi 0, %s85
    %s100 = sphi 0, %s86
    %s108 = sphi 0, %s110
    %s111 = sphi 0, %s108
    %s112 = sphi 0, %s111
    %s128 = sphi 0, %s112
  $region4: #{km3d_core_head.5} parent=0 // loop_header_branch
    %12 = sbr.rel (%p10) target = $region8
  $region5: #{km3d_core_head.5} parent=0 // loop_body
    %s14 = ssub.s32 %s9, 1
    %s15 = ssub.s32 %s9, 2
    %s22 = sadd.s32 1, %s17
    %p23 = scmp.ge.s32.totalorder %s22, 2
    %s24 = scalar_select %p23, 0, %s22
    %s25 = sadd.s32 1, %s16
    %s26 = scalar_select %p23, %s25, %s16
    %p27 = scmp.ge.s32.totalorder %s26, 4
    %s28 = scalar_select %p27, 0, %s26
    %s29 = ssub.s32 %s16, %s28
    %s30 = ssub.s32 %s17, %s24
    %s31 = sor.u32 %s29, %s30
    %p32 = scmp.eq.s32.totalorder %s31, 0
    %s34 = sadd.s32 %s33, 1
    %s35 = scalar_select %p32, %s33, %s34
    %p38 = pneg %p32
    %p39 = scmp.eq.s32.totalorder %s9, 7
    %p40 = por %p38, %p39
    %p41 = scmp.ne.s32.totalorder %s33, %s36
    %p42 = scmp.eq.s32.totalorder %s9, 0
    %p43 = por %p41, %p42
    %p44 = scmp.ne.s32.totalorder %s33, %s36
    %p45 = scmp.eq.s32.totalorder %s14, 7
    %p46 = por %p44, %p45
    %p47 = scmp.ne.s32.totalorder %s36, %s37
    %p48 = scmp.eq.s32.totalorder %s14, 0
    %p49 = por %p47, %p48
    %p50 = scmp.ne.s32.totalorder %s36, %s37
    %p51 = scmp.eq.s32.totalorder %s15, 7
    %p52 = por %p50, %p51
    %p54 = scmp.ne.s32.totalorder %s37, %s53
    %p55 = scmp.eq.s32.totalorder %s15, 0
    %p56 = por %p54, %p55
    %s57 = ssub.s32 %s16, %s28
    %p58 = scmp.eq.s32.totalorder %s57, 0
    %s60 = sadd.s32 %s59, 1
    %s61 = scalar_select %p58, %s59, %s60
    %p64 = pneg %p58
    %p65 = scmp.eq.s32.totalorder %s9, 7
    %p66 = por %p64, %p65
    %p67 = scmp.ne.s32.totalorder %s59, %s62
    %p68 = scmp.eq.s32.totalorder %s9, 0
    %p69 = por %p67, %p68
    %p70 = scmp.ne.s32.totalorder %s59, %s62
    %p71 = scmp.eq.s32.totalorder %s14, 7
    %p72 = por %p70, %p71
    %p73 = scmp.ne.s32.totalorder %s62, %s63
    %p74 = scmp.eq.s32.totalorder %s14, 0
    %p75 = por %p73, %p74
    %p76 = scmp.ne.s32.totalorder %s62, %s63
    %p77 = scmp.eq.s32.totalorder %s15, 7
    %p78 = por %p76, %p77
    %p80 = scmp.ne.s32.totalorder %s63, %s79
    %p81 = scmp.eq.s32.totalorder %s15, 0
    %p82 = por %p80, %p81
    %s84 = sadd.s32 %s83, 1
    %p87 = scmp.eq.s32.totalorder %s9, 7
    %p88 = scmp.ne.s32.totalorder %s83, %s85
    %p89 = scmp.eq.s32.totalorder %s9, 0
    %p90 = por %p88, %p89
    %p91 = scmp.ne.s32.totalorder %s83, %s85
    %p92 = scmp.eq.s32.totalorder %s14, 7
    %p93 = por %p91, %p92
    %p94 = scmp.ne.s32.totalorder %s85, %s86
    %p95 = scmp.eq.s32.totalorder %s14, 0
    %p96 = por %p94, %p95
    %p97 = scmp.ne.s32.totalorder %s85, %s86
    %p98 = scmp.eq.s32.totalorder %s15, 7
    %p99 = por %p97, %p98
    %p101 = scmp.ne.s32.totalorder %s86, %s100
    %p102 = scmp.eq.s32.totalorder %s15, 0
    %p103 = por %p101, %p102
    %s104 = ssub.s32 %s16, %s28
    %s105 = ssub.s32 %s17, %s24
    %s106 = sor.u32 %s104, %s105
    %p107 = scmp.eq.s32.totalorder %s106, 0
    %s109 = sadd.s32 %s108, 1
    %s110 = scalar_select %p107, %s108, %s109
    %p113 = pneg %p107
    %p114 = scmp.eq.s32.totalorder %s9, 7
    %p115 = por %p113, %p114
    %p116 = scmp.ne.s32.totalorder %s108, %s111
    %p117 = scmp.eq.s32.totalorder %s9, 0
    %p118 = por %p116, %p117
    %p119 = scmp.ne.s32.totalorder %s108, %s111
    %p120 = scmp.eq.s32.totalorder %s14, 7
    %p121 = por %p119, %p120
    %p122 = scmp.ne.s32.totalorder %s111, %s112
    %p123 = scmp.eq.s32.totalorder %s14, 0
    %p124 = por %p122, %p123
    %p125 = scmp.ne.s32.totalorder %s111, %s112
    %p126 = scmp.eq.s32.totalorder %s15, 7
    %p127 = por %p125, %p126
    %p129 = scmp.ne.s32.totalorder %s112, %s128
    %p130 = scmp.eq.s32.totalorder %s15, 0
    %p131 = por %p129, %p130
    %p132 = scmp.le.s32.totalorder 1, %s9
    %p133 = scmp.lt.s32.totalorder %s9, 9
    %p134 = pnand %p132, %p133
    %p135 = pneg %p134
    // Predicated region
    $region9: #{km3d_core_head.5} parent=5 // pred_check
      _
    $region10: #{km3d_core_head.5} parent=5 // pred_check_branch
      %137 = sbr.rel (%p134) target = $region12
    $region11: #{km3d_core_head.5} parent=5 // pred_region
      %s138 = ssub.s32 %s9, 1
      // Predicated region
      $region13: #{km3d_core_head.5} parent=11 // pred_check
        %p139 = pneg %p96
      $region14: #{km3d_core_head.5} parent=11 // pred_check_branch
        %141 = sbr.rel (%p139) target = $region16
      $region15: #{km3d_core_head.5} parent=11 // pred_region
        _
      $region16: #{km3d_core_head.5} parent=11 // pred_fallthru
        _
    $region12: #{km3d_core_head.5} parent=5 // pred_fallthru
      _
    %p142 = scmp.lt.s32.totalorder %s9, 8
    // Predicated region
    $region17: #{km3d_core_head.5} parent=5 // pred_check
      %p143 = pneg %p142
    $region18: #{km3d_core_head.5} parent=5 // pred_check_branch
      %145 = sbr.rel (%p143) target = $region20
    $region19: #{km3d_core_head.5} parent=5 // pred_region
      // Predicated region
      $region21: #{km3d_core_head.5} parent=19 // pred_check
        %p146 = pneg %p43
      $region22: #{km3d_core_head.5} parent=19 // pred_check_branch
        %148 = sbr.rel (%p146) target = $region24
      $region23: #{km3d_core_head.5} parent=19 // pred_region
        %s149 = smul.u32 32, %s17
        %p150 = scmp.lt.s32.totalorder %s16, 3
        %s151 = scalar_select %p150, %s16, 3
        %p152 = scmp.lt.s32.totalorder %s149, 63
        %s153 = scalar_select %p152, %s149, 63
        %s154 = smul.addr %s153, 8
        %s155 = smul.addr %s151, 512
        %s156 = sadd.s32 %s154, %s155
        %s157 = smul.addr %s156, 4
        %s158 = scalar_lea.vmem %s0, %s157
        %s159 = smul.u32 32, %s17
      $region24: #{km3d_core_head.5} parent=19 // pred_fallthru
        _
      // Predicated region
      $region25: #{km3d_core_head.5} parent=19 // pred_check
        %p160 = pneg %p69
      $region26: #{km3d_core_head.5} parent=19 // pred_check_branch
        %162 = sbr.rel (%p160) target = $region28
      $region27: #{km3d_core_head.5} parent=19 // pred_region
        %p163 = scmp.lt.s32.totalorder %s16, 3
        %s164 = scalar_select %p163, %s16, 3
        %s165 = smul.addr %s164, 256
        %s166 = smul.addr %s165, 4
        %s167 = scalar_lea.vmem %s1, %s166
      $region28: #{km3d_core_head.5} parent=19 // pred_fallthru
        _
    $region20: #{km3d_core_head.5} parent=5 // pred_fallthru
      _
    %p168 = scmp.le.s32.totalorder 1, %s9
    %p169 = scmp.lt.s32.totalorder %s9, 9
    %p170 = pnand %p168, %p169
    %p171 = pneg %p170
    // Predicated region
    $region29: #{km3d_core_head.5} parent=5 // pred_check
      _
    $region30: #{km3d_core_head.5} parent=5 // pred_check_branch
      %173 = sbr.rel (%p170) target = $region32
    $region31: #{km3d_core_head.5} parent=5 // pred_region
      %s174 = ssub.s32 %s9, 1
      %s175 = smul.u32 32, %s19
      %p176 = scmp.lt.s32.totalorder %s18, 3
      %s177 = scalar_select %p176, %s18, 3
      %p178 = scmp.lt.s32.totalorder %s175, 63
      %s179 = scalar_select %p178, %s175, 63
      %s180 = smul.addr %s179, 8
      %s181 = smul.addr %s177, 512
      %s182 = sadd.s32 %s180, %s181
      %s183 = smul.addr %s182, 4
      %s184 = scalar_lea.vmem %s0, %s183
      %p185 = pneg %p49
      %p186 = pneg %p46
      %p187 = scmp.lt.s32.totalorder %s18, 3
      %s188 = scalar_select %p187, %s18, 3
      %s189 = smul.addr %s188, 256
      %s190 = smul.addr %s189, 4
      %s191 = scalar_lea.vmem %s1, %s190
      %p192 = pneg %p75
      %p193 = pneg %p72
      %p194 = pneg %p96
      %p195 = pneg %p93
      %p196 = pneg %p124
      %p197 = pneg %p121
      %s198 = smul.u32 32, %s19
      %p199 = scmp.lt.s32.totalorder %s18, 3
      %s200 = scalar_select %p199, %s18, 3
      %p201 = scmp.lt.s32.totalorder %s198, 63
      %s202 = scalar_select %p201, %s198, 63
      %s203 = smul.addr %s202, 2
      %s204 = smul.addr %s200, 128
      %s205 = sadd.s32 %s203, %s204
      %s206 = smul.addr %s205, 8
      %s207 = scalar_lea.vmem %s3, %s206
      %s208 = smul.u32 32, %s19
      %p209 = scmp.lt.s32.totalorder %s18, 3
      %s210 = scalar_select %p209, %s18, 3
      %p211 = scmp.lt.s32.totalorder %s208, 63
      %s212 = scalar_select %p211, %s208, 63
      %s213 = smul.addr %s212, 8
      %s214 = smul.addr %s210, 512
      %s215 = sadd.s32 %s213, %s214
      %s216 = smul.addr %s215, 4
      %s217 = scalar_lea.vmem %s0, %s216
      %s218 = smul.u32 32, %s19
      %p219 = scmp.lt.s32.totalorder %s18, 3
      %s220 = scalar_select %p219, %s18, 3
      %s221 = smul.addr %s220, 256
      %s222 = smul.addr %s221, 4
      %s223 = scalar_lea.vmem %s1, %s222
      %s224 = smul.u32 32, %s19
      %p225 = scmp.lt.s32.totalorder %s18, 3
      %s226 = scalar_select %p225, %s18, 3
      %p227 = scmp.lt.s32.totalorder %s224, 63
      %s228 = scalar_select %p227, %s224, 63
      %s229 = smul.addr %s228, 2
      %s230 = smul.addr %s226, 128
      %s231 = sadd.s32 %s229, %s230
      %s232 = smul.addr %s231, 8
      %s233 = scalar_lea.vmem %s3, %s232
      %s234 = smul.u32 32, %s19
      %v235 = vld [vmem:[%s217] sm:$0xff]
      %v236 = vld [vmem:[%s217 + $0x8] sm:$0xff]
      %v237 = vld [vmem:[%s217 + $0x10] sm:$0xff]
      %v238 = vld [vmem:[%s217 + $0x18] sm:$0xff]
      %v239 = vld [vmem:[%s217 + $0x20] sm:$0xff]
      %v240 = vld [vmem:[%s217 + $0x28] sm:$0xff]
      %v241 = vld [vmem:[%s217 + $0x30] sm:$0xff]
      %v242 = vld [vmem:[%s217 + $0x38] sm:$0xff]
      %v243 = vld [vmem:[%s217 + $0x40] sm:$0xff]
      %v244 = vld [vmem:[%s217 + $0x48] sm:$0xff]
      %v245 = vld [vmem:[%s217 + $0x50] sm:$0xff]
      %v246 = vld [vmem:[%s217 + $0x58] sm:$0xff]
      %v247 = vld [vmem:[%s217 + $0x60] sm:$0xff]
      %v248 = vld [vmem:[%s217 + $0x68] sm:$0xff]
      %v249 = vld [vmem:[%s217 + $0x70] sm:$0xff]
      %v250 = vld [vmem:[%s217 + $0x78] sm:$0xff]
      %v251 = vld [vmem:[%s217 + $0x80] sm:$0xff]
      %v252 = vld [vmem:[%s217 + $0x88] sm:$0xff]
      %v253 = vld [vmem:[%s217 + $0x90] sm:$0xff]
      %v254 = vld [vmem:[%s217 + $0x98] sm:$0xff]
      %v255 = vld [vmem:[%s217 + $0xa0] sm:$0xff]
      %v256 = vld [vmem:[%s217 + $0xa8] sm:$0xff]
      %v257 = vld [vmem:[%s217 + $0xb0] sm:$0xff]
      %v258 = vld [vmem:[%s217 + $0xb8] sm:$0xff]
      %v259 = vld [vmem:[%s217 + $0xc0] sm:$0xff]
      %v260 = vld [vmem:[%s217 + $0xc8] sm:$0xff]
      %v261 = vld [vmem:[%s217 + $0xd0] sm:$0xff]
      %v262 = vld [vmem:[%s217 + $0xd8] sm:$0xff]
      %v263 = vld [vmem:[%s217 + $0xe0] sm:$0xff]
      %v264 = vld [vmem:[%s217 + $0xe8] sm:$0xff]
      %v265 = vld [vmem:[%s217 + $0xf0] sm:$0xff]
      %v266 = vld [vmem:[%s217 + $0xf8] sm:$0xff]
      %v267 = vld [vmem:[%s217 + $0x100] sm:$0xff]
      %v268 = vld [vmem:[%s217 + $0x108] sm:$0xff]
      %v269 = vld [vmem:[%s217 + $0x110] sm:$0xff]
      %v270 = vld [vmem:[%s217 + $0x118] sm:$0xff]
      %v271 = vld [vmem:[%s217 + $0x120] sm:$0xff]
      %v272 = vld [vmem:[%s217 + $0x128] sm:$0xff]
      %v273 = vld [vmem:[%s217 + $0x130] sm:$0xff]
      %v274 = vld [vmem:[%s217 + $0x138] sm:$0xff]
      %v275 = vld [vmem:[%s217 + $0x140] sm:$0xff]
      %v276 = vld [vmem:[%s217 + $0x148] sm:$0xff]
      %v277 = vld [vmem:[%s217 + $0x150] sm:$0xff]
      %v278 = vld [vmem:[%s217 + $0x158] sm:$0xff]
      %v279 = vld [vmem:[%s217 + $0x160] sm:$0xff]
      %v280 = vld [vmem:[%s217 + $0x168] sm:$0xff]
      %v281 = vld [vmem:[%s217 + $0x170] sm:$0xff]
      %v282 = vld [vmem:[%s217 + $0x178] sm:$0xff]
      %v283 = vld [vmem:[%s217 + $0x180] sm:$0xff]
      %v284 = vld [vmem:[%s217 + $0x188] sm:$0xff]
      %v285 = vld [vmem:[%s217 + $0x190] sm:$0xff]
      %v286 = vld [vmem:[%s217 + $0x198] sm:$0xff]
      %v287 = vld [vmem:[%s217 + $0x1a0] sm:$0xff]
      %v288 = vld [vmem:[%s217 + $0x1a8] sm:$0xff]
      %v289 = vld [vmem:[%s217 + $0x1b0] sm:$0xff]
      %v290 = vld [vmem:[%s217 + $0x1b8] sm:$0xff]
      %v291 = vld [vmem:[%s217 + $0x1c0] sm:$0xff]
      %v292 = vld [vmem:[%s217 + $0x1c8] sm:$0xff]
      %v293 = vld [vmem:[%s217 + $0x1d0] sm:$0xff]
      %v294 = vld [vmem:[%s217 + $0x1d8] sm:$0xff]
      %v295 = vld [vmem:[%s217 + $0x1e0] sm:$0xff]
      %v296 = vld [vmem:[%s217 + $0x1e8] sm:$0xff]
      %v297 = vld [vmem:[%s217 + $0x1f0] sm:$0xff]
      %v298 = vld [vmem:[%s217 + $0x1f8] sm:$0xff]
      %v299 = vld [vmem:[%s217 + $0x200] sm:$0xff]
      %v300 = vld [vmem:[%s217 + $0x208] sm:$0xff]
      %v301 = vld [vmem:[%s217 + $0x210] sm:$0xff]
      %v302 = vld [vmem:[%s217 + $0x218] sm:$0xff]
      %v303 = vld [vmem:[%s217 + $0x220] sm:$0xff]
      %v304 = vld [vmem:[%s217 + $0x228] sm:$0xff]
      %v305 = vld [vmem:[%s217 + $0x230] sm:$0xff]
      %v306 = vld [vmem:[%s217 + $0x238] sm:$0xff]
      %v307 = vld [vmem:[%s217 + $0x240] sm:$0xff]
      %v308 = vld [vmem:[%s217 + $0x248] sm:$0xff]
      %v309 = vld [vmem:[%s217 + $0x250] sm:$0xff]
      %v310 = vld [vmem:[%s217 + $0x258] sm:$0xff]
      %v311 = vld [vmem:[%s217 + $0x260] sm:$0xff]
      %v312 = vld [vmem:[%s217 + $0x268] sm:$0xff]
      %v313 = vld [vmem:[%s217 + $0x270] sm:$0xff]
      %v314 = vld [vmem:[%s217 + $0x278] sm:$0xff]
      %v315 = vld [vmem:[%s217 + $0x280] sm:$0xff]
      %v316 = vld [vmem:[%s217 + $0x288] sm:$0xff]
      %v317 = vld [vmem:[%s217 + $0x290] sm:$0xff]
      %v318 = vld [vmem:[%s217 + $0x298] sm:$0xff]
      %v319 = vld [vmem:[%s217 + $0x2a0] sm:$0xff]
      %v320 = vld [vmem:[%s217 + $0x2a8] sm:$0xff]
      %v321 = vld [vmem:[%s217 + $0x2b0] sm:$0xff]
      %v322 = vld [vmem:[%s217 + $0x2b8] sm:$0xff]
      %v323 = vld [vmem:[%s217 + $0x2c0] sm:$0xff]
      %v324 = vld [vmem:[%s217 + $0x2c8] sm:$0xff]
      %v325 = vld [vmem:[%s217 + $0x2d0] sm:$0xff]
      %v326 = vld [vmem:[%s217 + $0x2d8] sm:$0xff]
      %v327 = vld [vmem:[%s217 + $0x2e0] sm:$0xff]
      %v328 = vld [vmem:[%s217 + $0x2e8] sm:$0xff]
      %v329 = vld [vmem:[%s217 + $0x2f0] sm:$0xff]
      %v330 = vld [vmem:[%s217 + $0x2f8] sm:$0xff]
      %v331 = vld [vmem:[%s217 + $0x300] sm:$0xff]
      %v332 = vld [vmem:[%s217 + $0x308] sm:$0xff]
      %v333 = vld [vmem:[%s217 + $0x310] sm:$0xff]
      %v334 = vld [vmem:[%s217 + $0x318] sm:$0xff]
      %v335 = vld [vmem:[%s217 + $0x320] sm:$0xff]
      %v336 = vld [vmem:[%s217 + $0x328] sm:$0xff]
      %v337 = vld [vmem:[%s217 + $0x330] sm:$0xff]
      %v338 = vld [vmem:[%s217 + $0x338] sm:$0xff]
      %v339 = vld [vmem:[%s217 + $0x340] sm:$0xff]
      %v340 = vld [vmem:[%s217 + $0x348] sm:$0xff]
      %v341 = vld [vmem:[%s217 + $0x350] sm:$0xff]
      %v342 = vld [vmem:[%s217 + $0x358] sm:$0xff]
      %v343 = vld [vmem:[%s217 + $0x360] sm:$0xff]
      %v344 = vld [vmem:[%s217 + $0x368] sm:$0xff]
      %v345 = vld [vmem:[%s217 + $0x370] sm:$0xff]
      %v346 = vld [vmem:[%s217 + $0x378] sm:$0xff]
      %v347 = vld [vmem:[%s217 + $0x380] sm:$0xff]
      %v348 = vld [vmem:[%s217 + $0x388] sm:$0xff]
      %v349 = vld [vmem:[%s217 + $0x390] sm:$0xff]
      %v350 = vld [vmem:[%s217 + $0x398] sm:$0xff]
      %v351 = vld [vmem:[%s217 + $0x3a0] sm:$0xff]
      %v352 = vld [vmem:[%s217 + $0x3a8] sm:$0xff]
      %v353 = vld [vmem:[%s217 + $0x3b0] sm:$0xff]
      %v354 = vld [vmem:[%s217 + $0x3b8] sm:$0xff]
      %v355 = vld [vmem:[%s217 + $0x3c0] sm:$0xff]
      %v356 = vld [vmem:[%s217 + $0x3c8] sm:$0xff]
      %v357 = vld [vmem:[%s217 + $0x3d0] sm:$0xff]
      %v358 = vld [vmem:[%s217 + $0x3d8] sm:$0xff]
      %v359 = vld [vmem:[%s217 + $0x3e0] sm:$0xff]
      %v360 = vld [vmem:[%s217 + $0x3e8] sm:$0xff]
      %v361 = vld [vmem:[%s217 + $0x3f0] sm:$0xff]
      %v362 = vld [vmem:[%s217 + $0x3f8] sm:$0xff]
      %v363 = vld [vmem:[%s223] sm:$0xff]
      %v364 = vld [vmem:[%s223 + $0x8] sm:$0xff]
      %v365 = vld [vmem:[%s223 + $0x10] sm:$0xff]
      %v366 = vld [vmem:[%s223 + $0x18] sm:$0xff]
      %v367 = vld [vmem:[%s223 + $0x20] sm:$0xff]
      %v368 = vld [vmem:[%s223 + $0x28] sm:$0xff]
      %v369 = vld [vmem:[%s223 + $0x30] sm:$0xff]
      %v370 = vld [vmem:[%s223 + $0x38] sm:$0xff]
      %v371 = vld [vmem:[%s223 + $0x40] sm:$0xff]
      %v372 = vld [vmem:[%s223 + $0x48] sm:$0xff]
      %v373 = vld [vmem:[%s223 + $0x50] sm:$0xff]
      %v374 = vld [vmem:[%s223 + $0x58] sm:$0xff]
      %v375 = vld [vmem:[%s223 + $0x60] sm:$0xff]
      %v376 = vld [vmem:[%s223 + $0x68] sm:$0xff]
      %v377 = vld [vmem:[%s223 + $0x70] sm:$0xff]
      %v378 = vld [vmem:[%s223 + $0x78] sm:$0xff]
      %v379 = vld [vmem:[%s223 + $0x80] sm:$0xff]
      %v380 = vld [vmem:[%s223 + $0x88] sm:$0xff]
      %v381 = vld [vmem:[%s223 + $0x90] sm:$0xff]
      %v382 = vld [vmem:[%s223 + $0x98] sm:$0xff]
      %v383 = vld [vmem:[%s223 + $0xa0] sm:$0xff]
      %v384 = vld [vmem:[%s223 + $0xa8] sm:$0xff]
      %v385 = vld [vmem:[%s223 + $0xb0] sm:$0xff]
      %v386 = vld [vmem:[%s223 + $0xb8] sm:$0xff]
      %v387 = vld [vmem:[%s223 + $0xc0] sm:$0xff]
      %v388 = vld [vmem:[%s223 + $0xc8] sm:$0xff]
      %v389 = vld [vmem:[%s223 + $0xd0] sm:$0xff]
      %v390 = vld [vmem:[%s223 + $0xd8] sm:$0xff]
      %v391 = vld [vmem:[%s223 + $0xe0] sm:$0xff]
      %v392 = vld [vmem:[%s223 + $0xe8] sm:$0xff]
      %v393 = vld [vmem:[%s223 + $0xf0] sm:$0xff]
      %v394 = vld [vmem:[%s223 + $0xf8] sm:$0xff]
      %v395 = vld [vmem:[%s223 + $0x100] sm:$0xff]
      %v396 = vld [vmem:[%s223 + $0x108] sm:$0xff]
      %v397 = vld [vmem:[%s223 + $0x110] sm:$0xff]
      %v398 = vld [vmem:[%s223 + $0x118] sm:$0xff]
      %v399 = vld [vmem:[%s223 + $0x120] sm:$0xff]
      %v400 = vld [vmem:[%s223 + $0x128] sm:$0xff]
      %v401 = vld [vmem:[%s223 + $0x130] sm:$0xff]
      %v402 = vld [vmem:[%s223 + $0x138] sm:$0xff]
      %v403 = vld [vmem:[%s223 + $0x140] sm:$0xff]
      %v404 = vld [vmem:[%s223 + $0x148] sm:$0xff]
      %v405 = vld [vmem:[%s223 + $0x150] sm:$0xff]
      %v406 = vld [vmem:[%s223 + $0x158] sm:$0xff]
      %v407 = vld [vmem:[%s223 + $0x160] sm:$0xff]
      %v408 = vld [vmem:[%s223 + $0x168] sm:$0xff]
      %v409 = vld [vmem:[%s223 + $0x170] sm:$0xff]
      %v410 = vld [vmem:[%s223 + $0x178] sm:$0xff]
      %v411 = vld [vmem:[%s223 + $0x180] sm:$0xff]
      %v412 = vld [vmem:[%s223 + $0x188] sm:$0xff]
      %v413 = vld [vmem:[%s223 + $0x190] sm:$0xff]
      %v414 = vld [vmem:[%s223 + $0x198] sm:$0xff]
      %v415 = vld [vmem:[%s223 + $0x1a0] sm:$0xff]
      %v416 = vld [vmem:[%s223 + $0x1a8] sm:$0xff]
      %v417 = vld [vmem:[%s223 + $0x1b0] sm:$0xff]
      %v418 = vld [vmem:[%s223 + $0x1b8] sm:$0xff]
      %v419 = vld [vmem:[%s223 + $0x1c0] sm:$0xff]
      %v420 = vld [vmem:[%s223 + $0x1c8] sm:$0xff]
      %v421 = vld [vmem:[%s223 + $0x1d0] sm:$0xff]
      %v422 = vld [vmem:[%s223 + $0x1d8] sm:$0xff]
      %v423 = vld [vmem:[%s223 + $0x1e0] sm:$0xff]
      %v424 = vld [vmem:[%s223 + $0x1e8] sm:$0xff]
      %v425 = vld [vmem:[%s223 + $0x1f0] sm:$0xff]
      %v426 = vld [vmem:[%s223 + $0x1f8] sm:$0xff]
      %v427 = vld [vmem:[%s223 + $0x200] sm:$0xff]
      %v428 = vld [vmem:[%s223 + $0x208] sm:$0xff]
      %v429 = vld [vmem:[%s223 + $0x210] sm:$0xff]
      %v430 = vld [vmem:[%s223 + $0x218] sm:$0xff]
      %v431 = vld [vmem:[%s223 + $0x220] sm:$0xff]
      %v432 = vld [vmem:[%s223 + $0x228] sm:$0xff]
      %v433 = vld [vmem:[%s223 + $0x230] sm:$0xff]
      %v434 = vld [vmem:[%s223 + $0x238] sm:$0xff]
      %v435 = vld [vmem:[%s223 + $0x240] sm:$0xff]
      %v436 = vld [vmem:[%s223 + $0x248] sm:$0xff]
      %v437 = vld [vmem:[%s223 + $0x250] sm:$0xff]
      %v438 = vld [vmem:[%s223 + $0x258] sm:$0xff]
      %v439 = vld [vmem:[%s223 + $0x260] sm:$0xff]
      %v440 = vld [vmem:[%s223 + $0x268] sm:$0xff]
      %v441 = vld [vmem:[%s223 + $0x270] sm:$0xff]
      %v442 = vld [vmem:[%s223 + $0x278] sm:$0xff]
      %v443 = vld [vmem:[%s223 + $0x280] sm:$0xff]
      %v444 = vld [vmem:[%s223 + $0x288] sm:$0xff]
      %v445 = vld [vmem:[%s223 + $0x290] sm:$0xff]
      %v446 = vld [vmem:[%s223 + $0x298] sm:$0xff]
      %v447 = vld [vmem:[%s223 + $0x2a0] sm:$0xff]
      %v448 = vld [vmem:[%s223 + $0x2a8] sm:$0xff]
      %v449 = vld [vmem:[%s223 + $0x2b0] sm:$0xff]
      %v450 = vld [vmem:[%s223 + $0x2b8] sm:$0xff]
      %v451 = vld [vmem:[%s223 + $0x2c0] sm:$0xff]
      %v452 = vld [vmem:[%s223 + $0x2c8] sm:$0xff]
      %v453 = vld [vmem:[%s223 + $0x2d0] sm:$0xff]
      %v454 = vld [vmem:[%s223 + $0x2d8] sm:$0xff]
      %v455 = vld [vmem:[%s223 + $0x2e0] sm:$0xff]
      %v456 = vld [vmem:[%s223 + $0x2e8] sm:$0xff]
      %v457 = vld [vmem:[%s223 + $0x2f0] sm:$0xff]
      %v458 = vld [vmem:[%s223 + $0x2f8] sm:$0xff]
      %v459 = vld [vmem:[%s223 + $0x300] sm:$0xff]
      %v460 = vld [vmem:[%s223 + $0x308] sm:$0xff]
      %v461 = vld [vmem:[%s223 + $0x310] sm:$0xff]
      %v462 = vld [vmem:[%s223 + $0x318] sm:$0xff]
      %v463 = vld [vmem:[%s223 + $0x320] sm:$0xff]
      %v464 = vld [vmem:[%s223 + $0x328] sm:$0xff]
      %v465 = vld [vmem:[%s223 + $0x330] sm:$0xff]
      %v466 = vld [vmem:[%s223 + $0x338] sm:$0xff]
      %v467 = vld [vmem:[%s223 + $0x340] sm:$0xff]
      %v468 = vld [vmem:[%s223 + $0x348] sm:$0xff]
      %v469 = vld [vmem:[%s223 + $0x350] sm:$0xff]
      %v470 = vld [vmem:[%s223 + $0x358] sm:$0xff]
      %v471 = vld [vmem:[%s223 + $0x360] sm:$0xff]
      %v472 = vld [vmem:[%s223 + $0x368] sm:$0xff]
      %v473 = vld [vmem:[%s223 + $0x370] sm:$0xff]
      %v474 = vld [vmem:[%s223 + $0x378] sm:$0xff]
      %v475 = vld [vmem:[%s223 + $0x380] sm:$0xff]
      %v476 = vld [vmem:[%s223 + $0x388] sm:$0xff]
      %v477 = vld [vmem:[%s223 + $0x390] sm:$0xff]
      %v478 = vld [vmem:[%s223 + $0x398] sm:$0xff]
      %v479 = vld [vmem:[%s223 + $0x3a0] sm:$0xff]
      %v480 = vld [vmem:[%s223 + $0x3a8] sm:$0xff]
      %v481 = vld [vmem:[%s223 + $0x3b0] sm:$0xff]
      %v482 = vld [vmem:[%s223 + $0x3b8] sm:$0xff]
      %v483 = vld [vmem:[%s223 + $0x3c0] sm:$0xff]
      %v484 = vld [vmem:[%s223 + $0x3c8] sm:$0xff]
      %v485 = vld [vmem:[%s223 + $0x3d0] sm:$0xff]
      %v486 = vld [vmem:[%s223 + $0x3d8] sm:$0xff]
      %v487 = vld [vmem:[%s223 + $0x3e0] sm:$0xff]
      %v488 = vld [vmem:[%s223 + $0x3e8] sm:$0xff]
      %v489 = vld [vmem:[%s223 + $0x3f0] sm:$0xff]
      %v490 = vld [vmem:[%s223 + $0x3f8] sm:$0xff]
      %v491 = vld [vmem:[%s2] sm:$0x3]
      %v493 = vperm.slane %v491, 0
      %v494 = vperm.slane %v491, 1
      %v625 = vunpack.c.l.b16 %v235
      %v626 = vunpack.c.h.b16 %v235
      %v627 = vunpack.c.l.b16 %v236
      %v628 = vunpack.c.h.b16 %v236
      %v629 = vunpack.c.l.b16 %v237
      %v630 = vunpack.c.h.b16 %v237
      %v631 = vunpack.c.l.b16 %v238
      %v632 = vunpack.c.h.b16 %v238
      %v633 = vunpack.c.l.b16 %v239
      %v634 = vunpack.c.h.b16 %v239
      %v635 = vunpack.c.l.b16 %v240
      %v636 = vunpack.c.h.b16 %v240
      %v637 = vunpack.c.l.b16 %v241
      %v638 = vunpack.c.h.b16 %v241
      %v639 = vunpack.c.l.b16 %v242
      %v640 = vunpack.c.h.b16 %v242
      %v641 = vunpack.c.l.b16 %v243
      %v642 = vunpack.c.h.b16 %v243
      %v643 = vunpack.c.l.b16 %v244
      %v644 = vunpack.c.h.b16 %v244
      %v645 = vunpack.c.l.b16 %v245
      %v646 = vunpack.c.h.b16 %v245
      %v647 = vunpack.c.l.b16 %v246
      %v648 = vunpack.c.h.b16 %v246
      %v649 = vunpack.c.l.b16 %v247
      %v650 = vunpack.c.h.b16 %v247
      %v651 = vunpack.c.l.b16 %v248
      %v652 = vunpack.c.h.b16 %v248
      %v653 = vunpack.c.l.b16 %v249
      %v654 = vunpack.c.h.b16 %v249
      %v655 = vunpack.c.l.b16 %v250
      %v656 = vunpack.c.h.b16 %v250
      %v657 = vunpack.c.l.b16 %v251
      %v658 = vunpack.c.h.b16 %v251
      %v659 = vunpack.c.l.b16 %v252
      %v660 = vunpack.c.h.b16 %v252
      %v661 = vunpack.c.l.b16 %v253
      %v662 = vunpack.c.h.b16 %v253
      %v663 = vunpack.c.l.b16 %v254
      %v664 = vunpack.c.h.b16 %v254
      %v665 = vunpack.c.l.b16 %v255
      %v666 = vunpack.c.h.b16 %v255
      %v667 = vunpack.c.l.b16 %v256
      %v668 = vunpack.c.h.b16 %v256
      %v669 = vunpack.c.l.b16 %v257
      %v670 = vunpack.c.h.b16 %v257
      %v671 = vunpack.c.l.b16 %v258
      %v672 = vunpack.c.h.b16 %v258
      %v673 = vunpack.c.l.b16 %v259
      %v674 = vunpack.c.h.b16 %v259
      %v675 = vunpack.c.l.b16 %v260
      %v676 = vunpack.c.h.b16 %v260
      %v677 = vunpack.c.l.b16 %v261
      %v678 = vunpack.c.h.b16 %v261
      %v679 = vunpack.c.l.b16 %v262
      %v680 = vunpack.c.h.b16 %v262
      %v681 = vunpack.c.l.b16 %v263
      %v682 = vunpack.c.h.b16 %v263
      %v683 = vunpack.c.l.b16 %v264
      %v684 = vunpack.c.h.b16 %v264
      %v685 = vunpack.c.l.b16 %v265
      %v686 = vunpack.c.h.b16 %v265
      %v687 = vunpack.c.l.b16 %v266
      %v688 = vunpack.c.h.b16 %v266
      %v689 = vunpack.c.l.b16 %v267
      %v690 = vunpack.c.h.b16 %v267
      %v691 = vunpack.c.l.b16 %v268
      %v692 = vunpack.c.h.b16 %v268
      %v693 = vunpack.c.l.b16 %v269
      %v694 = vunpack.c.h.b16 %v269
      %v695 = vunpack.c.l.b16 %v270
      %v696 = vunpack.c.h.b16 %v270
      %v697 = vunpack.c.l.b16 %v271
      %v698 = vunpack.c.h.b16 %v271
      %v699 = vunpack.c.l.b16 %v272
      %v700 = vunpack.c.h.b16 %v272
      %v701 = vunpack.c.l.b16 %v273
      %v702 = vunpack.c.h.b16 %v273
      %v703 = vunpack.c.l.b16 %v274
      %v704 = vunpack.c.h.b16 %v274
      %v705 = vunpack.c.l.b16 %v275
      %v706 = vunpack.c.h.b16 %v275
      %v707 = vunpack.c.l.b16 %v276
      %v708 = vunpack.c.h.b16 %v276
      %v709 = vunpack.c.l.b16 %v277
      %v710 = vunpack.c.h.b16 %v277
      %v711 = vunpack.c.l.b16 %v278
      %v712 = vunpack.c.h.b16 %v278
      %v713 = vunpack.c.l.b16 %v279
      %v714 = vunpack.c.h.b16 %v279
      %v715 = vunpack.c.l.b16 %v280
      %v716 = vunpack.c.h.b16 %v280
      %v717 = vunpack.c.l.b16 %v281
      %v718 = vunpack.c.h.b16 %v281
      %v719 = vunpack.c.l.b16 %v282
      %v720 = vunpack.c.h.b16 %v282
      %v721 = vunpack.c.l.b16 %v283
      %v722 = vunpack.c.h.b16 %v283
      %v723 = vunpack.c.l.b16 %v284
      %v724 = vunpack.c.h.b16 %v284
      %v725 = vunpack.c.l.b16 %v285
      %v726 = vunpack.c.h.b16 %v285
      %v727 = vunpack.c.l.b16 %v286
      %v728 = vunpack.c.h.b16 %v286
      %v729 = vunpack.c.l.b16 %v287
      %v730 = vunpack.c.h.b16 %v287
      %v731 = vunpack.c.l.b16 %v288
      %v732 = vunpack.c.h.b16 %v288
      %v733 = vunpack.c.l.b16 %v289
      %v734 = vunpack.c.h.b16 %v289
      %v735 = vunpack.c.l.b16 %v290
      %v736 = vunpack.c.h.b16 %v290
      %v737 = vunpack.c.l.b16 %v291
      %v738 = vunpack.c.h.b16 %v291
      %v739 = vunpack.c.l.b16 %v292
      %v740 = vunpack.c.h.b16 %v292
      %v741 = vunpack.c.l.b16 %v293
      %v742 = vunpack.c.h.b16 %v293
      %v743 = vunpack.c.l.b16 %v294
      %v744 = vunpack.c.h.b16 %v294
      %v745 = vunpack.c.l.b16 %v295
      %v746 = vunpack.c.h.b16 %v295
      %v747 = vunpack.c.l.b16 %v296
      %v748 = vunpack.c.h.b16 %v296
      %v749 = vunpack.c.l.b16 %v297
      %v750 = vunpack.c.h.b16 %v297
      %v751 = vunpack.c.l.b16 %v298
      %v752 = vunpack.c.h.b16 %v298
      %v753 = vunpack.c.l.b16 %v299
      %v754 = vunpack.c.h.b16 %v299
      %v755 = vunpack.c.l.b16 %v300
      %v756 = vunpack.c.h.b16 %v300
      %v757 = vunpack.c.l.b16 %v301
      %v758 = vunpack.c.h.b16 %v301
      %v759 = vunpack.c.l.b16 %v302
      %v760 = vunpack.c.h.b16 %v302
      %v761 = vunpack.c.l.b16 %v303
      %v762 = vunpack.c.h.b16 %v303
      %v763 = vunpack.c.l.b16 %v304
      %v764 = vunpack.c.h.b16 %v304
      %v765 = vunpack.c.l.b16 %v305
      %v766 = vunpack.c.h.b16 %v305
      %v767 = vunpack.c.l.b16 %v306
      %v768 = vunpack.c.h.b16 %v306
      %v769 = vunpack.c.l.b16 %v307
      %v770 = vunpack.c.h.b16 %v307
      %v771 = vunpack.c.l.b16 %v308
      %v772 = vunpack.c.h.b16 %v308
      %v773 = vunpack.c.l.b16 %v309
      %v774 = vunpack.c.h.b16 %v309
      %v775 = vunpack.c.l.b16 %v310
      %v776 = vunpack.c.h.b16 %v310
      %v777 = vunpack.c.l.b16 %v311
      %v778 = vunpack.c.h.b16 %v311
      %v779 = vunpack.c.l.b16 %v312
      %v780 = vunpack.c.h.b16 %v312
      %v781 = vunpack.c.l.b16 %v313
      %v782 = vunpack.c.h.b16 %v313
      %v783 = vunpack.c.l.b16 %v314
      %v784 = vunpack.c.h.b16 %v314
      %v785 = vunpack.c.l.b16 %v315
      %v786 = vunpack.c.h.b16 %v315
      %v787 = vunpack.c.l.b16 %v316
      %v788 = vunpack.c.h.b16 %v316
      %v789 = vunpack.c.l.b16 %v317
      %v790 = vunpack.c.h.b16 %v317
      %v791 = vunpack.c.l.b16 %v318
      %v792 = vunpack.c.h.b16 %v318
      %v793 = vunpack.c.l.b16 %v319
      %v794 = vunpack.c.h.b16 %v319
      %v795 = vunpack.c.l.b16 %v320
      %v796 = vunpack.c.h.b16 %v320
      %v797 = vunpack.c.l.b16 %v321
      %v798 = vunpack.c.h.b16 %v321
      %v799 = vunpack.c.l.b16 %v322
      %v800 = vunpack.c.h.b16 %v322
      %v801 = vunpack.c.l.b16 %v323
      %v802 = vunpack.c.h.b16 %v323
      %v803 = vunpack.c.l.b16 %v324
      %v804 = vunpack.c.h.b16 %v324
      %v805 = vunpack.c.l.b16 %v325
      %v806 = vunpack.c.h.b16 %v325
      %v807 = vunpack.c.l.b16 %v326
      %v808 = vunpack.c.h.b16 %v326
      %v809 = vunpack.c.l.b16 %v327
      %v810 = vunpack.c.h.b16 %v327
      %v811 = vunpack.c.l.b16 %v328
      %v812 = vunpack.c.h.b16 %v328
      %v813 = vunpack.c.l.b16 %v329
      %v814 = vunpack.c.h.b16 %v329
      %v815 = vunpack.c.l.b16 %v330
      %v816 = vunpack.c.h.b16 %v330
      %v817 = vunpack.c.l.b16 %v331
      %v818 = vunpack.c.h.b16 %v331
      %v819 = vunpack.c.l.b16 %v332
      %v820 = vunpack.c.h.b16 %v332
      %v821 = vunpack.c.l.b16 %v333
      %v822 = vunpack.c.h.b16 %v333
      %v823 = vunpack.c.l.b16 %v334
      %v824 = vunpack.c.h.b16 %v334
      %v825 = vunpack.c.l.b16 %v335
      %v826 = vunpack.c.h.b16 %v335
      %v827 = vunpack.c.l.b16 %v336
      %v828 = vunpack.c.h.b16 %v336
      %v829 = vunpack.c.l.b16 %v337
      %v830 = vunpack.c.h.b16 %v337
      %v831 = vunpack.c.l.b16 %v338
      %v832 = vunpack.c.h.b16 %v338
      %v833 = vunpack.c.l.b16 %v339
      %v834 = vunpack.c.h.b16 %v339
      %v835 = vunpack.c.l.b16 %v340
      %v836 = vunpack.c.h.b16 %v340
      %v837 = vunpack.c.l.b16 %v341
      %v838 = vunpack.c.h.b16 %v341
      %v839 = vunpack.c.l.b16 %v342
      %v840 = vunpack.c.h.b16 %v342
      %v841 = vunpack.c.l.b16 %v343
      %v842 = vunpack.c.h.b16 %v343
      %v843 = vunpack.c.l.b16 %v344
      %v844 = vunpack.c.h.b16 %v344
      %v845 = vunpack.c.l.b16 %v345
      %v846 = vunpack.c.h.b16 %v345
      %v847 = vunpack.c.l.b16 %v346
      %v848 = vunpack.c.h.b16 %v346
      %v849 = vunpack.c.l.b16 %v347
      %v850 = vunpack.c.h.b16 %v347
      %v851 = vunpack.c.l.b16 %v348
      %v852 = vunpack.c.h.b16 %v348
      %v853 = vunpack.c.l.b16 %v349
      %v854 = vunpack.c.h.b16 %v349
      %v855 = vunpack.c.l.b16 %v350
      %v856 = vunpack.c.h.b16 %v350
      %v857 = vunpack.c.l.b16 %v351
      %v858 = vunpack.c.h.b16 %v351
      %v859 = vunpack.c.l.b16 %v352
      %v860 = vunpack.c.h.b16 %v352
      %v861 = vunpack.c.l.b16 %v353
      %v862 = vunpack.c.h.b16 %v353
      %v863 = vunpack.c.l.b16 %v354
      %v864 = vunpack.c.h.b16 %v354
      %v865 = vunpack.c.l.b16 %v355
      %v866 = vunpack.c.h.b16 %v355
      %v867 = vunpack.c.l.b16 %v356
      %v868 = vunpack.c.h.b16 %v356
      %v869 = vunpack.c.l.b16 %v357
      %v870 = vunpack.c.h.b16 %v357
      %v871 = vunpack.c.l.b16 %v358
      %v872 = vunpack.c.h.b16 %v358
      %v873 = vunpack.c.l.b16 %v359
      %v874 = vunpack.c.h.b16 %v359
      %v875 = vunpack.c.l.b16 %v360
      %v876 = vunpack.c.h.b16 %v360
      %v877 = vunpack.c.l.b16 %v361
      %v878 = vunpack.c.h.b16 %v361
      %v879 = vunpack.c.l.b16 %v362
      %v880 = vunpack.c.h.b16 %v362
      %v881 = vpack.c.b16 %v633, %v625
      %v882 = vpack.c.b16 %v634, %v626
      %v883 = vpack.c.b16 %v635, %v627
      %v884 = vpack.c.b16 %v636, %v628
      %v885 = vpack.c.b16 %v637, %v629
      %v886 = vpack.c.b16 %v638, %v630
      %v887 = vpack.c.b16 %v639, %v631
      %v888 = vpack.c.b16 %v640, %v632
      %v889 = vpack.c.b16 %v649, %v641
      %v890 = vpack.c.b16 %v650, %v642
      %v891 = vpack.c.b16 %v651, %v643
      %v892 = vpack.c.b16 %v652, %v644
      %v893 = vpack.c.b16 %v653, %v645
      %v894 = vpack.c.b16 %v654, %v646
      %v895 = vpack.c.b16 %v655, %v647
      %v896 = vpack.c.b16 %v656, %v648
      %v897 = vpack.c.b16 %v665, %v657
      %v898 = vpack.c.b16 %v666, %v658
      %v899 = vpack.c.b16 %v667, %v659
      %v900 = vpack.c.b16 %v668, %v660
      %v901 = vpack.c.b16 %v669, %v661
      %v902 = vpack.c.b16 %v670, %v662
      %v903 = vpack.c.b16 %v671, %v663
      %v904 = vpack.c.b16 %v672, %v664
      %v905 = vpack.c.b16 %v681, %v673
      %v906 = vpack.c.b16 %v682, %v674
      %v907 = vpack.c.b16 %v683, %v675
      %v908 = vpack.c.b16 %v684, %v676
      %v909 = vpack.c.b16 %v685, %v677
      %v910 = vpack.c.b16 %v686, %v678
      %v911 = vpack.c.b16 %v687, %v679
      %v912 = vpack.c.b16 %v688, %v680
      %v913 = vpack.c.b16 %v697, %v689
      %v914 = vpack.c.b16 %v698, %v690
      %v915 = vpack.c.b16 %v699, %v691
      %v916 = vpack.c.b16 %v700, %v692
      %v917 = vpack.c.b16 %v701, %v693
      %v918 = vpack.c.b16 %v702, %v694
      %v919 = vpack.c.b16 %v703, %v695
      %v920 = vpack.c.b16 %v704, %v696
      %v921 = vpack.c.b16 %v713, %v705
      %v922 = vpack.c.b16 %v714, %v706
      %v923 = vpack.c.b16 %v715, %v707
      %v924 = vpack.c.b16 %v716, %v708
      %v925 = vpack.c.b16 %v717, %v709
      %v926 = vpack.c.b16 %v718, %v710
      %v927 = vpack.c.b16 %v719, %v711
      %v928 = vpack.c.b16 %v720, %v712
      %v929 = vpack.c.b16 %v729, %v721
      %v930 = vpack.c.b16 %v730, %v722
      %v931 = vpack.c.b16 %v731, %v723
      %v932 = vpack.c.b16 %v732, %v724
      %v933 = vpack.c.b16 %v733, %v725
      %v934 = vpack.c.b16 %v734, %v726
      %v935 = vpack.c.b16 %v735, %v727
      %v936 = vpack.c.b16 %v736, %v728
      %v937 = vpack.c.b16 %v745, %v737
      %v938 = vpack.c.b16 %v746, %v738
      %v939 = vpack.c.b16 %v747, %v739
      %v940 = vpack.c.b16 %v748, %v740
      %v941 = vpack.c.b16 %v749, %v741
      %v942 = vpack.c.b16 %v750, %v742
      %v943 = vpack.c.b16 %v751, %v743
      %v944 = vpack.c.b16 %v752, %v744
      %v945 = vpack.c.b16 %v761, %v753
      %v946 = vpack.c.b16 %v762, %v754
      %v947 = vpack.c.b16 %v763, %v755
      %v948 = vpack.c.b16 %v764, %v756
      %v949 = vpack.c.b16 %v765, %v757
      %v950 = vpack.c.b16 %v766, %v758
      %v951 = vpack.c.b16 %v767, %v759
      %v952 = vpack.c.b16 %v768, %v760
      %v953 = vpack.c.b16 %v777, %v769
      %v954 = vpack.c.b16 %v778, %v770
      %v955 = vpack.c.b16 %v779, %v771
      %v956 = vpack.c.b16 %v780, %v772
      %v957 = vpack.c.b16 %v781, %v773
      %v958 = vpack.c.b16 %v782, %v774
      %v959 = vpack.c.b16 %v783, %v775
      %v960 = vpack.c.b16 %v784, %v776
      %v961 = vpack.c.b16 %v793, %v785
      %v962 = vpack.c.b16 %v794, %v786
      %v963 = vpack.c.b16 %v795, %v787
      %v964 = vpack.c.b16 %v796, %v788
      %v965 = vpack.c.b16 %v797, %v789
      %v966 = vpack.c.b16 %v798, %v790
      %v967 = vpack.c.b16 %v799, %v791
      %v968 = vpack.c.b16 %v800, %v792
      %v969 = vpack.c.b16 %v809, %v801
      %v970 = vpack.c.b16 %v810, %v802
      %v971 = vpack.c.b16 %v811, %v803
      %v972 = vpack.c.b16 %v812, %v804
      %v973 = vpack.c.b16 %v813, %v805
      %v974 = vpack.c.b16 %v814, %v806
      %v975 = vpack.c.b16 %v815, %v807
      %v976 = vpack.c.b16 %v816, %v808
      %v977 = vpack.c.b16 %v825, %v817
      %v978 = vpack.c.b16 %v826, %v818
      %v979 = vpack.c.b16 %v827, %v819
      %v980 = vpack.c.b16 %v828, %v820
      %v981 = vpack.c.b16 %v829, %v821
      %v982 = vpack.c.b16 %v830, %v822
      %v983 = vpack.c.b16 %v831, %v823
      %v984 = vpack.c.b16 %v832, %v824
      %v985 = vpack.c.b16 %v841, %v833
      %v986 = vpack.c.b16 %v842, %v834
      %v987 = vpack.c.b16 %v843, %v835
      %v988 = vpack.c.b16 %v844, %v836
      %v989 = vpack.c.b16 %v845, %v837
      %v990 = vpack.c.b16 %v846, %v838
      %v991 = vpack.c.b16 %v847, %v839
      %v992 = vpack.c.b16 %v848, %v840
      %v993 = vpack.c.b16 %v857, %v849
      %v994 = vpack.c.b16 %v858, %v850
      %v995 = vpack.c.b16 %v859, %v851
      %v996 = vpack.c.b16 %v860, %v852
      %v997 = vpack.c.b16 %v861, %v853
      %v998 = vpack.c.b16 %v862, %v854
      %v999 = vpack.c.b16 %v863, %v855
      %v1000 = vpack.c.b16 %v864, %v856
      %v1001 = vpack.c.b16 %v873, %v865
      %v1002 = vpack.c.b16 %v874, %v866
      %v1003 = vpack.c.b16 %v875, %v867
      %v1004 = vpack.c.b16 %v876, %v868
      %v1005 = vpack.c.b16 %v877, %v869
      %v1006 = vpack.c.b16 %v878, %v870
      %v1007 = vpack.c.b16 %v879, %v871
      %v1008 = vpack.c.b16 %v880, %v872
      %v1265 = vunpack.c.l.b16 %v363
      %v1266 = vunpack.c.h.b16 %v363
      %v1267 = vunpack.c.l.b16 %v364
      %v1268 = vunpack.c.h.b16 %v364
      %v1269 = vunpack.c.l.b16 %v365
      %v1270 = vunpack.c.h.b16 %v365
      %v1271 = vunpack.c.l.b16 %v366
      %v1272 = vunpack.c.h.b16 %v366
      %v1273 = vunpack.c.l.b16 %v367
      %v1274 = vunpack.c.h.b16 %v367
      %v1275 = vunpack.c.l.b16 %v368
      %v1276 = vunpack.c.h.b16 %v368
      %v1277 = vunpack.c.l.b16 %v369
      %v1278 = vunpack.c.h.b16 %v369
      %v1279 = vunpack.c.l.b16 %v370
      %v1280 = vunpack.c.h.b16 %v370
      %v1281 = vunpack.c.l.b16 %v371
      %v1282 = vunpack.c.h.b16 %v371
      %v1283 = vunpack.c.l.b16 %v372
      %v1284 = vunpack.c.h.b16 %v372
      %v1285 = vunpack.c.l.b16 %v373
      %v1286 = vunpack.c.h.b16 %v373
      %v1287 = vunpack.c.l.b16 %v374
      %v1288 = vunpack.c.h.b16 %v374
      %v1289 = vunpack.c.l.b16 %v375
      %v1290 = vunpack.c.h.b16 %v375
      %v1291 = vunpack.c.l.b16 %v376
      %v1292 = vunpack.c.h.b16 %v376
      %v1293 = vunpack.c.l.b16 %v377
      %v1294 = vunpack.c.h.b16 %v377
      %v1295 = vunpack.c.l.b16 %v378
      %v1296 = vunpack.c.h.b16 %v378
      %v1297 = vunpack.c.l.b16 %v379
      %v1298 = vunpack.c.h.b16 %v379
      %v1299 = vunpack.c.l.b16 %v380
      %v1300 = vunpack.c.h.b16 %v380
      %v1301 = vunpack.c.l.b16 %v381
      %v1302 = vunpack.c.h.b16 %v381
      %v1303 = vunpack.c.l.b16 %v382
      %v1304 = vunpack.c.h.b16 %v382
      %v1305 = vunpack.c.l.b16 %v383
      %v1306 = vunpack.c.h.b16 %v383
      %v1307 = vunpack.c.l.b16 %v384
      %v1308 = vunpack.c.h.b16 %v384
      %v1309 = vunpack.c.l.b16 %v385
      %v1310 = vunpack.c.h.b16 %v385
      %v1311 = vunpack.c.l.b16 %v386
      %v1312 = vunpack.c.h.b16 %v386
      %v1313 = vunpack.c.l.b16 %v387
      %v1314 = vunpack.c.h.b16 %v387
      %v1315 = vunpack.c.l.b16 %v388
      %v1316 = vunpack.c.h.b16 %v388
      %v1317 = vunpack.c.l.b16 %v389
      %v1318 = vunpack.c.h.b16 %v389
      %v1319 = vunpack.c.l.b16 %v390
      %v1320 = vunpack.c.h.b16 %v390
      %v1321 = vunpack.c.l.b16 %v391
      %v1322 = vunpack.c.h.b16 %v391
      %v1323 = vunpack.c.l.b16 %v392
      %v1324 = vunpack.c.h.b16 %v392
      %v1325 = vunpack.c.l.b16 %v393
      %v1326 = vunpack.c.h.b16 %v393
      %v1327 = vunpack.c.l.b16 %v394
      %v1328 = vunpack.c.h.b16 %v394
      %v1329 = vunpack.c.l.b16 %v395
      %v1330 = vunpack.c.h.b16 %v395
      %v1331 = vunpack.c.l.b16 %v396
      %v1332 = vunpack.c.h.b16 %v396
      %v1333 = vunpack.c.l.b16 %v397
      %v1334 = vunpack.c.h.b16 %v397
      %v1335 = vunpack.c.l.b16 %v398
      %v1336 = vunpack.c.h.b16 %v398
      %v1337 = vunpack.c.l.b16 %v399
      %v1338 = vunpack.c.h.b16 %v399
      %v1339 = vunpack.c.l.b16 %v400
      %v1340 = vunpack.c.h.b16 %v400
      %v1341 = vunpack.c.l.b16 %v401
      %v1342 = vunpack.c.h.b16 %v401
      %v1343 = vunpack.c.l.b16 %v402
      %v1344 = vunpack.c.h.b16 %v402
      %v1345 = vunpack.c.l.b16 %v403
      %v1346 = vunpack.c.h.b16 %v403
      %v1347 = vunpack.c.l.b16 %v404
      %v1348 = vunpack.c.h.b16 %v404
      %v1349 = vunpack.c.l.b16 %v405
      %v1350 = vunpack.c.h.b16 %v405
      %v1351 = vunpack.c.l.b16 %v406
      %v1352 = vunpack.c.h.b16 %v406
      %v1353 = vunpack.c.l.b16 %v407
      %v1354 = vunpack.c.h.b16 %v407
      %v1355 = vunpack.c.l.b16 %v408
      %v1356 = vunpack.c.h.b16 %v408
      %v1357 = vunpack.c.l.b16 %v409
      %v1358 = vunpack.c.h.b16 %v409
      %v1359 = vunpack.c.l.b16 %v410
      %v1360 = vunpack.c.h.b16 %v410
      %v1361 = vunpack.c.l.b16 %v411
      %v1362 = vunpack.c.h.b16 %v411
      %v1363 = vunpack.c.l.b16 %v412
      %v1364 = vunpack.c.h.b16 %v412
      %v1365 = vunpack.c.l.b16 %v413
      %v1366 = vunpack.c.h.b16 %v413
      %v1367 = vunpack.c.l.b16 %v414
      %v1368 = vunpack.c.h.b16 %v414
      %v1369 = vunpack.c.l.b16 %v415
      %v1370 = vunpack.c.h.b16 %v415
      %v1371 = vunpack.c.l.b16 %v416
      %v1372 = vunpack.c.h.b16 %v416
      %v1373 = vunpack.c.l.b16 %v417
      %v1374 = vunpack.c.h.b16 %v417
      %v1375 = vunpack.c.l.b16 %v418
      %v1376 = vunpack.c.h.b16 %v418
      %v1377 = vunpack.c.l.b16 %v419
      %v1378 = vunpack.c.h.b16 %v419
      %v1379 = vunpack.c.l.b16 %v420
      %v1380 = vunpack.c.h.b16 %v420
      %v1381 = vunpack.c.l.b16 %v421
      %v1382 = vunpack.c.h.b16 %v421
      %v1383 = vunpack.c.l.b16 %v422
      %v1384 = vunpack.c.h.b16 %v422
      %v1385 = vunpack.c.l.b16 %v423
      %v1386 = vunpack.c.h.b16 %v423
      %v1387 = vunpack.c.l.b16 %v424
      %v1388 = vunpack.c.h.b16 %v424
      %v1389 = vunpack.c.l.b16 %v425
      %v1390 = vunpack.c.h.b16 %v425
      %v1391 = vunpack.c.l.b16 %v426
      %v1392 = vunpack.c.h.b16 %v426
      %v1393 = vunpack.c.l.b16 %v427
      %v1394 = vunpack.c.h.b16 %v427
      %v1395 = vunpack.c.l.b16 %v428
      %v1396 = vunpack.c.h.b16 %v428
      %v1397 = vunpack.c.l.b16 %v429
      %v1398 = vunpack.c.h.b16 %v429
      %v1399 = vunpack.c.l.b16 %v430
      %v1400 = vunpack.c.h.b16 %v430
      %v1401 = vunpack.c.l.b16 %v431
      %v1402 = vunpack.c.h.b16 %v431
      %v1403 = vunpack.c.l.b16 %v432
      %v1404 = vunpack.c.h.b16 %v432
      %v1405 = vunpack.c.l.b16 %v433
      %v1406 = vunpack.c.h.b16 %v433
      %v1407 = vunpack.c.l.b16 %v434
      %v1408 = vunpack.c.h.b16 %v434
      %v1409 = vunpack.c.l.b16 %v435
      %v1410 = vunpack.c.h.b16 %v435
      %v1411 = vunpack.c.l.b16 %v436
      %v1412 = vunpack.c.h.b16 %v436
      %v1413 = vunpack.c.l.b16 %v437
      %v1414 = vunpack.c.h.b16 %v437
      %v1415 = vunpack.c.l.b16 %v438
      %v1416 = vunpack.c.h.b16 %v438
      %v1417 = vunpack.c.l.b16 %v439
      %v1418 = vunpack.c.h.b16 %v439
      %v1419 = vunpack.c.l.b16 %v440
      %v1420 = vunpack.c.h.b16 %v440
      %v1421 = vunpack.c.l.b16 %v441
      %v1422 = vunpack.c.h.b16 %v441
      %v1423 = vunpack.c.l.b16 %v442
      %v1424 = vunpack.c.h.b16 %v442
      %v1425 = vunpack.c.l.b16 %v443
      %v1426 = vunpack.c.h.b16 %v443
      %v1427 = vunpack.c.l.b16 %v444
      %v1428 = vunpack.c.h.b16 %v444
      %v1429 = vunpack.c.l.b16 %v445
      %v1430 = vunpack.c.h.b16 %v445
      %v1431 = vunpack.c.l.b16 %v446
      %v1432 = vunpack.c.h.b16 %v446
      %v1433 = vunpack.c.l.b16 %v447
      %v1434 = vunpack.c.h.b16 %v447
      %v1435 = vunpack.c.l.b16 %v448
      %v1436 = vunpack.c.h.b16 %v448
      %v1437 = vunpack.c.l.b16 %v449
      %v1438 = vunpack.c.h.b16 %v449
      %v1439 = vunpack.c.l.b16 %v450
      %v1440 = vunpack.c.h.b16 %v450
      %v1441 = vunpack.c.l.b16 %v451
      %v1442 = vunpack.c.h.b16 %v451
      %v1443 = vunpack.c.l.b16 %v452
      %v1444 = vunpack.c.h.b16 %v452
      %v1445 = vunpack.c.l.b16 %v453
      %v1446 = vunpack.c.h.b16 %v453
      %v1447 = vunpack.c.l.b16 %v454
      %v1448 = vunpack.c.h.b16 %v454
      %v1449 = vunpack.c.l.b16 %v455
      %v1450 = vunpack.c.h.b16 %v455
      %v1451 = vunpack.c.l.b16 %v456
      %v1452 = vunpack.c.h.b16 %v456
      %v1453 = vunpack.c.l.b16 %v457
      %v1454 = vunpack.c.h.b16 %v457
      %v1455 = vunpack.c.l.b16 %v458
      %v1456 = vunpack.c.h.b16 %v458
      %v1457 = vunpack.c.l.b16 %v459
      %v1458 = vunpack.c.h.b16 %v459
      %v1459 = vunpack.c.l.b16 %v460
      %v1460 = vunpack.c.h.b16 %v460
      %v1461 = vunpack.c.l.b16 %v461
      %v1462 = vunpack.c.h.b16 %v461
      %v1463 = vunpack.c.l.b16 %v462
      %v1464 = vunpack.c.h.b16 %v462
      %v1465 = vunpack.c.l.b16 %v463
      %v1466 = vunpack.c.h.b16 %v463
      %v1467 = vunpack.c.l.b16 %v464
      %v1468 = vunpack.c.h.b16 %v464
      %v1469 = vunpack.c.l.b16 %v465
      %v1470 = vunpack.c.h.b16 %v465
      %v1471 = vunpack.c.l.b16 %v466
      %v1472 = vunpack.c.h.b16 %v466
      %v1473 = vunpack.c.l.b16 %v467
      %v1474 = vunpack.c.h.b16 %v467
      %v1475 = vunpack.c.l.b16 %v468
      %v1476 = vunpack.c.h.b16 %v468
      %v1477 = vunpack.c.l.b16 %v469
      %v1478 = vunpack.c.h.b16 %v469
      %v1479 = vunpack.c.l.b16 %v470
      %v1480 = vunpack.c.h.b16 %v470
      %v1481 = vunpack.c.l.b16 %v471
      %v1482 = vunpack.c.h.b16 %v471
      %v1483 = vunpack.c.l.b16 %v472
      %v1484 = vunpack.c.h.b16 %v472
      %v1485 = vunpack.c.l.b16 %v473
      %v1486 = vunpack.c.h.b16 %v473
      %v1487 = vunpack.c.l.b16 %v474
      %v1488 = vunpack.c.h.b16 %v474
      %v1489 = vunpack.c.l.b16 %v475
      %v1490 = vunpack.c.h.b16 %v475
      %v1491 = vunpack.c.l.b16 %v476
      %v1492 = vunpack.c.h.b16 %v476
      %v1493 = vunpack.c.l.b16 %v477
      %v1494 = vunpack.c.h.b16 %v477
      %v1495 = vunpack.c.l.b16 %v478
      %v1496 = vunpack.c.h.b16 %v478
      %v1497 = vunpack.c.l.b16 %v479
      %v1498 = vunpack.c.h.b16 %v479
      %v1499 = vunpack.c.l.b16 %v480
      %v1500 = vunpack.c.h.b16 %v480
      %v1501 = vunpack.c.l.b16 %v481
      %v1502 = vunpack.c.h.b16 %v481
      %v1503 = vunpack.c.l.b16 %v482
      %v1504 = vunpack.c.h.b16 %v482
      %v1505 = vunpack.c.l.b16 %v483
      %v1506 = vunpack.c.h.b16 %v483
      %v1507 = vunpack.c.l.b16 %v484
      %v1508 = vunpack.c.h.b16 %v484
      %v1509 = vunpack.c.l.b16 %v485
      %v1510 = vunpack.c.h.b16 %v485
      %v1511 = vunpack.c.l.b16 %v486
      %v1512 = vunpack.c.h.b16 %v486
      %v1513 = vunpack.c.l.b16 %v487
      %v1514 = vunpack.c.h.b16 %v487
      %v1515 = vunpack.c.l.b16 %v488
      %v1516 = vunpack.c.h.b16 %v488
      %v1517 = vunpack.c.l.b16 %v489
      %v1518 = vunpack.c.h.b16 %v489
      %v1519 = vunpack.c.l.b16 %v490
      %v1520 = vunpack.c.h.b16 %v490
      %v1521 = vpack.c.b16 %v1267, %v1265
      %v1522 = vpack.c.b16 %v1268, %v1266
      %v1523 = vpack.c.b16 %v1271, %v1269
      %v1524 = vpack.c.b16 %v1272, %v1270
      %v1525 = vpack.c.b16 %v1275, %v1273
      %v1526 = vpack.c.b16 %v1276, %v1274
      %v1527 = vpack.c.b16 %v1279, %v1277
      %v1528 = vpack.c.b16 %v1280, %v1278
      %v1529 = vpack.c.b16 %v1283, %v1281
      %v1530 = vpack.c.b16 %v1284, %v1282
      %v1531 = vpack.c.b16 %v1287, %v1285
      %v1532 = vpack.c.b16 %v1288, %v1286
      %v1533 = vpack.c.b16 %v1291, %v1289
      %v1534 = vpack.c.b16 %v1292, %v1290
      %v1535 = vpack.c.b16 %v1295, %v1293
      %v1536 = vpack.c.b16 %v1296, %v1294
      %v1537 = vpack.c.b16 %v1299, %v1297
      %v1538 = vpack.c.b16 %v1300, %v1298
      %v1539 = vpack.c.b16 %v1303, %v1301
      %v1540 = vpack.c.b16 %v1304, %v1302
      %v1541 = vpack.c.b16 %v1307, %v1305
      %v1542 = vpack.c.b16 %v1308, %v1306
      %v1543 = vpack.c.b16 %v1311, %v1309
      %v1544 = vpack.c.b16 %v1312, %v1310
      %v1545 = vpack.c.b16 %v1315, %v1313
      %v1546 = vpack.c.b16 %v1316, %v1314
      %v1547 = vpack.c.b16 %v1319, %v1317
      %v1548 = vpack.c.b16 %v1320, %v1318
      %v1549 = vpack.c.b16 %v1323, %v1321
      %v1550 = vpack.c.b16 %v1324, %v1322
      %v1551 = vpack.c.b16 %v1327, %v1325
      %v1552 = vpack.c.b16 %v1328, %v1326
      %v1553 = vpack.c.b16 %v1331, %v1329
      %v1554 = vpack.c.b16 %v1332, %v1330
      %v1555 = vpack.c.b16 %v1335, %v1333
      %v1556 = vpack.c.b16 %v1336, %v1334
      %v1557 = vpack.c.b16 %v1339, %v1337
      %v1558 = vpack.c.b16 %v1340, %v1338
      %v1559 = vpack.c.b16 %v1343, %v1341
      %v1560 = vpack.c.b16 %v1344, %v1342
      %v1561 = vpack.c.b16 %v1347, %v1345
      %v1562 = vpack.c.b16 %v1348, %v1346
      %v1563 = vpack.c.b16 %v1351, %v1349
      %v1564 = vpack.c.b16 %v1352, %v1350
      %v1565 = vpack.c.b16 %v1355, %v1353
      %v1566 = vpack.c.b16 %v1356, %v1354
      %v1567 = vpack.c.b16 %v1359, %v1357
      %v1568 = vpack.c.b16 %v1360, %v1358
      %v1569 = vpack.c.b16 %v1363, %v1361
      %v1570 = vpack.c.b16 %v1364, %v1362
      %v1571 = vpack.c.b16 %v1367, %v1365
      %v1572 = vpack.c.b16 %v1368, %v1366
      %v1573 = vpack.c.b16 %v1371, %v1369
      %v1574 = vpack.c.b16 %v1372, %v1370
      %v1575 = vpack.c.b16 %v1375, %v1373
      %v1576 = vpack.c.b16 %v1376, %v1374
      %v1577 = vpack.c.b16 %v1379, %v1377
      %v1578 = vpack.c.b16 %v1380, %v1378
      %v1579 = vpack.c.b16 %v1383, %v1381
      %v1580 = vpack.c.b16 %v1384, %v1382
      %v1581 = vpack.c.b16 %v1387, %v1385
      %v1582 = vpack.c.b16 %v1388, %v1386
      %v1583 = vpack.c.b16 %v1391, %v1389
      %v1584 = vpack.c.b16 %v1392, %v1390
      %v1585 = vpack.c.b16 %v1395, %v1393
      %v1586 = vpack.c.b16 %v1396, %v1394
      %v1587 = vpack.c.b16 %v1399, %v1397
      %v1588 = vpack.c.b16 %v1400, %v1398
      %v1589 = vpack.c.b16 %v1403, %v1401
      %v1590 = vpack.c.b16 %v1404, %v1402
      %v1591 = vpack.c.b16 %v1407, %v1405
      %v1592 = vpack.c.b16 %v1408, %v1406
      %v1593 = vpack.c.b16 %v1411, %v1409
      %v1594 = vpack.c.b16 %v1412, %v1410
      %v1595 = vpack.c.b16 %v1415, %v1413
      %v1596 = vpack.c.b16 %v1416, %v1414
      %v1597 = vpack.c.b16 %v1419, %v1417
      %v1598 = vpack.c.b16 %v1420, %v1418
      %v1599 = vpack.c.b16 %v1423, %v1421
      %v1600 = vpack.c.b16 %v1424, %v1422
      %v1601 = vpack.c.b16 %v1427, %v1425
      %v1602 = vpack.c.b16 %v1428, %v1426
      %v1603 = vpack.c.b16 %v1431, %v1429
      %v1604 = vpack.c.b16 %v1432, %v1430
      %v1605 = vpack.c.b16 %v1435, %v1433
      %v1606 = vpack.c.b16 %v1436, %v1434
      %v1607 = vpack.c.b16 %v1439, %v1437
      %v1608 = vpack.c.b16 %v1440, %v1438
      %v1609 = vpack.c.b16 %v1443, %v1441
      %v1610 = vpack.c.b16 %v1444, %v1442
      %v1611 = vpack.c.b16 %v1447, %v1445
      %v1612 = vpack.c.b16 %v1448, %v1446
      %v1613 = vpack.c.b16 %v1451, %v1449
      %v1614 = vpack.c.b16 %v1452, %v1450
      %v1615 = vpack.c.b16 %v1455, %v1453
      %v1616 = vpack.c.b16 %v1456, %v1454
      %v1617 = vpack.c.b16 %v1459, %v1457
      %v1618 = vpack.c.b16 %v1460, %v1458
      %v1619 = vpack.c.b16 %v1463, %v1461
      %v1620 = vpack.c.b16 %v1464, %v1462
      %v1621 = vpack.c.b16 %v1467, %v1465
      %v1622 = vpack.c.b16 %v1468, %v1466
      %v1623 = vpack.c.b16 %v1471, %v1469
      %v1624 = vpack.c.b16 %v1472, %v1470
      %v1625 = vpack.c.b16 %v1475, %v1473
      %v1626 = vpack.c.b16 %v1476, %v1474
      %v1627 = vpack.c.b16 %v1479, %v1477
      %v1628 = vpack.c.b16 %v1480, %v1478
      %v1629 = vpack.c.b16 %v1483, %v1481
      %v1630 = vpack.c.b16 %v1484, %v1482
      %v1631 = vpack.c.b16 %v1487, %v1485
      %v1632 = vpack.c.b16 %v1488, %v1486
      %v1633 = vpack.c.b16 %v1491, %v1489
      %v1634 = vpack.c.b16 %v1492, %v1490
      %v1635 = vpack.c.b16 %v1495, %v1493
      %v1636 = vpack.c.b16 %v1496, %v1494
      %v1637 = vpack.c.b16 %v1499, %v1497
      %v1638 = vpack.c.b16 %v1500, %v1498
      %v1639 = vpack.c.b16 %v1503, %v1501
      %v1640 = vpack.c.b16 %v1504, %v1502
      %v1641 = vpack.c.b16 %v1507, %v1505
      %v1642 = vpack.c.b16 %v1508, %v1506
      %v1643 = vpack.c.b16 %v1511, %v1509
      %v1644 = vpack.c.b16 %v1512, %v1510
      %v1645 = vpack.c.b16 %v1515, %v1513
      %v1646 = vpack.c.b16 %v1516, %v1514
      %v1647 = vpack.c.b16 %v1519, %v1517
      %v1648 = vpack.c.b16 %v1520, %v1518
      %1777 = vmatpush.bf16.msra.mxu0 %v1535
      %1778 = vmatpush.bf16.msra.mxu0 %v1533
      %1779 = vmatpush.bf16.msra.mxu0 %v1531
      %1780 = vmatpush.bf16.msra.mxu0 %v1529
      %1781 = vmatpush.bf16.msra.mxu0 %v1527
      %1782 = vmatpush.bf16.msra.mxu0 %v1525
      %1783 = vmatpush.bf16.msra.mxu0 %v1523
      %1784 = vmatpush.bf16.msra.mxu0 %v1521
      %1785 = vmatmul.bf16.gmra.mxu0 %v881
      %v1786 = vpop.f32.mrf.mxu0
      %v1787 = vadd.f32 %v493, %v1786
      %v1788 = vpop.f32.mrf.mxu0
      %v1789 = vadd.f32 %v493, %v1788
      %1790 = vmatmul.bf16.gmra.mxu0 %v889
      %v1791 = vpop.f32.mrf.mxu0
      %v1792 = vadd.f32 %v493, %v1791
      %v1793 = vpop.f32.mrf.mxu0
      %v1794 = vadd.f32 %v493, %v1793
      %1795 = vmatmul.bf16.gmra.mxu0 %v897
      %v1796 = vpop.f32.mrf.mxu0
      %v1797 = vadd.f32 %v493, %v1796
      %v1798 = vpop.f32.mrf.mxu0
      %v1799 = vadd.f32 %v493, %v1798
      %1800 = vmatmul.bf16.gmra.mxu0 %v905
      %v1801 = vpop.f32.mrf.mxu0
      %v1802 = vadd.f32 %v493, %v1801
      %v1803 = vpop.f32.mrf.mxu0
      %v1804 = vadd.f32 %v493, %v1803
      %1805 = vmatmul.bf16.gmra.mxu0 %v913
      %v1806 = vpop.f32.mrf.mxu0
      %v1807 = vadd.f32 %v493, %v1806
      %v1808 = vpop.f32.mrf.mxu0
      %v1809 = vadd.f32 %v493, %v1808
      %1810 = vmatmul.bf16.gmra.mxu0 %v921
      %v1811 = vpop.f32.mrf.mxu0
      %v1812 = vadd.f32 %v493, %v1811
      %v1813 = vpop.f32.mrf.mxu0
      %v1814 = vadd.f32 %v493, %v1813
      %1815 = vmatmul.bf16.gmra.mxu0 %v929
      %v1816 = vpop.f32.mrf.mxu0
      %v1817 = vadd.f32 %v493, %v1816
      %v1818 = vpop.f32.mrf.mxu0
      %v1819 = vadd.f32 %v493, %v1818
      %1820 = vmatmul.bf16.gmra.mxu0 %v937
      %v1821 = vpop.f32.mrf.mxu0
      %v1822 = vadd.f32 %v493, %v1821
      %v1823 = vpop.f32.mrf.mxu0
      %v1824 = vadd.f32 %v493, %v1823
      %1825 = vmatmul.bf16.gmra.mxu0 %v945
      %v1826 = vpop.f32.mrf.mxu0
      %v1827 = vadd.f32 %v493, %v1826
      %v1828 = vpop.f32.mrf.mxu0
      %v1829 = vadd.f32 %v493, %v1828
      %1830 = vmatmul.bf16.gmra.mxu0 %v953
      %v1831 = vpop.f32.mrf.mxu0
      %v1832 = vadd.f32 %v493, %v1831
      %v1833 = vpop.f32.mrf.mxu0
      %v1834 = vadd.f32 %v493, %v1833
      %1835 = vmatmul.bf16.gmra.mxu0 %v961
      %v1836 = vpop.f32.mrf.mxu0
      %v1837 = vadd.f32 %v493, %v1836
      %v1838 = vpop.f32.mrf.mxu0
      %v1839 = vadd.f32 %v493, %v1838
      %1840 = vmatmul.bf16.gmra.mxu0 %v969
      %v1841 = vpop.f32.mrf.mxu0
      %v1842 = vadd.f32 %v493, %v1841
      %v1843 = vpop.f32.mrf.mxu0
      %v1844 = vadd.f32 %v493, %v1843
      %1845 = vmatmul.bf16.gmra.mxu0 %v977
      %v1846 = vpop.f32.mrf.mxu0
      %v1847 = vadd.f32 %v493, %v1846
      %v1848 = vpop.f32.mrf.mxu0
      %v1849 = vadd.f32 %v493, %v1848
      %1850 = vmatmul.bf16.gmra.mxu0 %v985
      %v1851 = vpop.f32.mrf.mxu0
      %v1852 = vadd.f32 %v493, %v1851
      %v1853 = vpop.f32.mrf.mxu0
      %v1854 = vadd.f32 %v493, %v1853
      %1855 = vmatmul.bf16.gmra.mxu0 %v993
      %v1856 = vpop.f32.mrf.mxu0
      %v1857 = vadd.f32 %v493, %v1856
      %v1858 = vpop.f32.mrf.mxu0
      %v1859 = vadd.f32 %v493, %v1858
      %1860 = vmatmul.bf16.gmra.mxu0 %v1001
      %v1861 = vpop.f32.mrf.mxu0
      %v1862 = vadd.f32 %v493, %v1861
      %v1863 = vpop.f32.mrf.mxu0
      %v1864 = vadd.f32 %v493, %v1863
      %1865 = vdwg.mxu0
      %1866 = vmatpush.bf16.msra.mxu0 %v1551
      %1867 = vmatpush.bf16.msra.mxu0 %v1549
      %1868 = vmatpush.bf16.msra.mxu0 %v1547
      %1869 = vmatpush.bf16.msra.mxu0 %v1545
      %1870 = vmatpush.bf16.msra.mxu0 %v1543
      %1871 = vmatpush.bf16.msra.mxu0 %v1541
      %1872 = vmatpush.bf16.msra.mxu0 %v1539
      %1873 = vmatpush.bf16.msra.mxu0 %v1537
      %1874 = vmatmul.bf16.gmra.mxu0 %v882
      %v1875 = vpop.f32.mrf.mxu0
      %v1876 = vadd.f32 %v1787, %v1875
      %v1877 = vpop.f32.mrf.mxu0
      %v1878 = vadd.f32 %v1789, %v1877
      %1879 = vmatmul.bf16.gmra.mxu0 %v890
      %v1880 = vpop.f32.mrf.mxu0
      %v1881 = vadd.f32 %v1792, %v1880
      %v1882 = vpop.f32.mrf.mxu0
      %v1883 = vadd.f32 %v1794, %v1882
      %1884 = vmatmul.bf16.gmra.mxu0 %v898
      %v1885 = vpop.f32.mrf.mxu0
      %v1886 = vadd.f32 %v1797, %v1885
      %v1887 = vpop.f32.mrf.mxu0
      %v1888 = vadd.f32 %v1799, %v1887
      %1889 = vmatmul.bf16.gmra.mxu0 %v906
      %v1890 = vpop.f32.mrf.mxu0
      %v1891 = vadd.f32 %v1802, %v1890
      %v1892 = vpop.f32.mrf.mxu0
      %v1893 = vadd.f32 %v1804, %v1892
      %1894 = vmatmul.bf16.gmra.mxu0 %v914
      %v1895 = vpop.f32.mrf.mxu0
      %v1896 = vadd.f32 %v1807, %v1895
      %v1897 = vpop.f32.mrf.mxu0
      %v1898 = vadd.f32 %v1809, %v1897
      %1899 = vmatmul.bf16.gmra.mxu0 %v922
      %v1900 = vpop.f32.mrf.mxu0
      %v1901 = vadd.f32 %v1812, %v1900
      %v1902 = vpop.f32.mrf.mxu0
      %v1903 = vadd.f32 %v1814, %v1902
      %1904 = vmatmul.bf16.gmra.mxu0 %v930
      %v1905 = vpop.f32.mrf.mxu0
      %v1906 = vadd.f32 %v1817, %v1905
      %v1907 = vpop.f32.mrf.mxu0
      %v1908 = vadd.f32 %v1819, %v1907
      %1909 = vmatmul.bf16.gmra.mxu0 %v938
      %v1910 = vpop.f32.mrf.mxu0
      %v1911 = vadd.f32 %v1822, %v1910
      %v1912 = vpop.f32.mrf.mxu0
      %v1913 = vadd.f32 %v1824, %v1912
      %1914 = vmatmul.bf16.gmra.mxu0 %v946
      %v1915 = vpop.f32.mrf.mxu0
      %v1916 = vadd.f32 %v1827, %v1915
      %v1917 = vpop.f32.mrf.mxu0
      %v1918 = vadd.f32 %v1829, %v1917
      %1919 = vmatmul.bf16.gmra.mxu0 %v954
      %v1920 = vpop.f32.mrf.mxu0
      %v1921 = vadd.f32 %v1832, %v1920
      %v1922 = vpop.f32.mrf.mxu0
      %v1923 = vadd.f32 %v1834, %v1922
      %1924 = vmatmul.bf16.gmra.mxu0 %v962
      %v1925 = vpop.f32.mrf.mxu0
      %v1926 = vadd.f32 %v1837, %v1925
      %v1927 = vpop.f32.mrf.mxu0
      %v1928 = vadd.f32 %v1839, %v1927
      %1929 = vmatmul.bf16.gmra.mxu0 %v970
      %v1930 = vpop.f32.mrf.mxu0
      %v1931 = vadd.f32 %v1842, %v1930
      %v1932 = vpop.f32.mrf.mxu0
      %v1933 = vadd.f32 %v1844, %v1932
      %1934 = vmatmul.bf16.gmra.mxu0 %v978
      %v1935 = vpop.f32.mrf.mxu0
      %v1936 = vadd.f32 %v1847, %v1935
      %v1937 = vpop.f32.mrf.mxu0
      %v1938 = vadd.f32 %v1849, %v1937
      %1939 = vmatmul.bf16.gmra.mxu0 %v986
      %v1940 = vpop.f32.mrf.mxu0
      %v1941 = vadd.f32 %v1852, %v1940
      %v1942 = vpop.f32.mrf.mxu0
      %v1943 = vadd.f32 %v1854, %v1942
      %1944 = vmatmul.bf16.gmra.mxu0 %v994
      %v1945 = vpop.f32.mrf.mxu0
      %v1946 = vadd.f32 %v1857, %v1945
      %v1947 = vpop.f32.mrf.mxu0
      %v1948 = vadd.f32 %v1859, %v1947
      %1949 = vmatmul.bf16.gmra.mxu0 %v1002
      %v1950 = vpop.f32.mrf.mxu0
      %v1951 = vadd.f32 %v1862, %v1950
      %v1952 = vpop.f32.mrf.mxu0
      %v1953 = vadd.f32 %v1864, %v1952
      %1954 = vdwg.mxu0
      %1955 = vmatpush.bf16.msra.mxu0 %v1567
      %1956 = vmatpush.bf16.msra.mxu0 %v1565
      %1957 = vmatpush.bf16.msra.mxu0 %v1563
      %1958 = vmatpush.bf16.msra.mxu0 %v1561
      %1959 = vmatpush.bf16.msra.mxu0 %v1559
      %1960 = vmatpush.bf16.msra.mxu0 %v1557
      %1961 = vmatpush.bf16.msra.mxu0 %v1555
      %1962 = vmatpush.bf16.msra.mxu0 %v1553
      %1963 = vmatmul.bf16.gmra.mxu0 %v883
      %v1964 = vpop.f32.mrf.mxu0
      %v1965 = vadd.f32 %v1876, %v1964
      %v1966 = vpop.f32.mrf.mxu0
      %v1967 = vadd.f32 %v1878, %v1966
      %1968 = vmatmul.bf16.gmra.mxu0 %v891
      %v1969 = vpop.f32.mrf.mxu0
      %v1970 = vadd.f32 %v1881, %v1969
      %v1971 = vpop.f32.mrf.mxu0
      %v1972 = vadd.f32 %v1883, %v1971
      %1973 = vmatmul.bf16.gmra.mxu0 %v899
      %v1974 = vpop.f32.mrf.mxu0
      %v1975 = vadd.f32 %v1886, %v1974
      %v1976 = vpop.f32.mrf.mxu0
      %v1977 = vadd.f32 %v1888, %v1976
      %1978 = vmatmul.bf16.gmra.mxu0 %v907
      %v1979 = vpop.f32.mrf.mxu0
      %v1980 = vadd.f32 %v1891, %v1979
      %v1981 = vpop.f32.mrf.mxu0
      %v1982 = vadd.f32 %v1893, %v1981
      %1983 = vmatmul.bf16.gmra.mxu0 %v915
      %v1984 = vpop.f32.mrf.mxu0
      %v1985 = vadd.f32 %v1896, %v1984
      %v1986 = vpop.f32.mrf.mxu0
      %v1987 = vadd.f32 %v1898, %v1986
      %1988 = vmatmul.bf16.gmra.mxu0 %v923
      %v1989 = vpop.f32.mrf.mxu0
      %v1990 = vadd.f32 %v1901, %v1989
      %v1991 = vpop.f32.mrf.mxu0
      %v1992 = vadd.f32 %v1903, %v1991
      %1993 = vmatmul.bf16.gmra.mxu0 %v931
      %v1994 = vpop.f32.mrf.mxu0
      %v1995 = vadd.f32 %v1906, %v1994
      %v1996 = vpop.f32.mrf.mxu0
      %v1997 = vadd.f32 %v1908, %v1996
      %1998 = vmatmul.bf16.gmra.mxu0 %v939
      %v1999 = vpop.f32.mrf.mxu0
      %v2000 = vadd.f32 %v1911, %v1999
      %v2001 = vpop.f32.mrf.mxu0
      %v2002 = vadd.f32 %v1913, %v2001
      %2003 = vmatmul.bf16.gmra.mxu0 %v947
      %v2004 = vpop.f32.mrf.mxu0
      %v2005 = vadd.f32 %v1916, %v2004
      %v2006 = vpop.f32.mrf.mxu0
      %v2007 = vadd.f32 %v1918, %v2006
      %2008 = vmatmul.bf16.gmra.mxu0 %v955
      %v2009 = vpop.f32.mrf.mxu0
      %v2010 = vadd.f32 %v1921, %v2009
      %v2011 = vpop.f32.mrf.mxu0
      %v2012 = vadd.f32 %v1923, %v2011
      %2013 = vmatmul.bf16.gmra.mxu0 %v963
      %v2014 = vpop.f32.mrf.mxu0
      %v2015 = vadd.f32 %v1926, %v2014
      %v2016 = vpop.f32.mrf.mxu0
      %v2017 = vadd.f32 %v1928, %v2016
      %2018 = vmatmul.bf16.gmra.mxu0 %v971
      %v2019 = vpop.f32.mrf.mxu0
      %v2020 = vadd.f32 %v1931, %v2019
      %v2021 = vpop.f32.mrf.mxu0
      %v2022 = vadd.f32 %v1933, %v2021
      %2023 = vmatmul.bf16.gmra.mxu0 %v979
      %v2024 = vpop.f32.mrf.mxu0
      %v2025 = vadd.f32 %v1936, %v2024
      %v2026 = vpop.f32.mrf.mxu0
      %v2027 = vadd.f32 %v1938, %v2026
      %2028 = vmatmul.bf16.gmra.mxu0 %v987
      %v2029 = vpop.f32.mrf.mxu0
      %v2030 = vadd.f32 %v1941, %v2029
      %v2031 = vpop.f32.mrf.mxu0
      %v2032 = vadd.f32 %v1943, %v2031
      %2033 = vmatmul.bf16.gmra.mxu0 %v995
      %v2034 = vpop.f32.mrf.mxu0
      %v2035 = vadd.f32 %v1946, %v2034
      %v2036 = vpop.f32.mrf.mxu0
      %v2037 = vadd.f32 %v1948, %v2036
      %2038 = vmatmul.bf16.gmra.mxu0 %v1003
      %v2039 = vpop.f32.mrf.mxu0
      %v2040 = vadd.f32 %v1951, %v2039
      %v2041 = vpop.f32.mrf.mxu0
      %v2042 = vadd.f32 %v1953, %v2041
      %2043 = vdwg.mxu0
      %2044 = vmatpush.bf16.msra.mxu0 %v1583
      %2045 = vmatpush.bf16.msra.mxu0 %v1581
      %2046 = vmatpush.bf16.msra.mxu0 %v1579
      %2047 = vmatpush.bf16.msra.mxu0 %v1577
      %2048 = vmatpush.bf16.msra.mxu0 %v1575
      %2049 = vmatpush.bf16.msra.mxu0 %v1573
      %2050 = vmatpush.bf16.msra.mxu0 %v1571
      %2051 = vmatpush.bf16.msra.mxu0 %v1569
      %2052 = vmatmul.bf16.gmra.mxu0 %v884
      %v2053 = vpop.f32.mrf.mxu0
      %v2054 = vadd.f32 %v1965, %v2053
      %v2055 = vpop.f32.mrf.mxu0
      %v2056 = vadd.f32 %v1967, %v2055
      %2057 = vmatmul.bf16.gmra.mxu0 %v892
      %v2058 = vpop.f32.mrf.mxu0
      %v2059 = vadd.f32 %v1970, %v2058
      %v2060 = vpop.f32.mrf.mxu0
      %v2061 = vadd.f32 %v1972, %v2060
      %2062 = vmatmul.bf16.gmra.mxu0 %v900
      %v2063 = vpop.f32.mrf.mxu0
      %v2064 = vadd.f32 %v1975, %v2063
      %v2065 = vpop.f32.mrf.mxu0
      %v2066 = vadd.f32 %v1977, %v2065
      %2067 = vmatmul.bf16.gmra.mxu0 %v908
      %v2068 = vpop.f32.mrf.mxu0
      %v2069 = vadd.f32 %v1980, %v2068
      %v2070 = vpop.f32.mrf.mxu0
      %v2071 = vadd.f32 %v1982, %v2070
      %2072 = vmatmul.bf16.gmra.mxu0 %v916
      %v2073 = vpop.f32.mrf.mxu0
      %v2074 = vadd.f32 %v1985, %v2073
      %v2075 = vpop.f32.mrf.mxu0
      %v2076 = vadd.f32 %v1987, %v2075
      %2077 = vmatmul.bf16.gmra.mxu0 %v924
      %v2078 = vpop.f32.mrf.mxu0
      %v2079 = vadd.f32 %v1990, %v2078
      %v2080 = vpop.f32.mrf.mxu0
      %v2081 = vadd.f32 %v1992, %v2080
      %2082 = vmatmul.bf16.gmra.mxu0 %v932
      %v2083 = vpop.f32.mrf.mxu0
      %v2084 = vadd.f32 %v1995, %v2083
      %v2085 = vpop.f32.mrf.mxu0
      %v2086 = vadd.f32 %v1997, %v2085
      %2087 = vmatmul.bf16.gmra.mxu0 %v940
      %v2088 = vpop.f32.mrf.mxu0
      %v2089 = vadd.f32 %v2000, %v2088
      %v2090 = vpop.f32.mrf.mxu0
      %v2091 = vadd.f32 %v2002, %v2090
      %2092 = vmatmul.bf16.gmra.mxu0 %v948
      %v2093 = vpop.f32.mrf.mxu0
      %v2094 = vadd.f32 %v2005, %v2093
      %v2095 = vpop.f32.mrf.mxu0
      %v2096 = vadd.f32 %v2007, %v2095
      %2097 = vmatmul.bf16.gmra.mxu0 %v956
      %v2098 = vpop.f32.mrf.mxu0
      %v2099 = vadd.f32 %v2010, %v2098
      %v2100 = vpop.f32.mrf.mxu0
      %v2101 = vadd.f32 %v2012, %v2100
      %2102 = vmatmul.bf16.gmra.mxu0 %v964
      %v2103 = vpop.f32.mrf.mxu0
      %v2104 = vadd.f32 %v2015, %v2103
      %v2105 = vpop.f32.mrf.mxu0
      %v2106 = vadd.f32 %v2017, %v2105
      %2107 = vmatmul.bf16.gmra.mxu0 %v972
      %v2108 = vpop.f32.mrf.mxu0
      %v2109 = vadd.f32 %v2020, %v2108
      %v2110 = vpop.f32.mrf.mxu0
      %v2111 = vadd.f32 %v2022, %v2110
      %2112 = vmatmul.bf16.gmra.mxu0 %v980
      %v2113 = vpop.f32.mrf.mxu0
      %v2114 = vadd.f32 %v2025, %v2113
      %v2115 = vpop.f32.mrf.mxu0
      %v2116 = vadd.f32 %v2027, %v2115
      %2117 = vmatmul.bf16.gmra.mxu0 %v988
      %v2118 = vpop.f32.mrf.mxu0
      %v2119 = vadd.f32 %v2030, %v2118
      %v2120 = vpop.f32.mrf.mxu0
      %v2121 = vadd.f32 %v2032, %v2120
      %2122 = vmatmul.bf16.gmra.mxu0 %v996
      %v2123 = vpop.f32.mrf.mxu0
      %v2124 = vadd.f32 %v2035, %v2123
      %v2125 = vpop.f32.mrf.mxu0
      %v2126 = vadd.f32 %v2037, %v2125
      %2127 = vmatmul.bf16.gmra.mxu0 %v1004
      %v2128 = vpop.f32.mrf.mxu0
      %v2129 = vadd.f32 %v2040, %v2128
      %v2130 = vpop.f32.mrf.mxu0
      %v2131 = vadd.f32 %v2042, %v2130
      %2132 = vdwg.mxu0
      %2133 = vmatpush.bf16.msra.mxu0 %v1599
      %2134 = vmatpush.bf16.msra.mxu0 %v1597
      %2135 = vmatpush.bf16.msra.mxu0 %v1595
      %2136 = vmatpush.bf16.msra.mxu0 %v1593
      %2137 = vmatpush.bf16.msra.mxu0 %v1591
      %2138 = vmatpush.bf16.msra.mxu0 %v1589
      %2139 = vmatpush.bf16.msra.mxu0 %v1587
      %2140 = vmatpush.bf16.msra.mxu0 %v1585
      %2141 = vmatmul.bf16.gmra.mxu0 %v885
      %v2142 = vpop.f32.mrf.mxu0
      %v2143 = vadd.f32 %v2054, %v2142
      %v2144 = vpop.f32.mrf.mxu0
      %v2145 = vadd.f32 %v2056, %v2144
      %2146 = vmatmul.bf16.gmra.mxu0 %v893
      %v2147 = vpop.f32.mrf.mxu0
      %v2148 = vadd.f32 %v2059, %v2147
      %v2149 = vpop.f32.mrf.mxu0
      %v2150 = vadd.f32 %v2061, %v2149
      %2151 = vmatmul.bf16.gmra.mxu0 %v901
      %v2152 = vpop.f32.mrf.mxu0
      %v2153 = vadd.f32 %v2064, %v2152
      %v2154 = vpop.f32.mrf.mxu0
      %v2155 = vadd.f32 %v2066, %v2154
      %2156 = vmatmul.bf16.gmra.mxu0 %v909
      %v2157 = vpop.f32.mrf.mxu0
      %v2158 = vadd.f32 %v2069, %v2157
      %v2159 = vpop.f32.mrf.mxu0
      %v2160 = vadd.f32 %v2071, %v2159
      %2161 = vmatmul.bf16.gmra.mxu0 %v917
      %v2162 = vpop.f32.mrf.mxu0
      %v2163 = vadd.f32 %v2074, %v2162
      %v2164 = vpop.f32.mrf.mxu0
      %v2165 = vadd.f32 %v2076, %v2164
      %2166 = vmatmul.bf16.gmra.mxu0 %v925
      %v2167 = vpop.f32.mrf.mxu0
      %v2168 = vadd.f32 %v2079, %v2167
      %v2169 = vpop.f32.mrf.mxu0
      %v2170 = vadd.f32 %v2081, %v2169
      %2171 = vmatmul.bf16.gmra.mxu0 %v933
      %v2172 = vpop.f32.mrf.mxu0
      %v2173 = vadd.f32 %v2084, %v2172
      %v2174 = vpop.f32.mrf.mxu0
      %v2175 = vadd.f32 %v2086, %v2174
      %2176 = vmatmul.bf16.gmra.mxu0 %v941
      %v2177 = vpop.f32.mrf.mxu0
      %v2178 = vadd.f32 %v2089, %v2177
      %v2179 = vpop.f32.mrf.mxu0
      %v2180 = vadd.f32 %v2091, %v2179
      %2181 = vmatmul.bf16.gmra.mxu0 %v949
      %v2182 = vpop.f32.mrf.mxu0
      %v2183 = vadd.f32 %v2094, %v2182
      %v2184 = vpop.f32.mrf.mxu0
      %v2185 = vadd.f32 %v2096, %v2184
      %2186 = vmatmul.bf16.gmra.mxu0 %v957
      %v2187 = vpop.f32.mrf.mxu0
      %v2188 = vadd.f32 %v2099, %v2187
      %v2189 = vpop.f32.mrf.mxu0
      %v2190 = vadd.f32 %v2101, %v2189
      %2191 = vmatmul.bf16.gmra.mxu0 %v965
      %v2192 = vpop.f32.mrf.mxu0
      %v2193 = vadd.f32 %v2104, %v2192
      %v2194 = vpop.f32.mrf.mxu0
      %v2195 = vadd.f32 %v2106, %v2194
      %2196 = vmatmul.bf16.gmra.mxu0 %v973
      %v2197 = vpop.f32.mrf.mxu0
      %v2198 = vadd.f32 %v2109, %v2197
      %v2199 = vpop.f32.mrf.mxu0
      %v2200 = vadd.f32 %v2111, %v2199
      %2201 = vmatmul.bf16.gmra.mxu0 %v981
      %v2202 = vpop.f32.mrf.mxu0
      %v2203 = vadd.f32 %v2114, %v2202
      %v2204 = vpop.f32.mrf.mxu0
      %v2205 = vadd.f32 %v2116, %v2204
      %2206 = vmatmul.bf16.gmra.mxu0 %v989
      %v2207 = vpop.f32.mrf.mxu0
      %v2208 = vadd.f32 %v2119, %v2207
      %v2209 = vpop.f32.mrf.mxu0
      %v2210 = vadd.f32 %v2121, %v2209
      %2211 = vmatmul.bf16.gmra.mxu0 %v997
      %v2212 = vpop.f32.mrf.mxu0
      %v2213 = vadd.f32 %v2124, %v2212
      %v2214 = vpop.f32.mrf.mxu0
      %v2215 = vadd.f32 %v2126, %v2214
      %2216 = vmatmul.bf16.gmra.mxu0 %v1005
      %v2217 = vpop.f32.mrf.mxu0
      %v2218 = vadd.f32 %v2129, %v2217
      %v2219 = vpop.f32.mrf.mxu0
      %v2220 = vadd.f32 %v2131, %v2219
      %2221 = vdwg.mxu0
      %2222 = vmatpush.bf16.msra.mxu0 %v1615
      %2223 = vmatpush.bf16.msra.mxu0 %v1613
      %2224 = vmatpush.bf16.msra.mxu0 %v1611
      %2225 = vmatpush.bf16.msra.mxu0 %v1609
      %2226 = vmatpush.bf16.msra.mxu0 %v1607
      %2227 = vmatpush.bf16.msra.mxu0 %v1605
      %2228 = vmatpush.bf16.msra.mxu0 %v1603
      %2229 = vmatpush.bf16.msra.mxu0 %v1601
      %2230 = vmatmul.bf16.gmra.mxu0 %v886
      %v2231 = vpop.f32.mrf.mxu0
      %v2232 = vadd.f32 %v2143, %v2231
      %v2233 = vpop.f32.mrf.mxu0
      %v2234 = vadd.f32 %v2145, %v2233
      %2235 = vmatmul.bf16.gmra.mxu0 %v894
      %v2236 = vpop.f32.mrf.mxu0
      %v2237 = vadd.f32 %v2148, %v2236
      %v2238 = vpop.f32.mrf.mxu0
      %v2239 = vadd.f32 %v2150, %v2238
      %2240 = vmatmul.bf16.gmra.mxu0 %v902
      %v2241 = vpop.f32.mrf.mxu0
      %v2242 = vadd.f32 %v2153, %v2241
      %v2243 = vpop.f32.mrf.mxu0
      %v2244 = vadd.f32 %v2155, %v2243
      %2245 = vmatmul.bf16.gmra.mxu0 %v910
      %v2246 = vpop.f32.mrf.mxu0
      %v2247 = vadd.f32 %v2158, %v2246
      %v2248 = vpop.f32.mrf.mxu0
      %v2249 = vadd.f32 %v2160, %v2248
      %2250 = vmatmul.bf16.gmra.mxu0 %v918
      %v2251 = vpop.f32.mrf.mxu0
      %v2252 = vadd.f32 %v2163, %v2251
      %v2253 = vpop.f32.mrf.mxu0
      %v2254 = vadd.f32 %v2165, %v2253
      %2255 = vmatmul.bf16.gmra.mxu0 %v926
      %v2256 = vpop.f32.mrf.mxu0
      %v2257 = vadd.f32 %v2168, %v2256
      %v2258 = vpop.f32.mrf.mxu0
      %v2259 = vadd.f32 %v2170, %v2258
      %2260 = vmatmul.bf16.gmra.mxu0 %v934
      %v2261 = vpop.f32.mrf.mxu0
      %v2262 = vadd.f32 %v2173, %v2261
      %v2263 = vpop.f32.mrf.mxu0
      %v2264 = vadd.f32 %v2175, %v2263
      %2265 = vmatmul.bf16.gmra.mxu0 %v942
      %v2266 = vpop.f32.mrf.mxu0
      %v2267 = vadd.f32 %v2178, %v2266
      %v2268 = vpop.f32.mrf.mxu0
      %v2269 = vadd.f32 %v2180, %v2268
      %2270 = vmatmul.bf16.gmra.mxu0 %v950
      %v2271 = vpop.f32.mrf.mxu0
      %v2272 = vadd.f32 %v2183, %v2271
      %v2273 = vpop.f32.mrf.mxu0
      %v2274 = vadd.f32 %v2185, %v2273
      %2275 = vmatmul.bf16.gmra.mxu0 %v958
      %v2276 = vpop.f32.mrf.mxu0
      %v2277 = vadd.f32 %v2188, %v2276
      %v2278 = vpop.f32.mrf.mxu0
      %v2279 = vadd.f32 %v2190, %v2278
      %2280 = vmatmul.bf16.gmra.mxu0 %v966
      %v2281 = vpop.f32.mrf.mxu0
      %v2282 = vadd.f32 %v2193, %v2281
      %v2283 = vpop.f32.mrf.mxu0
      %v2284 = vadd.f32 %v2195, %v2283
      %2285 = vmatmul.bf16.gmra.mxu0 %v974
      %v2286 = vpop.f32.mrf.mxu0
      %v2287 = vadd.f32 %v2198, %v2286
      %v2288 = vpop.f32.mrf.mxu0
      %v2289 = vadd.f32 %v2200, %v2288
      %2290 = vmatmul.bf16.gmra.mxu0 %v982
      %v2291 = vpop.f32.mrf.mxu0
      %v2292 = vadd.f32 %v2203, %v2291
      %v2293 = vpop.f32.mrf.mxu0
      %v2294 = vadd.f32 %v2205, %v2293
      %2295 = vmatmul.bf16.gmra.mxu0 %v990
      %v2296 = vpop.f32.mrf.mxu0
      %v2297 = vadd.f32 %v2208, %v2296
      %v2298 = vpop.f32.mrf.mxu0
      %v2299 = vadd.f32 %v2210, %v2298
      %2300 = vmatmul.bf16.gmra.mxu0 %v998
      %v2301 = vpop.f32.mrf.mxu0
      %v2302 = vadd.f32 %v2213, %v2301
      %v2303 = vpop.f32.mrf.mxu0
      %v2304 = vadd.f32 %v2215, %v2303
      %2305 = vmatmul.bf16.gmra.mxu0 %v1006
      %v2306 = vpop.f32.mrf.mxu0
      %v2307 = vadd.f32 %v2218, %v2306
      %v2308 = vpop.f32.mrf.mxu0
      %v2309 = vadd.f32 %v2220, %v2308
      %2310 = vdwg.mxu0
      %2311 = vmatpush.bf16.msra.mxu0 %v1631
      %2312 = vmatpush.bf16.msra.mxu0 %v1629
      %2313 = vmatpush.bf16.msra.mxu0 %v1627
      %2314 = vmatpush.bf16.msra.mxu0 %v1625
      %2315 = vmatpush.bf16.msra.mxu0 %v1623
      %2316 = vmatpush.bf16.msra.mxu0 %v1621
      %2317 = vmatpush.bf16.msra.mxu0 %v1619
      %2318 = vmatpush.bf16.msra.mxu0 %v1617
      %2319 = vmatmul.bf16.gmra.mxu0 %v887
      %v2320 = vpop.f32.mrf.mxu0
      %v2321 = vadd.f32 %v2232, %v2320
      %v2322 = vpop.f32.mrf.mxu0
      %v2323 = vadd.f32 %v2234, %v2322
      %2324 = vmatmul.bf16.gmra.mxu0 %v895
      %v2325 = vpop.f32.mrf.mxu0
      %v2326 = vadd.f32 %v2237, %v2325
      %v2327 = vpop.f32.mrf.mxu0
      %v2328 = vadd.f32 %v2239, %v2327
      %2329 = vmatmul.bf16.gmra.mxu0 %v903
      %v2330 = vpop.f32.mrf.mxu0
      %v2331 = vadd.f32 %v2242, %v2330
      %v2332 = vpop.f32.mrf.mxu0
      %v2333 = vadd.f32 %v2244, %v2332
      %2334 = vmatmul.bf16.gmra.mxu0 %v911
      %v2335 = vpop.f32.mrf.mxu0
      %v2336 = vadd.f32 %v2247, %v2335
      %v2337 = vpop.f32.mrf.mxu0
      %v2338 = vadd.f32 %v2249, %v2337
      %2339 = vmatmul.bf16.gmra.mxu0 %v919
      %v2340 = vpop.f32.mrf.mxu0
      %v2341 = vadd.f32 %v2252, %v2340
      %v2342 = vpop.f32.mrf.mxu0
      %v2343 = vadd.f32 %v2254, %v2342
      %2344 = vmatmul.bf16.gmra.mxu0 %v927
      %v2345 = vpop.f32.mrf.mxu0
      %v2346 = vadd.f32 %v2257, %v2345
      %v2347 = vpop.f32.mrf.mxu0
      %v2348 = vadd.f32 %v2259, %v2347
      %2349 = vmatmul.bf16.gmra.mxu0 %v935
      %v2350 = vpop.f32.mrf.mxu0
      %v2351 = vadd.f32 %v2262, %v2350
      %v2352 = vpop.f32.mrf.mxu0
      %v2353 = vadd.f32 %v2264, %v2352
      %2354 = vmatmul.bf16.gmra.mxu0 %v943
      %v2355 = vpop.f32.mrf.mxu0
      %v2356 = vadd.f32 %v2267, %v2355
      %v2357 = vpop.f32.mrf.mxu0
      %v2358 = vadd.f32 %v2269, %v2357
      %2359 = vmatmul.bf16.gmra.mxu0 %v951
      %v2360 = vpop.f32.mrf.mxu0
      %v2361 = vadd.f32 %v2272, %v2360
      %v2362 = vpop.f32.mrf.mxu0
      %v2363 = vadd.f32 %v2274, %v2362
      %2364 = vmatmul.bf16.gmra.mxu0 %v959
      %v2365 = vpop.f32.mrf.mxu0
      %v2366 = vadd.f32 %v2277, %v2365
      %v2367 = vpop.f32.mrf.mxu0
      %v2368 = vadd.f32 %v2279, %v2367
      %2369 = vmatmul.bf16.gmra.mxu0 %v967
      %v2370 = vpop.f32.mrf.mxu0
      %v2371 = vadd.f32 %v2282, %v2370
      %v2372 = vpop.f32.mrf.mxu0
      %v2373 = vadd.f32 %v2284, %v2372
      %2374 = vmatmul.bf16.gmra.mxu0 %v975
      %v2375 = vpop.f32.mrf.mxu0
      %v2376 = vadd.f32 %v2287, %v2375
      %v2377 = vpop.f32.mrf.mxu0
      %v2378 = vadd.f32 %v2289, %v2377
      %2379 = vmatmul.bf16.gmra.mxu0 %v983
      %v2380 = vpop.f32.mrf.mxu0
      %v2381 = vadd.f32 %v2292, %v2380
      %v2382 = vpop.f32.mrf.mxu0
      %v2383 = vadd.f32 %v2294, %v2382
      %2384 = vmatmul.bf16.gmra.mxu0 %v991
      %v2385 = vpop.f32.mrf.mxu0
      %v2386 = vadd.f32 %v2297, %v2385
      %v2387 = vpop.f32.mrf.mxu0
      %v2388 = vadd.f32 %v2299, %v2387
      %2389 = vmatmul.bf16.gmra.mxu0 %v999
      %v2390 = vpop.f32.mrf.mxu0
      %v2391 = vadd.f32 %v2302, %v2390
      %v2392 = vpop.f32.mrf.mxu0
      %v2393 = vadd.f32 %v2304, %v2392
      %2394 = vmatmul.bf16.gmra.mxu0 %v1007
      %v2395 = vpop.f32.mrf.mxu0
      %v2396 = vadd.f32 %v2307, %v2395
      %v2397 = vpop.f32.mrf.mxu0
      %v2398 = vadd.f32 %v2309, %v2397
      %2399 = vdwg.mxu0
      %2400 = vmatpush.bf16.msra.mxu0 %v1647
      %2401 = vmatpush.bf16.msra.mxu0 %v1645
      %2402 = vmatpush.bf16.msra.mxu0 %v1643
      %2403 = vmatpush.bf16.msra.mxu0 %v1641
      %2404 = vmatpush.bf16.msra.mxu0 %v1639
      %2405 = vmatpush.bf16.msra.mxu0 %v1637
      %2406 = vmatpush.bf16.msra.mxu0 %v1635
      %2407 = vmatpush.bf16.msra.mxu0 %v1633
      %2408 = vmatmul.bf16.gmra.mxu0 %v888
      %v2409 = vpop.f32.mrf.mxu0
      %v2410 = vadd.f32 %v2321, %v2409
      %v2411 = vpop.f32.mrf.mxu0
      %v2412 = vadd.f32 %v2323, %v2411
      %2413 = vmatmul.bf16.gmra.mxu0 %v896
      %v2414 = vpop.f32.mrf.mxu0
      %v2415 = vadd.f32 %v2326, %v2414
      %v2416 = vpop.f32.mrf.mxu0
      %v2417 = vadd.f32 %v2328, %v2416
      %2418 = vmatmul.bf16.gmra.mxu0 %v904
      %v2419 = vpop.f32.mrf.mxu0
      %v2420 = vadd.f32 %v2331, %v2419
      %v2421 = vpop.f32.mrf.mxu0
      %v2422 = vadd.f32 %v2333, %v2421
      %2423 = vmatmul.bf16.gmra.mxu0 %v912
      %v2424 = vpop.f32.mrf.mxu0
      %v2425 = vadd.f32 %v2336, %v2424
      %v2426 = vpop.f32.mrf.mxu0
      %v2427 = vadd.f32 %v2338, %v2426
      %2428 = vmatmul.bf16.gmra.mxu0 %v920
      %v2429 = vpop.f32.mrf.mxu0
      %v2430 = vadd.f32 %v2341, %v2429
      %v2431 = vpop.f32.mrf.mxu0
      %v2432 = vadd.f32 %v2343, %v2431
      %2433 = vmatmul.bf16.gmra.mxu0 %v928
      %v2434 = vpop.f32.mrf.mxu0
      %v2435 = vadd.f32 %v2346, %v2434
      %v2436 = vpop.f32.mrf.mxu0
      %v2437 = vadd.f32 %v2348, %v2436
      %2438 = vmatmul.bf16.gmra.mxu0 %v936
      %v2439 = vpop.f32.mrf.mxu0
      %v2440 = vadd.f32 %v2351, %v2439
      %v2441 = vpop.f32.mrf.mxu0
      %v2442 = vadd.f32 %v2353, %v2441
      %2443 = vmatmul.bf16.gmra.mxu0 %v944
      %v2444 = vpop.f32.mrf.mxu0
      %v2445 = vadd.f32 %v2356, %v2444
      %v2446 = vpop.f32.mrf.mxu0
      %v2447 = vadd.f32 %v2358, %v2446
      %2448 = vmatmul.bf16.gmra.mxu0 %v952
      %v2449 = vpop.f32.mrf.mxu0
      %v2450 = vadd.f32 %v2361, %v2449
      %v2451 = vpop.f32.mrf.mxu0
      %v2452 = vadd.f32 %v2363, %v2451
      %2453 = vmatmul.bf16.gmra.mxu0 %v960
      %v2454 = vpop.f32.mrf.mxu0
      %v2455 = vadd.f32 %v2366, %v2454
      %v2456 = vpop.f32.mrf.mxu0
      %v2457 = vadd.f32 %v2368, %v2456
      %2458 = vmatmul.bf16.gmra.mxu0 %v968
      %v2459 = vpop.f32.mrf.mxu0
      %v2460 = vadd.f32 %v2371, %v2459
      %v2461 = vpop.f32.mrf.mxu0
      %v2462 = vadd.f32 %v2373, %v2461
      %2463 = vmatmul.bf16.gmra.mxu0 %v976
      %v2464 = vpop.f32.mrf.mxu0
      %v2465 = vadd.f32 %v2376, %v2464
      %v2466 = vpop.f32.mrf.mxu0
      %v2467 = vadd.f32 %v2378, %v2466
      %2468 = vmatmul.bf16.gmra.mxu0 %v984
      %v2469 = vpop.f32.mrf.mxu0
      %v2470 = vadd.f32 %v2381, %v2469
      %v2471 = vpop.f32.mrf.mxu0
      %v2472 = vadd.f32 %v2383, %v2471
      %2473 = vmatmul.bf16.gmra.mxu0 %v992
      %v2474 = vpop.f32.mrf.mxu0
      %v2475 = vadd.f32 %v2386, %v2474
      %v2476 = vpop.f32.mrf.mxu0
      %v2477 = vadd.f32 %v2388, %v2476
      %2478 = vmatmul.bf16.gmra.mxu0 %v1000
      %v2479 = vpop.f32.mrf.mxu0
      %v2480 = vadd.f32 %v2391, %v2479
      %v2481 = vpop.f32.mrf.mxu0
      %v2482 = vadd.f32 %v2393, %v2481
      %2483 = vmatmul.bf16.gmra.mxu0 %v1008
      %v2484 = vpop.f32.mrf.mxu0
      %v2485 = vadd.f32 %v2396, %v2484
      %v2486 = vpop.f32.mrf.mxu0
      %v2487 = vadd.f32 %v2398, %v2486
      %2488 = vdwg.mxu0
      %2489 = vmatpush.bf16.msra.mxu0 %v1536
      %2490 = vmatpush.bf16.msra.mxu0 %v1534
      %2491 = vmatpush.bf16.msra.mxu0 %v1532
      %2492 = vmatpush.bf16.msra.mxu0 %v1530
      %2493 = vmatpush.bf16.msra.mxu0 %v1528
      %2494 = vmatpush.bf16.msra.mxu0 %v1526
      %2495 = vmatpush.bf16.msra.mxu0 %v1524
      %2496 = vmatpush.bf16.msra.mxu0 %v1522
      %2497 = vmatmul.bf16.gmra.mxu0 %v881
      %v2498 = vpop.f32.mrf.mxu0
      %v2499 = vadd.f32 %v494, %v2498
      %v2500 = vpop.f32.mrf.mxu0
      %v2501 = vadd.f32 %v494, %v2500
      %2502 = vmatmul.bf16.gmra.mxu0 %v889
      %v2503 = vpop.f32.mrf.mxu0
      %v2504 = vadd.f32 %v494, %v2503
      %v2505 = vpop.f32.mrf.mxu0
      %v2506 = vadd.f32 %v494, %v2505
      %2507 = vmatmul.bf16.gmra.mxu0 %v897
      %v2508 = vpop.f32.mrf.mxu0
      %v2509 = vadd.f32 %v494, %v2508
      %v2510 = vpop.f32.mrf.mxu0
      %v2511 = vadd.f32 %v494, %v2510
      %2512 = vmatmul.bf16.gmra.mxu0 %v905
      %v2513 = vpop.f32.mrf.mxu0
      %v2514 = vadd.f32 %v494, %v2513
      %v2515 = vpop.f32.mrf.mxu0
      %v2516 = vadd.f32 %v494, %v2515
      %2517 = vmatmul.bf16.gmra.mxu0 %v913
      %v2518 = vpop.f32.mrf.mxu0
      %v2519 = vadd.f32 %v494, %v2518
      %v2520 = vpop.f32.mrf.mxu0
      %v2521 = vadd.f32 %v494, %v2520
      %2522 = vmatmul.bf16.gmra.mxu0 %v921
      %v2523 = vpop.f32.mrf.mxu0
      %v2524 = vadd.f32 %v494, %v2523
      %v2525 = vpop.f32.mrf.mxu0
      %v2526 = vadd.f32 %v494, %v2525
      %2527 = vmatmul.bf16.gmra.mxu0 %v929
      %v2528 = vpop.f32.mrf.mxu0
      %v2529 = vadd.f32 %v494, %v2528
      %v2530 = vpop.f32.mrf.mxu0
      %v2531 = vadd.f32 %v494, %v2530
      %2532 = vmatmul.bf16.gmra.mxu0 %v937
      %v2533 = vpop.f32.mrf.mxu0
      %v2534 = vadd.f32 %v494, %v2533
      %v2535 = vpop.f32.mrf.mxu0
      %v2536 = vadd.f32 %v494, %v2535
      %2537 = vmatmul.bf16.gmra.mxu0 %v945
      %v2538 = vpop.f32.mrf.mxu0
      %v2539 = vadd.f32 %v494, %v2538
      %v2540 = vpop.f32.mrf.mxu0
      %v2541 = vadd.f32 %v494, %v2540
      %2542 = vmatmul.bf16.gmra.mxu0 %v953
      %v2543 = vpop.f32.mrf.mxu0
      %v2544 = vadd.f32 %v494, %v2543
      %v2545 = vpop.f32.mrf.mxu0
      %v2546 = vadd.f32 %v494, %v2545
      %2547 = vmatmul.bf16.gmra.mxu0 %v961
      %v2548 = vpop.f32.mrf.mxu0
      %v2549 = vadd.f32 %v494, %v2548
      %v2550 = vpop.f32.mrf.mxu0
      %v2551 = vadd.f32 %v494, %v2550
      %2552 = vmatmul.bf16.gmra.mxu0 %v969
      %v2553 = vpop.f32.mrf.mxu0
      %v2554 = vadd.f32 %v494, %v2553
      %v2555 = vpop.f32.mrf.mxu0
      %v2556 = vadd.f32 %v494, %v2555
      %2557 = vmatmul.bf16.gmra.mxu0 %v977
      %v2558 = vpop.f32.mrf.mxu0
      %v2559 = vadd.f32 %v494, %v2558
      %v2560 = vpop.f32.mrf.mxu0
      %v2561 = vadd.f32 %v494, %v2560
      %2562 = vmatmul.bf16.gmra.mxu0 %v985
      %v2563 = vpop.f32.mrf.mxu0
      %v2564 = vadd.f32 %v494, %v2563
      %v2565 = vpop.f32.mrf.mxu0
      %v2566 = vadd.f32 %v494, %v2565
      %2567 = vmatmul.bf16.gmra.mxu0 %v993
      %v2568 = vpop.f32.mrf.mxu0
      %v2569 = vadd.f32 %v494, %v2568
      %v2570 = vpop.f32.mrf.mxu0
      %v2571 = vadd.f32 %v494, %v2570
      %2572 = vmatmul.bf16.gmra.mxu0 %v1001
      %v2573 = vpop.f32.mrf.mxu0
      %v2574 = vadd.f32 %v494, %v2573
      %v2575 = vpop.f32.mrf.mxu0
      %v2576 = vadd.f32 %v494, %v2575
      %2577 = vdwg.mxu0
      %2578 = vmatpush.bf16.msra.mxu0 %v1552
      %2579 = vmatpush.bf16.msra.mxu0 %v1550
      %2580 = vmatpush.bf16.msra.mxu0 %v1548
      %2581 = vmatpush.bf16.msra.mxu0 %v1546
      %2582 = vmatpush.bf16.msra.mxu0 %v1544
      %2583 = vmatpush.bf16.msra.mxu0 %v1542
      %2584 = vmatpush.bf16.msra.mxu0 %v1540
      %2585 = vmatpush.bf16.msra.mxu0 %v1538
      %2586 = vmatmul.bf16.gmra.mxu0 %v882
      %v2587 = vpop.f32.mrf.mxu0
      %v2588 = vadd.f32 %v2499, %v2587
      %v2589 = vpop.f32.mrf.mxu0
      %v2590 = vadd.f32 %v2501, %v2589
      %2591 = vmatmul.bf16.gmra.mxu0 %v890
      %v2592 = vpop.f32.mrf.mxu0
      %v2593 = vadd.f32 %v2504, %v2592
      %v2594 = vpop.f32.mrf.mxu0
      %v2595 = vadd.f32 %v2506, %v2594
      %2596 = vmatmul.bf16.gmra.mxu0 %v898
      %v2597 = vpop.f32.mrf.mxu0
      %v2598 = vadd.f32 %v2509, %v2597
      %v2599 = vpop.f32.mrf.mxu0
      %v2600 = vadd.f32 %v2511, %v2599
      %2601 = vmatmul.bf16.gmra.mxu0 %v906
      %v2602 = vpop.f32.mrf.mxu0
      %v2603 = vadd.f32 %v2514, %v2602
      %v2604 = vpop.f32.mrf.mxu0
      %v2605 = vadd.f32 %v2516, %v2604
      %2606 = vmatmul.bf16.gmra.mxu0 %v914
      %v2607 = vpop.f32.mrf.mxu0
      %v2608 = vadd.f32 %v2519, %v2607
      %v2609 = vpop.f32.mrf.mxu0
      %v2610 = vadd.f32 %v2521, %v2609
      %2611 = vmatmul.bf16.gmra.mxu0 %v922
      %v2612 = vpop.f32.mrf.mxu0
      %v2613 = vadd.f32 %v2524, %v2612
      %v2614 = vpop.f32.mrf.mxu0
      %v2615 = vadd.f32 %v2526, %v2614
      %2616 = vmatmul.bf16.gmra.mxu0 %v930
      %v2617 = vpop.f32.mrf.mxu0
      %v2618 = vadd.f32 %v2529, %v2617
      %v2619 = vpop.f32.mrf.mxu0
      %v2620 = vadd.f32 %v2531, %v2619
      %2621 = vmatmul.bf16.gmra.mxu0 %v938
      %v2622 = vpop.f32.mrf.mxu0
      %v2623 = vadd.f32 %v2534, %v2622
      %v2624 = vpop.f32.mrf.mxu0
      %v2625 = vadd.f32 %v2536, %v2624
      %2626 = vmatmul.bf16.gmra.mxu0 %v946
      %v2627 = vpop.f32.mrf.mxu0
      %v2628 = vadd.f32 %v2539, %v2627
      %v2629 = vpop.f32.mrf.mxu0
      %v2630 = vadd.f32 %v2541, %v2629
      %2631 = vmatmul.bf16.gmra.mxu0 %v954
      %v2632 = vpop.f32.mrf.mxu0
      %v2633 = vadd.f32 %v2544, %v2632
      %v2634 = vpop.f32.mrf.mxu0
      %v2635 = vadd.f32 %v2546, %v2634
      %2636 = vmatmul.bf16.gmra.mxu0 %v962
      %v2637 = vpop.f32.mrf.mxu0
      %v2638 = vadd.f32 %v2549, %v2637
      %v2639 = vpop.f32.mrf.mxu0
      %v2640 = vadd.f32 %v2551, %v2639
      %2641 = vmatmul.bf16.gmra.mxu0 %v970
      %v2642 = vpop.f32.mrf.mxu0
      %v2643 = vadd.f32 %v2554, %v2642
      %v2644 = vpop.f32.mrf.mxu0
      %v2645 = vadd.f32 %v2556, %v2644
      %2646 = vmatmul.bf16.gmra.mxu0 %v978
      %v2647 = vpop.f32.mrf.mxu0
      %v2648 = vadd.f32 %v2559, %v2647
      %v2649 = vpop.f32.mrf.mxu0
      %v2650 = vadd.f32 %v2561, %v2649
      %2651 = vmatmul.bf16.gmra.mxu0 %v986
      %v2652 = vpop.f32.mrf.mxu0
      %v2653 = vadd.f32 %v2564, %v2652
      %v2654 = vpop.f32.mrf.mxu0
      %v2655 = vadd.f32 %v2566, %v2654
      %2656 = vmatmul.bf16.gmra.mxu0 %v994
      %v2657 = vpop.f32.mrf.mxu0
      %v2658 = vadd.f32 %v2569, %v2657
      %v2659 = vpop.f32.mrf.mxu0
      %v2660 = vadd.f32 %v2571, %v2659
      %2661 = vmatmul.bf16.gmra.mxu0 %v1002
      %v2662 = vpop.f32.mrf.mxu0
      %v2663 = vadd.f32 %v2574, %v2662
      %v2664 = vpop.f32.mrf.mxu0
      %v2665 = vadd.f32 %v2576, %v2664
      %2666 = vdwg.mxu0
      %2667 = vmatpush.bf16.msra.mxu0 %v1568
      %2668 = vmatpush.bf16.msra.mxu0 %v1566
      %2669 = vmatpush.bf16.msra.mxu0 %v1564
      %2670 = vmatpush.bf16.msra.mxu0 %v1562
      %2671 = vmatpush.bf16.msra.mxu0 %v1560
      %2672 = vmatpush.bf16.msra.mxu0 %v1558
      %2673 = vmatpush.bf16.msra.mxu0 %v1556
      %2674 = vmatpush.bf16.msra.mxu0 %v1554
      %2675 = vmatmul.bf16.gmra.mxu0 %v883
      %v2676 = vpop.f32.mrf.mxu0
      %v2677 = vadd.f32 %v2588, %v2676
      %v2678 = vpop.f32.mrf.mxu0
      %v2679 = vadd.f32 %v2590, %v2678
      %2680 = vmatmul.bf16.gmra.mxu0 %v891
      %v2681 = vpop.f32.mrf.mxu0
      %v2682 = vadd.f32 %v2593, %v2681
      %v2683 = vpop.f32.mrf.mxu0
      %v2684 = vadd.f32 %v2595, %v2683
      %2685 = vmatmul.bf16.gmra.mxu0 %v899
      %v2686 = vpop.f32.mrf.mxu0
      %v2687 = vadd.f32 %v2598, %v2686
      %v2688 = vpop.f32.mrf.mxu0
      %v2689 = vadd.f32 %v2600, %v2688
      %2690 = vmatmul.bf16.gmra.mxu0 %v907
      %v2691 = vpop.f32.mrf.mxu0
      %v2692 = vadd.f32 %v2603, %v2691
      %v2693 = vpop.f32.mrf.mxu0
      %v2694 = vadd.f32 %v2605, %v2693
      %2695 = vmatmul.bf16.gmra.mxu0 %v915
      %v2696 = vpop.f32.mrf.mxu0
      %v2697 = vadd.f32 %v2608, %v2696
      %v2698 = vpop.f32.mrf.mxu0
      %v2699 = vadd.f32 %v2610, %v2698
      %2700 = vmatmul.bf16.gmra.mxu0 %v923
      %v2701 = vpop.f32.mrf.mxu0
      %v2702 = vadd.f32 %v2613, %v2701
      %v2703 = vpop.f32.mrf.mxu0
      %v2704 = vadd.f32 %v2615, %v2703
      %2705 = vmatmul.bf16.gmra.mxu0 %v931
      %v2706 = vpop.f32.mrf.mxu0
      %v2707 = vadd.f32 %v2618, %v2706
      %v2708 = vpop.f32.mrf.mxu0
      %v2709 = vadd.f32 %v2620, %v2708
      %2710 = vmatmul.bf16.gmra.mxu0 %v939
      %v2711 = vpop.f32.mrf.mxu0
      %v2712 = vadd.f32 %v2623, %v2711
      %v2713 = vpop.f32.mrf.mxu0
      %v2714 = vadd.f32 %v2625, %v2713
      %2715 = vmatmul.bf16.gmra.mxu0 %v947
      %v2716 = vpop.f32.mrf.mxu0
      %v2717 = vadd.f32 %v2628, %v2716
      %v2718 = vpop.f32.mrf.mxu0
      %v2719 = vadd.f32 %v2630, %v2718
      %2720 = vmatmul.bf16.gmra.mxu0 %v955
      %v2721 = vpop.f32.mrf.mxu0
      %v2722 = vadd.f32 %v2633, %v2721
      %v2723 = vpop.f32.mrf.mxu0
      %v2724 = vadd.f32 %v2635, %v2723
      %2725 = vmatmul.bf16.gmra.mxu0 %v963
      %v2726 = vpop.f32.mrf.mxu0
      %v2727 = vadd.f32 %v2638, %v2726
      %v2728 = vpop.f32.mrf.mxu0
      %v2729 = vadd.f32 %v2640, %v2728
      %2730 = vmatmul.bf16.gmra.mxu0 %v971
      %v2731 = vpop.f32.mrf.mxu0
      %v2732 = vadd.f32 %v2643, %v2731
      %v2733 = vpop.f32.mrf.mxu0
      %v2734 = vadd.f32 %v2645, %v2733
      %2735 = vmatmul.bf16.gmra.mxu0 %v979
      %v2736 = vpop.f32.mrf.mxu0
      %v2737 = vadd.f32 %v2648, %v2736
      %v2738 = vpop.f32.mrf.mxu0
      %v2739 = vadd.f32 %v2650, %v2738
      %2740 = vmatmul.bf16.gmra.mxu0 %v987
      %v2741 = vpop.f32.mrf.mxu0
      %v2742 = vadd.f32 %v2653, %v2741
      %v2743 = vpop.f32.mrf.mxu0
      %v2744 = vadd.f32 %v2655, %v2743
      %2745 = vmatmul.bf16.gmra.mxu0 %v995
      %v2746 = vpop.f32.mrf.mxu0
      %v2747 = vadd.f32 %v2658, %v2746
      %v2748 = vpop.f32.mrf.mxu0
      %v2749 = vadd.f32 %v2660, %v2748
      %2750 = vmatmul.bf16.gmra.mxu0 %v1003
      %v2751 = vpop.f32.mrf.mxu0
      %v2752 = vadd.f32 %v2663, %v2751
      %v2753 = vpop.f32.mrf.mxu0
      %v2754 = vadd.f32 %v2665, %v2753
      %2755 = vdwg.mxu0
      %2756 = vmatpush.bf16.msra.mxu0 %v1584
      %2757 = vmatpush.bf16.msra.mxu0 %v1582
      %2758 = vmatpush.bf16.msra.mxu0 %v1580
      %2759 = vmatpush.bf16.msra.mxu0 %v1578
      %2760 = vmatpush.bf16.msra.mxu0 %v1576
      %2761 = vmatpush.bf16.msra.mxu0 %v1574
      %2762 = vmatpush.bf16.msra.mxu0 %v1572
      %2763 = vmatpush.bf16.msra.mxu0 %v1570
      %2764 = vmatmul.bf16.gmra.mxu0 %v884
      %v2765 = vpop.f32.mrf.mxu0
      %v2766 = vadd.f32 %v2677, %v2765
      %v2767 = vpop.f32.mrf.mxu0
      %v2768 = vadd.f32 %v2679, %v2767
      %2769 = vmatmul.bf16.gmra.mxu0 %v892
      %v2770 = vpop.f32.mrf.mxu0
      %v2771 = vadd.f32 %v2682, %v2770
      %v2772 = vpop.f32.mrf.mxu0
      %v2773 = vadd.f32 %v2684, %v2772
      %2774 = vmatmul.bf16.gmra.mxu0 %v900
      %v2775 = vpop.f32.mrf.mxu0
      %v2776 = vadd.f32 %v2687, %v2775
      %v2777 = vpop.f32.mrf.mxu0
      %v2778 = vadd.f32 %v2689, %v2777
      %2779 = vmatmul.bf16.gmra.mxu0 %v908
      %v2780 = vpop.f32.mrf.mxu0
      %v2781 = vadd.f32 %v2692, %v2780
      %v2782 = vpop.f32.mrf.mxu0
      %v2783 = vadd.f32 %v2694, %v2782
      %2784 = vmatmul.bf16.gmra.mxu0 %v916
      %v2785 = vpop.f32.mrf.mxu0
      %v2786 = vadd.f32 %v2697, %v2785
      %v2787 = vpop.f32.mrf.mxu0
      %v2788 = vadd.f32 %v2699, %v2787
      %2789 = vmatmul.bf16.gmra.mxu0 %v924
      %v2790 = vpop.f32.mrf.mxu0
      %v2791 = vadd.f32 %v2702, %v2790
      %v2792 = vpop.f32.mrf.mxu0
      %v2793 = vadd.f32 %v2704, %v2792
      %2794 = vmatmul.bf16.gmra.mxu0 %v932
      %v2795 = vpop.f32.mrf.mxu0
      %v2796 = vadd.f32 %v2707, %v2795
      %v2797 = vpop.f32.mrf.mxu0
      %v2798 = vadd.f32 %v2709, %v2797
      %2799 = vmatmul.bf16.gmra.mxu0 %v940
      %v2800 = vpop.f32.mrf.mxu0
      %v2801 = vadd.f32 %v2712, %v2800
      %v2802 = vpop.f32.mrf.mxu0
      %v2803 = vadd.f32 %v2714, %v2802
      %2804 = vmatmul.bf16.gmra.mxu0 %v948
      %v2805 = vpop.f32.mrf.mxu0
      %v2806 = vadd.f32 %v2717, %v2805
      %v2807 = vpop.f32.mrf.mxu0
      %v2808 = vadd.f32 %v2719, %v2807
      %2809 = vmatmul.bf16.gmra.mxu0 %v956
      %v2810 = vpop.f32.mrf.mxu0
      %v2811 = vadd.f32 %v2722, %v2810
      %v2812 = vpop.f32.mrf.mxu0
      %v2813 = vadd.f32 %v2724, %v2812
      %2814 = vmatmul.bf16.gmra.mxu0 %v964
      %v2815 = vpop.f32.mrf.mxu0
      %v2816 = vadd.f32 %v2727, %v2815
      %v2817 = vpop.f32.mrf.mxu0
      %v2818 = vadd.f32 %v2729, %v2817
      %2819 = vmatmul.bf16.gmra.mxu0 %v972
      %v2820 = vpop.f32.mrf.mxu0
      %v2821 = vadd.f32 %v2732, %v2820
      %v2822 = vpop.f32.mrf.mxu0
      %v2823 = vadd.f32 %v2734, %v2822
      %2824 = vmatmul.bf16.gmra.mxu0 %v980
      %v2825 = vpop.f32.mrf.mxu0
      %v2826 = vadd.f32 %v2737, %v2825
      %v2827 = vpop.f32.mrf.mxu0
      %v2828 = vadd.f32 %v2739, %v2827
      %2829 = vmatmul.bf16.gmra.mxu0 %v988
      %v2830 = vpop.f32.mrf.mxu0
      %v2831 = vadd.f32 %v2742, %v2830
      %v2832 = vpop.f32.mrf.mxu0
      %v2833 = vadd.f32 %v2744, %v2832
      %2834 = vmatmul.bf16.gmra.mxu0 %v996
      %v2835 = vpop.f32.mrf.mxu0
      %v2836 = vadd.f32 %v2747, %v2835
      %v2837 = vpop.f32.mrf.mxu0
      %v2838 = vadd.f32 %v2749, %v2837
      %2839 = vmatmul.bf16.gmra.mxu0 %v1004
      %v2840 = vpop.f32.mrf.mxu0
      %v2841 = vadd.f32 %v2752, %v2840
      %v2842 = vpop.f32.mrf.mxu0
      %v2843 = vadd.f32 %v2754, %v2842
      %2844 = vdwg.mxu0
      %2845 = vmatpush.bf16.msra.mxu0 %v1600
      %2846 = vmatpush.bf16.msra.mxu0 %v1598
      %2847 = vmatpush.bf16.msra.mxu0 %v1596
      %2848 = vmatpush.bf16.msra.mxu0 %v1594
      %2849 = vmatpush.bf16.msra.mxu0 %v1592
      %2850 = vmatpush.bf16.msra.mxu0 %v1590
      %2851 = vmatpush.bf16.msra.mxu0 %v1588
      %2852 = vmatpush.bf16.msra.mxu0 %v1586
      %2853 = vmatmul.bf16.gmra.mxu0 %v885
      %v2854 = vpop.f32.mrf.mxu0
      %v2855 = vadd.f32 %v2766, %v2854
      %v2856 = vpop.f32.mrf.mxu0
      %v2857 = vadd.f32 %v2768, %v2856
      %2858 = vmatmul.bf16.gmra.mxu0 %v893
      %v2859 = vpop.f32.mrf.mxu0
      %v2860 = vadd.f32 %v2771, %v2859
      %v2861 = vpop.f32.mrf.mxu0
      %v2862 = vadd.f32 %v2773, %v2861
      %2863 = vmatmul.bf16.gmra.mxu0 %v901
      %v2864 = vpop.f32.mrf.mxu0
      %v2865 = vadd.f32 %v2776, %v2864
      %v2866 = vpop.f32.mrf.mxu0
      %v2867 = vadd.f32 %v2778, %v2866
      %2868 = vmatmul.bf16.gmra.mxu0 %v909
      %v2869 = vpop.f32.mrf.mxu0
      %v2870 = vadd.f32 %v2781, %v2869
      %v2871 = vpop.f32.mrf.mxu0
      %v2872 = vadd.f32 %v2783, %v2871
      %2873 = vmatmul.bf16.gmra.mxu0 %v917
      %v2874 = vpop.f32.mrf.mxu0
      %v2875 = vadd.f32 %v2786, %v2874
      %v2876 = vpop.f32.mrf.mxu0
      %v2877 = vadd.f32 %v2788, %v2876
      %2878 = vmatmul.bf16.gmra.mxu0 %v925
      %v2879 = vpop.f32.mrf.mxu0
      %v2880 = vadd.f32 %v2791, %v2879
      %v2881 = vpop.f32.mrf.mxu0
      %v2882 = vadd.f32 %v2793, %v2881
      %2883 = vmatmul.bf16.gmra.mxu0 %v933
      %v2884 = vpop.f32.mrf.mxu0
      %v2885 = vadd.f32 %v2796, %v2884
      %v2886 = vpop.f32.mrf.mxu0
      %v2887 = vadd.f32 %v2798, %v2886
      %2888 = vmatmul.bf16.gmra.mxu0 %v941
      %v2889 = vpop.f32.mrf.mxu0
      %v2890 = vadd.f32 %v2801, %v2889
      %v2891 = vpop.f32.mrf.mxu0
      %v2892 = vadd.f32 %v2803, %v2891
      %2893 = vmatmul.bf16.gmra.mxu0 %v949
      %v2894 = vpop.f32.mrf.mxu0
      %v2895 = vadd.f32 %v2806, %v2894
      %v2896 = vpop.f32.mrf.mxu0
      %v2897 = vadd.f32 %v2808, %v2896
      %2898 = vmatmul.bf16.gmra.mxu0 %v957
      %v2899 = vpop.f32.mrf.mxu0
      %v2900 = vadd.f32 %v2811, %v2899
      %v2901 = vpop.f32.mrf.mxu0
      %v2902 = vadd.f32 %v2813, %v2901
      %2903 = vmatmul.bf16.gmra.mxu0 %v965
      %v2904 = vpop.f32.mrf.mxu0
      %v2905 = vadd.f32 %v2816, %v2904
      %v2906 = vpop.f32.mrf.mxu0
      %v2907 = vadd.f32 %v2818, %v2906
      %2908 = vmatmul.bf16.gmra.mxu0 %v973
      %v2909 = vpop.f32.mrf.mxu0
      %v2910 = vadd.f32 %v2821, %v2909
      %v2911 = vpop.f32.mrf.mxu0
      %v2912 = vadd.f32 %v2823, %v2911
      %2913 = vmatmul.bf16.gmra.mxu0 %v981
      %v2914 = vpop.f32.mrf.mxu0
      %v2915 = vadd.f32 %v2826, %v2914
      %v2916 = vpop.f32.mrf.mxu0
      %v2917 = vadd.f32 %v2828, %v2916
      %2918 = vmatmul.bf16.gmra.mxu0 %v989
      %v2919 = vpop.f32.mrf.mxu0
      %v2920 = vadd.f32 %v2831, %v2919
      %v2921 = vpop.f32.mrf.mxu0
      %v2922 = vadd.f32 %v2833, %v2921
      %2923 = vmatmul.bf16.gmra.mxu0 %v997
      %v2924 = vpop.f32.mrf.mxu0
      %v2925 = vadd.f32 %v2836, %v2924
      %v2926 = vpop.f32.mrf.mxu0
      %v2927 = vadd.f32 %v2838, %v2926
      %2928 = vmatmul.bf16.gmra.mxu0 %v1005
      %v2929 = vpop.f32.mrf.mxu0
      %v2930 = vadd.f32 %v2841, %v2929
      %v2931 = vpop.f32.mrf.mxu0
      %v2932 = vadd.f32 %v2843, %v2931
      %2933 = vdwg.mxu0
      %2934 = vmatpush.bf16.msra.mxu0 %v1616
      %2935 = vmatpush.bf16.msra.mxu0 %v1614
      %2936 = vmatpush.bf16.msra.mxu0 %v1612
      %2937 = vmatpush.bf16.msra.mxu0 %v1610
      %2938 = vmatpush.bf16.msra.mxu0 %v1608
      %2939 = vmatpush.bf16.msra.mxu0 %v1606
      %2940 = vmatpush.bf16.msra.mxu0 %v1604
      %2941 = vmatpush.bf16.msra.mxu0 %v1602
      %2942 = vmatmul.bf16.gmra.mxu0 %v886
      %v2943 = vpop.f32.mrf.mxu0
      %v2944 = vadd.f32 %v2855, %v2943
      %v2945 = vpop.f32.mrf.mxu0
      %v2946 = vadd.f32 %v2857, %v2945
      %2947 = vmatmul.bf16.gmra.mxu0 %v894
      %v2948 = vpop.f32.mrf.mxu0
      %v2949 = vadd.f32 %v2860, %v2948
      %v2950 = vpop.f32.mrf.mxu0
      %v2951 = vadd.f32 %v2862, %v2950
      %2952 = vmatmul.bf16.gmra.mxu0 %v902
      %v2953 = vpop.f32.mrf.mxu0
      %v2954 = vadd.f32 %v2865, %v2953
      %v2955 = vpop.f32.mrf.mxu0
      %v2956 = vadd.f32 %v2867, %v2955
      %2957 = vmatmul.bf16.gmra.mxu0 %v910
      %v2958 = vpop.f32.mrf.mxu0
      %v2959 = vadd.f32 %v2870, %v2958
      %v2960 = vpop.f32.mrf.mxu0
      %v2961 = vadd.f32 %v2872, %v2960
      %2962 = vmatmul.bf16.gmra.mxu0 %v918
      %v2963 = vpop.f32.mrf.mxu0
      %v2964 = vadd.f32 %v2875, %v2963
      %v2965 = vpop.f32.mrf.mxu0
      %v2966 = vadd.f32 %v2877, %v2965
      %2967 = vmatmul.bf16.gmra.mxu0 %v926
      %v2968 = vpop.f32.mrf.mxu0
      %v2969 = vadd.f32 %v2880, %v2968
      %v2970 = vpop.f32.mrf.mxu0
      %v2971 = vadd.f32 %v2882, %v2970
      %2972 = vmatmul.bf16.gmra.mxu0 %v934
      %v2973 = vpop.f32.mrf.mxu0
      %v2974 = vadd.f32 %v2885, %v2973
      %v2975 = vpop.f32.mrf.mxu0
      %v2976 = vadd.f32 %v2887, %v2975
      %2977 = vmatmul.bf16.gmra.mxu0 %v942
      %v2978 = vpop.f32.mrf.mxu0
      %v2979 = vadd.f32 %v2890, %v2978
      %v2980 = vpop.f32.mrf.mxu0
      %v2981 = vadd.f32 %v2892, %v2980
      %2982 = vmatmul.bf16.gmra.mxu0 %v950
      %v2983 = vpop.f32.mrf.mxu0
      %v2984 = vadd.f32 %v2895, %v2983
      %v2985 = vpop.f32.mrf.mxu0
      %v2986 = vadd.f32 %v2897, %v2985
      %2987 = vmatmul.bf16.gmra.mxu0 %v958
      %v2988 = vpop.f32.mrf.mxu0
      %v2989 = vadd.f32 %v2900, %v2988
      %v2990 = vpop.f32.mrf.mxu0
      %v2991 = vadd.f32 %v2902, %v2990
      %2992 = vmatmul.bf16.gmra.mxu0 %v966
      %v2993 = vpop.f32.mrf.mxu0
      %v2994 = vadd.f32 %v2905, %v2993
      %v2995 = vpop.f32.mrf.mxu0
      %v2996 = vadd.f32 %v2907, %v2995
      %2997 = vmatmul.bf16.gmra.mxu0 %v974
      %v2998 = vpop.f32.mrf.mxu0
      %v2999 = vadd.f32 %v2910, %v2998
      %v3000 = vpop.f32.mrf.mxu0
      %v3001 = vadd.f32 %v2912, %v3000
      %3002 = vmatmul.bf16.gmra.mxu0 %v982
      %v3003 = vpop.f32.mrf.mxu0
      %v3004 = vadd.f32 %v2915, %v3003
      %v3005 = vpop.f32.mrf.mxu0
      %v3006 = vadd.f32 %v2917, %v3005
      %3007 = vmatmul.bf16.gmra.mxu0 %v990
      %v3008 = vpop.f32.mrf.mxu0
      %v3009 = vadd.f32 %v2920, %v3008
      %v3010 = vpop.f32.mrf.mxu0
      %v3011 = vadd.f32 %v2922, %v3010
      %3012 = vmatmul.bf16.gmra.mxu0 %v998
      %v3013 = vpop.f32.mrf.mxu0
      %v3014 = vadd.f32 %v2925, %v3013
      %v3015 = vpop.f32.mrf.mxu0
      %v3016 = vadd.f32 %v2927, %v3015
      %3017 = vmatmul.bf16.gmra.mxu0 %v1006
      %v3018 = vpop.f32.mrf.mxu0
      %v3019 = vadd.f32 %v2930, %v3018
      %v3020 = vpop.f32.mrf.mxu0
      %v3021 = vadd.f32 %v2932, %v3020
      %3022 = vdwg.mxu0
      %3023 = vmatpush.bf16.msra.mxu0 %v1632
      %3024 = vmatpush.bf16.msra.mxu0 %v1630
      %3025 = vmatpush.bf16.msra.mxu0 %v1628
      %3026 = vmatpush.bf16.msra.mxu0 %v1626
      %3027 = vmatpush.bf16.msra.mxu0 %v1624
      %3028 = vmatpush.bf16.msra.mxu0 %v1622
      %3029 = vmatpush.bf16.msra.mxu0 %v1620
      %3030 = vmatpush.bf16.msra.mxu0 %v1618
      %3031 = vmatmul.bf16.gmra.mxu0 %v887
      %v3032 = vpop.f32.mrf.mxu0
      %v3033 = vadd.f32 %v2944, %v3032
      %v3034 = vpop.f32.mrf.mxu0
      %v3035 = vadd.f32 %v2946, %v3034
      %3036 = vmatmul.bf16.gmra.mxu0 %v895
      %v3037 = vpop.f32.mrf.mxu0
      %v3038 = vadd.f32 %v2949, %v3037
      %v3039 = vpop.f32.mrf.mxu0
      %v3040 = vadd.f32 %v2951, %v3039
      %3041 = vmatmul.bf16.gmra.mxu0 %v903
      %v3042 = vpop.f32.mrf.mxu0
      %v3043 = vadd.f32 %v2954, %v3042
      %v3044 = vpop.f32.mrf.mxu0
      %v3045 = vadd.f32 %v2956, %v3044
      %3046 = vmatmul.bf16.gmra.mxu0 %v911
      %v3047 = vpop.f32.mrf.mxu0
      %v3048 = vadd.f32 %v2959, %v3047
      %v3049 = vpop.f32.mrf.mxu0
      %v3050 = vadd.f32 %v2961, %v3049
      %3051 = vmatmul.bf16.gmra.mxu0 %v919
      %v3052 = vpop.f32.mrf.mxu0
      %v3053 = vadd.f32 %v2964, %v3052
      %v3054 = vpop.f32.mrf.mxu0
      %v3055 = vadd.f32 %v2966, %v3054
      %3056 = vmatmul.bf16.gmra.mxu0 %v927
      %v3057 = vpop.f32.mrf.mxu0
      %v3058 = vadd.f32 %v2969, %v3057
      %v3059 = vpop.f32.mrf.mxu0
      %v3060 = vadd.f32 %v2971, %v3059
      %3061 = vmatmul.bf16.gmra.mxu0 %v935
      %v3062 = vpop.f32.mrf.mxu0
      %v3063 = vadd.f32 %v2974, %v3062
      %v3064 = vpop.f32.mrf.mxu0
      %v3065 = vadd.f32 %v2976, %v3064
      %3066 = vmatmul.bf16.gmra.mxu0 %v943
      %v3067 = vpop.f32.mrf.mxu0
      %v3068 = vadd.f32 %v2979, %v3067
      %v3069 = vpop.f32.mrf.mxu0
      %v3070 = vadd.f32 %v2981, %v3069
      %3071 = vmatmul.bf16.gmra.mxu0 %v951
      %v3072 = vpop.f32.mrf.mxu0
      %v3073 = vadd.f32 %v2984, %v3072
      %v3074 = vpop.f32.mrf.mxu0
      %v3075 = vadd.f32 %v2986, %v3074
      %3076 = vmatmul.bf16.gmra.mxu0 %v959
      %v3077 = vpop.f32.mrf.mxu0
      %v3078 = vadd.f32 %v2989, %v3077
      %v3079 = vpop.f32.mrf.mxu0
      %v3080 = vadd.f32 %v2991, %v3079
      %3081 = vmatmul.bf16.gmra.mxu0 %v967
      %v3082 = vpop.f32.mrf.mxu0
      %v3083 = vadd.f32 %v2994, %v3082
      %v3084 = vpop.f32.mrf.mxu0
      %v3085 = vadd.f32 %v2996, %v3084
      %3086 = vmatmul.bf16.gmra.mxu0 %v975
      %v3087 = vpop.f32.mrf.mxu0
      %v3088 = vadd.f32 %v2999, %v3087
      %v3089 = vpop.f32.mrf.mxu0
      %v3090 = vadd.f32 %v3001, %v3089
      %3091 = vmatmul.bf16.gmra.mxu0 %v983
      %v3092 = vpop.f32.mrf.mxu0
      %v3093 = vadd.f32 %v3004, %v3092
      %v3094 = vpop.f32.mrf.mxu0
      %v3095 = vadd.f32 %v3006, %v3094
      %3096 = vmatmul.bf16.gmra.mxu0 %v991
      %v3097 = vpop.f32.mrf.mxu0
      %v3098 = vadd.f32 %v3009, %v3097
      %v3099 = vpop.f32.mrf.mxu0
      %v3100 = vadd.f32 %v3011, %v3099
      %3101 = vmatmul.bf16.gmra.mxu0 %v999
      %v3102 = vpop.f32.mrf.mxu0
      %v3103 = vadd.f32 %v3014, %v3102
      %v3104 = vpop.f32.mrf.mxu0
      %v3105 = vadd.f32 %v3016, %v3104
      %3106 = vmatmul.bf16.gmra.mxu0 %v1007
      %v3107 = vpop.f32.mrf.mxu0
      %v3108 = vadd.f32 %v3019, %v3107
      %v3109 = vpop.f32.mrf.mxu0
      %v3110 = vadd.f32 %v3021, %v3109
      %3111 = vdwg.mxu0
      %3112 = vmatpush.bf16.msra.mxu0 %v1648
      %3113 = vmatpush.bf16.msra.mxu0 %v1646
      %3114 = vmatpush.bf16.msra.mxu0 %v1644
      %3115 = vmatpush.bf16.msra.mxu0 %v1642
      %3116 = vmatpush.bf16.msra.mxu0 %v1640
      %3117 = vmatpush.bf16.msra.mxu0 %v1638
      %3118 = vmatpush.bf16.msra.mxu0 %v1636
      %3119 = vmatpush.bf16.msra.mxu0 %v1634
      %3120 = vmatmul.bf16.gmra.mxu0 %v888
      %v3121 = vpop.f32.mrf.mxu0
      %v3122 = vadd.f32 %v3033, %v3121
      %v3123 = vpop.f32.mrf.mxu0
      %v3124 = vadd.f32 %v3035, %v3123
      %3125 = vmatmul.bf16.gmra.mxu0 %v896
      %v3126 = vpop.f32.mrf.mxu0
      %v3127 = vadd.f32 %v3038, %v3126
      %v3128 = vpop.f32.mrf.mxu0
      %v3129 = vadd.f32 %v3040, %v3128
      %3130 = vmatmul.bf16.gmra.mxu0 %v904
      %v3131 = vpop.f32.mrf.mxu0
      %v3132 = vadd.f32 %v3043, %v3131
      %v3133 = vpop.f32.mrf.mxu0
      %v3134 = vadd.f32 %v3045, %v3133
      %3135 = vmatmul.bf16.gmra.mxu0 %v912
      %v3136 = vpop.f32.mrf.mxu0
      %v3137 = vadd.f32 %v3048, %v3136
      %v3138 = vpop.f32.mrf.mxu0
      %v3139 = vadd.f32 %v3050, %v3138
      %3140 = vmatmul.bf16.gmra.mxu0 %v920
      %v3141 = vpop.f32.mrf.mxu0
      %v3142 = vadd.f32 %v3053, %v3141
      %v3143 = vpop.f32.mrf.mxu0
      %v3144 = vadd.f32 %v3055, %v3143
      %3145 = vmatmul.bf16.gmra.mxu0 %v928
      %v3146 = vpop.f32.mrf.mxu0
      %v3147 = vadd.f32 %v3058, %v3146
      %v3148 = vpop.f32.mrf.mxu0
      %v3149 = vadd.f32 %v3060, %v3148
      %3150 = vmatmul.bf16.gmra.mxu0 %v936
      %v3151 = vpop.f32.mrf.mxu0
      %v3152 = vadd.f32 %v3063, %v3151
      %v3153 = vpop.f32.mrf.mxu0
      %v3154 = vadd.f32 %v3065, %v3153
      %3155 = vmatmul.bf16.gmra.mxu0 %v944
      %v3156 = vpop.f32.mrf.mxu0
      %v3157 = vadd.f32 %v3068, %v3156
      %v3158 = vpop.f32.mrf.mxu0
      %v3159 = vadd.f32 %v3070, %v3158
      %3160 = vmatmul.bf16.gmra.mxu0 %v952
      %v3161 = vpop.f32.mrf.mxu0
      %v3162 = vadd.f32 %v3073, %v3161
      %v3163 = vpop.f32.mrf.mxu0
      %v3164 = vadd.f32 %v3075, %v3163
      %3165 = vmatmul.bf16.gmra.mxu0 %v960
      %v3166 = vpop.f32.mrf.mxu0
      %v3167 = vadd.f32 %v3078, %v3166
      %v3168 = vpop.f32.mrf.mxu0
      %v3169 = vadd.f32 %v3080, %v3168
      %3170 = vmatmul.bf16.gmra.mxu0 %v968
      %v3171 = vpop.f32.mrf.mxu0
      %v3172 = vadd.f32 %v3083, %v3171
      %v3173 = vpop.f32.mrf.mxu0
      %v3174 = vadd.f32 %v3085, %v3173
      %3175 = vmatmul.bf16.gmra.mxu0 %v976
      %v3176 = vpop.f32.mrf.mxu0
      %v3177 = vadd.f32 %v3088, %v3176
      %v3178 = vpop.f32.mrf.mxu0
      %v3179 = vadd.f32 %v3090, %v3178
      %3180 = vmatmul.bf16.gmra.mxu0 %v984
      %v3181 = vpop.f32.mrf.mxu0
      %v3182 = vadd.f32 %v3093, %v3181
      %v3183 = vpop.f32.mrf.mxu0
      %v3184 = vadd.f32 %v3095, %v3183
      %3185 = vmatmul.bf16.gmra.mxu0 %v992
      %v3186 = vpop.f32.mrf.mxu0
      %v3187 = vadd.f32 %v3098, %v3186
      %v3188 = vpop.f32.mrf.mxu0
      %v3189 = vadd.f32 %v3100, %v3188
      %3190 = vmatmul.bf16.gmra.mxu0 %v1000
      %v3191 = vpop.f32.mrf.mxu0
      %v3192 = vadd.f32 %v3103, %v3191
      %v3193 = vpop.f32.mrf.mxu0
      %v3194 = vadd.f32 %v3105, %v3193
      %3195 = vmatmul.bf16.gmra.mxu0 %v1008
      %v3196 = vpop.f32.mrf.mxu0
      %v3197 = vadd.f32 %v3108, %v3196
      %v3198 = vpop.f32.mrf.mxu0
      %v3199 = vadd.f32 %v3110, %v3198
      %3200 = vdwg.mxu0
      %v3201 = vmax.f32 %v2410, 0.0
      %v3202 = vmax.f32 %v3122, 0.0
      %v3203 = vmax.f32 %v2412, 0.0
      %v3204 = vmax.f32 %v3124, 0.0
      %v3205 = vmax.f32 %v2415, 0.0
      %v3206 = vmax.f32 %v3127, 0.0
      %v3207 = vmax.f32 %v2417, 0.0
      %v3208 = vmax.f32 %v3129, 0.0
      %v3209 = vmax.f32 %v2420, 0.0
      %v3210 = vmax.f32 %v3132, 0.0
      %v3211 = vmax.f32 %v2422, 0.0
      %v3212 = vmax.f32 %v3134, 0.0
      %v3213 = vmax.f32 %v2425, 0.0
      %v3214 = vmax.f32 %v3137, 0.0
      %v3215 = vmax.f32 %v2427, 0.0
      %v3216 = vmax.f32 %v3139, 0.0
      %v3217 = vmax.f32 %v2430, 0.0
      %v3218 = vmax.f32 %v3142, 0.0
      %v3219 = vmax.f32 %v2432, 0.0
      %v3220 = vmax.f32 %v3144, 0.0
      %v3221 = vmax.f32 %v2435, 0.0
      %v3222 = vmax.f32 %v3147, 0.0
      %v3223 = vmax.f32 %v2437, 0.0
      %v3224 = vmax.f32 %v3149, 0.0
      %v3225 = vmax.f32 %v2440, 0.0
      %v3226 = vmax.f32 %v3152, 0.0
      %v3227 = vmax.f32 %v2442, 0.0
      %v3228 = vmax.f32 %v3154, 0.0
      %v3229 = vmax.f32 %v2445, 0.0
      %v3230 = vmax.f32 %v3157, 0.0
      %v3231 = vmax.f32 %v2447, 0.0
      %v3232 = vmax.f32 %v3159, 0.0
      %v3233 = vmax.f32 %v2450, 0.0
      %v3234 = vmax.f32 %v3162, 0.0
      %v3235 = vmax.f32 %v2452, 0.0
      %v3236 = vmax.f32 %v3164, 0.0
      %v3237 = vmax.f32 %v2455, 0.0
      %v3238 = vmax.f32 %v3167, 0.0
      %v3239 = vmax.f32 %v2457, 0.0
      %v3240 = vmax.f32 %v3169, 0.0
      %v3241 = vmax.f32 %v2460, 0.0
      %v3242 = vmax.f32 %v3172, 0.0
      %v3243 = vmax.f32 %v2462, 0.0
      %v3244 = vmax.f32 %v3174, 0.0
      %v3245 = vmax.f32 %v2465, 0.0
      %v3246 = vmax.f32 %v3177, 0.0
      %v3247 = vmax.f32 %v2467, 0.0
      %v3248 = vmax.f32 %v3179, 0.0
      %v3249 = vmax.f32 %v2470, 0.0
      %v3250 = vmax.f32 %v3182, 0.0
      %v3251 = vmax.f32 %v2472, 0.0
      %v3252 = vmax.f32 %v3184, 0.0
      %v3253 = vmax.f32 %v2475, 0.0
      %v3254 = vmax.f32 %v3187, 0.0
      %v3255 = vmax.f32 %v2477, 0.0
      %v3256 = vmax.f32 %v3189, 0.0
      %v3257 = vmax.f32 %v2480, 0.0
      %v3258 = vmax.f32 %v3192, 0.0
      %v3259 = vmax.f32 %v2482, 0.0
      %v3260 = vmax.f32 %v3194, 0.0
      %v3261 = vmax.f32 %v2485, 0.0
      %v3262 = vmax.f32 %v3197, 0.0
      %v3263 = vmax.f32 %v2487, 0.0
      %v3264 = vmax.f32 %v3199, 0.0
      %3265 = vst [vmem:[%s233] sm:$0xff] %v3201
      %3266 = vst [vmem:[%s233 + $0x8] sm:$0xff] %v3202
      %3267 = vst [vmem:[%s233 + $0x10] sm:$0xff] %v3203
      %3268 = vst [vmem:[%s233 + $0x18] sm:$0xff] %v3204
      %3269 = vst [vmem:[%s233 + $0x20] sm:$0xff] %v3205
      %3270 = vst [vmem:[%s233 + $0x28] sm:$0xff] %v3206
      %3271 = vst [vmem:[%s233 + $0x30] sm:$0xff] %v3207
      %3272 = vst [vmem:[%s233 + $0x38] sm:$0xff] %v3208
      %3273 = vst [vmem:[%s233 + $0x40] sm:$0xff] %v3209
      %3274 = vst [vmem:[%s233 + $0x48] sm:$0xff] %v3210
      %3275 = vst [vmem:[%s233 + $0x50] sm:$0xff] %v3211
      %3276 = vst [vmem:[%s233 + $0x58] sm:$0xff] %v3212
      %3277 = vst [vmem:[%s233 + $0x60] sm:$0xff] %v3213
      %3278 = vst [vmem:[%s233 + $0x68] sm:$0xff] %v3214
      %3279 = vst [vmem:[%s233 + $0x70] sm:$0xff] %v3215
      %3280 = vst [vmem:[%s233 + $0x78] sm:$0xff] %v3216
      %3281 = vst [vmem:[%s233 + $0x80] sm:$0xff] %v3217
      %3282 = vst [vmem:[%s233 + $0x88] sm:$0xff] %v3218
      %3283 = vst [vmem:[%s233 + $0x90] sm:$0xff] %v3219
      %3284 = vst [vmem:[%s233 + $0x98] sm:$0xff] %v3220
      %3285 = vst [vmem:[%s233 + $0xa0] sm:$0xff] %v3221
      %3286 = vst [vmem:[%s233 + $0xa8] sm:$0xff] %v3222
      %3287 = vst [vmem:[%s233 + $0xb0] sm:$0xff] %v3223
      %3288 = vst [vmem:[%s233 + $0xb8] sm:$0xff] %v3224
      %3289 = vst [vmem:[%s233 + $0xc0] sm:$0xff] %v3225
      %3290 = vst [vmem:[%s233 + $0xc8] sm:$0xff] %v3226
      %3291 = vst [vmem:[%s233 + $0xd0] sm:$0xff] %v3227
      %3292 = vst [vmem:[%s233 + $0xd8] sm:$0xff] %v3228
      %3293 = vst [vmem:[%s233 + $0xe0] sm:$0xff] %v3229
      %3294 = vst [vmem:[%s233 + $0xe8] sm:$0xff] %v3230
      %3295 = vst [vmem:[%s233 + $0xf0] sm:$0xff] %v3231
      %3296 = vst [vmem:[%s233 + $0xf8] sm:$0xff] %v3232
      %3297 = vst [vmem:[%s233 + $0x100] sm:$0xff] %v3233
      %3298 = vst [vmem:[%s233 + $0x108] sm:$0xff] %v3234
      %3299 = vst [vmem:[%s233 + $0x110] sm:$0xff] %v3235
      %3300 = vst [vmem:[%s233 + $0x118] sm:$0xff] %v3236
      %3301 = vst [vmem:[%s233 + $0x120] sm:$0xff] %v3237
      %3302 = vst [vmem:[%s233 + $0x128] sm:$0xff] %v3238
      %3303 = vst [vmem:[%s233 + $0x130] sm:$0xff] %v3239
      %3304 = vst [vmem:[%s233 + $0x138] sm:$0xff] %v3240
      %3305 = vst [vmem:[%s233 + $0x140] sm:$0xff] %v3241
      %3306 = vst [vmem:[%s233 + $0x148] sm:$0xff] %v3242
      %3307 = vst [vmem:[%s233 + $0x150] sm:$0xff] %v3243
      %3308 = vst [vmem:[%s233 + $0x158] sm:$0xff] %v3244
      %3309 = vst [vmem:[%s233 + $0x160] sm:$0xff] %v3245
      %3310 = vst [vmem:[%s233 + $0x168] sm:$0xff] %v3246
      %3311 = vst [vmem:[%s233 + $0x170] sm:$0xff] %v3247
      %3312 = vst [vmem:[%s233 + $0x178] sm:$0xff] %v3248
      %3313 = vst [vmem:[%s233 + $0x180] sm:$0xff] %v3249
      %3314 = vst [vmem:[%s233 + $0x188] sm:$0xff] %v3250
      %3315 = vst [vmem:[%s233 + $0x190] sm:$0xff] %v3251
      %3316 = vst [vmem:[%s233 + $0x198] sm:$0xff] %v3252
      %3317 = vst [vmem:[%s233 + $0x1a0] sm:$0xff] %v3253
      %3318 = vst [vmem:[%s233 + $0x1a8] sm:$0xff] %v3254
      %3319 = vst [vmem:[%s233 + $0x1b0] sm:$0xff] %v3255
      %3320 = vst [vmem:[%s233 + $0x1b8] sm:$0xff] %v3256
      %3321 = vst [vmem:[%s233 + $0x1c0] sm:$0xff] %v3257
      %3322 = vst [vmem:[%s233 + $0x1c8] sm:$0xff] %v3258
      %3323 = vst [vmem:[%s233 + $0x1d0] sm:$0xff] %v3259
      %3324 = vst [vmem:[%s233 + $0x1d8] sm:$0xff] %v3260
      %3325 = vst [vmem:[%s233 + $0x1e0] sm:$0xff] %v3261
      %3326 = vst [vmem:[%s233 + $0x1e8] sm:$0xff] %v3262
      %3327 = vst [vmem:[%s233 + $0x1f0] sm:$0xff] %v3263
      %3328 = vst [vmem:[%s233 + $0x1f8] sm:$0xff] %v3264
      %s3329 = smul.u32 32, %s19
      %p3330 = scmp.lt.s32.totalorder %s18, 3
      %s3331 = scalar_select %p3330, %s18, 3
      %p3332 = scmp.lt.s32.totalorder %s3329, 63
      %s3333 = scalar_select %p3332, %s3329, 63
      %s3334 = smul.addr %s3333, 2
      %s3335 = smul.addr %s3331, 128
      %s3336 = sadd.s32 %s3334, %s3335
      %s3337 = smul.addr %s3336, 8
      %s3338 = scalar_lea.vmem %s3, %s3337
      // Predicated region
      $region33: #{km3d_core_head.5} parent=31 // pred_check
        %p3339 = pneg %p121
      $region34: #{km3d_core_head.5} parent=31 // pred_check_branch
        %3341 = sbr.rel (%p3339) target = $region36
      $region35: #{km3d_core_head.5} parent=31 // pred_region
        %s3342 = smul.u32 32, %s19
      $region36: #{km3d_core_head.5} parent=31 // pred_fallthru
        _
    $region32: #{km3d_core_head.5} parent=5 // pred_fallthru
      _
    %p3343 = scmp.le.s32.totalorder 2, %s9
    // Predicated region
    $region37: #{km3d_core_head.5} parent=5 // pred_check
      %p3344 = pneg %p3343
    $region38: #{km3d_core_head.5} parent=5 // pred_check_branch
      %3346 = sbr.rel (%p3344) target = $region40
    $region39: #{km3d_core_head.5} parent=5 // pred_region
      %s3347 = ssub.s32 %s9, 2
      // Predicated region
      $region41: #{km3d_core_head.5} parent=39 // pred_check
        %p3348 = pneg %p127
      $region42: #{km3d_core_head.5} parent=39 // pred_check_branch
        %3350 = sbr.rel (%p3348) target = $region44
      $region43: #{km3d_core_head.5} parent=39 // pred_region
        %s3351 = smul.u32 32, %s21
        %p3352 = scmp.lt.s32.totalorder %s20, 3
        %s3353 = scalar_select %p3352, %s20, 3
        %p3354 = scmp.lt.s32.totalorder %s3351, 63
        %s3355 = scalar_select %p3354, %s3351, 63
        %s3356 = smul.addr %s3355, 2
        %s3357 = smul.addr %s3353, 128
        %s3358 = sadd.s32 %s3356, %s3357
        %s3359 = smul.addr %s3358, 8
        %s3360 = scalar_lea.vmem %s3, %s3359
      $region44: #{km3d_core_head.5} parent=39 // pred_fallthru
        _
    $region40: #{km3d_core_head.5} parent=5 // pred_fallthru
      _
  $region6: #{km3d_core_head.5} parent=0 // loop_footer
    %s13 = sadd.s32 1, %s9
  $region7: #{km3d_core_head.5} parent=0 // loop_footer_branch
    %8 = sbr.rel target = $region3
  $region8: #{km3d_core_head.5} parent=0 // loop_exit
    _

</llo_original>
